<compile_context>
chip_gen: v6e
topology: v6e:2x2x1
jax: 0.10.0
libtpu: 0.0.40
codegen_flags: <defaults>
</compile_context>

<pallas_src>
import functools
import math

import jax
import jax.numpy as jnp
from jax.experimental import pallas as pl
from jax.experimental.pallas import tpu as pltpu

LANE = 128
_VMEM_LIMIT = 32 * 1024 * 1024


def _round_up(x, m):
    return ((x + m - 1) // m) * m


def _pick_tm(m, cap=128):
    """Row tile: multiple of 8, and >=2 grid steps when possible (v7x megacore)."""
    if m <= 8:
        return 8
    tm = _round_up(-(-m // 2), 8)
    return min(tm, cap)


# ----------------------------------------------------------------------------
# Pallas kernel 1: matmul + bias + activation (every conv via im2col)
# ----------------------------------------------------------------------------
def _mm_kernel(x_ref, w_ref, b_ref, o_ref, *, act):
    acc = jnp.dot(x_ref[...], w_ref[...], preferred_element_type=jnp.float32)
    acc = acc + b_ref[...]
    if act == "relu":
        acc = jnp.maximum(acc, 0.0)
    elif act == "sigmoid":
        acc = jax.nn.sigmoid(acc)
    o_ref[...] = acc.astype(o_ref.dtype)


def matmul_bias_act(x, w, b, act="none", out_dtype=jnp.bfloat16):
    """x: (M, K) bf16, w: (K, Np) bf16 with Np a multiple of 128, b: (1, Np) f32."""
    M, K = x.shape
    Np = w.shape[1]
    tm = _pick_tm(M)
    return pl.pallas_call(
        functools.partial(_mm_kernel, act=act),
        out_shape=jax.ShapeDtypeStruct((M, Np), out_dtype),
        grid=(pl.cdiv(M, tm),),
        in_specs=[
            pl.BlockSpec((tm, K), lambda i: (i, 0)),
            pl.BlockSpec((K, Np), lambda i: (0, 0)),
            pl.BlockSpec((1, Np), lambda i: (0, 0)),
        ],
        out_specs=pl.BlockSpec((tm, Np), lambda i: (i, 0)),
        compiler_params=pltpu.CompilerParams(
            dimension_semantics=("parallel",),
            vmem_limit_bytes=_VMEM_LIMIT),
    )(x.astype(jnp.bfloat16), w, b)


# ----------------------------------------------------------------------------
# Pallas kernel 2: vector quantizer with fused 1x1 quantize-conv (+ concat)
# ----------------------------------------------------------------------------
def _vq_kernel(*refs, n_in, m_total, tm):
    x_refs = refs[:n_in]
    w_refs = refs[n_in:2 * n_in]
    b_ref, et_ref, e_ref, e2_ref = refs[2 * n_in:2 * n_in + 4]
    q_ref, ssq_ref = refs[2 * n_in + 4:]

    # fused 1x1 quantize-conv (and fused channel concat when n_in == 2)
    x = b_ref[...]                                     # (1, Dp) f32
    for xr, wr in zip(x_refs, w_refs):
        x = x + jnp.dot(xr[...], wr[...], preferred_element_type=jnp.float32)
    # x: (tm, Dp) f32

    # nearest code: argmin_k ||x - e_k||^2 == argmin_k (||e_k||^2 - 2 x.e_k)
    xe = jnp.dot(x.astype(jnp.bfloat16), et_ref[...],
                 preferred_element_type=jnp.float32)   # (tm, Kp)
    d = e2_ref[...] - 2.0 * xe
    dmin = jnp.min(d, axis=-1, keepdims=True)
    col = jax.lax.broadcasted_iota(jnp.int32, d.shape, 1)
    # first index attaining the min (matches torch argmin tie-break)
    idx = jnp.min(jnp.where(d <= dmin, col, d.shape[1]), axis=-1, keepdims=True)
    onehot = (col == idx).astype(jnp.bfloat16)

    # codebook gather via one-hot matmul
    q = jnp.dot(onehot, e_ref[...], preferred_element_type=jnp.float32)  # (tm, Dp)
    q_ref[...] = q.astype(q_ref.dtype)

    # partial sum of squared error (padded D columns are zero in both x and q)
    row = pl.program_id(0) * tm + jax.lax.broadcasted_iota(
        jnp.int32, (x.shape[0], 1), 0)
    sq = jnp.where(row < m_total, (q - x) ** 2, 0.0)

    @pl.when(pl.program_id(0) == 0)
    def _():
        ssq_ref[...] = jnp.zeros_like(ssq_ref)
    ssq_ref[...] += jnp.sum(sq).reshape(1, 1)


def vq_quantize(parts, bias, embed):
    """parts: list of (x2d (M, C_i), w (C_i, D)); the 1x1 quantize conv (and, for
    the bottom level, the channel concat) is fused into the kernel.
    Returns (quantized (M, D) bf16, sum-of-squared-error scalar f32)."""
    M = parts[0][0].shape[0]
    Ke, D = embed.shape
    Dp = _round_up(D, LANE)
    Kp = _round_up(Ke, LANE)

    xs = [p[0].astype(jnp.bfloat16) for p in parts]
    ws = [jnp.pad(p[1].astype(jnp.float32), ((0, 0), (0, Dp - D))).astype(jnp.bfloat16)
          for p in parts]
    bp = jnp.pad(bias.astype(jnp.float32), (0, Dp - D)).reshape(1, Dp)

    e_pad = jnp.pad(embed.astype(jnp.float32), ((0, Kp - Ke), (0, Dp - D)))
    e_bf = e_pad.astype(jnp.bfloat16)           # (Kp, Dp) gather operand
    et_bf = jnp.transpose(e_bf)                 # (Dp, Kp) distance operand
    e2 = jnp.sum(e_pad * e_pad, axis=-1)
    e2 = jnp.where(jnp.arange(Kp) < Ke, e2, 1e30).reshape(1, Kp).astype(jnp.float32)

    tm = _pick_tm(M, cap=256)
    nt = pl.cdiv(M, tm)
    n_in = len(parts)

    in_specs = (
        [pl.BlockSpec((tm, x.shape[1]), lambda i: (i, 0)) for x in xs]
        + [pl.BlockSpec(w.shape, lambda i: (0, 0)) for w in ws]
        + [pl.BlockSpec((1, Dp), lambda i: (0, 0)),
           pl.BlockSpec((Dp, Kp), lambda i: (0, 0)),
           pl.BlockSpec((Kp, Dp), lambda i: (0, 0)),
           pl.BlockSpec((1, Kp), lambda i: (0, 0))])

    q, ssq = pl.pallas_call(
        functools.partial(_vq_kernel, n_in=n_in, m_total=M, tm=tm),
        out_shape=(jax.ShapeDtypeStruct((M, Dp), jnp.bfloat16),
                   jax.ShapeDtypeStruct((1, 1), jnp.float32)),
        grid=(nt,),
        in_specs=in_specs,
        out_specs=(pl.BlockSpec((tm, Dp), lambda i: (i, 0)),
                   pl.BlockSpec((1, 1), lambda i: (0, 0))),
        compiler_params=pltpu.CompilerParams(
            dimension_semantics=("arbitrary",),   # ssq accumulator revisits its block
            vmem_limit_bytes=_VMEM_LIMIT),
    )(*xs, *ws, bp, et_bf, e_bf, e2)
    return q[:, :D], ssq[0, 0]


# ----------------------------------------------------------------------------
# Conv helpers (im2col glue in plain JAX, matmul in Pallas)
# ----------------------------------------------------------------------------
def _im2col(x, kh, kw, stride, pad):
    """x: (B,H,W,C) -> (B,Ho,Wo,kh*kw*C), patch ordering (i, j, c); pad is
    ((top, bottom), (left, right))."""
    x = jnp.pad(x, ((0, 0), pad[0], pad[1], (0, 0)))
    B, H, W, C = x.shape
    Ho = (H - kh) // stride + 1
    Wo = (W - kw) // stride + 1
    cols = []
    for i in range(kh):
        for j in range(kw):
            cols.append(x[:, i:i + stride * Ho:stride, j:j + stride * Wo:stride, :])
    return jnp.concatenate(cols, axis=-1), Ho, Wo


def _prep_conv_w(w, b):
    """PyTorch Conv2d weight (Cout,Cin,kh,kw) -> lane-padded
    ((kh*kw*Cin, Np) bf16, (1, Np) f32, Cout)."""
    Cout, Cin, kh, kw = w.shape
    Np = _round_up(Cout, LANE)
    wm = jnp.transpose(w, (2, 3, 1, 0)).reshape(kh * kw * Cin, Cout)
    wm = jnp.pad(wm.astype(jnp.float32), ((0, 0), (0, Np - Cout))).astype(jnp.bfloat16)
    bp = jnp.pad(b.astype(jnp.float32), (0, Np - Cout)).reshape(1, Np)
    return wm, bp, Cout


def conv2d(x, w, b, stride, pad, act="none", out_dtype=jnp.bfloat16):
    """x: (B,H,W,Cin) NHWC; w: (Cout,Cin,kh,kw) (PyTorch conv layout); b: (Cout,)."""
    if isinstance(pad, int):
        pad = ((pad, pad), (pad, pad))
    Cout, Cin, kh, kw = w.shape
    patches, Ho, Wo = _im2col(x.astype(jnp.bfloat16), kh, kw, stride, pad)
    B = x.shape[0]
    wm, bp, n = _prep_conv_w(w, b)
    y = matmul_bias_act(patches.reshape(B * Ho * Wo, kh * kw * Cin),
                        wm, bp, act, out_dtype)
    return y[:, :n].reshape(B, Ho, Wo, n)


def conv_transpose2d_s2(x, w_ct, bias, act="none", out_dtype=jnp.bfloat16):
    """PyTorch ConvTranspose2d(k=4, stride=2, padding=1) via sub-pixel phase
    decomposition: 4 stride-1 2x2 convolutions (no zero-dilated input).
    w_ct: (Cin, Cout, 4, 4) PyTorch ConvTranspose2d layout."""
    Cin, Cout, k, _ = w_ct.shape
    assert k == 4
    TAPS = ((3, 1), (2, 0))   # output phase r: input offsets (m-1+a)/(m+a) use rows TAPS[r]
    B, H, W, _ = x.shape
    phases = []
    for rh in (0, 1):
        row = []
        for rw in (0, 1):
            w_eff = jnp.stack(
                [jnp.stack([w_ct[:, :, TAPS[rh][a], TAPS[rw][c]] for c in (0, 1)],
                           axis=-1) for a in (0, 1)], axis=-2)   # (Cin, Cout, 2, 2)
            w_eff = jnp.transpose(w_eff, (1, 0, 2, 3))           # (Cout, Cin, 2, 2)
            pad = ((1, 0) if rh == 0 else (0, 1),
                   (1, 0) if rw == 0 else (0, 1))
            row.append(conv2d(x, w_eff, bias, 1, pad, act, out_dtype))
        phases.append(row)
    a0 = jnp.stack([phases[0][0], phases[0][1]], axis=3)   # (B,H,W,2,Cout), axis3 = rw
    a1 = jnp.stack([phases[1][0], phases[1][1]], axis=3)
    full = jnp.stack([a0, a1], axis=2)                     # (B,H,2,W,2,Cout), axis2 = rh
    return full.reshape(B, 2 * H, 2 * W, Cout)


# ----------------------------------------------------------------------------
# Reconstructed sub-module forwards (NHWC)
# ----------------------------------------------------------------------------
def encoder_b_fwd(x, p):      # n_groups=2: x4 downsample
    h = conv2d(x, p["w0"], p["b0"], 2, 1, "relu")
    h = conv2d(h, p["w1"], p["b1"], 2, 1, "relu")
    return conv2d(h, p["w2"], p["b2"], 1, 1, "none")


def encoder_t_fwd(x, p):      # n_groups=1: x2 downsample
    h = conv2d(x, p["w0"], p["b0"], 2, 1, "relu")
    return conv2d(h, p["w1"], p["b1"], 1, 1, "none")


def decoder_t_fwd(x, p):      # n_groups=1: x2 upsample
    h = conv2d(x, p["w0"], p["b0"], 1, 1, "relu")
    return conv_transpose2d_s2(h, p["wt0"], p["bt0"], "none")


def decoder_b_fwd(x, p, final_act="none", out_dtype=jnp.float32):  # n_groups=2: x4
    h = conv2d(x, p["w0"], p["b0"], 1, 1, "relu")
    h = conv_transpose2d_s2(h, p["wt0"], p["bt0"], "relu")
    return conv_transpose2d_s2(h, p["wt1"], p["bt1"], final_act, out_dtype=out_dtype)


# ----------------------------------------------------------------------------
# Full VQVAE2 forward
# ----------------------------------------------------------------------------
def vqvae2_forward(x_nchw, params):
    x = jnp.transpose(x_nchw, (0, 2, 3, 1)).astype(jnp.bfloat16)   # NCHW -> NHWC

    enc_b = encoder_b_fwd(x, params["enc_b"])          # (B, H/4, W/4, n_hid)
    enc_t = encoder_t_fwd(enc_b, params["enc_t"])      # (B, H/8, W/8, n_hid)

    B, Ht, Wt, n_hid = enc_t.shape
    D = params["embed_t"].shape[1]

    # top level: fused quantize_conv_t (1x1) + VQ
    w_qt = params["qconv_t_w"][:, :, 0, 0].T                        # (n_hid, D)
    q_t, ssq_t = vq_quantize([(enc_t.reshape(-1, n_hid), w_qt)],
                             params["qconv_t_b"], params["embed_t"])
    quant_t = q_t.reshape(B, Ht, Wt, D)
    diff_t = ssq_t / (B * Ht * Wt * D)                  # MSE(quantize, input)

    dec_t = decoder_t_fwd(quant_t, params["dec_t"])     # (B, H/4, W/4, D)

    # bottom level: fused concat([dec_t, enc_b]) + quantize_conv_b (1x1) + VQ
    Bb, Hb, Wb, _ = enc_b.shape
    w_qb = params["qconv_b_w"][:, :, 0, 0].T                        # (D + n_hid, D)
    q_b, ssq_b = vq_quantize(
        [(dec_t.reshape(-1, D), w_qb[:D]), (enc_b.reshape(-1, n_hid), w_qb[D:])],
        params["qconv_b_b"], params["embed_b"])
    quant_b = q_b.reshape(Bb, Hb, Wb, D)
    diff_b = ssq_b / (Bb * Hb * Wb * D)

    # decode (sigmoid fused into the final Pallas matmul)
    up_t = conv_transpose2d_s2(quant_t, params["up_t_w"], params["up_t_b"])
    quant = jnp.concatenate([up_t, quant_b], axis=-1)
    dec = decoder_b_fwd(quant, params["dec_b"], final_act="sigmoid",
                        out_dtype=jnp.float32)

    out = jnp.transpose(dec, (0, 3, 1, 2))                          # back to NCHW
    diff = (diff_t + diff_b)[None].astype(jnp.float32)              # shape (1,)
    return out, diff


# ----------------------------------------------------------------------------
# Deterministic parameter init (shapes implied by the module's __init__)
# ----------------------------------------------------------------------------
def _conv_init(key, cout, cin, k):
    kw, kb = jax.random.split(key)
    w = jax.random.normal(kw, (cout, cin, k, k), jnp.float32) / math.sqrt(cin * k * k)
    b = 0.01 * jax.random.normal(kb, (cout,), jnp.float32)
    return w, b


def _convT_init(key, cin, cout, k):
    kw, kb = jax.random.split(key)
    w = jax.random.normal(kw, (cin, cout, k, k), jnp.float32) / math.sqrt(cin * k * k)
    b = 0.01 * jax.random.normal(kb, (cout,), jnp.float32)
    return w, b


def init_params(key, n_hid, embedding_dim, n_embed):
    ks = jax.random.split(key, 16)
    p = {}
    # encoder_b: 3 -> n_hid//2 (k4 s2) -> n_hid (k4 s2) -> n_hid (k3 s1)
    w0, b0 = _conv_init(ks[0], n_hid // 2, 3, 4)
    w1, b1 = _conv_init(ks[1], n_hid, n_hid // 2, 4)
    w2, b2 = _conv_init(ks[2], n_hid, n_hid, 3)
    p["enc_b"] = {"w0": w0, "b0": b0, "w1": w1, "b1": b1, "w2": w2, "b2": b2}
    # encoder_t: n_hid -> n_hid//2 (k4 s2) -> n_hid (k3 s1)
    w0, b0 = _conv_init(ks[3], n_hid // 2, n_hid, 4)
    w1, b1 = _conv_init(ks[4], n_hid, n_hid // 2, 3)
    p["enc_t"] = {"w0": w0, "b0": b0, "w1": w1, "b1": b1}
    # 1x1 quantize convs
    p["qconv_t_w"], p["qconv_t_b"] = _conv_init(ks[5], embedding_dim, n_hid, 1)
    p["qconv_b_w"], p["qconv_b_b"] = _conv_init(
        ks[6], embedding_dim, n_hid + embedding_dim, 1)
    # codebooks
    p["embed_t"] = jax.random.normal(ks[7], (n_embed, embedding_dim), jnp.float32)
    p["embed_b"] = jax.random.normal(ks[8], (n_embed, embedding_dim), jnp.float32)
    # decoder_t: D -> n_hid (k3) relu, convT n_hid -> D
    w0, b0 = _conv_init(ks[9], n_hid, embedding_dim, 3)
    wt0, bt0 = _convT_init(ks[10], n_hid, embedding_dim, 4)
    p["dec_t"] = {"w0": w0, "b0": b0, "wt0": wt0, "bt0": bt0}
    # decoder_b: 2D -> n_hid (k3) relu, convT n_hid -> n_hid//2 relu, convT -> 3
    w0, b0 = _conv_init(ks[11], n_hid, 2 * embedding_dim, 3)
    wt0, bt0 = _convT_init(ks[12], n_hid, n_hid // 2, 4)
    wt1, bt1 = _convT_init(ks[13], n_hid // 2, 3, 4)
    p["dec_b"] = {"w0": w0, "b0": b0, "wt0": wt0, "bt0": bt0, "wt1": wt1, "bt1": bt1}
    # upsample_t: ConvTranspose2d(D, D, 4, stride=2, padding=1)
    p["up_t_w"], p["up_t_b"] = _convT_init(ks[14], embedding_dim, embedding_dim, 4)
    return p


if __name__ == "__main__":
    n_hid, embedding_dim, n_embed = 32, 16, 64
    params = init_params(jax.random.PRNGKey(1), n_hid, embedding_dim, n_embed)
    x = jax.random.uniform(jax.random.PRNGKey(0), (2, 3, 32, 32), jnp.float32)  # NCHW

    fwd = jax.jit(lambda xx: vqvae2_forward(xx, params))
    out, diff = fwd(x)
    jax.block_until_ready((out, diff))

    assert out.shape == (2, 3, 32, 32), out.shape
    assert diff.shape == (1,), diff.shape
    assert bool(jnp.all(jnp.isfinite(out))) and bool(jnp.all(jnp.isfinite(diff)))
    print("KERNEL_OK")
</pallas_src>

<mosaic_0001>
module attributes {stable_mosaic.version = 11 : i64} {
  func.func @_mm_kernel(%arg0: i32, %arg1: memref<128x48xbf16, #tpu.memory_space<vmem>>, %arg2: memref<48x128xbf16, #tpu.memory_space<vmem>>, %arg3: memref<1x128xf32, #tpu.memory_space<vmem>>, %arg4: memref<128x128xbf16, #tpu.memory_space<vmem>>) attributes {dimension_semantics = [#tpu.dimension_semantics<parallel>], iteration_bounds = array<i64: 4>, scalar_prefetch = 0 : i64, scratch_operands = 0 : i64, tpu.core_type = #tpu.core_type<tc>, window_params = [{transform_indices = @transform_0, window_bounds = array<i64: 128, 48>}, {pipeline_mode = #tpu.pipeline_mode<synchronous>, transform_indices = @transform_1, window_bounds = array<i64: 48, 128>}, {pipeline_mode = #tpu.pipeline_mode<synchronous>, transform_indices = @transform_2, window_bounds = array<i64: 1, 128>}, {transform_indices = @transform_3, window_bounds = array<i64: 128, 128>}]} {
    %c0 = arith.constant 0 : index
    %c0_0 = arith.constant 0 : index
    %0 = vector.load %arg1[%c0, %c0_0] : memref<128x48xbf16, #tpu.memory_space<vmem>>, vector<128x48xbf16>
    %c0_1 = arith.constant 0 : index
    %c0_2 = arith.constant 0 : index
    %1 = vector.load %arg2[%c0_1, %c0_2] : memref<48x128xbf16, #tpu.memory_space<vmem>>, vector<48x128xbf16>
    %cst = arith.constant dense<0.000000e+00> : vector<128x128xf32>
    %2 = tpu.matmul %0, %1, %cst {dimension_numbers = #tpu.dot_dimension_numbers<[1], [0], [0], [1], [0, 0, 1, 1], [], []>} : vector<128x48xbf16>, vector<48x128xbf16>, vector<128x128xf32> -> vector<128x128xf32>
    %c0_3 = arith.constant 0 : index
    %c0_4 = arith.constant 0 : index
    %3 = vector.load %arg3[%c0_3, %c0_4] : memref<1x128xf32, #tpu.memory_space<vmem>>, vector<1x128xf32>
    %4 = vector.broadcast %3 : vector<1x128xf32> to vector<128x128xf32>
    %5 = arith.addf %2, %4 : vector<128x128xf32>
    %cst_5 = arith.constant 0.000000e+00 : f32
    %6 = vector.broadcast %cst_5 : f32 to vector<128x128xf32>
    %7 = arith.maximumf %5, %6 : vector<128x128xf32>
    %8 = arith.truncf %7 : vector<128x128xf32> to vector<128x128xbf16>
    %c0_6 = arith.constant 0 : index
    %c0_7 = arith.constant 0 : index
    %9 = vector.load %arg4[%c0_6, %c0_7] : memref<128x128xbf16, #tpu.memory_space<vmem>>, vector<128x128xbf16>
    tpu.vector_store %arg4[%c0_6, %c0_7], %8 {strides = array<i32>} : memref<128x128xbf16, #tpu.memory_space<vmem>>, vector<128x128xbf16>,
    return
  }
  func.func @transform_0(%arg0: i32) -> (i32, i32) {
    %c0_i32 = arith.constant 0 : i32
    %c0_i32_0 = arith.constant 0 : i32
    return %arg0, %c0_i32 : i32, i32
  }
  func.func @transform_1(%arg0: i32) -> (i32, i32) {
    %c0_i32 = arith.constant 0 : i32
    %c0_i32_0 = arith.constant 0 : i32
    %c0_i32_1 = arith.constant 0 : i32
    return %c0_i32, %c0_i32_0 : i32, i32
  }
  func.func @transform_2(%arg0: i32) -> (i32, i32) {
    %c0_i32 = arith.constant 0 : i32
    %c0_i32_0 = arith.constant 0 : i32
    %c0_i32_1 = arith.constant 0 : i32
    return %c0_i32, %c0_i32_0 : i32, i32
  }
  func.func @transform_3(%arg0: i32) -> (i32, i32) {
    %c0_i32 = arith.constant 0 : i32
    %c0_i32_0 = arith.constant 0 : i32
    return %arg0, %c0_i32 : i32, i32
  }
}

module attributes {stable_mosaic.version = 11 : i64} {
  func.func @_mm_kernel(%arg0: i32, %arg1: memref<64x256xbf16, #tpu.memory_space<vmem>>, %arg2: memref<256x128xbf16, #tpu.memory_space<vmem>>, %arg3: memref<1x128xf32, #tpu.memory_space<vmem>>, %arg4: memref<64x128xbf16, #tpu.memory_space<vmem>>) attributes {dimension_semantics = [#tpu.dimension_semantics<parallel>], iteration_bounds = array<i64: 2>, scalar_prefetch = 0 : i64, scratch_operands = 0 : i64, tpu.core_type = #tpu.core_type<tc>, window_params = [{transform_indices = @transform_0, window_bounds = array<i64: 64, 256>}, {pipeline_mode = #tpu.pipeline_mode<synchronous>, transform_indices = @transform_1, window_bounds = array<i64: 256, 128>}, {pipeline_mode = #tpu.pipeline_mode<synchronous>, transform_indices = @transform_2, window_bounds = array<i64: 1, 128>}, {transform_indices = @transform_3, window_bounds = array<i64: 64, 128>}]} {
    %c0 = arith.constant 0 : index
    %c0_0 = arith.constant 0 : index
    %0 = vector.load %arg1[%c0, %c0_0] : memref<64x256xbf16, #tpu.memory_space<vmem>>, vector<64x256xbf16>
    %c0_1 = arith.constant 0 : index
    %c0_2 = arith.constant 0 : index
    %1 = vector.load %arg2[%c0_1, %c0_2] : memref<256x128xbf16, #tpu.memory_space<vmem>>, vector<256x128xbf16>
    %cst = arith.constant dense<0.000000e+00> : vector<64x128xf32>
    %2 = tpu.matmul %0, %1, %cst {dimension_numbers = #tpu.dot_dimension_numbers<[1], [0], [0], [1], [0, 0, 1, 1], [], []>} : vector<64x256xbf16>, vector<256x128xbf16>, vector<64x128xf32> -> vector<64x128xf32>
    %c0_3 = arith.constant 0 : index
    %c0_4 = arith.constant 0 : index
    %3 = vector.load %arg3[%c0_3, %c0_4] : memref<1x128xf32, #tpu.memory_space<vmem>>, vector<1x128xf32>
    %4 = vector.broadcast %3 : vector<1x128xf32> to vector<64x128xf32>
    %5 = arith.addf %2, %4 : vector<64x128xf32>
    %cst_5 = arith.constant 0.000000e+00 : f32
    %6 = vector.broadcast %cst_5 : f32 to vector<64x128xf32>
    %7 = arith.maximumf %5, %6 : vector<64x128xf32>
    %8 = arith.truncf %7 : vector<64x128xf32> to vector<64x128xbf16>
    %c0_6 = arith.constant 0 : index
    %c0_7 = arith.constant 0 : index
    %9 = vector.load %arg4[%c0_6, %c0_7] : memref<64x128xbf16, #tpu.memory_space<vmem>>, vector<64x128xbf16>
    tpu.vector_store %arg4[%c0_6, %c0_7], %8 {strides = array<i32>} : memref<64x128xbf16, #tpu.memory_space<vmem>>, vector<64x128xbf16>,
    return
  }
  func.func @transform_0(%arg0: i32) -> (i32, i32) {
    %c0_i32 = arith.constant 0 : i32
    %c0_i32_0 = arith.constant 0 : i32
    return %arg0, %c0_i32 : i32, i32
  }
  func.func @transform_1(%arg0: i32) -> (i32, i32) {
    %c0_i32 = arith.constant 0 : i32
    %c0_i32_0 = arith.constant 0 : i32
    %c0_i32_1 = arith.constant 0 : i32
    return %c0_i32, %c0_i32_0 : i32, i32
  }
  func.func @transform_2(%arg0: i32) -> (i32, i32) {
    %c0_i32 = arith.constant 0 : i32
    %c0_i32_0 = arith.constant 0 : i32
    %c0_i32_1 = arith.constant 0 : i32
    return %c0_i32, %c0_i32_0 : i32, i32
  }
  func.func @transform_3(%arg0: i32) -> (i32, i32) {
    %c0_i32 = arith.constant 0 : i32
    %c0_i32_0 = arith.constant 0 : i32
    return %arg0, %c0_i32 : i32, i32
  }
}

module attributes {stable_mosaic.version = 11 : i64} {
  func.func @_mm_kernel(%arg0: i32, %arg1: memref<64x288xbf16, #tpu.memory_space<vmem>>, %arg2: memref<288x128xbf16, #tpu.memory_space<vmem>>, %arg3: memref<1x128xf32, #tpu.memory_space<vmem>>, %arg4: memref<64x128xbf16, #tpu.memory_space<vmem>>) attributes {dimension_semantics = [#tpu.dimension_semantics<parallel>], iteration_bounds = array<i64: 2>, scalar_prefetch = 0 : i64, scratch_operands = 0 : i64, tpu.core_type = #tpu.core_type<tc>, window_params = [{transform_indices = @transform_0, window_bounds = array<i64: 64, 288>}, {pipeline_mode = #tpu.pipeline_mode<synchronous>, transform_indices = @transform_1, window_bounds = array<i64: 288, 128>}, {pipeline_mode = #tpu.pipeline_mode<synchronous>, transform_indices = @transform_2, window_bounds = array<i64: 1, 128>}, {transform_indices = @transform_3, window_bounds = array<i64: 64, 128>}]} {
    %c0 = arith.constant 0 : index
    %c0_0 = arith.constant 0 : index
    %0 = vector.load %arg1[%c0, %c0_0] : memref<64x288xbf16, #tpu.memory_space<vmem>>, vector<64x288xbf16>
    %c0_1 = arith.constant 0 : index
    %c0_2 = arith.constant 0 : index
    %1 = vector.load %arg2[%c0_1, %c0_2] : memref<288x128xbf16, #tpu.memory_space<vmem>>, vector<288x128xbf16>
    %cst = arith.constant dense<0.000000e+00> : vector<64x128xf32>
    %2 = tpu.matmul %0, %1, %cst {dimension_numbers = #tpu.dot_dimension_numbers<[1], [0], [0], [1], [0, 0, 1, 1], [], []>} : vector<64x288xbf16>, vector<288x128xbf16>, vector<64x128xf32> -> vector<64x128xf32>
    %c0_3 = arith.constant 0 : index
    %c0_4 = arith.constant 0 : index
    %3 = vector.load %arg3[%c0_3, %c0_4] : memref<1x128xf32, #tpu.memory_space<vmem>>, vector<1x128xf32>
    %4 = vector.broadcast %3 : vector<1x128xf32> to vector<64x128xf32>
    %5 = arith.addf %2, %4 : vector<64x128xf32>
    %6 = arith.truncf %5 : vector<64x128xf32> to vector<64x128xbf16>
    %c0_5 = arith.constant 0 : index
    %c0_6 = arith.constant 0 : index
    %7 = vector.load %arg4[%c0_5, %c0_6] : memref<64x128xbf16, #tpu.memory_space<vmem>>, vector<64x128xbf16>
    tpu.vector_store %arg4[%c0_5, %c0_6], %6 {strides = array<i32>} : memref<64x128xbf16, #tpu.memory_space<vmem>>, vector<64x128xbf16>,
    return
  }
  func.func @transform_0(%arg0: i32) -> (i32, i32) {
    %c0_i32 = arith.constant 0 : i32
    %c0_i32_0 = arith.constant 0 : i32
    return %arg0, %c0_i32 : i32, i32
  }
  func.func @transform_1(%arg0: i32) -> (i32, i32) {
    %c0_i32 = arith.constant 0 : i32
    %c0_i32_0 = arith.constant 0 : i32
    %c0_i32_1 = arith.constant 0 : i32
    return %c0_i32, %c0_i32_0 : i32, i32
  }
  func.func @transform_2(%arg0: i32) -> (i32, i32) {
    %c0_i32 = arith.constant 0 : i32
    %c0_i32_0 = arith.constant 0 : i32
    %c0_i32_1 = arith.constant 0 : i32
    return %c0_i32, %c0_i32_0 : i32, i32
  }
  func.func @transform_3(%arg0: i32) -> (i32, i32) {
    %c0_i32 = arith.constant 0 : i32
    %c0_i32_0 = arith.constant 0 : i32
    return %arg0, %c0_i32 : i32, i32
  }
}

module attributes {stable_mosaic.version = 11 : i64} {
  func.func @_mm_kernel(%arg0: i32, %arg1: memref<16x512xbf16, #tpu.memory_space<vmem>>, %arg2: memref<512x128xbf16, #tpu.memory_space<vmem>>, %arg3: memref<1x128xf32, #tpu.memory_space<vmem>>, %arg4: memref<16x128xbf16, #tpu.memory_space<vmem>>) attributes {dimension_semantics = [#tpu.dimension_semantics<parallel>], iteration_bounds = array<i64: 2>, scalar_prefetch = 0 : i64, scratch_operands = 0 : i64, tpu.core_type = #tpu.core_type<tc>, window_params = [{transform_indices = @transform_0, window_bounds = array<i64: 16, 512>}, {pipeline_mode = #tpu.pipeline_mode<synchronous>, transform_indices = @transform_1, window_bounds = array<i64: 512, 128>}, {pipeline_mode = #tpu.pipeline_mode<synchronous>, transform_indices = @transform_2, window_bounds = array<i64: 1, 128>}, {transform_indices = @transform_3, window_bounds = array<i64: 16, 128>}]} {
    %c0 = arith.constant 0 : index
    %c0_0 = arith.constant 0 : index
    %0 = vector.load %arg1[%c0, %c0_0] : memref<16x512xbf16, #tpu.memory_space<vmem>>, vector<16x512xbf16>
    %c0_1 = arith.constant 0 : index
    %c0_2 = arith.constant 0 : index
    %1 = vector.load %arg2[%c0_1, %c0_2] : memref<512x128xbf16, #tpu.memory_space<vmem>>, vector<512x128xbf16>
    %cst = arith.constant dense<0.000000e+00> : vector<16x128xf32>
    %2 = tpu.matmul %0, %1, %cst {dimension_numbers = #tpu.dot_dimension_numbers<[1], [0], [0], [1], [0, 0, 1, 1], [], []>} : vector<16x512xbf16>, vector<512x128xbf16>, vector<16x128xf32> -> vector<16x128xf32>
    %c0_3 = arith.constant 0 : index
    %c0_4 = arith.constant 0 : index
    %3 = vector.load %arg3[%c0_3, %c0_4] : memref<1x128xf32, #tpu.memory_space<vmem>>, vector<1x128xf32>
    %4 = vector.broadcast %3 : vector<1x128xf32> to vector<16x128xf32>
    %5 = arith.addf %2, %4 : vector<16x128xf32>
    %cst_5 = arith.constant 0.000000e+00 : f32
    %6 = vector.broadcast %cst_5 : f32 to vector<16x128xf32>
    %7 = arith.maximumf %5, %6 : vector<16x128xf32>
    %8 = arith.truncf %7 : vector<16x128xf32> to vector<16x128xbf16>
    %c0_6 = arith.constant 0 : index
    %c0_7 = arith.constant 0 : index
    %9 = vector.load %arg4[%c0_6, %c0_7] : memref<16x128xbf16, #tpu.memory_space<vmem>>, vector<16x128xbf16>
    tpu.vector_store %arg4[%c0_6, %c0_7], %8 {strides = array<i32>} : memref<16x128xbf16, #tpu.memory_space<vmem>>, vector<16x128xbf16>,
    return
  }
  func.func @transform_0(%arg0: i32) -> (i32, i32) {
    %c0_i32 = arith.constant 0 : i32
    %c0_i32_0 = arith.constant 0 : i32
    return %arg0, %c0_i32 : i32, i32
  }
  func.func @transform_1(%arg0: i32) -> (i32, i32) {
    %c0_i32 = arith.constant 0 : i32
    %c0_i32_0 = arith.constant 0 : i32
    %c0_i32_1 = arith.constant 0 : i32
    return %c0_i32, %c0_i32_0 : i32, i32
  }
  func.func @transform_2(%arg0: i32) -> (i32, i32) {
    %c0_i32 = arith.constant 0 : i32
    %c0_i32_0 = arith.constant 0 : i32
    %c0_i32_1 = arith.constant 0 : i32
    return %c0_i32, %c0_i32_0 : i32, i32
  }
  func.func @transform_3(%arg0: i32) -> (i32, i32) {
    %c0_i32 = arith.constant 0 : i32
    %c0_i32_0 = arith.constant 0 : i32
    return %arg0, %c0_i32 : i32, i32
  }
}

module attributes {stable_mosaic.version = 11 : i64} {
  func.func @_mm_kernel(%arg0: i32, %arg1: memref<16x144xbf16, #tpu.memory_space<vmem>>, %arg2: memref<144x128xbf16, #tpu.memory_space<vmem>>, %arg3: memref<1x128xf32, #tpu.memory_space<vmem>>, %arg4: memref<16x128xbf16, #tpu.memory_space<vmem>>) attributes {dimension_semantics = [#tpu.dimension_semantics<parallel>], iteration_bounds = array<i64: 2>, scalar_prefetch = 0 : i64, scratch_operands = 0 : i64, tpu.core_type = #tpu.core_type<tc>, window_params = [{transform_indices = @transform_0, window_bounds = array<i64: 16, 144>}, {pipeline_mode = #tpu.pipeline_mode<synchronous>, transform_indices = @transform_1, window_bounds = array<i64: 144, 128>}, {pipeline_mode = #tpu.pipeline_mode<synchronous>, transform_indices = @transform_2, window_bounds = array<i64: 1, 128>}, {transform_indices = @transform_3, window_bounds = array<i64: 16, 128>}]} {
    %c0 = arith.constant 0 : index
    %c0_0 = arith.constant 0 : index
    %0 = vector.load %arg1[%c0, %c0_0] : memref<16x144xbf16, #tpu.memory_space<vmem>>, vector<16x144xbf16>
    %c0_1 = arith.constant 0 : index
    %c0_2 = arith.constant 0 : index
    %1 = vector.load %arg2[%c0_1, %c0_2] : memref<144x128xbf16, #tpu.memory_space<vmem>>, vector<144x128xbf16>
    %cst = arith.constant dense<0.000000e+00> : vector<16x128xf32>
    %2 = tpu.matmul %0, %1, %cst {dimension_numbers = #tpu.dot_dimension_numbers<[1], [0], [0], [1], [0, 0, 1, 1], [], []>} : vector<16x144xbf16>, vector<144x128xbf16>, vector<16x128xf32> -> vector<16x128xf32>
    %c0_3 = arith.constant 0 : index
    %c0_4 = arith.constant 0 : index
    %3 = vector.load %arg3[%c0_3, %c0_4] : memref<1x128xf32, #tpu.memory_space<vmem>>, vector<1x128xf32>
    %4 = vector.broadcast %3 : vector<1x128xf32> to vector<16x128xf32>
    %5 = arith.addf %2, %4 : vector<16x128xf32>
    %6 = arith.truncf %5 : vector<16x128xf32> to vector<16x128xbf16>
    %c0_5 = arith.constant 0 : index
    %c0_6 = arith.constant 0 : index
    %7 = vector.load %arg4[%c0_5, %c0_6] : memref<16x128xbf16, #tpu.memory_space<vmem>>, vector<16x128xbf16>
    tpu.vector_store %arg4[%c0_5, %c0_6], %6 {strides = array<i32>} : memref<16x128xbf16, #tpu.memory_space<vmem>>, vector<16x128xbf16>,
    return
  }
  func.func @transform_0(%arg0: i32) -> (i32, i32) {
    %c0_i32 = arith.constant 0 : i32
    %c0_i32_0 = arith.constant 0 : i32
    return %arg0, %c0_i32 : i32, i32
  }
  func.func @transform_1(%arg0: i32) -> (i32, i32) {
    %c0_i32 = arith.constant 0 : i32
    %c0_i32_0 = arith.constant 0 : i32
    %c0_i32_1 = arith.constant 0 : i32
    return %c0_i32, %c0_i32_0 : i32, i32
  }
  func.func @transform_2(%arg0: i32) -> (i32, i32) {
    %c0_i32 = arith.constant 0 : i32
    %c0_i32_0 = arith.constant 0 : i32
    %c0_i32_1 = arith.constant 0 : i32
    return %c0_i32, %c0_i32_0 : i32, i32
  }
  func.func @transform_3(%arg0: i32) -> (i32, i32) {
    %c0_i32 = arith.constant 0 : i32
    %c0_i32_0 = arith.constant 0 : i32
    return %arg0, %c0_i32 : i32, i32
  }
}

module attributes {stable_mosaic.version = 11 : i64} {
  func.func @_vq_kernel(%arg0: i32, %arg1: memref<16x32xbf16, #tpu.memory_space<vmem>>, %arg2: memref<32x128xbf16, #tpu.memory_space<vmem>>, %arg3: memref<1x128xf32, #tpu.memory_space<vmem>>, %arg4: memref<128x128xbf16, #tpu.memory_space<vmem>>, %arg5: memref<128x128xbf16, #tpu.memory_space<vmem>>, %arg6: memref<1x128xf32, #tpu.memory_space<vmem>>, %arg7: memref<16x128xbf16, #tpu.memory_space<vmem>>, %arg8: memref<1x1xf32, #tpu.memory_space<vmem>>) attributes {dimension_semantics = [#tpu.dimension_semantics<arbitrary>], iteration_bounds = array<i64: 2>, scalar_prefetch = 0 : i64, scratch_operands = 0 : i64, tpu.core_type = #tpu.core_type<tc>, window_params = [{transform_indices = @transform_0, window_bounds = array<i64: 16, 32>}, {pipeline_mode = #tpu.pipeline_mode<synchronous>, transform_indices = @transform_1, window_bounds = array<i64: 32, 128>}, {pipeline_mode = #tpu.pipeline_mode<synchronous>, transform_indices = @transform_2, window_bounds = array<i64: 1, 128>}, {pipeline_mode = #tpu.pipeline_mode<synchronous>, transform_indices = @transform_3, window_bounds = array<i64: 128, 128>}, {pipeline_mode = #tpu.pipeline_mode<synchronous>, transform_indices = @transform_4, window_bounds = array<i64: 128, 128>}, {pipeline_mode = #tpu.pipeline_mode<synchronous>, transform_indices = @transform_5, window_bounds = array<i64: 1, 128>}, {transform_indices = @transform_6, window_bounds = array<i64: 16, 128>}, {pipeline_mode = #tpu.pipeline_mode<synchronous>, transform_indices = @transform_7, window_bounds = array<i64: 1, 1>}]} {
    %c0 = arith.constant 0 : index
    %c0_0 = arith.constant 0 : index
    %0 = vector.load %arg3[%c0, %c0_0] : memref<1x128xf32, #tpu.memory_space<vmem>>, vector<1x128xf32>
    %c0_1 = arith.constant 0 : index
    %c0_2 = arith.constant 0 : index
    %1 = vector.load %arg1[%c0_1, %c0_2] : memref<16x32xbf16, #tpu.memory_space<vmem>>, vector<16x32xbf16>
    %c0_3 = arith.constant 0 : index
    %c0_4 = arith.constant 0 : index
    %2 = vector.load %arg2[%c0_3, %c0_4] : memref<32x128xbf16, #tpu.memory_space<vmem>>, vector<32x128xbf16>
    %cst = arith.constant dense<0.000000e+00> : vector<16x128xf32>
    %3 = tpu.matmul %1, %2, %cst {dimension_numbers = #tpu.dot_dimension_numbers<[1], [0], [0], [1], [0, 0, 1, 1], [], []>} : vector<16x32xbf16>, vector<32x128xbf16>, vector<16x128xf32> -> vector<16x128xf32>
    %4 = vector.broadcast %0 : vector<1x128xf32> to vector<16x128xf32>
    %5 = arith.addf %4, %3 : vector<16x128xf32>
    %6 = arith.truncf %5 : vector<16x128xf32> to vector<16x128xbf16>
    %c0_5 = arith.constant 0 : index
    %c0_6 = arith.constant 0 : index
    %7 = vector.load %arg4[%c0_5, %c0_6] : memref<128x128xbf16, #tpu.memory_space<vmem>>, vector<128x128xbf16>
    %cst_7 = arith.constant dense<0.000000e+00> : vector<16x128xf32>
    %8 = tpu.matmul %6, %7, %cst_7 {dimension_numbers = #tpu.dot_dimension_numbers<[1], [0], [0], [1], [0, 0, 1, 1], [], []>} : vector<16x128xbf16>, vector<128x128xbf16>, vector<16x128xf32> -> vector<16x128xf32>
    %c0_8 = arith.constant 0 : index
    %c0_9 = arith.constant 0 : index
    %9 = vector.load %arg6[%c0_8, %c0_9] : memref<1x128xf32, #tpu.memory_space<vmem>>, vector<1x128xf32>
    %cst_10 = arith.constant 2.000000e+00 : f32
    %10 = vector.broadcast %cst_10 : f32 to vector<16x128xf32>
    %11 = arith.mulf %10, %8 : vector<16x128xf32>
    %12 = vector.broadcast %9 : vector<1x128xf32> to vector<16x128xf32>
    %13 = arith.subf %12, %11 : vector<16x128xf32>
    %cst_11 = arith.constant dense<0x7F800000> : vector<16xf32>
    %14 = vector.multi_reduction <minimumf>, %13, %cst_11 [1] : vector<16x128xf32> to vector<16xf32>
    %15 = vector.shape_cast %14 : vector<16xf32> to vector<16x1xf32>
    %16 = tpu.iota {dimensions = array<i32: 1>} : vector<16x128xi32>
    %17 = vector.broadcast %15 : vector<16x1xf32> to vector<16x128xf32>
    %18 = arith.cmpf ole, %13, %17 : vector<16x128xf32>
    %c128_i32 = arith.constant 128 : i32
    %19 = vector.broadcast %c128_i32 : i32 to vector<16x128xi32>
    %20 = arith.select %18, %16, %19 : vector<16x128xi1>, vector<16x128xi32>
    %cst_12 = arith.constant dense<2147483647> : vector<16xi32>
    %21 = vector.multi_reduction <minsi>, %20, %cst_12 [1] : vector<16x128xi32> to vector<16xi32>
    %22 = vector.shape_cast %21 : vector<16xi32> to vector<16x1xi32>
    %23 = vector.broadcast %22 : vector<16x1xi32> to vector<16x128xi32>
    %24 = arith.cmpi eq, %16, %23 : vector<16x128xi32>
    %25 = arith.extui %24 : vector<16x128xi1> to vector<16x128xi32>
    %26 = arith.sitofp %25 : vector<16x128xi32> to vector<16x128xf32>
    %27 = arith.truncf %26 : vector<16x128xf32> to vector<16x128xbf16>
    %c0_13 = arith.constant 0 : index
    %c0_14 = arith.constant 0 : index
    %28 = vector.load %arg5[%c0_13, %c0_14] : memref<128x128xbf16, #tpu.memory_space<vmem>>, vector<128x128xbf16>
    %cst_15 = arith.constant dense<0.000000e+00> : vector<16x128xf32>
    %29 = tpu.matmul %27, %28, %cst_15 {dimension_numbers = #tpu.dot_dimension_numbers<[1], [0], [0], [1], [0, 0, 1, 1], [], []>} : vector<16x128xbf16>, vector<128x128xbf16>, vector<16x128xf32> -> vector<16x128xf32>
    %30 = arith.truncf %29 : vector<16x128xf32> to vector<16x128xbf16>
    %c0_16 = arith.constant 0 : index
    %c0_17 = arith.constant 0 : index
    %31 = vector.load %arg7[%c0_16, %c0_17] : memref<16x128xbf16, #tpu.memory_space<vmem>>, vector<16x128xbf16>
    tpu.vector_store %arg7[%c0_16, %c0_17], %30 {strides = array<i32>} : memref<16x128xbf16, #tpu.memory_space<vmem>>, vector<16x128xbf16>,
    %c16_i32 = arith.constant 16 : i32
    %32 = arith.muli %arg0, %c16_i32 : i32
    %33 = tpu.iota {dimensions = array<i32: 0>} : vector<16x1xi32>
    %34 = vector.broadcast %32 : i32 to vector<16x1xi32>
    %35 = arith.addi %34, %33 : vector<16x1xi32>
    %c32_i32 = arith.constant 32 : i32
    %36 = vector.broadcast %c32_i32 : i32 to vector<16x1xi32>
    %37 = arith.cmpi slt, %35, %36 : vector<16x1xi32>
    %38 = arith.subf %29, %5 : vector<16x128xf32>
    %39 = arith.mulf %38, %38 : vector<16x128xf32>
    %cst_18 = arith.constant 0.000000e+00 : f32
    %40 = vector.shape_cast %37 : vector<16x1xi1> to vector<16x1xi1>
    %41 = vector.broadcast %40 : vector<16x1xi1> to vector<16x128xi1>
    %42 = vector.broadcast %cst_18 : f32 to vector<16x128xf32>
    %43 = arith.select %41, %39, %42 : vector<16x128xi1>, vector<16x128xf32>
    %c0_i32 = arith.constant 0 : i32
    %44 = arith.cmpi eq, %arg0, %c0_i32 : i32
    %45 = arith.extui %44 : i1 to i32
    %c0_i32_19 = arith.constant 0 : i32
    %46 = arith.cmpi ne, %45, %c0_i32_19 : i32
    scf.if %46 {
      %cst_25 = arith.constant 0.000000e+00 : f32
      %55 = vector.broadcast %cst_25 : f32 to vector<1x1xf32>
      %c0_26 = arith.constant 0 : index
      %c0_27 = arith.constant 0 : index
      %56 = vector.load %arg8[%c0_26, %c0_27] : memref<1x1xf32, #tpu.memory_space<vmem>>, vector<1x1xf32>
      tpu.vector_store %arg8[%c0_26, %c0_27], %55 {strides = array<i32>} : memref<1x1xf32, #tpu.memory_space<vmem>>, vector<1x1xf32>,
    } else {
    }
    %c0_20 = arith.constant 0 : index
    %c0_21 = arith.constant 0 : index
    %47 = vector.load %arg8[%c0_20, %c0_21] : memref<1x1xf32, #tpu.memory_space<vmem>>, vector<1x1xf32>
    %48 = vector.shape_cast %43 : vector<16x128xf32> to vector<1x16x128xf32>
    %cst_22 = arith.constant dense<0.000000e+00> : vector<1xf32>
    %49 = vector.multi_reduction <add>, %48, %cst_22 [1, 2] : vector<1x16x128xf32> to vector<1xf32>
    %50 = vector.shape_cast %49 : vector<1xf32> to vector<1x1x1xf32>
    %51 = vector.extract %50[0, 0, 0] : f32 from vector<1x1x1xf32>
    %52 = vector.broadcast %51 : f32 to vector<1x1xf32>
    %53 = arith.addf %47, %52 : vector<1x1xf32>
    %c0_23 = arith.constant 0 : index
    %c0_24 = arith.constant 0 : index
    %54 = vector.load %arg8[%c0_23, %c0_24] : memref<1x1xf32, #tpu.memory_space<vmem>>, vector<1x1xf32>
    tpu.vector_store %arg8[%c0_23, %c0_24], %53 {strides = array<i32>} : memref<1x1xf32, #tpu.memory_space<vmem>>, vector<1x1xf32>,
    return
  }
  func.func @transform_0(%arg0: i32) -> (i32, i32) {
    %c0_i32 = arith.constant 0 : i32
    %c0_i32_0 = arith.constant 0 : i32
    return %arg0, %c0_i32 : i32, i32
  }
  func.func @transform_1(%arg0: i32) -> (i32, i32) {
    %c0_i32 = arith.constant 0 : i32
    %c0_i32_0 = arith.constant 0 : i32
    %c0_i32_1 = arith.constant 0 : i32
    return %c0_i32, %c0_i32_0 : i32, i32
  }
  func.func @transform_2(%arg0: i32) -> (i32, i32) {
    %c0_i32 = arith.constant 0 : i32
    %c0_i32_0 = arith.constant 0 : i32
    %c0_i32_1 = arith.constant 0 : i32
    return %c0_i32, %c0_i32_0 : i32, i32
  }
  func.func @transform_3(%arg0: i32) -> (i32, i32) {
    %c0_i32 = arith.constant 0 : i32
    %c0_i32_0 = arith.constant 0 : i32
    %c0_i32_1 = arith.constant 0 : i32
    return %c0_i32, %c0_i32_0 : i32, i32
  }
  func.func @transform_4(%arg0: i32) -> (i32, i32) {
    %c0_i32 = arith.constant 0 : i32
    %c0_i32_0 = arith.constant 0 : i32
    %c0_i32_1 = arith.constant 0 : i32
    return %c0_i32, %c0_i32_0 : i32, i32
  }
  func.func @transform_5(%arg0: i32) -> (i32, i32) {
    %c0_i32 = arith.constant 0 : i32
    %c0_i32_0 = arith.constant 0 : i32
    %c0_i32_1 = arith.constant 0 : i32
    return %c0_i32, %c0_i32_0 : i32, i32
  }
  func.func @transform_6(%arg0: i32) -> (i32, i32) {
    %c0_i32 = arith.constant 0 : i32
    %c0_i32_0 = arith.constant 0 : i32
    return %arg0, %c0_i32 : i32, i32
  }
  func.func @transform_7(%arg0: i32) -> (i32, i32) {
    %c0_i32 = arith.constant 0 : i32
    %c0_i32_0 = arith.constant 0 : i32
    %c0_i32_1 = arith.constant 0 : i32
    return %c0_i32, %c0_i32_0 : i32, i32
  }
}

module attributes {stable_mosaic.version = 11 : i64} {
  func.func @_mm_kernel(%arg0: i32, %arg1: memref<16x64xbf16, #tpu.memory_space<vmem>>, %arg2: memref<64x128xbf16, #tpu.memory_space<vmem>>, %arg3: memref<1x128xf32, #tpu.memory_space<vmem>>, %arg4: memref<16x128xbf16, #tpu.memory_space<vmem>>) attributes {dimension_semantics = [#tpu.dimension_semantics<parallel>], iteration_bounds = array<i64: 2>, scalar_prefetch = 0 : i64, scratch_operands = 0 : i64, tpu.core_type = #tpu.core_type<tc>, window_params = [{transform_indices = @transform_0, window_bounds = array<i64: 16, 64>}, {pipeline_mode = #tpu.pipeline_mode<synchronous>, transform_indices = @transform_1, window_bounds = array<i64: 64, 128>}, {pipeline_mode = #tpu.pipeline_mode<synchronous>, transform_indices = @transform_2, window_bounds = array<i64: 1, 128>}, {transform_indices = @transform_3, window_bounds = array<i64: 16, 128>}]} {
    %c0 = arith.constant 0 : index
    %c0_0 = arith.constant 0 : index
    %0 = vector.load %arg1[%c0, %c0_0] : memref<16x64xbf16, #tpu.memory_space<vmem>>, vector<16x64xbf16>
    %c0_1 = arith.constant 0 : index
    %c0_2 = arith.constant 0 : index
    %1 = vector.load %arg2[%c0_1, %c0_2] : memref<64x128xbf16, #tpu.memory_space<vmem>>, vector<64x128xbf16>
    %cst = arith.constant dense<0.000000e+00> : vector<16x128xf32>
    %2 = tpu.matmul %0, %1, %cst {dimension_numbers = #tpu.dot_dimension_numbers<[1], [0], [0], [1], [0, 0, 1, 1], [], []>} : vector<16x64xbf16>, vector<64x128xbf16>, vector<16x128xf32> -> vector<16x128xf32>
    %c0_3 = arith.constant 0 : index
    %c0_4 = arith.constant 0 : index
    %3 = vector.load %arg3[%c0_3, %c0_4] : memref<1x128xf32, #tpu.memory_space<vmem>>, vector<1x128xf32>
    %4 = vector.broadcast %3 : vector<1x128xf32> to vector<16x128xf32>
    %5 = arith.addf %2, %4 : vector<16x128xf32>
    %6 = arith.truncf %5 : vector<16x128xf32> to vector<16x128xbf16>
    %c0_5 = arith.constant 0 : index
    %c0_6 = arith.constant 0 : index
    %7 = vector.load %arg4[%c0_5, %c0_6] : memref<16x128xbf16, #tpu.memory_space<vmem>>, vector<16x128xbf16>
    tpu.vector_store %arg4[%c0_5, %c0_6], %6 {strides = array<i32>} : memref<16x128xbf16, #tpu.memory_space<vmem>>, vector<16x128xbf16>,
    return
  }
  func.func @transform_0(%arg0: i32) -> (i32, i32) {
    %c0_i32 = arith.constant 0 : i32
    %c0_i32_0 = arith.constant 0 : i32
    return %arg0, %c0_i32 : i32, i32
  }
  func.func @transform_1(%arg0: i32) -> (i32, i32) {
    %c0_i32 = arith.constant 0 : i32
    %c0_i32_0 = arith.constant 0 : i32
    %c0_i32_1 = arith.constant 0 : i32
    return %c0_i32, %c0_i32_0 : i32, i32
  }
  func.func @transform_2(%arg0: i32) -> (i32, i32) {
    %c0_i32 = arith.constant 0 : i32
    %c0_i32_0 = arith.constant 0 : i32
    %c0_i32_1 = arith.constant 0 : i32
    return %c0_i32, %c0_i32_0 : i32, i32
  }
  func.func @transform_3(%arg0: i32) -> (i32, i32) {
    %c0_i32 = arith.constant 0 : i32
    %c0_i32_0 = arith.constant 0 : i32
    return %arg0, %c0_i32 : i32, i32
  }
}

module attributes {stable_mosaic.version = 11 : i64} {
  func.func @_mm_kernel(%arg0: i32, %arg1: memref<16x144xbf16, #tpu.memory_space<vmem>>, %arg2: memref<144x128xbf16, #tpu.memory_space<vmem>>, %arg3: memref<1x128xf32, #tpu.memory_space<vmem>>, %arg4: memref<16x128xbf16, #tpu.memory_space<vmem>>) attributes {dimension_semantics = [#tpu.dimension_semantics<parallel>], iteration_bounds = array<i64: 2>, scalar_prefetch = 0 : i64, scratch_operands = 0 : i64, tpu.core_type = #tpu.core_type<tc>, window_params = [{transform_indices = @transform_0, window_bounds = array<i64: 16, 144>}, {pipeline_mode = #tpu.pipeline_mode<synchronous>, transform_indices = @transform_1, window_bounds = array<i64: 144, 128>}, {pipeline_mode = #tpu.pipeline_mode<synchronous>, transform_indices = @transform_2, window_bounds = array<i64: 1, 128>}, {transform_indices = @transform_3, window_bounds = array<i64: 16, 128>}]} {
    %c0 = arith.constant 0 : index
    %c0_0 = arith.constant 0 : index
    %0 = vector.load %arg1[%c0, %c0_0] : memref<16x144xbf16, #tpu.memory_space<vmem>>, vector<16x144xbf16>
    %c0_1 = arith.constant 0 : index
    %c0_2 = arith.constant 0 : index
    %1 = vector.load %arg2[%c0_1, %c0_2] : memref<144x128xbf16, #tpu.memory_space<vmem>>, vector<144x128xbf16>
    %cst = arith.constant dense<0.000000e+00> : vector<16x128xf32>
    %2 = tpu.matmul %0, %1, %cst {dimension_numbers = #tpu.dot_dimension_numbers<[1], [0], [0], [1], [0, 0, 1, 1], [], []>} : vector<16x144xbf16>, vector<144x128xbf16>, vector<16x128xf32> -> vector<16x128xf32>
    %c0_3 = arith.constant 0 : index
    %c0_4 = arith.constant 0 : index
    %3 = vector.load %arg3[%c0_3, %c0_4] : memref<1x128xf32, #tpu.memory_space<vmem>>, vector<1x128xf32>
    %4 = vector.broadcast %3 : vector<1x128xf32> to vector<16x128xf32>
    %5 = arith.addf %2, %4 : vector<16x128xf32>
    %cst_5 = arith.constant 0.000000e+00 : f32
    %6 = vector.broadcast %cst_5 : f32 to vector<16x128xf32>
    %7 = arith.maximumf %5, %6 : vector<16x128xf32>
    %8 = arith.truncf %7 : vector<16x128xf32> to vector<16x128xbf16>
    %c0_6 = arith.constant 0 : index
    %c0_7 = arith.constant 0 : index
    %9 = vector.load %arg4[%c0_6, %c0_7] : memref<16x128xbf16, #tpu.memory_space<vmem>>, vector<16x128xbf16>
    tpu.vector_store %arg4[%c0_6, %c0_7], %8 {strides = array<i32>} : memref<16x128xbf16, #tpu.memory_space<vmem>>, vector<16x128xbf16>,
    return
  }
  func.func @transform_0(%arg0: i32) -> (i32, i32) {
    %c0_i32 = arith.constant 0 : i32
    %c0_i32_0 = arith.constant 0 : i32
    return %arg0, %c0_i32 : i32, i32
  }
  func.func @transform_1(%arg0: i32) -> (i32, i32) {
    %c0_i32 = arith.constant 0 : i32
    %c0_i32_0 = arith.constant 0 : i32
    %c0_i32_1 = arith.constant 0 : i32
    return %c0_i32, %c0_i32_0 : i32, i32
  }
  func.func @transform_2(%arg0: i32) -> (i32, i32) {
    %c0_i32 = arith.constant 0 : i32
    %c0_i32_0 = arith.constant 0 : i32
    %c0_i32_1 = arith.constant 0 : i32
    return %c0_i32, %c0_i32_0 : i32, i32
  }
  func.func @transform_3(%arg0: i32) -> (i32, i32) {
    %c0_i32 = arith.constant 0 : i32
    %c0_i32_0 = arith.constant 0 : i32
    return %arg0, %c0_i32 : i32, i32
  }
}

module attributes {stable_mosaic.version = 11 : i64} {
  func.func @_mm_kernel(%arg0: i32, %arg1: memref<16x128xbf16, #tpu.memory_space<vmem>>, %arg2: memref<128x128xbf16, #tpu.memory_space<vmem>>, %arg3: memref<1x128xf32, #tpu.memory_space<vmem>>, %arg4: memref<16x128xbf16, #tpu.memory_space<vmem>>) attributes {dimension_semantics = [#tpu.dimension_semantics<parallel>], iteration_bounds = array<i64: 2>, scalar_prefetch = 0 : i64, scratch_operands = 0 : i64, tpu.core_type = #tpu.core_type<tc>, window_params = [{transform_indices = @transform_0, window_bounds = array<i64: 16, 128>}, {pipeline_mode = #tpu.pipeline_mode<synchronous>, transform_indices = @transform_1, window_bounds = array<i64: 128, 128>}, {pipeline_mode = #tpu.pipeline_mode<synchronous>, transform_indices = @transform_2, window_bounds = array<i64: 1, 128>}, {transform_indices = @transform_3, window_bounds = array<i64: 16, 128>}]} {
    %c0 = arith.constant 0 : index
    %c0_0 = arith.constant 0 : index
    %0 = vector.load %arg1[%c0, %c0_0] : memref<16x128xbf16, #tpu.memory_space<vmem>>, vector<16x128xbf16>
    %c0_1 = arith.constant 0 : index
    %c0_2 = arith.constant 0 : index
    %1 = vector.load %arg2[%c0_1, %c0_2] : memref<128x128xbf16, #tpu.memory_space<vmem>>, vector<128x128xbf16>
    %cst = arith.constant dense<0.000000e+00> : vector<16x128xf32>
    %2 = tpu.matmul %0, %1, %cst {dimension_numbers = #tpu.dot_dimension_numbers<[1], [0], [0], [1], [0, 0, 1, 1], [], []>} : vector<16x128xbf16>, vector<128x128xbf16>, vector<16x128xf32> -> vector<16x128xf32>
    %c0_3 = arith.constant 0 : index
    %c0_4 = arith.constant 0 : index
    %3 = vector.load %arg3[%c0_3, %c0_4] : memref<1x128xf32, #tpu.memory_space<vmem>>, vector<1x128xf32>
    %4 = vector.broadcast %3 : vector<1x128xf32> to vector<16x128xf32>
    %5 = arith.addf %2, %4 : vector<16x128xf32>
    %6 = arith.truncf %5 : vector<16x128xf32> to vector<16x128xbf16>
    %c0_5 = arith.constant 0 : index
    %c0_6 = arith.constant 0 : index
    %7 = vector.load %arg4[%c0_5, %c0_6] : memref<16x128xbf16, #tpu.memory_space<vmem>>, vector<16x128xbf16>
    tpu.vector_store %arg4[%c0_5, %c0_6], %6 {strides = array<i32>} : memref<16x128xbf16, #tpu.memory_space<vmem>>, vector<16x128xbf16>,
    return
  }
  func.func @transform_0(%arg0: i32) -> (i32, i32) {
    %c0_i32 = arith.constant 0 : i32
    %c0_i32_0 = arith.constant 0 : i32
    return %arg0, %c0_i32 : i32, i32
  }
  func.func @transform_1(%arg0: i32) -> (i32, i32) {
    %c0_i32 = arith.constant 0 : i32
    %c0_i32_0 = arith.constant 0 : i32
    %c0_i32_1 = arith.constant 0 : i32
    return %c0_i32, %c0_i32_0 : i32, i32
  }
  func.func @transform_2(%arg0: i32) -> (i32, i32) {
    %c0_i32 = arith.constant 0 : i32
    %c0_i32_0 = arith.constant 0 : i32
    %c0_i32_1 = arith.constant 0 : i32
    return %c0_i32, %c0_i32_0 : i32, i32
  }
  func.func @transform_3(%arg0: i32) -> (i32, i32) {
    %c0_i32 = arith.constant 0 : i32
    %c0_i32_0 = arith.constant 0 : i32
    return %arg0, %c0_i32 : i32, i32
  }
}

module attributes {stable_mosaic.version = 11 : i64} {
  func.func @_vq_kernel(%arg0: i32, %arg1: memref<64x16xbf16, #tpu.memory_space<vmem>>, %arg2: memref<64x32xbf16, #tpu.memory_space<vmem>>, %arg3: memref<16x128xbf16, #tpu.memory_space<vmem>>, %arg4: memref<32x128xbf16, #tpu.memory_space<vmem>>, %arg5: memref<1x128xf32, #tpu.memory_space<vmem>>, %arg6: memref<128x128xbf16, #tpu.memory_space<vmem>>, %arg7: memref<128x128xbf16, #tpu.memory_space<vmem>>, %arg8: memref<1x128xf32, #tpu.memory_space<vmem>>, %arg9: memref<64x128xbf16, #tpu.memory_space<vmem>>, %arg10: memref<1x1xf32, #tpu.memory_space<vmem>>) attributes {dimension_semantics = [#tpu.dimension_semantics<arbitrary>], iteration_bounds = array<i64: 2>, scalar_prefetch = 0 : i64, scratch_operands = 0 : i64, tpu.core_type = #tpu.core_type<tc>, window_params = [{transform_indices = @transform_0, window_bounds = array<i64: 64, 16>}, {transform_indices = @transform_1, window_bounds = array<i64: 64, 32>}, {pipeline_mode = #tpu.pipeline_mode<synchronous>, transform_indices = @transform_2, window_bounds = array<i64: 16, 128>}, {pipeline_mode = #tpu.pipeline_mode<synchronous>, transform_indices = @transform_3, window_bounds = array<i64: 32, 128>}, {pipeline_mode = #tpu.pipeline_mode<synchronous>, transform_indices = @transform_4, window_bounds = array<i64: 1, 128>}, {pipeline_mode = #tpu.pipeline_mode<synchronous>, transform_indices = @transform_5, window_bounds = array<i64: 128, 128>}, {pipeline_mode = #tpu.pipeline_mode<synchronous>, transform_indices = @transform_6, window_bounds = array<i64: 128, 128>}, {pipeline_mode = #tpu.pipeline_mode<synchronous>, transform_indices = @transform_7, window_bounds = array<i64: 1, 128>}, {transform_indices = @transform_8, window_bounds = array<i64: 64, 128>}, {pipeline_mode = #tpu.pipeline_mode<synchronous>, transform_indices = @transform_9, window_bounds = array<i64: 1, 1>}]} {
    %c0 = arith.constant 0 : index
    %c0_0 = arith.constant 0 : index
    %0 = vector.load %arg5[%c0, %c0_0] : memref<1x128xf32, #tpu.memory_space<vmem>>, vector<1x128xf32>
    %c0_1 = arith.constant 0 : index
    %c0_2 = arith.constant 0 : index
    %1 = vector.load %arg1[%c0_1, %c0_2] : memref<64x16xbf16, #tpu.memory_space<vmem>>, vector<64x16xbf16>
    %c0_3 = arith.constant 0 : index
    %c0_4 = arith.constant 0 : index
    %2 = vector.load %arg3[%c0_3, %c0_4] : memref<16x128xbf16, #tpu.memory_space<vmem>>, vector<16x128xbf16>
    %cst = arith.constant dense<0.000000e+00> : vector<64x128xf32>
    %3 = tpu.matmul %1, %2, %cst {dimension_numbers = #tpu.dot_dimension_numbers<[1], [0], [0], [1], [0, 0, 1, 1], [], []>} : vector<64x16xbf16>, vector<16x128xbf16>, vector<64x128xf32> -> vector<64x128xf32>
    %4 = vector.broadcast %0 : vector<1x128xf32> to vector<64x128xf32>
    %5 = arith.addf %4, %3 : vector<64x128xf32>
    %c0_5 = arith.constant 0 : index
    %c0_6 = arith.constant 0 : index
    %6 = vector.load %arg2[%c0_5, %c0_6] : memref<64x32xbf16, #tpu.memory_space<vmem>>, vector<64x32xbf16>
    %c0_7 = arith.constant 0 : index
    %c0_8 = arith.constant 0 : index
    %7 = vector.load %arg4[%c0_7, %c0_8] : memref<32x128xbf16, #tpu.memory_space<vmem>>, vector<32x128xbf16>
    %cst_9 = arith.constant dense<0.000000e+00> : vector<64x128xf32>
    %8 = tpu.matmul %6, %7, %cst_9 {dimension_numbers = #tpu.dot_dimension_numbers<[1], [0], [0], [1], [0, 0, 1, 1], [], []>} : vector<64x32xbf16>, vector<32x128xbf16>, vector<64x128xf32> -> vector<64x128xf32>
    %9 = arith.addf %5, %8 : vector<64x128xf32>
    %10 = arith.truncf %9 : vector<64x128xf32> to vector<64x128xbf16>
    %c0_10 = arith.constant 0 : index
    %c0_11 = arith.constant 0 : index
    %11 = vector.load %arg6[%c0_10, %c0_11] : memref<128x128xbf16, #tpu.memory_space<vmem>>, vector<128x128xbf16>
    %cst_12 = arith.constant dense<0.000000e+00> : vector<64x128xf32>
    %12 = tpu.matmul %10, %11, %cst_12 {dimension_numbers = #tpu.dot_dimension_numbers<[1], [0], [0], [1], [0, 0, 1, 1], [], []>} : vector<64x128xbf16>, vector<128x128xbf16>, vector<64x128xf32> -> vector<64x128xf32>
    %c0_13 = arith.constant 0 : index
    %c0_14 = arith.constant 0 : index
    %13 = vector.load %arg8[%c0_13, %c0_14] : memref<1x128xf32, #tpu.memory_space<vmem>>, vector<1x128xf32>
    %cst_15 = arith.constant 2.000000e+00 : f32
    %14 = vector.broadcast %cst_15 : f32 to vector<64x128xf32>
    %15 = arith.mulf %14, %12 : vector<64x128xf32>
    %16 = vector.broadcast %13 : vector<1x128xf32> to vector<64x128xf32>
    %17 = arith.subf %16, %15 : vector<64x128xf32>
    %cst_16 = arith.constant dense<0x7F800000> : vector<64xf32>
    %18 = vector.multi_reduction <minimumf>, %17, %cst_16 [1] : vector<64x128xf32> to vector<64xf32>
    %19 = vector.shape_cast %18 : vector<64xf32> to vector<64x1xf32>
    %20 = tpu.iota {dimensions = array<i32: 1>} : vector<64x128xi32>
    %21 = vector.broadcast %19 : vector<64x1xf32> to vector<64x128xf32>
    %22 = arith.cmpf ole, %17, %21 : vector<64x128xf32>
    %c128_i32 = arith.constant 128 : i32
    %23 = vector.broadcast %c128_i32 : i32 to vector<64x128xi32>
    %24 = arith.select %22, %20, %23 : vector<64x128xi1>, vector<64x128xi32>
    %cst_17 = arith.constant dense<2147483647> : vector<64xi32>
    %25 = vector.multi_reduction <minsi>, %24, %cst_17 [1] : vector<64x128xi32> to vector<64xi32>
    %26 = vector.shape_cast %25 : vector<64xi32> to vector<64x1xi32>
    %27 = vector.broadcast %26 : vector<64x1xi32> to vector<64x128xi32>
    %28 = arith.cmpi eq, %20, %27 : vector<64x128xi32>
    %29 = arith.extui %28 : vector<64x128xi1> to vector<64x128xi32>
    %30 = arith.sitofp %29 : vector<64x128xi32> to vector<64x128xf32>
    %31 = arith.truncf %30 : vector<64x128xf32> to vector<64x128xbf16>
    %c0_18 = arith.constant 0 : index
    %c0_19 = arith.constant 0 : index
    %32 = vector.load %arg7[%c0_18, %c0_19] : memref<128x128xbf16, #tpu.memory_space<vmem>>, vector<128x128xbf16>
    %cst_20 = arith.constant dense<0.000000e+00> : vector<64x128xf32>
    %33 = tpu.matmul %31, %32, %cst_20 {dimension_numbers = #tpu.dot_dimension_numbers<[1], [0], [0], [1], [0, 0, 1, 1], [], []>} : vector<64x128xbf16>, vector<128x128xbf16>, vector<64x128xf32> -> vector<64x128xf32>
    %34 = arith.truncf %33 : vector<64x128xf32> to vector<64x128xbf16>
    %c0_21 = arith.constant 0 : index
    %c0_22 = arith.constant 0 : index
    %35 = vector.load %arg9[%c0_21, %c0_22] : memref<64x128xbf16, #tpu.memory_space<vmem>>, vector<64x128xbf16>
    tpu.vector_store %arg9[%c0_21, %c0_22], %34 {strides = array<i32>} : memref<64x128xbf16, #tpu.memory_space<vmem>>, vector<64x128xbf16>,
    %c64_i32 = arith.constant 64 : i32
    %36 = arith.muli %arg0, %c64_i32 : i32
    %37 = tpu.iota {dimensions = array<i32: 0>} : vector<64x1xi32>
    %38 = vector.broadcast %36 : i32 to vector<64x1xi32>
    %39 = arith.addi %38, %37 : vector<64x1xi32>
    %c128_i32_23 = arith.constant 128 : i32
    %40 = vector.broadcast %c128_i32_23 : i32 to vector<64x1xi32>
    %41 = arith.cmpi slt, %39, %40 : vector<64x1xi32>
    %42 = arith.subf %33, %9 : vector<64x128xf32>
    %43 = arith.mulf %42, %42 : vector<64x128xf32>
    %cst_24 = arith.constant 0.000000e+00 : f32
    %44 = vector.shape_cast %41 : vector<64x1xi1> to vector<64x1xi1>
    %45 = vector.broadcast %44 : vector<64x1xi1> to vector<64x128xi1>
    %46 = vector.broadcast %cst_24 : f32 to vector<64x128xf32>
    %47 = arith.select %45, %43, %46 : vector<64x128xi1>, vector<64x128xf32>
    %c0_i32 = arith.constant 0 : i32
    %48 = arith.cmpi eq, %arg0, %c0_i32 : i32
    %49 = arith.extui %48 : i1 to i32
    %c0_i32_25 = arith.constant 0 : i32
    %50 = arith.cmpi ne, %49, %c0_i32_25 : i32
    scf.if %50 {
      %cst_31 = arith.constant 0.000000e+00 : f32
      %59 = vector.broadcast %cst_31 : f32 to vector<1x1xf32>
      %c0_32 = arith.constant 0 : index
      %c0_33 = arith.constant 0 : index
      %60 = vector.load %arg10[%c0_32, %c0_33] : memref<1x1xf32, #tpu.memory_space<vmem>>, vector<1x1xf32>
      tpu.vector_store %arg10[%c0_32, %c0_33], %59 {strides = array<i32>} : memref<1x1xf32, #tpu.memory_space<vmem>>, vector<1x1xf32>,
    } else {
    }
    %c0_26 = arith.constant 0 : index
    %c0_27 = arith.constant 0 : index
    %51 = vector.load %arg10[%c0_26, %c0_27] : memref<1x1xf32, #tpu.memory_space<vmem>>, vector<1x1xf32>
    %52 = vector.shape_cast %47 : vector<64x128xf32> to vector<1x64x128xf32>
    %cst_28 = arith.constant dense<0.000000e+00> : vector<1xf32>
    %53 = vector.multi_reduction <add>, %52, %cst_28 [1, 2] : vector<1x64x128xf32> to vector<1xf32>
    %54 = vector.shape_cast %53 : vector<1xf32> to vector<1x1x1xf32>
    %55 = vector.extract %54[0, 0, 0] : f32 from vector<1x1x1xf32>
    %56 = vector.broadcast %55 : f32 to vector<1x1xf32>
    %57 = arith.addf %51, %56 : vector<1x1xf32>
    %c0_29 = arith.constant 0 : index
    %c0_30 = arith.constant 0 : index
    %58 = vector.load %arg10[%c0_29, %c0_30] : memref<1x1xf32, #tpu.memory_space<vmem>>, vector<1x1xf32>
    tpu.vector_store %arg10[%c0_29, %c0_30], %57 {strides = array<i32>} : memref<1x1xf32, #tpu.memory_space<vmem>>, vector<1x1xf32>,
    return
  }
  func.func @transform_0(%arg0: i32) -> (i32, i32) {
    %c0_i32 = arith.constant 0 : i32
    %c0_i32_0 = arith.constant 0 : i32
    return %arg0, %c0_i32 : i32, i32
  }
  func.func @transform_1(%arg0: i32) -> (i32, i32) {
    %c0_i32 = arith.constant 0 : i32
    %c0_i32_0 = arith.constant 0 : i32
    return %arg0, %c0_i32 : i32, i32
  }
  func.func @transform_2(%arg0: i32) -> (i32, i32) {
    %c0_i32 = arith.constant 0 : i32
    %c0_i32_0 = arith.constant 0 : i32
    %c0_i32_1 = arith.constant 0 : i32
    return %c0_i32, %c0_i32_0 : i32, i32
  }
  func.func @transform_3(%arg0: i32) -> (i32, i32) {
    %c0_i32 = arith.constant 0 : i32
    %c0_i32_0 = arith.constant 0 : i32
    %c0_i32_1 = arith.constant 0 : i32
    return %c0_i32, %c0_i32_0 : i32, i32
  }
  func.func @transform_4(%arg0: i32) -> (i32, i32) {
    %c0_i32 = arith.constant 0 : i32
    %c0_i32_0 = arith.constant 0 : i32
    %c0_i32_1 = arith.constant 0 : i32
    return %c0_i32, %c0_i32_0 : i32, i32
  }
  func.func @transform_5(%arg0: i32) -> (i32, i32) {
    %c0_i32 = arith.constant 0 : i32
    %c0_i32_0 = arith.constant 0 : i32
    %c0_i32_1 = arith.constant 0 : i32
    return %c0_i32, %c0_i32_0 : i32, i32
  }
  func.func @transform_6(%arg0: i32) -> (i32, i32) {
    %c0_i32 = arith.constant 0 : i32
    %c0_i32_0 = arith.constant 0 : i32
    %c0_i32_1 = arith.constant 0 : i32
    return %c0_i32, %c0_i32_0 : i32, i32
  }
  func.func @transform_7(%arg0: i32) -> (i32, i32) {
    %c0_i32 = arith.constant 0 : i32
    %c0_i32_0 = arith.constant 0 : i32
    %c0_i32_1 = arith.constant 0 : i32
    return %c0_i32, %c0_i32_0 : i32, i32
  }
  func.func @transform_8(%arg0: i32) -> (i32, i32) {
    %c0_i32 = arith.constant 0 : i32
    %c0_i32_0 = arith.constant 0 : i32
    return %arg0, %c0_i32 : i32, i32
  }
  func.func @transform_9(%arg0: i32) -> (i32, i32) {
    %c0_i32 = arith.constant 0 : i32
    %c0_i32_0 = arith.constant 0 : i32
    %c0_i32_1 = arith.constant 0 : i32
    return %c0_i32, %c0_i32_0 : i32, i32
  }
}

module attributes {stable_mosaic.version = 11 : i64} {
  func.func @_mm_kernel(%arg0: i32, %arg1: memref<64x288xbf16, #tpu.memory_space<vmem>>, %arg2: memref<288x128xbf16, #tpu.memory_space<vmem>>, %arg3: memref<1x128xf32, #tpu.memory_space<vmem>>, %arg4: memref<64x128xbf16, #tpu.memory_space<vmem>>) attributes {dimension_semantics = [#tpu.dimension_semantics<parallel>], iteration_bounds = array<i64: 2>, scalar_prefetch = 0 : i64, scratch_operands = 0 : i64, tpu.core_type = #tpu.core_type<tc>, window_params = [{transform_indices = @transform_0, window_bounds = array<i64: 64, 288>}, {pipeline_mode = #tpu.pipeline_mode<synchronous>, transform_indices = @transform_1, window_bounds = array<i64: 288, 128>}, {pipeline_mode = #tpu.pipeline_mode<synchronous>, transform_indices = @transform_2, window_bounds = array<i64: 1, 128>}, {transform_indices = @transform_3, window_bounds = array<i64: 64, 128>}]} {
    %c0 = arith.constant 0 : index
    %c0_0 = arith.constant 0 : index
    %0 = vector.load %arg1[%c0, %c0_0] : memref<64x288xbf16, #tpu.memory_space<vmem>>, vector<64x288xbf16>
    %c0_1 = arith.constant 0 : index
    %c0_2 = arith.constant 0 : index
    %1 = vector.load %arg2[%c0_1, %c0_2] : memref<288x128xbf16, #tpu.memory_space<vmem>>, vector<288x128xbf16>
    %cst = arith.constant dense<0.000000e+00> : vector<64x128xf32>
    %2 = tpu.matmul %0, %1, %cst {dimension_numbers = #tpu.dot_dimension_numbers<[1], [0], [0], [1], [0, 0, 1, 1], [], []>} : vector<64x288xbf16>, vector<288x128xbf16>, vector<64x128xf32> -> vector<64x128xf32>
    %c0_3 = arith.constant 0 : index
    %c0_4 = arith.constant 0 : index
    %3 = vector.load %arg3[%c0_3, %c0_4] : memref<1x128xf32, #tpu.memory_space<vmem>>, vector<1x128xf32>
    %4 = vector.broadcast %3 : vector<1x128xf32> to vector<64x128xf32>
    %5 = arith.addf %2, %4 : vector<64x128xf32>
    %cst_5 = arith.constant 0.000000e+00 : f32
    %6 = vector.broadcast %cst_5 : f32 to vector<64x128xf32>
    %7 = arith.maximumf %5, %6 : vector<64x128xf32>
    %8 = arith.truncf %7 : vector<64x128xf32> to vector<64x128xbf16>
    %c0_6 = arith.constant 0 : index
    %c0_7 = arith.constant 0 : index
    %9 = vector.load %arg4[%c0_6, %c0_7] : memref<64x128xbf16, #tpu.memory_space<vmem>>, vector<64x128xbf16>
    tpu.vector_store %arg4[%c0_6, %c0_7], %8 {strides = array<i32>} : memref<64x128xbf16, #tpu.memory_space<vmem>>, vector<64x128xbf16>,
    return
  }
  func.func @transform_0(%arg0: i32) -> (i32, i32) {
    %c0_i32 = arith.constant 0 : i32
    %c0_i32_0 = arith.constant 0 : i32
    return %arg0, %c0_i32 : i32, i32
  }
  func.func @transform_1(%arg0: i32) -> (i32, i32) {
    %c0_i32 = arith.constant 0 : i32
    %c0_i32_0 = arith.constant 0 : i32
    %c0_i32_1 = arith.constant 0 : i32
    return %c0_i32, %c0_i32_0 : i32, i32
  }
  func.func @transform_2(%arg0: i32) -> (i32, i32) {
    %c0_i32 = arith.constant 0 : i32
    %c0_i32_0 = arith.constant 0 : i32
    %c0_i32_1 = arith.constant 0 : i32
    return %c0_i32, %c0_i32_0 : i32, i32
  }
  func.func @transform_3(%arg0: i32) -> (i32, i32) {
    %c0_i32 = arith.constant 0 : i32
    %c0_i32_0 = arith.constant 0 : i32
    return %arg0, %c0_i32 : i32, i32
  }
}

module attributes {stable_mosaic.version = 11 : i64} {
  func.func @_mm_kernel(%arg0: i32, %arg1: memref<64x128xbf16, #tpu.memory_space<vmem>>, %arg2: memref<128x128xbf16, #tpu.memory_space<vmem>>, %arg3: memref<1x128xf32, #tpu.memory_space<vmem>>, %arg4: memref<64x128xbf16, #tpu.memory_space<vmem>>) attributes {dimension_semantics = [#tpu.dimension_semantics<parallel>], iteration_bounds = array<i64: 2>, scalar_prefetch = 0 : i64, scratch_operands = 0 : i64, tpu.core_type = #tpu.core_type<tc>, window_params = [{transform_indices = @transform_0, window_bounds = array<i64: 64, 128>}, {pipeline_mode = #tpu.pipeline_mode<synchronous>, transform_indices = @transform_1, window_bounds = array<i64: 128, 128>}, {pipeline_mode = #tpu.pipeline_mode<synchronous>, transform_indices = @transform_2, window_bounds = array<i64: 1, 128>}, {transform_indices = @transform_3, window_bounds = array<i64: 64, 128>}]} {
    %c0 = arith.constant 0 : index
    %c0_0 = arith.constant 0 : index
    %0 = vector.load %arg1[%c0, %c0_0] : memref<64x128xbf16, #tpu.memory_space<vmem>>, vector<64x128xbf16>
    %c0_1 = arith.constant 0 : index
    %c0_2 = arith.constant 0 : index
    %1 = vector.load %arg2[%c0_1, %c0_2] : memref<128x128xbf16, #tpu.memory_space<vmem>>, vector<128x128xbf16>
    %cst = arith.constant dense<0.000000e+00> : vector<64x128xf32>
    %2 = tpu.matmul %0, %1, %cst {dimension_numbers = #tpu.dot_dimension_numbers<[1], [0], [0], [1], [0, 0, 1, 1], [], []>} : vector<64x128xbf16>, vector<128x128xbf16>, vector<64x128xf32> -> vector<64x128xf32>
    %c0_3 = arith.constant 0 : index
    %c0_4 = arith.constant 0 : index
    %3 = vector.load %arg3[%c0_3, %c0_4] : memref<1x128xf32, #tpu.memory_space<vmem>>, vector<1x128xf32>
    %4 = vector.broadcast %3 : vector<1x128xf32> to vector<64x128xf32>
    %5 = arith.addf %2, %4 : vector<64x128xf32>
    %cst_5 = arith.constant 0.000000e+00 : f32
    %6 = vector.broadcast %cst_5 : f32 to vector<64x128xf32>
    %7 = arith.maximumf %5, %6 : vector<64x128xf32>
    %8 = arith.truncf %7 : vector<64x128xf32> to vector<64x128xbf16>
    %c0_6 = arith.constant 0 : index
    %c0_7 = arith.constant 0 : index
    %9 = vector.load %arg4[%c0_6, %c0_7] : memref<64x128xbf16, #tpu.memory_space<vmem>>, vector<64x128xbf16>
    tpu.vector_store %arg4[%c0_6, %c0_7], %8 {strides = array<i32>} : memref<64x128xbf16, #tpu.memory_space<vmem>>, vector<64x128xbf16>,
    return
  }
  func.func @transform_0(%arg0: i32) -> (i32, i32) {
    %c0_i32 = arith.constant 0 : i32
    %c0_i32_0 = arith.constant 0 : i32
    return %arg0, %c0_i32 : i32, i32
  }
  func.func @transform_1(%arg0: i32) -> (i32, i32) {
    %c0_i32 = arith.constant 0 : i32
    %c0_i32_0 = arith.constant 0 : i32
    %c0_i32_1 = arith.constant 0 : i32
    return %c0_i32, %c0_i32_0 : i32, i32
  }
  func.func @transform_2(%arg0: i32) -> (i32, i32) {
    %c0_i32 = arith.constant 0 : i32
    %c0_i32_0 = arith.constant 0 : i32
    %c0_i32_1 = arith.constant 0 : i32
    return %c0_i32, %c0_i32_0 : i32, i32
  }
  func.func @transform_3(%arg0: i32) -> (i32, i32) {
    %c0_i32 = arith.constant 0 : i32
    %c0_i32_0 = arith.constant 0 : i32
    return %arg0, %c0_i32 : i32, i32
  }
}

module attributes {stable_mosaic.version = 11 : i64} {
  func.func @_mm_kernel(%arg0: i32, %arg1: memref<128x64xbf16, #tpu.memory_space<vmem>>, %arg2: memref<64x128xbf16, #tpu.memory_space<vmem>>, %arg3: memref<1x128xf32, #tpu.memory_space<vmem>>, %arg4: memref<128x128xf32, #tpu.memory_space<vmem>>) attributes {dimension_semantics = [#tpu.dimension_semantics<parallel>], iteration_bounds = array<i64: 4>, scalar_prefetch = 0 : i64, scratch_operands = 0 : i64, tpu.core_type = #tpu.core_type<tc>, window_params = [{transform_indices = @transform_0, window_bounds = array<i64: 128, 64>}, {pipeline_mode = #tpu.pipeline_mode<synchronous>, transform_indices = @transform_1, window_bounds = array<i64: 64, 128>}, {pipeline_mode = #tpu.pipeline_mode<synchronous>, transform_indices = @transform_2, window_bounds = array<i64: 1, 128>}, {transform_indices = @transform_3, window_bounds = array<i64: 128, 128>}]} {
    %c0 = arith.constant 0 : index
    %c0_0 = arith.constant 0 : index
    %0 = vector.load %arg1[%c0, %c0_0] : memref<128x64xbf16, #tpu.memory_space<vmem>>, vector<128x64xbf16>
    %c0_1 = arith.constant 0 : index
    %c0_2 = arith.constant 0 : index
    %1 = vector.load %arg2[%c0_1, %c0_2] : memref<64x128xbf16, #tpu.memory_space<vmem>>, vector<64x128xbf16>
    %cst = arith.constant dense<0.000000e+00> : vector<128x128xf32>
    %2 = tpu.matmul %0, %1, %cst {dimension_numbers = #tpu.dot_dimension_numbers<[1], [0], [0], [1], [0, 0, 1, 1], [], []>} : vector<128x64xbf16>, vector<64x128xbf16>, vector<128x128xf32> -> vector<128x128xf32>
    %c0_3 = arith.constant 0 : index
    %c0_4 = arith.constant 0 : index
    %3 = vector.load %arg3[%c0_3, %c0_4] : memref<1x128xf32, #tpu.memory_space<vmem>>, vector<1x128xf32>
    %4 = vector.broadcast %3 : vector<1x128xf32> to vector<128x128xf32>
    %5 = arith.addf %2, %4 : vector<128x128xf32>
    %6 = arith.negf %5 : vector<128x128xf32>
    %7 = math.exp %6 : vector<128x128xf32>
    %cst_5 = arith.constant 1.000000e+00 : f32
    %8 = vector.broadcast %cst_5 : f32 to vector<128x128xf32>
    %9 = arith.addf %8, %7 : vector<128x128xf32>
    %10 = arith.divf %8, %9 : vector<128x128xf32>
    %c0_6 = arith.constant 0 : index
    %c0_7 = arith.constant 0 : index
    %11 = vector.load %arg4[%c0_6, %c0_7] : memref<128x128xf32, #tpu.memory_space<vmem>>, vector<128x128xf32>
    tpu.vector_store %arg4[%c0_6, %c0_7], %10 {strides = array<i32>} : memref<128x128xf32, #tpu.memory_space<vmem>>, vector<128x128xf32>,
    return
  }
  func.func @transform_0(%arg0: i32) -> (i32, i32) {
    %c0_i32 = arith.constant 0 : i32
    %c0_i32_0 = arith.constant 0 : i32
    return %arg0, %c0_i32 : i32, i32
  }
  func.func @transform_1(%arg0: i32) -> (i32, i32) {
    %c0_i32 = arith.constant 0 : i32
    %c0_i32_0 = arith.constant 0 : i32
    %c0_i32_1 = arith.constant 0 : i32
    return %c0_i32, %c0_i32_0 : i32, i32
  }
  func.func @transform_2(%arg0: i32) -> (i32, i32) {
    %c0_i32 = arith.constant 0 : i32
    %c0_i32_0 = arith.constant 0 : i32
    %c0_i32_1 = arith.constant 0 : i32
    return %c0_i32, %c0_i32_0 : i32, i32
  }
  func.func @transform_3(%arg0: i32) -> (i32, i32) {
    %c0_i32 = arith.constant 0 : i32
    %c0_i32_0 = arith.constant 0 : i32
    return %arg0, %c0_i32 : i32, i32
  }
}

</mosaic_0001>

<llo_original>
// kernel: _lambda_.25
$region0: #{_lambda_.25}
  #allocation0 [shape = 'u32[]', space=smem, size = 0x4, offset = 0x4, fixed_abs, tag = 'smem constant byte address 0x4 - core index']
  #allocation1 [shape = 'u32[144,128]{1,0:T(1,128)}', space=vmem, size = 0x12000, scoped, tag = 'internal scratch']
  %s0 = inlined_call_operand.vmem [shape: bf16[512,48], index: 0, kind: input, shape index: {}]
  %s1 = inlined_call_operand.vmem [shape: bf16[48,128], index: 1, kind: input, shape index: {}]
  %s2 = inlined_call_operand.vmem [shape: f32[1,128], index: 2, kind: input, shape index: {}]
  %s3 = inlined_call_operand.vmem [shape: bf16[512,128], index: 3, kind: output, shape index: {}]
  %s4 = sld [smem:[#allocation0]]
  $region45: #{_lambda_.25} parent=0
    _
  %s6 = ssub.s32 1, %s4
  %s7 = scalar_select 0, %s6, %s4
  loop: start=0, step=1, limit=6
  $region2: #{_lambda_.25} parent=0 // loop_pre_header
    _
  $region3: #{_lambda_.25} parent=0 // loop_header
    %s9 = sphi 0, %s13
    %p10 = scmp.ge.s32.totalorder %s9, 6
    %s19 = sphi 0, %s21
    %s22 = sphi 0, %s19
    %s23 = sphi 0, %s22
    %s39 = sphi 0, %s23
    %s43 = sphi 0, %s43
    %s45 = sphi 0, %s43
    %s46 = sphi 0, %s45
    %s60 = sphi 0, %s46
    %s64 = sphi 0, %s64
    %s66 = sphi 0, %s64
    %s67 = sphi 0, %s66
    %s81 = sphi 0, %s67
    %s87 = sphi 0, %s89
    %s90 = sphi 0, %s87
    %s91 = sphi 0, %s90
    %s107 = sphi 0, %s91
  $region4: #{_lambda_.25} parent=0 // loop_header_branch
    %12 = sbr.rel (%p10) target = $region8
  $region5: #{_lambda_.25} parent=0 // loop_body
    %s14 = ssub.s32 %s9, 1
    %s15 = ssub.s32 %s9, 2
    %s16 = sadd.s32 %s9, 1
    %s17 = ssub.s32 %s9, %s16
    %p18 = scmp.eq.s32.totalorder %s17, 0
    %s20 = sadd.s32 %s19, 1
    %s21 = scalar_select %p18, %s19, %s20
    %p24 = pneg %p18
    %p25 = scmp.eq.s32.totalorder %s9, 3
    %p26 = por %p24, %p25
    %p27 = scmp.ne.s32.totalorder %s19, %s22
    %p28 = scmp.eq.s32.totalorder %s9, 0
    %p29 = por %p27, %p28
    %p30 = scmp.ne.s32.totalorder %s19, %s22
    %p31 = scmp.eq.s32.totalorder %s14, 3
    %p32 = por %p30, %p31
    %p33 = scmp.ne.s32.totalorder %s22, %s23
    %p34 = scmp.eq.s32.totalorder %s14, 0
    %p35 = por %p33, %p34
    %p36 = scmp.ne.s32.totalorder %s22, %s23
    %p37 = scmp.eq.s32.totalorder %s15, 3
    %p38 = por %p36, %p37
    %p40 = scmp.ne.s32.totalorder %s23, %s39
    %p41 = scmp.eq.s32.totalorder %s15, 0
    %p42 = por %p40, %p41
    %s44 = sadd.s32 %s43, 1
    %p47 = scmp.eq.s32.totalorder %s9, 3
    %p48 = scmp.ne.s32.totalorder %s43, %s45
    %p49 = scmp.eq.s32.totalorder %s9, 0
    %p50 = por %p48, %p49
    %p51 = scmp.ne.s32.totalorder %s43, %s45
    %p52 = scmp.eq.s32.totalorder %s14, 3
    %p53 = por %p51, %p52
    %p54 = scmp.ne.s32.totalorder %s45, %s46
    %p55 = scmp.eq.s32.totalorder %s14, 0
    %p56 = por %p54, %p55
    %p57 = scmp.ne.s32.totalorder %s45, %s46
    %p58 = scmp.eq.s32.totalorder %s15, 3
    %p59 = por %p57, %p58
    %p61 = scmp.ne.s32.totalorder %s46, %s60
    %p62 = scmp.eq.s32.totalorder %s15, 0
    %p63 = por %p61, %p62
    %s65 = sadd.s32 %s64, 1
    %p68 = scmp.eq.s32.totalorder %s9, 3
    %p69 = scmp.ne.s32.totalorder %s64, %s66
    %p70 = scmp.eq.s32.totalorder %s9, 0
    %p71 = por %p69, %p70
    %p72 = scmp.ne.s32.totalorder %s64, %s66
    %p73 = scmp.eq.s32.totalorder %s14, 3
    %p74 = por %p72, %p73
    %p75 = scmp.ne.s32.totalorder %s66, %s67
    %p76 = scmp.eq.s32.totalorder %s14, 0
    %p77 = por %p75, %p76
    %p78 = scmp.ne.s32.totalorder %s66, %s67
    %p79 = scmp.eq.s32.totalorder %s15, 3
    %p80 = por %p78, %p79
    %p82 = scmp.ne.s32.totalorder %s67, %s81
    %p83 = scmp.eq.s32.totalorder %s15, 0
    %p84 = por %p82, %p83
    %s85 = ssub.s32 %s9, %s16
    %p86 = scmp.eq.s32.totalorder %s85, 0
    %s88 = sadd.s32 %s87, 1
    %s89 = scalar_select %p86, %s87, %s88
    %p92 = pneg %p86
    %p93 = scmp.eq.s32.totalorder %s9, 3
    %p94 = por %p92, %p93
    %p95 = scmp.ne.s32.totalorder %s87, %s90
    %p96 = scmp.eq.s32.totalorder %s9, 0
    %p97 = por %p95, %p96
    %p98 = scmp.ne.s32.totalorder %s87, %s90
    %p99 = scmp.eq.s32.totalorder %s14, 3
    %p100 = por %p98, %p99
    %p101 = scmp.ne.s32.totalorder %s90, %s91
    %p102 = scmp.eq.s32.totalorder %s14, 0
    %p103 = por %p101, %p102
    %p104 = scmp.ne.s32.totalorder %s90, %s91
    %p105 = scmp.eq.s32.totalorder %s15, 3
    %p106 = por %p104, %p105
    %p108 = scmp.ne.s32.totalorder %s91, %s107
    %p109 = scmp.eq.s32.totalorder %s15, 0
    %p110 = por %p108, %p109
    %p111 = scmp.le.s32.totalorder 1, %s9
    %p112 = scmp.lt.s32.totalorder %s9, 5
    %p113 = pnand %p111, %p112
    %p114 = pneg %p113
    // Predicated region
    $region9: #{_lambda_.25} parent=5 // pred_check
      _
    $region10: #{_lambda_.25} parent=5 // pred_check_branch
      %116 = sbr.rel (%p113) target = $region12
    $region11: #{_lambda_.25} parent=5 // pred_region
      %s117 = ssub.s32 %s9, 1
      // Predicated region
      $region13: #{_lambda_.25} parent=11 // pred_check
        %p118 = pneg %p56
      $region14: #{_lambda_.25} parent=11 // pred_check_branch
        %120 = sbr.rel (%p118) target = $region16
      $region15: #{_lambda_.25} parent=11 // pred_region
        _
      $region16: #{_lambda_.25} parent=11 // pred_fallthru
        _
      // Predicated region
      $region17: #{_lambda_.25} parent=11 // pred_check
        %p121 = pneg %p77
      $region18: #{_lambda_.25} parent=11 // pred_check_branch
        %123 = sbr.rel (%p121) target = $region20
      $region19: #{_lambda_.25} parent=11 // pred_region
        _
      $region20: #{_lambda_.25} parent=11 // pred_fallthru
        _
    $region12: #{_lambda_.25} parent=5 // pred_fallthru
      _
    %p124 = scmp.lt.s32.totalorder %s9, 4
    // Predicated region
    $region21: #{_lambda_.25} parent=5 // pred_check
      %p125 = pneg %p124
    $region22: #{_lambda_.25} parent=5 // pred_check_branch
      %127 = sbr.rel (%p125) target = $region24
    $region23: #{_lambda_.25} parent=5 // pred_region
      // Predicated region
      $region25: #{_lambda_.25} parent=23 // pred_check
        %p128 = pneg %p29
      $region26: #{_lambda_.25} parent=23 // pred_check_branch
        %130 = sbr.rel (%p128) target = $region28
      $region27: #{_lambda_.25} parent=23 // pred_region
        %s131 = smul.u32 16, %s9
        %p132 = scmp.lt.s32.totalorder %s131, 63
        %s133 = scalar_select %p132, %s131, 63
        %s134 = smul.addr %s133, 4
        %s135 = scalar_lea.vmem %s0, %s134
        %s136 = smul.u32 16, %s9
      $region28: #{_lambda_.25} parent=23 // pred_fallthru
        _
    $region24: #{_lambda_.25} parent=5 // pred_fallthru
      _
    %p137 = scmp.le.s32.totalorder 1, %s9
    %p138 = scmp.lt.s32.totalorder %s9, 5
    %p139 = pnand %p137, %p138
    %p140 = pneg %p139
    // Predicated region
    $region29: #{_lambda_.25} parent=5 // pred_check
      _
    $region30: #{_lambda_.25} parent=5 // pred_check_branch
      %142 = sbr.rel (%p139) target = $region32
    $region31: #{_lambda_.25} parent=5 // pred_region
      %s143 = ssub.s32 %s9, 1
      %s144 = smul.u32 16, %s14
      %p145 = scmp.lt.s32.totalorder %s144, 63
      %s146 = scalar_select %p145, %s144, 63
      %s147 = smul.addr %s146, 4
      %s148 = scalar_lea.vmem %s0, %s147
      %p149 = pneg %p35
      %p150 = pneg %p32
      %p151 = pneg %p56
      %p152 = pneg %p53
      %p153 = pneg %p77
      %p154 = pneg %p74
      %p155 = pneg %p103
      %p156 = pneg %p100
      %s157 = smul.u32 16, %s14
      %p158 = scmp.lt.s32.totalorder %s157, 63
      %s159 = scalar_select %p158, %s157, 63
      %s160 = smul.addr %s159, 4
      %s161 = scalar_lea.vmem %s3, %s160
      %s162 = smul.u32 16, %s14
      %p163 = scmp.lt.s32.totalorder %s162, 63
      %s164 = scalar_select %p163, %s162, 63
      %s165 = smul.addr %s164, 4
      %s166 = scalar_lea.vmem %s0, %s165
      %s167 = smul.u32 16, %s14
      %s168 = smul.u32 16, %s14
      %p169 = scmp.lt.s32.totalorder %s168, 63
      %s170 = scalar_select %p169, %s168, 63
      %s171 = smul.addr %s170, 4
      %s172 = scalar_lea.vmem %s3, %s171
      %s173 = smul.u32 16, %s14
      %v175 = vld [vmem:[%s166] sm:$0xf]
      %v176 = vld [vmem:[%s166 + $0x4] sm:$0xf]
      %v177 = vld [vmem:[%s166 + $0x8] sm:$0xf]
      %v178 = vld [vmem:[%s166 + $0xc] sm:$0xf]
      %v179 = vld [vmem:[%s166 + $0x10] sm:$0xf]
      %v180 = vld [vmem:[%s166 + $0x14] sm:$0xf]
      %v181 = vld [vmem:[%s166 + $0x18] sm:$0xf]
      %v182 = vld [vmem:[%s166 + $0x1c] sm:$0xf]
      %v183 = vld [vmem:[%s166 + $0x20] sm:$0xf]
      %v184 = vld [vmem:[%s166 + $0x24] sm:$0xf]
      %v185 = vld [vmem:[%s166 + $0x28] sm:$0xf]
      %v186 = vld [vmem:[%s166 + $0x2c] sm:$0xf]
      %v187 = vld [vmem:[%s166 + $0x30] sm:$0xf]
      %v188 = vld [vmem:[%s166 + $0x34] sm:$0xf]
      %v189 = vld [vmem:[%s166 + $0x38] sm:$0xf]
      %v190 = vld [vmem:[%s166 + $0x3c] sm:$0xf]
      %v191 = vld [vmem:[%s1] sm:$0xf]
      %v192 = vld [vmem:[%s1 + $0x4] sm:$0xf]
      %v193 = vld [vmem:[%s1 + $0x8] sm:$0xf]
      %v194 = vld [vmem:[%s1 + $0xc] sm:$0xf]
      %v195 = vld [vmem:[%s1 + $0x10] sm:$0xf]
      %v196 = vld [vmem:[%s1 + $0x14] sm:$0xf]
      %v197 = vld [vmem:[%s2] sm:$0x1]
      %v199 = vlaneseq
      %v200 = vshrl.u32 %v199, 7
      %v201 = vsub.s32 0, %v200
      %v202 = vrot.slane %v197, %v201
      %v220 = vunpack.c.l.b16 %v175
      %v221 = vunpack.c.l.b16 %v176
      %v222 = vunpack.c.l.b16 %v177
      %v223 = vunpack.c.l.b16 %v178
      %v224 = vunpack.c.l.b16 %v179
      %v225 = vunpack.c.l.b16 %v180
      %v226 = vunpack.c.l.b16 %v181
      %v227 = vunpack.c.l.b16 %v182
      %v228 = vunpack.c.l.b16 %v183
      %v229 = vunpack.c.l.b16 %v184
      %v230 = vunpack.c.l.b16 %v185
      %v231 = vunpack.c.l.b16 %v186
      %v232 = vunpack.c.l.b16 %v187
      %v233 = vunpack.c.l.b16 %v188
      %v234 = vunpack.c.l.b16 %v189
      %v235 = vunpack.c.l.b16 %v190
      %v236 = vpack.c.b16 %v221, %v220
      %v237 = vpack.c.b16 %v223, %v222
      %v238 = vpack.c.b16 %v225, %v224
      %v239 = vpack.c.b16 %v227, %v226
      %v240 = vpack.c.b16 %v229, %v228
      %v241 = vpack.c.b16 %v231, %v230
      %v242 = vpack.c.b16 %v233, %v232
      %v243 = vpack.c.b16 %v235, %v234
      %v250 = vunpack.c.l.b16 %v191
      %v251 = vunpack.c.l.b16 %v192
      %v252 = vunpack.c.l.b16 %v193
      %v253 = vunpack.c.l.b16 %v194
      %v254 = vunpack.c.l.b16 %v195
      %v255 = vunpack.c.l.b16 %v196
      %v256 = vpack.c.b16 %v251, %v250
      %v257 = vpack.c.b16 %v253, %v252
      %v258 = vpack.c.b16 %v255, %v254
      %vm262 = vcmask 392192
      %v264 = vsel %vm262, %v236, 0
      %v267 = vsel %vm262, %v237, 0
      %v270 = vsel %vm262, %v238, 0
      %v273 = vsel %vm262, %v239, 0
      %v276 = vsel %vm262, %v240, 0
      %v279 = vsel %vm262, %v241, 0
      %v282 = vsel %vm262, %v242, 0
      %v285 = vsel %vm262, %v243, 0
      %287 = vmatprep.subr.bf16.mxu0 0
      %288 = vmatpush1.bf16.msra.mxu0 0
      %289 = vmatprep.subr.bf16.mxu0 0
      %290 = vmatpush1.bf16.msra.mxu0 0
      %291 = vmatprep.subr.bf16.mxu0 0
      %292 = vmatpush1.bf16.msra.mxu0 0
      %293 = vmatprep.subr.bf16.mxu0 0
      %294 = vmatpush1.bf16.msra.mxu0 0
      %295 = vmatprep.subr.bf16.mxu0 0
      %296 = vmatpush1.bf16.msra.mxu0 0
      %297 = vmatprep.subr.bf16.mxu0 0
      %298 = vmatpush1.bf16.msra.mxu0 %v258
      %299 = vmatprep.subr.bf16.mxu0 0
      %300 = vmatpush1.bf16.msra.mxu0 %v257
      %301 = vmatprep.subr.bf16.mxu0 0
      %302 = vmatpush1.bf16.msra.mxu0 %v256
      %303 = vmatprep.subr.bf16.mxu0 0
      %304 = vmatpush2.bf16.msra.mxu0 0
      %305 = vmatprep.subr.bf16.mxu0 0
      %306 = vmatpush2.bf16.msra.mxu0 0
      %307 = vmatprep.subr.bf16.mxu0 0
      %308 = vmatpush2.bf16.msra.mxu0 0
      %309 = vmatprep.subr.bf16.mxu0 0
      %310 = vmatpush2.bf16.msra.mxu0 0
      %311 = vmatprep.subr.bf16.mxu0 0
      %312 = vmatpush2.bf16.msra.mxu0 0
      %313 = vmatprep.subr.bf16.mxu0 0
      %314 = vmatpush2.bf16.msra.mxu0 0
      %315 = vmatprep.subr.bf16.mxu0 0
      %316 = vmatpush2.bf16.msra.mxu0 0
      %317 = vmatprep.subr.bf16.mxu0 0
      %318 = vmatpush2.bf16.msra.mxu0 0
      %319 = vmatprep.mubr.bf16.mxu0 0
      %320 = vmatmul.mubr.bf16.gmra.mxu0 %v264
      %v321 = vpop.f32.mrf.mxu0
      %v322 = vadd.f32 %v202, %v321
      %v323 = vpop.f32.mrf.mxu0
      %v324 = vpop.f32.mrf.mxu0
      %v325 = vadd.f32 %v202, %v324
      %v326 = vpop.f32.mrf.mxu0
      %327 = vmatprep.mubr.bf16.mxu0 0
      %328 = vmatmul.mubr.bf16.gmra.mxu0 %v267
      %v329 = vpop.f32.mrf.mxu0
      %v330 = vadd.f32 %v202, %v329
      %v331 = vpop.f32.mrf.mxu0
      %v332 = vpop.f32.mrf.mxu0
      %v333 = vadd.f32 %v202, %v332
      %v334 = vpop.f32.mrf.mxu0
      %335 = vmatprep.mubr.bf16.mxu0 0
      %336 = vmatmul.mubr.bf16.gmra.mxu0 %v270
      %v337 = vpop.f32.mrf.mxu0
      %v338 = vadd.f32 %v202, %v337
      %v339 = vpop.f32.mrf.mxu0
      %v340 = vpop.f32.mrf.mxu0
      %v341 = vadd.f32 %v202, %v340
      %v342 = vpop.f32.mrf.mxu0
      %343 = vmatprep.mubr.bf16.mxu0 0
      %344 = vmatmul.mubr.bf16.gmra.mxu0 %v273
      %v345 = vpop.f32.mrf.mxu0
      %v346 = vadd.f32 %v202, %v345
      %v347 = vpop.f32.mrf.mxu0
      %v348 = vpop.f32.mrf.mxu0
      %v349 = vadd.f32 %v202, %v348
      %v350 = vpop.f32.mrf.mxu0
      %351 = vmatprep.mubr.bf16.mxu0 0
      %352 = vmatmul.mubr.bf16.gmra.mxu0 %v276
      %v353 = vpop.f32.mrf.mxu0
      %v354 = vadd.f32 %v202, %v353
      %v355 = vpop.f32.mrf.mxu0
      %v356 = vpop.f32.mrf.mxu0
      %v357 = vadd.f32 %v202, %v356
      %v358 = vpop.f32.mrf.mxu0
      %359 = vmatprep.mubr.bf16.mxu0 0
      %360 = vmatmul.mubr.bf16.gmra.mxu0 %v279
      %v361 = vpop.f32.mrf.mxu0
      %v362 = vadd.f32 %v202, %v361
      %v363 = vpop.f32.mrf.mxu0
      %v364 = vpop.f32.mrf.mxu0
      %v365 = vadd.f32 %v202, %v364
      %v366 = vpop.f32.mrf.mxu0
      %367 = vmatprep.mubr.bf16.mxu0 0
      %368 = vmatmul.mubr.bf16.gmra.mxu0 %v282
      %v369 = vpop.f32.mrf.mxu0
      %v370 = vadd.f32 %v202, %v369
      %v371 = vpop.f32.mrf.mxu0
      %v372 = vpop.f32.mrf.mxu0
      %v373 = vadd.f32 %v202, %v372
      %v374 = vpop.f32.mrf.mxu0
      %375 = vmatprep.mubr.bf16.mxu0 0
      %376 = vmatmul.mubr.bf16.gmra.mxu0 %v285
      %v377 = vpop.f32.mrf.mxu0
      %v378 = vadd.f32 %v202, %v377
      %v379 = vpop.f32.mrf.mxu0
      %v380 = vpop.f32.mrf.mxu0
      %v381 = vadd.f32 %v202, %v380
      %v382 = vpop.f32.mrf.mxu0
      %383 = vdwg.mxu0
      %v384 = vmax.f32 %v322, 0.0
      %v385 = vmax.f32 %v325, 0.0
      %v386 = vmax.f32 %v330, 0.0
      %v387 = vmax.f32 %v333, 0.0
      %v388 = vmax.f32 %v338, 0.0
      %v389 = vmax.f32 %v341, 0.0
      %v390 = vmax.f32 %v346, 0.0
      %v391 = vmax.f32 %v349, 0.0
      %v392 = vmax.f32 %v354, 0.0
      %v393 = vmax.f32 %v357, 0.0
      %v394 = vmax.f32 %v362, 0.0
      %v395 = vmax.f32 %v365, 0.0
      %v396 = vmax.f32 %v370, 0.0
      %v397 = vmax.f32 %v373, 0.0
      %v398 = vmax.f32 %v378, 0.0
      %v399 = vmax.f32 %v381, 0.0
      %v400 = vpack.c.bf16 %v385, %v384
      %v401 = vpack.c.bf16 %v387, %v386
      %v402 = vpack.c.bf16 %v389, %v388
      %v403 = vpack.c.bf16 %v391, %v390
      %v404 = vpack.c.bf16 %v393, %v392
      %v405 = vpack.c.bf16 %v395, %v394
      %v406 = vpack.c.bf16 %v397, %v396
      %v407 = vpack.c.bf16 %v399, %v398
      %v416 = vunpack.c.l.b16 %v400
      %v417 = vunpack.c.h.b16 %v400
      %v418 = vunpack.c.l.b16 %v401
      %v419 = vunpack.c.h.b16 %v401
      %v420 = vunpack.c.l.b16 %v402
      %v421 = vunpack.c.h.b16 %v402
      %v422 = vunpack.c.l.b16 %v403
      %v423 = vunpack.c.h.b16 %v403
      %v424 = vunpack.c.l.b16 %v404
      %v425 = vunpack.c.h.b16 %v404
      %v426 = vunpack.c.l.b16 %v405
      %v427 = vunpack.c.h.b16 %v405
      %v428 = vunpack.c.l.b16 %v406
      %v429 = vunpack.c.h.b16 %v406
      %v430 = vunpack.c.l.b16 %v407
      %v431 = vunpack.c.h.b16 %v407
      %v432 = vpack.c.b16 %v416, %v416
      %v433 = vpack.c.b16 %v417, %v417
      %v434 = vpack.c.b16 %v418, %v418
      %v435 = vpack.c.b16 %v419, %v419
      %v436 = vpack.c.b16 %v420, %v420
      %v437 = vpack.c.b16 %v421, %v421
      %v438 = vpack.c.b16 %v422, %v422
      %v439 = vpack.c.b16 %v423, %v423
      %v440 = vpack.c.b16 %v424, %v424
      %v441 = vpack.c.b16 %v425, %v425
      %v442 = vpack.c.b16 %v426, %v426
      %v443 = vpack.c.b16 %v427, %v427
      %v444 = vpack.c.b16 %v428, %v428
      %v445 = vpack.c.b16 %v429, %v429
      %v446 = vpack.c.b16 %v430, %v430
      %v447 = vpack.c.b16 %v431, %v431
      %464 = vst [vmem:[%s172] sm:$0xf] %v432
      %465 = vst [vmem:[%s172 + $0x4] sm:$0xf] %v433
      %466 = vst [vmem:[%s172 + $0x8] sm:$0xf] %v434
      %467 = vst [vmem:[%s172 + $0xc] sm:$0xf] %v435
      %468 = vst [vmem:[%s172 + $0x10] sm:$0xf] %v436
      %469 = vst [vmem:[%s172 + $0x14] sm:$0xf] %v437
      %470 = vst [vmem:[%s172 + $0x18] sm:$0xf] %v438
      %471 = vst [vmem:[%s172 + $0x1c] sm:$0xf] %v439
      %472 = vst [vmem:[%s172 + $0x20] sm:$0xf] %v440
      %473 = vst [vmem:[%s172 + $0x24] sm:$0xf] %v441
      %474 = vst [vmem:[%s172 + $0x28] sm:$0xf] %v442
      %475 = vst [vmem:[%s172 + $0x2c] sm:$0xf] %v443
      %476 = vst [vmem:[%s172 + $0x30] sm:$0xf] %v444
      %477 = vst [vmem:[%s172 + $0x34] sm:$0xf] %v445
      %478 = vst [vmem:[%s172 + $0x38] sm:$0xf] %v446
      %479 = vst [vmem:[%s172 + $0x3c] sm:$0xf] %v447
      %s480 = smul.u32 16, %s14
      %p481 = scmp.lt.s32.totalorder %s480, 63
      %s482 = scalar_select %p481, %s480, 63
      %s483 = smul.addr %s482, 4
      %s484 = scalar_lea.vmem %s3, %s483
      // Predicated region
      $region33: #{_lambda_.25} parent=31 // pred_check
        %p485 = pneg %p100
      $region34: #{_lambda_.25} parent=31 // pred_check_branch
        %487 = sbr.rel (%p485) target = $region36
      $region35: #{_lambda_.25} parent=31 // pred_region
        %s488 = smul.u32 16, %s14
      $region36: #{_lambda_.25} parent=31 // pred_fallthru
        _
    $region32: #{_lambda_.25} parent=5 // pred_fallthru
      _
    %p489 = scmp.le.s32.totalorder 2, %s9
    // Predicated region
    $region37: #{_lambda_.25} parent=5 // pred_check
      %p490 = pneg %p489
    $region38: #{_lambda_.25} parent=5 // pred_check_branch
      %492 = sbr.rel (%p490) target = $region40
    $region39: #{_lambda_.25} parent=5 // pred_region
      %s493 = ssub.s32 %s9, 2
      // Predicated region
      $region41: #{_lambda_.25} parent=39 // pred_check
        %p494 = pneg %p106
      $region42: #{_lambda_.25} parent=39 // pred_check_branch
        %496 = sbr.rel (%p494) target = $region44
      $region43: #{_lambda_.25} parent=39 // pred_region
        %s497 = smul.u32 16, %s15
        %p498 = scmp.lt.s32.totalorder %s497, 63
        %s499 = scalar_select %p498, %s497, 63
        %s500 = smul.addr %s499, 4
        %s501 = scalar_lea.vmem %s3, %s500
      $region44: #{_lambda_.25} parent=39 // pred_fallthru
        _
    $region40: #{_lambda_.25} parent=5 // pred_fallthru
      _
  $region6: #{_lambda_.25} parent=0 // loop_footer
    %s13 = sadd.s32 1, %s9
  $region7: #{_lambda_.25} parent=0 // loop_footer_branch
    %8 = sbr.rel target = $region3
  $region8: #{_lambda_.25} parent=0 // loop_exit
    _

// kernel: _lambda_.26
$region0: #{_lambda_.26}
  #allocation0 [shape = 'u32[]', space=smem, size = 0x4, offset = 0x4, fixed_abs, tag = 'smem constant byte address 0x4 - core index']
  #allocation1 [shape = 'u32[144,128]{1,0:T(1,128)}', space=vmem, size = 0x12000, scoped, tag = 'internal scratch']
  %s0 = inlined_call_operand.vmem [shape: bf16[128,256], index: 0, kind: input, shape index: {}]
  %s1 = inlined_call_operand.vmem [shape: bf16[256,128], index: 1, kind: input, shape index: {}]
  %s2 = inlined_call_operand.vmem [shape: f32[1,128], index: 2, kind: input, shape index: {}]
  %s3 = inlined_call_operand.vmem [shape: bf16[128,128], index: 3, kind: output, shape index: {}]
  %s4 = sld [smem:[#allocation0]]
  $region45: #{_lambda_.26} parent=0
    _
  %s6 = ssub.s32 1, %s4
  %s7 = scalar_select 0, %s6, %s4
  loop: start=0, step=1, limit=4
  $region2: #{_lambda_.26} parent=0 // loop_pre_header
    _
  $region3: #{_lambda_.26} parent=0 // loop_header
    %s9 = sphi 0, %s13
    %p10 = scmp.ge.s32.totalorder %s9, 4
    %s19 = sphi 0, %s21
    %s22 = sphi 0, %s19
    %s23 = sphi 0, %s22
    %s39 = sphi 0, %s23
    %s43 = sphi 0, %s43
    %s45 = sphi 0, %s43
    %s46 = sphi 0, %s45
    %s60 = sphi 0, %s46
    %s64 = sphi 0, %s64
    %s66 = sphi 0, %s64
    %s67 = sphi 0, %s66
    %s81 = sphi 0, %s67
    %s87 = sphi 0, %s89
    %s90 = sphi 0, %s87
    %s91 = sphi 0, %s90
    %s107 = sphi 0, %s91
  $region4: #{_lambda_.26} parent=0 // loop_header_branch
    %12 = sbr.rel (%p10) target = $region8
  $region5: #{_lambda_.26} parent=0 // loop_body
    %s14 = ssub.s32 %s9, 1
    %s15 = ssub.s32 %s9, 2
    %s16 = sadd.s32 %s9, 1
    %s17 = ssub.s32 %s9, %s16
    %p18 = scmp.eq.s32.totalorder %s17, 0
    %s20 = sadd.s32 %s19, 1
    %s21 = scalar_select %p18, %s19, %s20
    %p24 = pneg %p18
    %p25 = scmp.eq.s32.totalorder %s9, 1
    %p26 = por %p24, %p25
    %p27 = scmp.ne.s32.totalorder %s19, %s22
    %p28 = scmp.eq.s32.totalorder %s9, 0
    %p29 = por %p27, %p28
    %p30 = scmp.ne.s32.totalorder %s19, %s22
    %p31 = scmp.eq.s32.totalorder %s14, 1
    %p32 = por %p30, %p31
    %p33 = scmp.ne.s32.totalorder %s22, %s23
    %p34 = scmp.eq.s32.totalorder %s14, 0
    %p35 = por %p33, %p34
    %p36 = scmp.ne.s32.totalorder %s22, %s23
    %p37 = scmp.eq.s32.totalorder %s15, 1
    %p38 = por %p36, %p37
    %p40 = scmp.ne.s32.totalorder %s23, %s39
    %p41 = scmp.eq.s32.totalorder %s15, 0
    %p42 = por %p40, %p41
    %s44 = sadd.s32 %s43, 1
    %p47 = scmp.eq.s32.totalorder %s9, 1
    %p48 = scmp.ne.s32.totalorder %s43, %s45
    %p49 = scmp.eq.s32.totalorder %s9, 0
    %p50 = por %p48, %p49
    %p51 = scmp.ne.s32.totalorder %s43, %s45
    %p52 = scmp.eq.s32.totalorder %s14, 1
    %p53 = por %p51, %p52
    %p54 = scmp.ne.s32.totalorder %s45, %s46
    %p55 = scmp.eq.s32.totalorder %s14, 0
    %p56 = por %p54, %p55
    %p57 = scmp.ne.s32.totalorder %s45, %s46
    %p58 = scmp.eq.s32.totalorder %s15, 1
    %p59 = por %p57, %p58
    %p61 = scmp.ne.s32.totalorder %s46, %s60
    %p62 = scmp.eq.s32.totalorder %s15, 0
    %p63 = por %p61, %p62
    %s65 = sadd.s32 %s64, 1
    %p68 = scmp.eq.s32.totalorder %s9, 1
    %p69 = scmp.ne.s32.totalorder %s64, %s66
    %p70 = scmp.eq.s32.totalorder %s9, 0
    %p71 = por %p69, %p70
    %p72 = scmp.ne.s32.totalorder %s64, %s66
    %p73 = scmp.eq.s32.totalorder %s14, 1
    %p74 = por %p72, %p73
    %p75 = scmp.ne.s32.totalorder %s66, %s67
    %p76 = scmp.eq.s32.totalorder %s14, 0
    %p77 = por %p75, %p76
    %p78 = scmp.ne.s32.totalorder %s66, %s67
    %p79 = scmp.eq.s32.totalorder %s15, 1
    %p80 = por %p78, %p79
    %p82 = scmp.ne.s32.totalorder %s67, %s81
    %p83 = scmp.eq.s32.totalorder %s15, 0
    %p84 = por %p82, %p83
    %s85 = ssub.s32 %s9, %s16
    %p86 = scmp.eq.s32.totalorder %s85, 0
    %s88 = sadd.s32 %s87, 1
    %s89 = scalar_select %p86, %s87, %s88
    %p92 = pneg %p86
    %p93 = scmp.eq.s32.totalorder %s9, 1
    %p94 = por %p92, %p93
    %p95 = scmp.ne.s32.totalorder %s87, %s90
    %p96 = scmp.eq.s32.totalorder %s9, 0
    %p97 = por %p95, %p96
    %p98 = scmp.ne.s32.totalorder %s87, %s90
    %p99 = scmp.eq.s32.totalorder %s14, 1
    %p100 = por %p98, %p99
    %p101 = scmp.ne.s32.totalorder %s90, %s91
    %p102 = scmp.eq.s32.totalorder %s14, 0
    %p103 = por %p101, %p102
    %p104 = scmp.ne.s32.totalorder %s90, %s91
    %p105 = scmp.eq.s32.totalorder %s15, 1
    %p106 = por %p104, %p105
    %p108 = scmp.ne.s32.totalorder %s91, %s107
    %p109 = scmp.eq.s32.totalorder %s15, 0
    %p110 = por %p108, %p109
    %p111 = scmp.le.s32.totalorder 1, %s9
    %p112 = scmp.lt.s32.totalorder %s9, 3
    %p113 = pnand %p111, %p112
    %p114 = pneg %p113
    // Predicated region
    $region9: #{_lambda_.26} parent=5 // pred_check
      _
    $region10: #{_lambda_.26} parent=5 // pred_check_branch
      %116 = sbr.rel (%p113) target = $region12
    $region11: #{_lambda_.26} parent=5 // pred_region
      %s117 = ssub.s32 %s9, 1
      // Predicated region
      $region13: #{_lambda_.26} parent=11 // pred_check
        %p118 = pneg %p56
      $region14: #{_lambda_.26} parent=11 // pred_check_branch
        %120 = sbr.rel (%p118) target = $region16
      $region15: #{_lambda_.26} parent=11 // pred_region
        _
      $region16: #{_lambda_.26} parent=11 // pred_fallthru
        _
      // Predicated region
      $region17: #{_lambda_.26} parent=11 // pred_check
        %p121 = pneg %p77
      $region18: #{_lambda_.26} parent=11 // pred_check_branch
        %123 = sbr.rel (%p121) target = $region20
      $region19: #{_lambda_.26} parent=11 // pred_region
        _
      $region20: #{_lambda_.26} parent=11 // pred_fallthru
        _
    $region12: #{_lambda_.26} parent=5 // pred_fallthru
      _
    %p124 = scmp.lt.s32.totalorder %s9, 2
    // Predicated region
    $region21: #{_lambda_.26} parent=5 // pred_check
      %p125 = pneg %p124
    $region22: #{_lambda_.26} parent=5 // pred_check_branch
      %127 = sbr.rel (%p125) target = $region24
    $region23: #{_lambda_.26} parent=5 // pred_region
      // Predicated region
      $region25: #{_lambda_.26} parent=23 // pred_check
        %p128 = pneg %p29
      $region26: #{_lambda_.26} parent=23 // pred_check_branch
        %130 = sbr.rel (%p128) target = $region28
      $region27: #{_lambda_.26} parent=23 // pred_region
        %s131 = smul.u32 8, %s9
        %p132 = scmp.lt.s32.totalorder %s131, 15
        %s133 = scalar_select %p132, %s131, 15
        %s134 = smul.addr %s133, 2
        %s135 = smul.addr %s134, 4
        %s136 = scalar_lea.vmem %s0, %s135
        %s137 = smul.u32 8, %s9
      $region28: #{_lambda_.26} parent=23 // pred_fallthru
        _
    $region24: #{_lambda_.26} parent=5 // pred_fallthru
      _
    %p138 = scmp.le.s32.totalorder 1, %s9
    %p139 = scmp.lt.s32.totalorder %s9, 3
    %p140 = pnand %p138, %p139
    %p141 = pneg %p140
    // Predicated region
    $region29: #{_lambda_.26} parent=5 // pred_check
      _
    $region30: #{_lambda_.26} parent=5 // pred_check_branch
      %143 = sbr.rel (%p140) target = $region32
    $region31: #{_lambda_.26} parent=5 // pred_region
      %s144 = ssub.s32 %s9, 1
      %s145 = smul.u32 8, %s14
      %p146 = scmp.lt.s32.totalorder %s145, 15
      %s147 = scalar_select %p146, %s145, 15
      %s148 = smul.addr %s147, 2
      %s149 = smul.addr %s148, 4
      %s150 = scalar_lea.vmem %s0, %s149
      %p151 = pneg %p35
      %p152 = pneg %p32
      %p153 = pneg %p56
      %p154 = pneg %p53
      %p155 = pneg %p77
      %p156 = pneg %p74
      %p157 = pneg %p103
      %p158 = pneg %p100
      %s159 = smul.u32 8, %s14
      %p160 = scmp.lt.s32.totalorder %s159, 15
      %s161 = scalar_select %p160, %s159, 15
      %s162 = smul.addr %s161, 4
      %s163 = scalar_lea.vmem %s3, %s162
      %s164 = smul.u32 8, %s14
      %p165 = scmp.lt.s32.totalorder %s164, 15
      %s166 = scalar_select %p165, %s164, 15
      %s167 = smul.addr %s166, 2
      %s168 = smul.addr %s167, 4
      %s169 = scalar_lea.vmem %s0, %s168
      %s170 = smul.u32 8, %s14
      %s171 = smul.u32 8, %s14
      %p172 = scmp.lt.s32.totalorder %s171, 15
      %s173 = scalar_select %p172, %s171, 15
      %s174 = smul.addr %s173, 4
      %s175 = scalar_lea.vmem %s3, %s174
      %s176 = smul.u32 8, %s14
      %v178 = vld [vmem:[%s169] sm:$0xff]
      %v179 = vld [vmem:[%s169 + $0x8] sm:$0xff]
      %v180 = vld [vmem:[%s169 + $0x10] sm:$0xff]
      %v181 = vld [vmem:[%s169 + $0x18] sm:$0xff]
      %v182 = vld [vmem:[%s169 + $0x20] sm:$0xff]
      %v183 = vld [vmem:[%s169 + $0x28] sm:$0xff]
      %v184 = vld [vmem:[%s169 + $0x30] sm:$0xff]
      %v185 = vld [vmem:[%s169 + $0x38] sm:$0xff]
      %v186 = vld [vmem:[%s1] sm:$0xf]
      %v187 = vld [vmem:[%s1 + $0x4] sm:$0xf]
      %v188 = vld [vmem:[%s1 + $0x8] sm:$0xf]
      %v189 = vld [vmem:[%s1 + $0xc] sm:$0xf]
      %v190 = vld [vmem:[%s1 + $0x10] sm:$0xf]
      %v191 = vld [vmem:[%s1 + $0x14] sm:$0xf]
      %v192 = vld [vmem:[%s1 + $0x18] sm:$0xf]
      %v193 = vld [vmem:[%s1 + $0x1c] sm:$0xf]
      %v194 = vld [vmem:[%s1 + $0x20] sm:$0xf]
      %v195 = vld [vmem:[%s1 + $0x24] sm:$0xf]
      %v196 = vld [vmem:[%s1 + $0x28] sm:$0xf]
      %v197 = vld [vmem:[%s1 + $0x2c] sm:$0xf]
      %v198 = vld [vmem:[%s1 + $0x30] sm:$0xf]
      %v199 = vld [vmem:[%s1 + $0x34] sm:$0xf]
      %v200 = vld [vmem:[%s1 + $0x38] sm:$0xf]
      %v201 = vld [vmem:[%s1 + $0x3c] sm:$0xf]
      %v202 = vld [vmem:[%s1 + $0x40] sm:$0xf]
      %v203 = vld [vmem:[%s1 + $0x44] sm:$0xf]
      %v204 = vld [vmem:[%s1 + $0x48] sm:$0xf]
      %v205 = vld [vmem:[%s1 + $0x4c] sm:$0xf]
      %v206 = vld [vmem:[%s1 + $0x50] sm:$0xf]
      %v207 = vld [vmem:[%s1 + $0x54] sm:$0xf]
      %v208 = vld [vmem:[%s1 + $0x58] sm:$0xf]
      %v209 = vld [vmem:[%s1 + $0x5c] sm:$0xf]
      %v210 = vld [vmem:[%s1 + $0x60] sm:$0xf]
      %v211 = vld [vmem:[%s1 + $0x64] sm:$0xf]
      %v212 = vld [vmem:[%s1 + $0x68] sm:$0xf]
      %v213 = vld [vmem:[%s1 + $0x6c] sm:$0xf]
      %v214 = vld [vmem:[%s1 + $0x70] sm:$0xf]
      %v215 = vld [vmem:[%s1 + $0x74] sm:$0xf]
      %v216 = vld [vmem:[%s1 + $0x78] sm:$0xf]
      %v217 = vld [vmem:[%s1 + $0x7c] sm:$0xf]
      %v218 = vld [vmem:[%s2] sm:$0x1]
      %v220 = vlaneseq
      %v221 = vshrl.u32 %v220, 7
      %v222 = vsub.s32 0, %v221
      %v223 = vrot.slane %v218, %v222
      %v233 = vunpack.c.l.b16 %v178
      %v234 = vunpack.c.h.b16 %v178
      %v235 = vunpack.c.l.b16 %v179
      %v236 = vunpack.c.h.b16 %v179
      %v237 = vunpack.c.l.b16 %v180
      %v238 = vunpack.c.h.b16 %v180
      %v239 = vunpack.c.l.b16 %v181
      %v240 = vunpack.c.h.b16 %v181
      %v241 = vunpack.c.l.b16 %v182
      %v242 = vunpack.c.h.b16 %v182
      %v243 = vunpack.c.l.b16 %v183
      %v244 = vunpack.c.h.b16 %v183
      %v245 = vunpack.c.l.b16 %v184
      %v246 = vunpack.c.h.b16 %v184
      %v247 = vunpack.c.l.b16 %v185
      %v248 = vunpack.c.h.b16 %v185
      %v249 = vpack.c.b16 %v235, %v233
      %v250 = vpack.c.b16 %v236, %v234
      %v251 = vpack.c.b16 %v239, %v237
      %v252 = vpack.c.b16 %v240, %v238
      %v253 = vpack.c.b16 %v243, %v241
      %v254 = vpack.c.b16 %v244, %v242
      %v255 = vpack.c.b16 %v247, %v245
      %v256 = vpack.c.b16 %v248, %v246
      %v297 = vunpack.c.l.b16 %v186
      %v298 = vunpack.c.l.b16 %v187
      %v299 = vunpack.c.l.b16 %v188
      %v300 = vunpack.c.l.b16 %v189
      %v301 = vunpack.c.l.b16 %v190
      %v302 = vunpack.c.l.b16 %v191
      %v303 = vunpack.c.l.b16 %v192
      %v304 = vunpack.c.l.b16 %v193
      %v305 = vunpack.c.l.b16 %v194
      %v306 = vunpack.c.l.b16 %v195
      %v307 = vunpack.c.l.b16 %v196
      %v308 = vunpack.c.l.b16 %v197
      %v309 = vunpack.c.l.b16 %v198
      %v310 = vunpack.c.l.b16 %v199
      %v311 = vunpack.c.l.b16 %v200
      %v312 = vunpack.c.l.b16 %v201
      %v313 = vunpack.c.l.b16 %v202
      %v314 = vunpack.c.l.b16 %v203
      %v315 = vunpack.c.l.b16 %v204
      %v316 = vunpack.c.l.b16 %v205
      %v317 = vunpack.c.l.b16 %v206
      %v318 = vunpack.c.l.b16 %v207
      %v319 = vunpack.c.l.b16 %v208
      %v320 = vunpack.c.l.b16 %v209
      %v321 = vunpack.c.l.b16 %v210
      %v322 = vunpack.c.l.b16 %v211
      %v323 = vunpack.c.l.b16 %v212
      %v324 = vunpack.c.l.b16 %v213
      %v325 = vunpack.c.l.b16 %v214
      %v326 = vunpack.c.l.b16 %v215
      %v327 = vunpack.c.l.b16 %v216
      %v328 = vunpack.c.l.b16 %v217
      %v329 = vpack.c.b16 %v298, %v297
      %v330 = vpack.c.b16 %v300, %v299
      %v331 = vpack.c.b16 %v302, %v301
      %v332 = vpack.c.b16 %v304, %v303
      %v333 = vpack.c.b16 %v306, %v305
      %v334 = vpack.c.b16 %v308, %v307
      %v335 = vpack.c.b16 %v310, %v309
      %v336 = vpack.c.b16 %v312, %v311
      %v337 = vpack.c.b16 %v314, %v313
      %v338 = vpack.c.b16 %v316, %v315
      %v339 = vpack.c.b16 %v318, %v317
      %v340 = vpack.c.b16 %v320, %v319
      %v341 = vpack.c.b16 %v322, %v321
      %v342 = vpack.c.b16 %v324, %v323
      %v343 = vpack.c.b16 %v326, %v325
      %v344 = vpack.c.b16 %v328, %v327
      %361 = vmatprep.subr.bf16.mxu0 0
      %362 = vmatpush1.bf16.msra.mxu0 %v336
      %363 = vmatprep.subr.bf16.mxu0 0
      %364 = vmatpush1.bf16.msra.mxu0 %v335
      %365 = vmatprep.subr.bf16.mxu0 0
      %366 = vmatpush1.bf16.msra.mxu0 %v334
      %367 = vmatprep.subr.bf16.mxu0 0
      %368 = vmatpush1.bf16.msra.mxu0 %v333
      %369 = vmatprep.subr.bf16.mxu0 0
      %370 = vmatpush1.bf16.msra.mxu0 %v332
      %371 = vmatprep.subr.bf16.mxu0 0
      %372 = vmatpush1.bf16.msra.mxu0 %v331
      %373 = vmatprep.subr.bf16.mxu0 0
      %374 = vmatpush1.bf16.msra.mxu0 %v330
      %375 = vmatprep.subr.bf16.mxu0 0
      %376 = vmatpush1.bf16.msra.mxu0 %v329
      %377 = vmatprep.subr.bf16.mxu0 0
      %378 = vmatpush2.bf16.msra.mxu0 %v344
      %379 = vmatprep.subr.bf16.mxu0 0
      %380 = vmatpush2.bf16.msra.mxu0 %v343
      %381 = vmatprep.subr.bf16.mxu0 0
      %382 = vmatpush2.bf16.msra.mxu0 %v342
      %383 = vmatprep.subr.bf16.mxu0 0
      %384 = vmatpush2.bf16.msra.mxu0 %v341
      %385 = vmatprep.subr.bf16.mxu0 0
      %386 = vmatpush2.bf16.msra.mxu0 %v340
      %387 = vmatprep.subr.bf16.mxu0 0
      %388 = vmatpush2.bf16.msra.mxu0 %v339
      %389 = vmatprep.subr.bf16.mxu0 0
      %390 = vmatpush2.bf16.msra.mxu0 %v338
      %391 = vmatprep.subr.bf16.mxu0 0
      %392 = vmatpush2.bf16.msra.mxu0 %v337
      %393 = vmatprep.mubr.bf16.mxu0 %v250
      %394 = vmatmul.mubr.bf16.gmra.mxu0 %v249
      %v395 = vpop.f32.mrf.mxu0
      %v396 = vadd.f32 %v223, %v395
      %v397 = vpop.f32.mrf.mxu0
      %v398 = vpop.f32.mrf.mxu0
      %v399 = vadd.f32 %v223, %v398
      %v400 = vpop.f32.mrf.mxu0
      %401 = vmatprep.mubr.bf16.mxu0 %v252
      %402 = vmatmul.mubr.bf16.gmra.mxu0 %v251
      %v403 = vpop.f32.mrf.mxu0
      %v404 = vadd.f32 %v223, %v403
      %v405 = vpop.f32.mrf.mxu0
      %v406 = vpop.f32.mrf.mxu0
      %v407 = vadd.f32 %v223, %v406
      %v408 = vpop.f32.mrf.mxu0
      %409 = vmatprep.mubr.bf16.mxu0 %v254
      %410 = vmatmul.mubr.bf16.gmra.mxu0 %v253
      %v411 = vpop.f32.mrf.mxu0
      %v412 = vadd.f32 %v223, %v411
      %v413 = vpop.f32.mrf.mxu0
      %v414 = vpop.f32.mrf.mxu0
      %v415 = vadd.f32 %v223, %v414
      %v416 = vpop.f32.mrf.mxu0
      %417 = vmatprep.mubr.bf16.mxu0 %v256
      %418 = vmatmul.mubr.bf16.gmra.mxu0 %v255
      %v419 = vpop.f32.mrf.mxu0
      %v420 = vadd.f32 %v223, %v419
      %v421 = vpop.f32.mrf.mxu0
      %v422 = vpop.f32.mrf.mxu0
      %v423 = vadd.f32 %v223, %v422
      %v424 = vpop.f32.mrf.mxu0
      %425 = vdwg.mxu0
      %v426 = vmax.f32 %v396, 0.0
      %v427 = vmax.f32 %v399, 0.0
      %v428 = vmax.f32 %v404, 0.0
      %v429 = vmax.f32 %v407, 0.0
      %v430 = vmax.f32 %v412, 0.0
      %v431 = vmax.f32 %v415, 0.0
      %v432 = vmax.f32 %v420, 0.0
      %v433 = vmax.f32 %v423, 0.0
      %v434 = vpack.c.bf16 %v427, %v426
      %v435 = vpack.c.bf16 %v429, %v428
      %v436 = vpack.c.bf16 %v431, %v430
      %v437 = vpack.c.bf16 %v433, %v432
      %v442 = vunpack.c.l.b16 %v434
      %v443 = vunpack.c.h.b16 %v434
      %v444 = vunpack.c.l.b16 %v435
      %v445 = vunpack.c.h.b16 %v435
      %v446 = vunpack.c.l.b16 %v436
      %v447 = vunpack.c.h.b16 %v436
      %v448 = vunpack.c.l.b16 %v437
      %v449 = vunpack.c.h.b16 %v437
      %v450 = vpack.c.b16 %v442, %v442
      %v451 = vpack.c.b16 %v443, %v443
      %v452 = vpack.c.b16 %v444, %v444
      %v453 = vpack.c.b16 %v445, %v445
      %v454 = vpack.c.b16 %v446, %v446
      %v455 = vpack.c.b16 %v447, %v447
      %v456 = vpack.c.b16 %v448, %v448
      %v457 = vpack.c.b16 %v449, %v449
      %466 = vst [vmem:[%s175] sm:$0xf] %v450
      %467 = vst [vmem:[%s175 + $0x4] sm:$0xf] %v451
      %468 = vst [vmem:[%s175 + $0x8] sm:$0xf] %v452
      %469 = vst [vmem:[%s175 + $0xc] sm:$0xf] %v453
      %470 = vst [vmem:[%s175 + $0x10] sm:$0xf] %v454
      %471 = vst [vmem:[%s175 + $0x14] sm:$0xf] %v455
      %472 = vst [vmem:[%s175 + $0x18] sm:$0xf] %v456
      %473 = vst [vmem:[%s175 + $0x1c] sm:$0xf] %v457
      %s474 = smul.u32 8, %s14
      %p475 = scmp.lt.s32.totalorder %s474, 15
      %s476 = scalar_select %p475, %s474, 15
      %s477 = smul.addr %s476, 4
      %s478 = scalar_lea.vmem %s3, %s477
      // Predicated region
      $region33: #{_lambda_.26} parent=31 // pred_check
        %p479 = pneg %p100
      $region34: #{_lambda_.26} parent=31 // pred_check_branch
        %481 = sbr.rel (%p479) target = $region36
      $region35: #{_lambda_.26} parent=31 // pred_region
        %s482 = smul.u32 8, %s14
      $region36: #{_lambda_.26} parent=31 // pred_fallthru
        _
    $region32: #{_lambda_.26} parent=5 // pred_fallthru
      _
    %p483 = scmp.le.s32.totalorder 2, %s9
    // Predicated region
    $region37: #{_lambda_.26} parent=5 // pred_check
      %p484 = pneg %p483
    $region38: #{_lambda_.26} parent=5 // pred_check_branch
      %486 = sbr.rel (%p484) target = $region40
    $region39: #{_lambda_.26} parent=5 // pred_region
      %s487 = ssub.s32 %s9, 2
      // Predicated region
      $region41: #{_lambda_.26} parent=39 // pred_check
        %p488 = pneg %p106
      $region42: #{_lambda_.26} parent=39 // pred_check_branch
        %490 = sbr.rel (%p488) target = $region44
      $region43: #{_lambda_.26} parent=39 // pred_region
        %s491 = smul.u32 8, %s15
        %p492 = scmp.lt.s32.totalorder %s491, 15
        %s493 = scalar_select %p492, %s491, 15
        %s494 = smul.addr %s493, 4
        %s495 = scalar_lea.vmem %s3, %s494
      $region44: #{_lambda_.26} parent=39 // pred_fallthru
        _
    $region40: #{_lambda_.26} parent=5 // pred_fallthru
      _
  $region6: #{_lambda_.26} parent=0 // loop_footer
    %s13 = sadd.s32 1, %s9
  $region7: #{_lambda_.26} parent=0 // loop_footer_branch
    %8 = sbr.rel target = $region3
  $region8: #{_lambda_.26} parent=0 // loop_exit
    _

// kernel: _lambda_.27
$region0: #{_lambda_.27}
  #allocation0 [shape = 'u32[]', space=smem, size = 0x4, offset = 0x4, fixed_abs, tag = 'smem constant byte address 0x4 - core index']
  #allocation1 [shape = 'u32[144,128]{1,0:T(1,128)}', space=vmem, size = 0x12000, scoped, tag = 'internal scratch']
  %s0 = inlined_call_operand.vmem [shape: bf16[128,288], index: 0, kind: input, shape index: {}]
  %s1 = inlined_call_operand.vmem [shape: bf16[288,128], index: 1, kind: input, shape index: {}]
  %s2 = inlined_call_operand.vmem [shape: f32[1,128], index: 2, kind: input, shape index: {}]
  %s3 = inlined_call_operand.vmem [shape: bf16[128,128], index: 3, kind: output, shape index: {}]
  %s4 = sld [smem:[#allocation0]]
  $region45: #{_lambda_.27} parent=0
    _
  %s6 = ssub.s32 1, %s4
  %s7 = scalar_select 0, %s6, %s4
  loop: start=0, step=1, limit=4
  $region2: #{_lambda_.27} parent=0 // loop_pre_header
    _
  $region3: #{_lambda_.27} parent=0 // loop_header
    %s9 = sphi 0, %s13
    %p10 = scmp.ge.s32.totalorder %s9, 4
    %s19 = sphi 0, %s21
    %s22 = sphi 0, %s19
    %s23 = sphi 0, %s22
    %s39 = sphi 0, %s23
    %s43 = sphi 0, %s43
    %s45 = sphi 0, %s43
    %s46 = sphi 0, %s45
    %s60 = sphi 0, %s46
    %s64 = sphi 0, %s64
    %s66 = sphi 0, %s64
    %s67 = sphi 0, %s66
    %s81 = sphi 0, %s67
    %s87 = sphi 0, %s89
    %s90 = sphi 0, %s87
    %s91 = sphi 0, %s90
    %s107 = sphi 0, %s91
  $region4: #{_lambda_.27} parent=0 // loop_header_branch
    %12 = sbr.rel (%p10) target = $region8
  $region5: #{_lambda_.27} parent=0 // loop_body
    %s14 = ssub.s32 %s9, 1
    %s15 = ssub.s32 %s9, 2
    %s16 = sadd.s32 %s9, 1
    %s17 = ssub.s32 %s9, %s16
    %p18 = scmp.eq.s32.totalorder %s17, 0
    %s20 = sadd.s32 %s19, 1
    %s21 = scalar_select %p18, %s19, %s20
    %p24 = pneg %p18
    %p25 = scmp.eq.s32.totalorder %s9, 1
    %p26 = por %p24, %p25
    %p27 = scmp.ne.s32.totalorder %s19, %s22
    %p28 = scmp.eq.s32.totalorder %s9, 0
    %p29 = por %p27, %p28
    %p30 = scmp.ne.s32.totalorder %s19, %s22
    %p31 = scmp.eq.s32.totalorder %s14, 1
    %p32 = por %p30, %p31
    %p33 = scmp.ne.s32.totalorder %s22, %s23
    %p34 = scmp.eq.s32.totalorder %s14, 0
    %p35 = por %p33, %p34
    %p36 = scmp.ne.s32.totalorder %s22, %s23
    %p37 = scmp.eq.s32.totalorder %s15, 1
    %p38 = por %p36, %p37
    %p40 = scmp.ne.s32.totalorder %s23, %s39
    %p41 = scmp.eq.s32.totalorder %s15, 0
    %p42 = por %p40, %p41
    %s44 = sadd.s32 %s43, 1
    %p47 = scmp.eq.s32.totalorder %s9, 1
    %p48 = scmp.ne.s32.totalorder %s43, %s45
    %p49 = scmp.eq.s32.totalorder %s9, 0
    %p50 = por %p48, %p49
    %p51 = scmp.ne.s32.totalorder %s43, %s45
    %p52 = scmp.eq.s32.totalorder %s14, 1
    %p53 = por %p51, %p52
    %p54 = scmp.ne.s32.totalorder %s45, %s46
    %p55 = scmp.eq.s32.totalorder %s14, 0
    %p56 = por %p54, %p55
    %p57 = scmp.ne.s32.totalorder %s45, %s46
    %p58 = scmp.eq.s32.totalorder %s15, 1
    %p59 = por %p57, %p58
    %p61 = scmp.ne.s32.totalorder %s46, %s60
    %p62 = scmp.eq.s32.totalorder %s15, 0
    %p63 = por %p61, %p62
    %s65 = sadd.s32 %s64, 1
    %p68 = scmp.eq.s32.totalorder %s9, 1
    %p69 = scmp.ne.s32.totalorder %s64, %s66
    %p70 = scmp.eq.s32.totalorder %s9, 0
    %p71 = por %p69, %p70
    %p72 = scmp.ne.s32.totalorder %s64, %s66
    %p73 = scmp.eq.s32.totalorder %s14, 1
    %p74 = por %p72, %p73
    %p75 = scmp.ne.s32.totalorder %s66, %s67
    %p76 = scmp.eq.s32.totalorder %s14, 0
    %p77 = por %p75, %p76
    %p78 = scmp.ne.s32.totalorder %s66, %s67
    %p79 = scmp.eq.s32.totalorder %s15, 1
    %p80 = por %p78, %p79
    %p82 = scmp.ne.s32.totalorder %s67, %s81
    %p83 = scmp.eq.s32.totalorder %s15, 0
    %p84 = por %p82, %p83
    %s85 = ssub.s32 %s9, %s16
    %p86 = scmp.eq.s32.totalorder %s85, 0
    %s88 = sadd.s32 %s87, 1
    %s89 = scalar_select %p86, %s87, %s88
    %p92 = pneg %p86
    %p93 = scmp.eq.s32.totalorder %s9, 1
    %p94 = por %p92, %p93
    %p95 = scmp.ne.s32.totalorder %s87, %s90
    %p96 = scmp.eq.s32.totalorder %s9, 0
    %p97 = por %p95, %p96
    %p98 = scmp.ne.s32.totalorder %s87, %s90
    %p99 = scmp.eq.s32.totalorder %s14, 1
    %p100 = por %p98, %p99
    %p101 = scmp.ne.s32.totalorder %s90, %s91
    %p102 = scmp.eq.s32.totalorder %s14, 0
    %p103 = por %p101, %p102
    %p104 = scmp.ne.s32.totalorder %s90, %s91
    %p105 = scmp.eq.s32.totalorder %s15, 1
    %p106 = por %p104, %p105
    %p108 = scmp.ne.s32.totalorder %s91, %s107
    %p109 = scmp.eq.s32.totalorder %s15, 0
    %p110 = por %p108, %p109
    %p111 = scmp.le.s32.totalorder 1, %s9
    %p112 = scmp.lt.s32.totalorder %s9, 3
    %p113 = pnand %p111, %p112
    %p114 = pneg %p113
    // Predicated region
    $region9: #{_lambda_.27} parent=5 // pred_check
      _
    $region10: #{_lambda_.27} parent=5 // pred_check_branch
      %116 = sbr.rel (%p113) target = $region12
    $region11: #{_lambda_.27} parent=5 // pred_region
      %s117 = ssub.s32 %s9, 1
      // Predicated region
      $region13: #{_lambda_.27} parent=11 // pred_check
        %p118 = pneg %p56
      $region14: #{_lambda_.27} parent=11 // pred_check_branch
        %120 = sbr.rel (%p118) target = $region16
      $region15: #{_lambda_.27} parent=11 // pred_region
        _
      $region16: #{_lambda_.27} parent=11 // pred_fallthru
        _
      // Predicated region
      $region17: #{_lambda_.27} parent=11 // pred_check
        %p121 = pneg %p77
      $region18: #{_lambda_.27} parent=11 // pred_check_branch
        %123 = sbr.rel (%p121) target = $region20
      $region19: #{_lambda_.27} parent=11 // pred_region
        _
      $region20: #{_lambda_.27} parent=11 // pred_fallthru
        _
    $region12: #{_lambda_.27} parent=5 // pred_fallthru
      _
    %p124 = scmp.lt.s32.totalorder %s9, 2
    // Predicated region
    $region21: #{_lambda_.27} parent=5 // pred_check
      %p125 = pneg %p124
    $region22: #{_lambda_.27} parent=5 // pred_check_branch
      %127 = sbr.rel (%p125) target = $region24
    $region23: #{_lambda_.27} parent=5 // pred_region
      // Predicated region
      $region25: #{_lambda_.27} parent=23 // pred_check
        %p128 = pneg %p29
      $region26: #{_lambda_.27} parent=23 // pred_check_branch
        %130 = sbr.rel (%p128) target = $region28
      $region27: #{_lambda_.27} parent=23 // pred_region
        %s131 = smul.u32 8, %s9
        %p132 = scmp.lt.s32.totalorder %s131, 15
        %s133 = scalar_select %p132, %s131, 15
        %s134 = smul.addr %s133, 3
        %s135 = smul.addr %s134, 4
        %s136 = scalar_lea.vmem %s0, %s135
        %s137 = smul.u32 8, %s9
      $region28: #{_lambda_.27} parent=23 // pred_fallthru
        _
    $region24: #{_lambda_.27} parent=5 // pred_fallthru
      _
    %p138 = scmp.le.s32.totalorder 1, %s9
    %p139 = scmp.lt.s32.totalorder %s9, 3
    %p140 = pnand %p138, %p139
    %p141 = pneg %p140
    // Predicated region
    $region29: #{_lambda_.27} parent=5 // pred_check
      _
    $region30: #{_lambda_.27} parent=5 // pred_check_branch
      %143 = sbr.rel (%p140) target = $region32
    $region31: #{_lambda_.27} parent=5 // pred_region
      %s144 = ssub.s32 %s9, 1
      %s145 = smul.u32 8, %s14
      %p146 = scmp.lt.s32.totalorder %s145, 15
      %s147 = scalar_select %p146, %s145, 15
      %s148 = smul.addr %s147, 3
      %s149 = smul.addr %s148, 4
      %s150 = scalar_lea.vmem %s0, %s149
      %p151 = pneg %p35
      %p152 = pneg %p32
      %p153 = pneg %p56
      %p154 = pneg %p53
      %p155 = pneg %p77
      %p156 = pneg %p74
      %p157 = pneg %p103
      %p158 = pneg %p100
      %s159 = smul.u32 8, %s14
      %p160 = scmp.lt.s32.totalorder %s159, 15
      %s161 = scalar_select %p160, %s159, 15
      %s162 = smul.addr %s161, 4
      %s163 = scalar_lea.vmem %s3, %s162
      %s164 = smul.u32 8, %s14
      %p165 = scmp.lt.s32.totalorder %s164, 15
      %s166 = scalar_select %p165, %s164, 15
      %s167 = smul.addr %s166, 3
      %s168 = smul.addr %s167, 4
      %s169 = scalar_lea.vmem %s0, %s168
      %s170 = smul.u32 8, %s14
      %s171 = smul.u32 8, %s14
      %p172 = scmp.lt.s32.totalorder %s171, 15
      %s173 = scalar_select %p172, %s171, 15
      %s174 = smul.addr %s173, 4
      %s175 = scalar_lea.vmem %s3, %s174
      %s176 = smul.u32 8, %s14
      %v178 = vld [vmem:[%s169] sm:$0xff]
      %v179 = vld [vmem:[%s169 + $0x8] sm:$0xf]
      %v180 = vld [vmem:[%s169 + $0xc] sm:$0xff]
      %v181 = vld [vmem:[%s169 + $0x14] sm:$0xf]
      %v182 = vld [vmem:[%s169 + $0x18] sm:$0xff]
      %v183 = vld [vmem:[%s169 + $0x20] sm:$0xf]
      %v184 = vld [vmem:[%s169 + $0x24] sm:$0xff]
      %v185 = vld [vmem:[%s169 + $0x2c] sm:$0xf]
      %v186 = vld [vmem:[%s169 + $0x30] sm:$0xff]
      %v187 = vld [vmem:[%s169 + $0x38] sm:$0xf]
      %v188 = vld [vmem:[%s169 + $0x3c] sm:$0xff]
      %v189 = vld [vmem:[%s169 + $0x44] sm:$0xf]
      %v190 = vld [vmem:[%s169 + $0x48] sm:$0xff]
      %v191 = vld [vmem:[%s169 + $0x50] sm:$0xf]
      %v192 = vld [vmem:[%s169 + $0x54] sm:$0xff]
      %v193 = vld [vmem:[%s169 + $0x5c] sm:$0xf]
      %v194 = vld [vmem:[%s1] sm:$0xf]
      %v195 = vld [vmem:[%s1 + $0x4] sm:$0xf]
      %v196 = vld [vmem:[%s1 + $0x8] sm:$0xf]
      %v197 = vld [vmem:[%s1 + $0xc] sm:$0xf]
      %v198 = vld [vmem:[%s1 + $0x10] sm:$0xf]
      %v199 = vld [vmem:[%s1 + $0x14] sm:$0xf]
      %v200 = vld [vmem:[%s1 + $0x18] sm:$0xf]
      %v201 = vld [vmem:[%s1 + $0x1c] sm:$0xf]
      %v202 = vld [vmem:[%s1 + $0x20] sm:$0xf]
      %v203 = vld [vmem:[%s1 + $0x24] sm:$0xf]
      %v204 = vld [vmem:[%s1 + $0x28] sm:$0xf]
      %v205 = vld [vmem:[%s1 + $0x2c] sm:$0xf]
      %v206 = vld [vmem:[%s1 + $0x30] sm:$0xf]
      %v207 = vld [vmem:[%s1 + $0x34] sm:$0xf]
      %v208 = vld [vmem:[%s1 + $0x38] sm:$0xf]
      %v209 = vld [vmem:[%s1 + $0x3c] sm:$0xf]
      %v210 = vld [vmem:[%s1 + $0x40] sm:$0xf]
      %v211 = vld [vmem:[%s1 + $0x44] sm:$0xf]
      %v212 = vld [vmem:[%s1 + $0x48] sm:$0xf]
      %v213 = vld [vmem:[%s1 + $0x4c] sm:$0xf]
      %v214 = vld [vmem:[%s1 + $0x50] sm:$0xf]
      %v215 = vld [vmem:[%s1 + $0x54] sm:$0xf]
      %v216 = vld [vmem:[%s1 + $0x58] sm:$0xf]
      %v217 = vld [vmem:[%s1 + $0x5c] sm:$0xf]
      %v218 = vld [vmem:[%s1 + $0x60] sm:$0xf]
      %v219 = vld [vmem:[%s1 + $0x64] sm:$0xf]
      %v220 = vld [vmem:[%s1 + $0x68] sm:$0xf]
      %v221 = vld [vmem:[%s1 + $0x6c] sm:$0xf]
      %v222 = vld [vmem:[%s1 + $0x70] sm:$0xf]
      %v223 = vld [vmem:[%s1 + $0x74] sm:$0xf]
      %v224 = vld [vmem:[%s1 + $0x78] sm:$0xf]
      %v225 = vld [vmem:[%s1 + $0x7c] sm:$0xf]
      %v226 = vld [vmem:[%s1 + $0x80] sm:$0xf]
      %v227 = vld [vmem:[%s1 + $0x84] sm:$0xf]
      %v228 = vld [vmem:[%s1 + $0x88] sm:$0xf]
      %v229 = vld [vmem:[%s1 + $0x8c] sm:$0xf]
      %v230 = vld [vmem:[%s2] sm:$0x1]
      %v232 = vlaneseq
      %v233 = vshrl.u32 %v232, 7
      %v234 = vsub.s32 0, %v233
      %v235 = vrot.slane %v230, %v234
      %v253 = vunpack.c.l.b16 %v178
      %v254 = vunpack.c.h.b16 %v178
      %v255 = vunpack.c.l.b16 %v179
      %v256 = vunpack.c.l.b16 %v180
      %v257 = vunpack.c.h.b16 %v180
      %v258 = vunpack.c.l.b16 %v181
      %v259 = vunpack.c.l.b16 %v182
      %v260 = vunpack.c.h.b16 %v182
      %v261 = vunpack.c.l.b16 %v183
      %v262 = vunpack.c.l.b16 %v184
      %v263 = vunpack.c.h.b16 %v184
      %v264 = vunpack.c.l.b16 %v185
      %v265 = vunpack.c.l.b16 %v186
      %v266 = vunpack.c.h.b16 %v186
      %v267 = vunpack.c.l.b16 %v187
      %v268 = vunpack.c.l.b16 %v188
      %v269 = vunpack.c.h.b16 %v188
      %v270 = vunpack.c.l.b16 %v189
      %v271 = vunpack.c.l.b16 %v190
      %v272 = vunpack.c.h.b16 %v190
      %v273 = vunpack.c.l.b16 %v191
      %v274 = vunpack.c.l.b16 %v192
      %v275 = vunpack.c.h.b16 %v192
      %v276 = vunpack.c.l.b16 %v193
      %v277 = vpack.c.b16 %v256, %v253
      %v278 = vpack.c.b16 %v257, %v254
      %v279 = vpack.c.b16 %v258, %v255
      %v280 = vpack.c.b16 %v262, %v259
      %v281 = vpack.c.b16 %v263, %v260
      %v282 = vpack.c.b16 %v264, %v261
      %v283 = vpack.c.b16 %v268, %v265
      %v284 = vpack.c.b16 %v269, %v266
      %v285 = vpack.c.b16 %v270, %v267
      %v286 = vpack.c.b16 %v274, %v271
      %v287 = vpack.c.b16 %v275, %v272
      %v288 = vpack.c.b16 %v276, %v273
      %v333 = vunpack.c.l.b16 %v194
      %v334 = vunpack.c.l.b16 %v195
      %v335 = vunpack.c.l.b16 %v196
      %v336 = vunpack.c.l.b16 %v197
      %v337 = vunpack.c.l.b16 %v198
      %v338 = vunpack.c.l.b16 %v199
      %v339 = vunpack.c.l.b16 %v200
      %v340 = vunpack.c.l.b16 %v201
      %v341 = vunpack.c.l.b16 %v202
      %v342 = vunpack.c.l.b16 %v203
      %v343 = vunpack.c.l.b16 %v204
      %v344 = vunpack.c.l.b16 %v205
      %v345 = vunpack.c.l.b16 %v206
      %v346 = vunpack.c.l.b16 %v207
      %v347 = vunpack.c.l.b16 %v208
      %v348 = vunpack.c.l.b16 %v209
      %v349 = vunpack.c.l.b16 %v210
      %v350 = vunpack.c.l.b16 %v211
      %v351 = vunpack.c.l.b16 %v212
      %v352 = vunpack.c.l.b16 %v213
      %v353 = vunpack.c.l.b16 %v214
      %v354 = vunpack.c.l.b16 %v215
      %v355 = vunpack.c.l.b16 %v216
      %v356 = vunpack.c.l.b16 %v217
      %v357 = vunpack.c.l.b16 %v218
      %v358 = vunpack.c.l.b16 %v219
      %v359 = vunpack.c.l.b16 %v220
      %v360 = vunpack.c.l.b16 %v221
      %v361 = vunpack.c.l.b16 %v222
      %v362 = vunpack.c.l.b16 %v223
      %v363 = vunpack.c.l.b16 %v224
      %v364 = vunpack.c.l.b16 %v225
      %v365 = vunpack.c.l.b16 %v226
      %v366 = vunpack.c.l.b16 %v227
      %v367 = vunpack.c.l.b16 %v228
      %v368 = vunpack.c.l.b16 %v229
      %v369 = vpack.c.b16 %v334, %v333
      %v370 = vpack.c.b16 %v336, %v335
      %v371 = vpack.c.b16 %v338, %v337
      %v372 = vpack.c.b16 %v340, %v339
      %v373 = vpack.c.b16 %v342, %v341
      %v374 = vpack.c.b16 %v344, %v343
      %v375 = vpack.c.b16 %v346, %v345
      %v376 = vpack.c.b16 %v348, %v347
      %v377 = vpack.c.b16 %v350, %v349
      %v378 = vpack.c.b16 %v352, %v351
      %v379 = vpack.c.b16 %v354, %v353
      %v380 = vpack.c.b16 %v356, %v355
      %v381 = vpack.c.b16 %v358, %v357
      %v382 = vpack.c.b16 %v360, %v359
      %v383 = vpack.c.b16 %v362, %v361
      %v384 = vpack.c.b16 %v364, %v363
      %v385 = vpack.c.b16 %v366, %v365
      %v386 = vpack.c.b16 %v368, %v367
      %vm405 = vcmask 261120
      %v407 = vsel %vm405, %v279, 0
      %v410 = vsel %vm405, %v282, 0
      %v413 = vsel %vm405, %v285, 0
      %v416 = vsel %vm405, %v288, 0
      %418 = vmatprep.subr.bf16.mxu0 0
      %419 = vmatpush1.bf16.msra.mxu0 %v376
      %420 = vmatprep.subr.bf16.mxu0 0
      %421 = vmatpush1.bf16.msra.mxu0 %v375
      %422 = vmatprep.subr.bf16.mxu0 0
      %423 = vmatpush1.bf16.msra.mxu0 %v374
      %424 = vmatprep.subr.bf16.mxu0 0
      %425 = vmatpush1.bf16.msra.mxu0 %v373
      %426 = vmatprep.subr.bf16.mxu0 0
      %427 = vmatpush1.bf16.msra.mxu0 %v372
      %428 = vmatprep.subr.bf16.mxu0 0
      %429 = vmatpush1.bf16.msra.mxu0 %v371
      %430 = vmatprep.subr.bf16.mxu0 0
      %431 = vmatpush1.bf16.msra.mxu0 %v370
      %432 = vmatprep.subr.bf16.mxu0 0
      %433 = vmatpush1.bf16.msra.mxu0 %v369
      %434 = vmatprep.subr.bf16.mxu0 0
      %435 = vmatpush2.bf16.msra.mxu0 %v384
      %436 = vmatprep.subr.bf16.mxu0 0
      %437 = vmatpush2.bf16.msra.mxu0 %v383
      %438 = vmatprep.subr.bf16.mxu0 0
      %439 = vmatpush2.bf16.msra.mxu0 %v382
      %440 = vmatprep.subr.bf16.mxu0 0
      %441 = vmatpush2.bf16.msra.mxu0 %v381
      %442 = vmatprep.subr.bf16.mxu0 0
      %443 = vmatpush2.bf16.msra.mxu0 %v380
      %444 = vmatprep.subr.bf16.mxu0 0
      %445 = vmatpush2.bf16.msra.mxu0 %v379
      %446 = vmatprep.subr.bf16.mxu0 0
      %447 = vmatpush2.bf16.msra.mxu0 %v378
      %448 = vmatprep.subr.bf16.mxu0 0
      %449 = vmatpush2.bf16.msra.mxu0 %v377
      %450 = vmatprep.mubr.bf16.mxu0 %v278
      %451 = vmatmul.mubr.bf16.gmra.mxu0 %v277
      %v452 = vpop.f32.mrf.mxu0
      %v453 = vadd.f32 %v235, %v452
      %v454 = vpop.f32.mrf.mxu0
      %v455 = vpop.f32.mrf.mxu0
      %v456 = vadd.f32 %v235, %v455
      %v457 = vpop.f32.mrf.mxu0
      %458 = vmatprep.mubr.bf16.mxu0 %v281
      %459 = vmatmul.mubr.bf16.gmra.mxu0 %v280
      %v460 = vpop.f32.mrf.mxu0
      %v461 = vadd.f32 %v235, %v460
      %v462 = vpop.f32.mrf.mxu0
      %v463 = vpop.f32.mrf.mxu0
      %v464 = vadd.f32 %v235, %v463
      %v465 = vpop.f32.mrf.mxu0
      %466 = vmatprep.mubr.bf16.mxu0 %v284
      %467 = vmatmul.mubr.bf16.gmra.mxu0 %v283
      %v468 = vpop.f32.mrf.mxu0
      %v469 = vadd.f32 %v235, %v468
      %v470 = vpop.f32.mrf.mxu0
      %v471 = vpop.f32.mrf.mxu0
      %v472 = vadd.f32 %v235, %v471
      %v473 = vpop.f32.mrf.mxu0
      %474 = vmatprep.mubr.bf16.mxu0 %v287
      %475 = vmatmul.mubr.bf16.gmra.mxu0 %v286
      %v476 = vpop.f32.mrf.mxu0
      %v477 = vadd.f32 %v235, %v476
      %v478 = vpop.f32.mrf.mxu0
      %v479 = vpop.f32.mrf.mxu0
      %v480 = vadd.f32 %v235, %v479
      %v481 = vpop.f32.mrf.mxu0
      %482 = vdwg.mxu0
      %483 = vmatprep.subr.bf16.mxu0 0
      %484 = vmatpush1.bf16.msra.mxu0 0
      %485 = vmatprep.subr.bf16.mxu0 0
      %486 = vmatpush1.bf16.msra.mxu0 0
      %487 = vmatprep.subr.bf16.mxu0 0
      %488 = vmatpush1.bf16.msra.mxu0 0
      %489 = vmatprep.subr.bf16.mxu0 0
      %490 = vmatpush1.bf16.msra.mxu0 0
      %491 = vmatprep.subr.bf16.mxu0 0
      %492 = vmatpush1.bf16.msra.mxu0 0
      %493 = vmatprep.subr.bf16.mxu0 0
      %494 = vmatpush1.bf16.msra.mxu0 0
      %495 = vmatprep.subr.bf16.mxu0 0
      %496 = vmatpush1.bf16.msra.mxu0 %v386
      %497 = vmatprep.subr.bf16.mxu0 0
      %498 = vmatpush1.bf16.msra.mxu0 %v385
      %499 = vmatprep.subr.bf16.mxu0 0
      %500 = vmatpush2.bf16.msra.mxu0 0
      %501 = vmatprep.subr.bf16.mxu0 0
      %502 = vmatpush2.bf16.msra.mxu0 0
      %503 = vmatprep.subr.bf16.mxu0 0
      %504 = vmatpush2.bf16.msra.mxu0 0
      %505 = vmatprep.subr.bf16.mxu0 0
      %506 = vmatpush2.bf16.msra.mxu0 0
      %507 = vmatprep.subr.bf16.mxu0 0
      %508 = vmatpush2.bf16.msra.mxu0 0
      %509 = vmatprep.subr.bf16.mxu0 0
      %510 = vmatpush2.bf16.msra.mxu0 0
      %511 = vmatprep.subr.bf16.mxu0 0
      %512 = vmatpush2.bf16.msra.mxu0 0
      %513 = vmatprep.subr.bf16.mxu0 0
      %514 = vmatpush2.bf16.msra.mxu0 0
      %515 = vmatprep.mubr.bf16.mxu0 0
      %516 = vmatmul.mubr.bf16.gmra.mxu0 %v407
      %v517 = vpop.f32.mrf.mxu0
      %v518 = vadd.f32 %v453, %v517
      %v519 = vpop.f32.mrf.mxu0
      %v520 = vpop.f32.mrf.mxu0
      %v521 = vadd.f32 %v456, %v520
      %v522 = vpop.f32.mrf.mxu0
      %523 = vmatprep.mubr.bf16.mxu0 0
      %524 = vmatmul.mubr.bf16.gmra.mxu0 %v410
      %v525 = vpop.f32.mrf.mxu0
      %v526 = vadd.f32 %v461, %v525
      %v527 = vpop.f32.mrf.mxu0
      %v528 = vpop.f32.mrf.mxu0
      %v529 = vadd.f32 %v464, %v528
      %v530 = vpop.f32.mrf.mxu0
      %531 = vmatprep.mubr.bf16.mxu0 0
      %532 = vmatmul.mubr.bf16.gmra.mxu0 %v413
      %v533 = vpop.f32.mrf.mxu0
      %v534 = vadd.f32 %v469, %v533
      %v535 = vpop.f32.mrf.mxu0
      %v536 = vpop.f32.mrf.mxu0
      %v537 = vadd.f32 %v472, %v536
      %v538 = vpop.f32.mrf.mxu0
      %539 = vmatprep.mubr.bf16.mxu0 0
      %540 = vmatmul.mubr.bf16.gmra.mxu0 %v416
      %v541 = vpop.f32.mrf.mxu0
      %v542 = vadd.f32 %v477, %v541
      %v543 = vpop.f32.mrf.mxu0
      %v544 = vpop.f32.mrf.mxu0
      %v545 = vadd.f32 %v480, %v544
      %v546 = vpop.f32.mrf.mxu0
      %547 = vdwg.mxu0
      %v548 = vpack.c.bf16 %v521, %v518
      %v549 = vpack.c.bf16 %v529, %v526
      %v550 = vpack.c.bf16 %v537, %v534
      %v551 = vpack.c.bf16 %v545, %v542
      %v556 = vunpack.c.l.b16 %v548
      %v557 = vunpack.c.h.b16 %v548
      %v558 = vunpack.c.l.b16 %v549
      %v559 = vunpack.c.h.b16 %v549
      %v560 = vunpack.c.l.b16 %v550
      %v561 = vunpack.c.h.b16 %v550
      %v562 = vunpack.c.l.b16 %v551
      %v563 = vunpack.c.h.b16 %v551
      %v564 = vpack.c.b16 %v556, %v556
      %v565 = vpack.c.b16 %v557, %v557
      %v566 = vpack.c.b16 %v558, %v558
      %v567 = vpack.c.b16 %v559, %v559
      %v568 = vpack.c.b16 %v560, %v560
      %v569 = vpack.c.b16 %v561, %v561
      %v570 = vpack.c.b16 %v562, %v562
      %v571 = vpack.c.b16 %v563, %v563
      %580 = vst [vmem:[%s175] sm:$0xf] %v564
      %581 = vst [vmem:[%s175 + $0x4] sm:$0xf] %v565
      %582 = vst [vmem:[%s175 + $0x8] sm:$0xf] %v566
      %583 = vst [vmem:[%s175 + $0xc] sm:$0xf] %v567
      %584 = vst [vmem:[%s175 + $0x10] sm:$0xf] %v568
      %585 = vst [vmem:[%s175 + $0x14] sm:$0xf] %v569
      %586 = vst [vmem:[%s175 + $0x18] sm:$0xf] %v570
      %587 = vst [vmem:[%s175 + $0x1c] sm:$0xf] %v571
      %s588 = smul.u32 8, %s14
      %p589 = scmp.lt.s32.totalorder %s588, 15
      %s590 = scalar_select %p589, %s588, 15
      %s591 = smul.addr %s590, 4
      %s592 = scalar_lea.vmem %s3, %s591
      // Predicated region
      $region33: #{_lambda_.27} parent=31 // pred_check
        %p593 = pneg %p100
      $region34: #{_lambda_.27} parent=31 // pred_check_branch
        %595 = sbr.rel (%p593) target = $region36
      $region35: #{_lambda_.27} parent=31 // pred_region
        %s596 = smul.u32 8, %s14
      $region36: #{_lambda_.27} parent=31 // pred_fallthru
        _
    $region32: #{_lambda_.27} parent=5 // pred_fallthru
      _
    %p597 = scmp.le.s32.totalorder 2, %s9
    // Predicated region
    $region37: #{_lambda_.27} parent=5 // pred_check
      %p598 = pneg %p597
    $region38: #{_lambda_.27} parent=5 // pred_check_branch
      %600 = sbr.rel (%p598) target = $region40
    $region39: #{_lambda_.27} parent=5 // pred_region
      %s601 = ssub.s32 %s9, 2
      // Predicated region
      $region41: #{_lambda_.27} parent=39 // pred_check
        %p602 = pneg %p106
      $region42: #{_lambda_.27} parent=39 // pred_check_branch
        %604 = sbr.rel (%p602) target = $region44
      $region43: #{_lambda_.27} parent=39 // pred_region
        %s605 = smul.u32 8, %s15
        %p606 = scmp.lt.s32.totalorder %s605, 15
        %s607 = scalar_select %p606, %s605, 15
        %s608 = smul.addr %s607, 4
        %s609 = scalar_lea.vmem %s3, %s608
      $region44: #{_lambda_.27} parent=39 // pred_fallthru
        _
    $region40: #{_lambda_.27} parent=5 // pred_fallthru
      _
  $region6: #{_lambda_.27} parent=0 // loop_footer
    %s13 = sadd.s32 1, %s9
  $region7: #{_lambda_.27} parent=0 // loop_footer_branch
    %8 = sbr.rel target = $region3
  $region8: #{_lambda_.27} parent=0 // loop_exit
    _

// kernel: _lambda_.28
$region0: #{_lambda_.28}
  #allocation0 [shape = 'u32[]', space=smem, size = 0x4, offset = 0x4, fixed_abs, tag = 'smem constant byte address 0x4 - core index']
  #allocation1 [shape = 'u32[144,128]{1,0:T(1,128)}', space=vmem, size = 0x12000, scoped, tag = 'internal scratch']
  %s0 = inlined_call_operand.vmem [shape: bf16[32,512], index: 0, kind: input, shape index: {}]
  %s1 = inlined_call_operand.vmem [shape: bf16[512,128], index: 1, kind: input, shape index: {}]
  %s2 = inlined_call_operand.vmem [shape: f32[1,128], index: 2, kind: input, shape index: {}]
  %s3 = inlined_call_operand.vmem [shape: bf16[32,128], index: 3, kind: output, shape index: {}]
  %s4 = sld [smem:[#allocation0]]
  $region45: #{_lambda_.28} parent=0
    _
  %s6 = ssub.s32 1, %s4
  %s7 = scalar_select 0, %s6, %s4
  loop: start=0, step=1, limit=4
  $region2: #{_lambda_.28} parent=0 // loop_pre_header
    _
  $region3: #{_lambda_.28} parent=0 // loop_header
    %s9 = sphi 0, %s13
    %p10 = scmp.ge.s32.totalorder %s9, 4
    %s19 = sphi 0, %s21
    %s22 = sphi 0, %s19
    %s23 = sphi 0, %s22
    %s39 = sphi 0, %s23
    %s43 = sphi 0, %s43
    %s45 = sphi 0, %s43
    %s46 = sphi 0, %s45
    %s60 = sphi 0, %s46
    %s64 = sphi 0, %s64
    %s66 = sphi 0, %s64
    %s67 = sphi 0, %s66
    %s81 = sphi 0, %s67
    %s87 = sphi 0, %s89
    %s90 = sphi 0, %s87
    %s91 = sphi 0, %s90
    %s107 = sphi 0, %s91
  $region4: #{_lambda_.28} parent=0 // loop_header_branch
    %12 = sbr.rel (%p10) target = $region8
  $region5: #{_lambda_.28} parent=0 // loop_body
    %s14 = ssub.s32 %s9, 1
    %s15 = ssub.s32 %s9, 2
    %s16 = sadd.s32 %s9, 1
    %s17 = ssub.s32 %s9, %s16
    %p18 = scmp.eq.s32.totalorder %s17, 0
    %s20 = sadd.s32 %s19, 1
    %s21 = scalar_select %p18, %s19, %s20
    %p24 = pneg %p18
    %p25 = scmp.eq.s32.totalorder %s9, 1
    %p26 = por %p24, %p25
    %p27 = scmp.ne.s32.totalorder %s19, %s22
    %p28 = scmp.eq.s32.totalorder %s9, 0
    %p29 = por %p27, %p28
    %p30 = scmp.ne.s32.totalorder %s19, %s22
    %p31 = scmp.eq.s32.totalorder %s14, 1
    %p32 = por %p30, %p31
    %p33 = scmp.ne.s32.totalorder %s22, %s23
    %p34 = scmp.eq.s32.totalorder %s14, 0
    %p35 = por %p33, %p34
    %p36 = scmp.ne.s32.totalorder %s22, %s23
    %p37 = scmp.eq.s32.totalorder %s15, 1
    %p38 = por %p36, %p37
    %p40 = scmp.ne.s32.totalorder %s23, %s39
    %p41 = scmp.eq.s32.totalorder %s15, 0
    %p42 = por %p40, %p41
    %s44 = sadd.s32 %s43, 1
    %p47 = scmp.eq.s32.totalorder %s9, 1
    %p48 = scmp.ne.s32.totalorder %s43, %s45
    %p49 = scmp.eq.s32.totalorder %s9, 0
    %p50 = por %p48, %p49
    %p51 = scmp.ne.s32.totalorder %s43, %s45
    %p52 = scmp.eq.s32.totalorder %s14, 1
    %p53 = por %p51, %p52
    %p54 = scmp.ne.s32.totalorder %s45, %s46
    %p55 = scmp.eq.s32.totalorder %s14, 0
    %p56 = por %p54, %p55
    %p57 = scmp.ne.s32.totalorder %s45, %s46
    %p58 = scmp.eq.s32.totalorder %s15, 1
    %p59 = por %p57, %p58
    %p61 = scmp.ne.s32.totalorder %s46, %s60
    %p62 = scmp.eq.s32.totalorder %s15, 0
    %p63 = por %p61, %p62
    %s65 = sadd.s32 %s64, 1
    %p68 = scmp.eq.s32.totalorder %s9, 1
    %p69 = scmp.ne.s32.totalorder %s64, %s66
    %p70 = scmp.eq.s32.totalorder %s9, 0
    %p71 = por %p69, %p70
    %p72 = scmp.ne.s32.totalorder %s64, %s66
    %p73 = scmp.eq.s32.totalorder %s14, 1
    %p74 = por %p72, %p73
    %p75 = scmp.ne.s32.totalorder %s66, %s67
    %p76 = scmp.eq.s32.totalorder %s14, 0
    %p77 = por %p75, %p76
    %p78 = scmp.ne.s32.totalorder %s66, %s67
    %p79 = scmp.eq.s32.totalorder %s15, 1
    %p80 = por %p78, %p79
    %p82 = scmp.ne.s32.totalorder %s67, %s81
    %p83 = scmp.eq.s32.totalorder %s15, 0
    %p84 = por %p82, %p83
    %s85 = ssub.s32 %s9, %s16
    %p86 = scmp.eq.s32.totalorder %s85, 0
    %s88 = sadd.s32 %s87, 1
    %s89 = scalar_select %p86, %s87, %s88
    %p92 = pneg %p86
    %p93 = scmp.eq.s32.totalorder %s9, 1
    %p94 = por %p92, %p93
    %p95 = scmp.ne.s32.totalorder %s87, %s90
    %p96 = scmp.eq.s32.totalorder %s9, 0
    %p97 = por %p95, %p96
    %p98 = scmp.ne.s32.totalorder %s87, %s90
    %p99 = scmp.eq.s32.totalorder %s14, 1
    %p100 = por %p98, %p99
    %p101 = scmp.ne.s32.totalorder %s90, %s91
    %p102 = scmp.eq.s32.totalorder %s14, 0
    %p103 = por %p101, %p102
    %p104 = scmp.ne.s32.totalorder %s90, %s91
    %p105 = scmp.eq.s32.totalorder %s15, 1
    %p106 = por %p104, %p105
    %p108 = scmp.ne.s32.totalorder %s91, %s107
    %p109 = scmp.eq.s32.totalorder %s15, 0
    %p110 = por %p108, %p109
    %p111 = scmp.le.s32.totalorder 1, %s9
    %p112 = scmp.lt.s32.totalorder %s9, 3
    %p113 = pnand %p111, %p112
    %p114 = pneg %p113
    // Predicated region
    $region9: #{_lambda_.28} parent=5 // pred_check
      _
    $region10: #{_lambda_.28} parent=5 // pred_check_branch
      %116 = sbr.rel (%p113) target = $region12
    $region11: #{_lambda_.28} parent=5 // pred_region
      %s117 = ssub.s32 %s9, 1
      // Predicated region
      $region13: #{_lambda_.28} parent=11 // pred_check
        %p118 = pneg %p56
      $region14: #{_lambda_.28} parent=11 // pred_check_branch
        %120 = sbr.rel (%p118) target = $region16
      $region15: #{_lambda_.28} parent=11 // pred_region
        _
      $region16: #{_lambda_.28} parent=11 // pred_fallthru
        _
      // Predicated region
      $region17: #{_lambda_.28} parent=11 // pred_check
        %p121 = pneg %p77
      $region18: #{_lambda_.28} parent=11 // pred_check_branch
        %123 = sbr.rel (%p121) target = $region20
      $region19: #{_lambda_.28} parent=11 // pred_region
        _
      $region20: #{_lambda_.28} parent=11 // pred_fallthru
        _
    $region12: #{_lambda_.28} parent=5 // pred_fallthru
      _
    %p124 = scmp.lt.s32.totalorder %s9, 2
    // Predicated region
    $region21: #{_lambda_.28} parent=5 // pred_check
      %p125 = pneg %p124
    $region22: #{_lambda_.28} parent=5 // pred_check_branch
      %127 = sbr.rel (%p125) target = $region24
    $region23: #{_lambda_.28} parent=5 // pred_region
      // Predicated region
      $region25: #{_lambda_.28} parent=23 // pred_check
        %p128 = pneg %p29
      $region26: #{_lambda_.28} parent=23 // pred_check_branch
        %130 = sbr.rel (%p128) target = $region28
      $region27: #{_lambda_.28} parent=23 // pred_region
        %s131 = smul.u32 2, %s9
        %p132 = scmp.lt.s32.totalorder %s131, 3
        %s133 = scalar_select %p132, %s131, 3
        %s134 = smul.addr %s133, 4
        %s135 = smul.addr %s134, 4
        %s136 = scalar_lea.vmem %s0, %s135
        %s137 = smul.u32 2, %s9
      $region28: #{_lambda_.28} parent=23 // pred_fallthru
        _
    $region24: #{_lambda_.28} parent=5 // pred_fallthru
      _
    %p138 = scmp.le.s32.totalorder 1, %s9
    %p139 = scmp.lt.s32.totalorder %s9, 3
    %p140 = pnand %p138, %p139
    %p141 = pneg %p140
    // Predicated region
    $region29: #{_lambda_.28} parent=5 // pred_check
      _
    $region30: #{_lambda_.28} parent=5 // pred_check_branch
      %143 = sbr.rel (%p140) target = $region32
    $region31: #{_lambda_.28} parent=5 // pred_region
      %s144 = ssub.s32 %s9, 1
      %s145 = smul.u32 2, %s14
      %p146 = scmp.lt.s32.totalorder %s145, 3
      %s147 = scalar_select %p146, %s145, 3
      %s148 = smul.addr %s147, 4
      %s149 = smul.addr %s148, 4
      %s150 = scalar_lea.vmem %s0, %s149
      %p151 = pneg %p35
      %p152 = pneg %p32
      %p153 = pneg %p56
      %p154 = pneg %p53
      %p155 = pneg %p77
      %p156 = pneg %p74
      %p157 = pneg %p103
      %p158 = pneg %p100
      %s159 = smul.u32 2, %s14
      %p160 = scmp.lt.s32.totalorder %s159, 3
      %s161 = scalar_select %p160, %s159, 3
      %s162 = smul.addr %s161, 4
      %s163 = scalar_lea.vmem %s3, %s162
      %s164 = smul.u32 2, %s14
      %p165 = scmp.lt.s32.totalorder %s164, 3
      %s166 = scalar_select %p165, %s164, 3
      %s167 = smul.addr %s166, 4
      %s168 = smul.addr %s167, 4
      %s169 = scalar_lea.vmem %s0, %s168
      %s170 = smul.u32 2, %s14
      %s171 = smul.u32 2, %s14
      %p172 = scmp.lt.s32.totalorder %s171, 3
      %s173 = scalar_select %p172, %s171, 3
      %s174 = smul.addr %s173, 4
      %s175 = scalar_lea.vmem %s3, %s174
      %s176 = smul.u32 2, %s14
      %v178 = vld [vmem:[%s169] sm:$0xff]
      %v179 = vld [vmem:[%s169 + $0x8] sm:$0xff]
      %v180 = vld [vmem:[%s169 + $0x10] sm:$0xff]
      %v181 = vld [vmem:[%s169 + $0x18] sm:$0xff]
      %v182 = vld [vmem:[%s1] sm:$0xf]
      %v183 = vld [vmem:[%s1 + $0x4] sm:$0xf]
      %v184 = vld [vmem:[%s1 + $0x8] sm:$0xf]
      %v185 = vld [vmem:[%s1 + $0xc] sm:$0xf]
      %v186 = vld [vmem:[%s1 + $0x10] sm:$0xf]
      %v187 = vld [vmem:[%s1 + $0x14] sm:$0xf]
      %v188 = vld [vmem:[%s1 + $0x18] sm:$0xf]
      %v189 = vld [vmem:[%s1 + $0x1c] sm:$0xf]
      %v190 = vld [vmem:[%s1 + $0x20] sm:$0xf]
      %v191 = vld [vmem:[%s1 + $0x24] sm:$0xf]
      %v192 = vld [vmem:[%s1 + $0x28] sm:$0xf]
      %v193 = vld [vmem:[%s1 + $0x2c] sm:$0xf]
      %v194 = vld [vmem:[%s1 + $0x30] sm:$0xf]
      %v195 = vld [vmem:[%s1 + $0x34] sm:$0xf]
      %v196 = vld [vmem:[%s1 + $0x38] sm:$0xf]
      %v197 = vld [vmem:[%s1 + $0x3c] sm:$0xf]
      %v198 = vld [vmem:[%s1 + $0x40] sm:$0xf]
      %v199 = vld [vmem:[%s1 + $0x44] sm:$0xf]
      %v200 = vld [vmem:[%s1 + $0x48] sm:$0xf]
      %v201 = vld [vmem:[%s1 + $0x4c] sm:$0xf]
      %v202 = vld [vmem:[%s1 + $0x50] sm:$0xf]
      %v203 = vld [vmem:[%s1 + $0x54] sm:$0xf]
      %v204 = vld [vmem:[%s1 + $0x58] sm:$0xf]
      %v205 = vld [vmem:[%s1 + $0x5c] sm:$0xf]
      %v206 = vld [vmem:[%s1 + $0x60] sm:$0xf]
      %v207 = vld [vmem:[%s1 + $0x64] sm:$0xf]
      %v208 = vld [vmem:[%s1 + $0x68] sm:$0xf]
      %v209 = vld [vmem:[%s1 + $0x6c] sm:$0xf]
      %v210 = vld [vmem:[%s1 + $0x70] sm:$0xf]
      %v211 = vld [vmem:[%s1 + $0x74] sm:$0xf]
      %v212 = vld [vmem:[%s1 + $0x78] sm:$0xf]
      %v213 = vld [vmem:[%s1 + $0x7c] sm:$0xf]
      %v214 = vld [vmem:[%s1 + $0x80] sm:$0xf]
      %v215 = vld [vmem:[%s1 + $0x84] sm:$0xf]
      %v216 = vld [vmem:[%s1 + $0x88] sm:$0xf]
      %v217 = vld [vmem:[%s1 + $0x8c] sm:$0xf]
      %v218 = vld [vmem:[%s1 + $0x90] sm:$0xf]
      %v219 = vld [vmem:[%s1 + $0x94] sm:$0xf]
      %v220 = vld [vmem:[%s1 + $0x98] sm:$0xf]
      %v221 = vld [vmem:[%s1 + $0x9c] sm:$0xf]
      %v222 = vld [vmem:[%s1 + $0xa0] sm:$0xf]
      %v223 = vld [vmem:[%s1 + $0xa4] sm:$0xf]
      %v224 = vld [vmem:[%s1 + $0xa8] sm:$0xf]
      %v225 = vld [vmem:[%s1 + $0xac] sm:$0xf]
      %v226 = vld [vmem:[%s1 + $0xb0] sm:$0xf]
      %v227 = vld [vmem:[%s1 + $0xb4] sm:$0xf]
      %v228 = vld [vmem:[%s1 + $0xb8] sm:$0xf]
      %v229 = vld [vmem:[%s1 + $0xbc] sm:$0xf]
      %v230 = vld [vmem:[%s1 + $0xc0] sm:$0xf]
      %v231 = vld [vmem:[%s1 + $0xc4] sm:$0xf]
      %v232 = vld [vmem:[%s1 + $0xc8] sm:$0xf]
      %v233 = vld [vmem:[%s1 + $0xcc] sm:$0xf]
      %v234 = vld [vmem:[%s1 + $0xd0] sm:$0xf]
      %v235 = vld [vmem:[%s1 + $0xd4] sm:$0xf]
      %v236 = vld [vmem:[%s1 + $0xd8] sm:$0xf]
      %v237 = vld [vmem:[%s1 + $0xdc] sm:$0xf]
      %v238 = vld [vmem:[%s1 + $0xe0] sm:$0xf]
      %v239 = vld [vmem:[%s1 + $0xe4] sm:$0xf]
      %v240 = vld [vmem:[%s1 + $0xe8] sm:$0xf]
      %v241 = vld [vmem:[%s1 + $0xec] sm:$0xf]
      %v242 = vld [vmem:[%s1 + $0xf0] sm:$0xf]
      %v243 = vld [vmem:[%s1 + $0xf4] sm:$0xf]
      %v244 = vld [vmem:[%s1 + $0xf8] sm:$0xf]
      %v245 = vld [vmem:[%s1 + $0xfc] sm:$0xf]
      %v246 = vld [vmem:[%s2] sm:$0x1]
      %v248 = vlaneseq
      %v249 = vshrl.u32 %v248, 7
      %v250 = vsub.s32 0, %v249
      %v251 = vrot.slane %v246, %v250
      %v257 = vunpack.c.l.b16 %v178
      %v258 = vunpack.c.h.b16 %v178
      %v259 = vunpack.c.l.b16 %v179
      %v260 = vunpack.c.h.b16 %v179
      %v261 = vunpack.c.l.b16 %v180
      %v262 = vunpack.c.h.b16 %v180
      %v263 = vunpack.c.l.b16 %v181
      %v264 = vunpack.c.h.b16 %v181
      %v265 = vpack.c.b16 %v261, %v257
      %v266 = vpack.c.b16 %v262, %v258
      %v267 = vpack.c.b16 %v263, %v259
      %v268 = vpack.c.b16 %v264, %v260
      %v337 = vunpack.c.l.b16 %v182
      %v338 = vunpack.c.l.b16 %v183
      %v339 = vunpack.c.l.b16 %v184
      %v340 = vunpack.c.l.b16 %v185
      %v341 = vunpack.c.l.b16 %v186
      %v342 = vunpack.c.l.b16 %v187
      %v343 = vunpack.c.l.b16 %v188
      %v344 = vunpack.c.l.b16 %v189
      %v345 = vunpack.c.l.b16 %v190
      %v346 = vunpack.c.l.b16 %v191
      %v347 = vunpack.c.l.b16 %v192
      %v348 = vunpack.c.l.b16 %v193
      %v349 = vunpack.c.l.b16 %v194
      %v350 = vunpack.c.l.b16 %v195
      %v351 = vunpack.c.l.b16 %v196
      %v352 = vunpack.c.l.b16 %v197
      %v353 = vunpack.c.l.b16 %v198
      %v354 = vunpack.c.l.b16 %v199
      %v355 = vunpack.c.l.b16 %v200
      %v356 = vunpack.c.l.b16 %v201
      %v357 = vunpack.c.l.b16 %v202
      %v358 = vunpack.c.l.b16 %v203
      %v359 = vunpack.c.l.b16 %v204
      %v360 = vunpack.c.l.b16 %v205
      %v361 = vunpack.c.l.b16 %v206
      %v362 = vunpack.c.l.b16 %v207
      %v363 = vunpack.c.l.b16 %v208
      %v364 = vunpack.c.l.b16 %v209
      %v365 = vunpack.c.l.b16 %v210
      %v366 = vunpack.c.l.b16 %v211
      %v367 = vunpack.c.l.b16 %v212
      %v368 = vunpack.c.l.b16 %v213
      %v369 = vunpack.c.l.b16 %v214
      %v370 = vunpack.c.l.b16 %v215
      %v371 = vunpack.c.l.b16 %v216
      %v372 = vunpack.c.l.b16 %v217
      %v373 = vunpack.c.l.b16 %v218
      %v374 = vunpack.c.l.b16 %v219
      %v375 = vunpack.c.l.b16 %v220
      %v376 = vunpack.c.l.b16 %v221
      %v377 = vunpack.c.l.b16 %v222
      %v378 = vunpack.c.l.b16 %v223
      %v379 = vunpack.c.l.b16 %v224
      %v380 = vunpack.c.l.b16 %v225
      %v381 = vunpack.c.l.b16 %v226
      %v382 = vunpack.c.l.b16 %v227
      %v383 = vunpack.c.l.b16 %v228
      %v384 = vunpack.c.l.b16 %v229
      %v385 = vunpack.c.l.b16 %v230
      %v386 = vunpack.c.l.b16 %v231
      %v387 = vunpack.c.l.b16 %v232
      %v388 = vunpack.c.l.b16 %v233
      %v389 = vunpack.c.l.b16 %v234
      %v390 = vunpack.c.l.b16 %v235
      %v391 = vunpack.c.l.b16 %v236
      %v392 = vunpack.c.l.b16 %v237
      %v393 = vunpack.c.l.b16 %v238
      %v394 = vunpack.c.l.b16 %v239
      %v395 = vunpack.c.l.b16 %v240
      %v396 = vunpack.c.l.b16 %v241
      %v397 = vunpack.c.l.b16 %v242
      %v398 = vunpack.c.l.b16 %v243
      %v399 = vunpack.c.l.b16 %v244
      %v400 = vunpack.c.l.b16 %v245
      %v401 = vpack.c.b16 %v338, %v337
      %v402 = vpack.c.b16 %v340, %v339
      %v403 = vpack.c.b16 %v342, %v341
      %v404 = vpack.c.b16 %v344, %v343
      %v405 = vpack.c.b16 %v346, %v345
      %v406 = vpack.c.b16 %v348, %v347
      %v407 = vpack.c.b16 %v350, %v349
      %v408 = vpack.c.b16 %v352, %v351
      %v409 = vpack.c.b16 %v354, %v353
      %v410 = vpack.c.b16 %v356, %v355
      %v411 = vpack.c.b16 %v358, %v357
      %v412 = vpack.c.b16 %v360, %v359
      %v413 = vpack.c.b16 %v362, %v361
      %v414 = vpack.c.b16 %v364, %v363
      %v415 = vpack.c.b16 %v366, %v365
      %v416 = vpack.c.b16 %v368, %v367
      %v417 = vpack.c.b16 %v370, %v369
      %v418 = vpack.c.b16 %v372, %v371
      %v419 = vpack.c.b16 %v374, %v373
      %v420 = vpack.c.b16 %v376, %v375
      %v421 = vpack.c.b16 %v378, %v377
      %v422 = vpack.c.b16 %v380, %v379
      %v423 = vpack.c.b16 %v382, %v381
      %v424 = vpack.c.b16 %v384, %v383
      %v425 = vpack.c.b16 %v386, %v385
      %v426 = vpack.c.b16 %v388, %v387
      %v427 = vpack.c.b16 %v390, %v389
      %v428 = vpack.c.b16 %v392, %v391
      %v429 = vpack.c.b16 %v394, %v393
      %v430 = vpack.c.b16 %v396, %v395
      %v431 = vpack.c.b16 %v398, %v397
      %v432 = vpack.c.b16 %v400, %v399
      %465 = vmatprep.subr.bf16.mxu0 0
      %466 = vmatpush1.bf16.msra.mxu0 %v408
      %467 = vmatprep.subr.bf16.mxu0 0
      %468 = vmatpush1.bf16.msra.mxu0 %v407
      %469 = vmatprep.subr.bf16.mxu0 0
      %470 = vmatpush1.bf16.msra.mxu0 %v406
      %471 = vmatprep.subr.bf16.mxu0 0
      %472 = vmatpush1.bf16.msra.mxu0 %v405
      %473 = vmatprep.subr.bf16.mxu0 0
      %474 = vmatpush1.bf16.msra.mxu0 %v404
      %475 = vmatprep.subr.bf16.mxu0 0
      %476 = vmatpush1.bf16.msra.mxu0 %v403
      %477 = vmatprep.subr.bf16.mxu0 0
      %478 = vmatpush1.bf16.msra.mxu0 %v402
      %479 = vmatprep.subr.bf16.mxu0 0
      %480 = vmatpush1.bf16.msra.mxu0 %v401
      %481 = vmatprep.subr.bf16.mxu0 0
      %482 = vmatpush2.bf16.msra.mxu0 %v416
      %483 = vmatprep.subr.bf16.mxu0 0
      %484 = vmatpush2.bf16.msra.mxu0 %v415
      %485 = vmatprep.subr.bf16.mxu0 0
      %486 = vmatpush2.bf16.msra.mxu0 %v414
      %487 = vmatprep.subr.bf16.mxu0 0
      %488 = vmatpush2.bf16.msra.mxu0 %v413
      %489 = vmatprep.subr.bf16.mxu0 0
      %490 = vmatpush2.bf16.msra.mxu0 %v412
      %491 = vmatprep.subr.bf16.mxu0 0
      %492 = vmatpush2.bf16.msra.mxu0 %v411
      %493 = vmatprep.subr.bf16.mxu0 0
      %494 = vmatpush2.bf16.msra.mxu0 %v410
      %495 = vmatprep.subr.bf16.mxu0 0
      %496 = vmatpush2.bf16.msra.mxu0 %v409
      %497 = vmatprep.mubr.bf16.mxu0 %v266
      %498 = vmatmul.mubr.bf16.gmra.mxu0 %v265
      %v499 = vpop.f32.mrf.mxu0
      %v500 = vadd.f32 %v251, %v499
      %v501 = vpop.f32.mrf.mxu0
      %v502 = vpop.f32.mrf.mxu0
      %v503 = vadd.f32 %v251, %v502
      %v504 = vpop.f32.mrf.mxu0
      %505 = vdwg.mxu0
      %506 = vmatprep.subr.bf16.mxu0 0
      %507 = vmatpush1.bf16.msra.mxu0 %v424
      %508 = vmatprep.subr.bf16.mxu0 0
      %509 = vmatpush1.bf16.msra.mxu0 %v423
      %510 = vmatprep.subr.bf16.mxu0 0
      %511 = vmatpush1.bf16.msra.mxu0 %v422
      %512 = vmatprep.subr.bf16.mxu0 0
      %513 = vmatpush1.bf16.msra.mxu0 %v421
      %514 = vmatprep.subr.bf16.mxu0 0
      %515 = vmatpush1.bf16.msra.mxu0 %v420
      %516 = vmatprep.subr.bf16.mxu0 0
      %517 = vmatpush1.bf16.msra.mxu0 %v419
      %518 = vmatprep.subr.bf16.mxu0 0
      %519 = vmatpush1.bf16.msra.mxu0 %v418
      %520 = vmatprep.subr.bf16.mxu0 0
      %521 = vmatpush1.bf16.msra.mxu0 %v417
      %522 = vmatprep.subr.bf16.mxu0 0
      %523 = vmatpush2.bf16.msra.mxu0 %v432
      %524 = vmatprep.subr.bf16.mxu0 0
      %525 = vmatpush2.bf16.msra.mxu0 %v431
      %526 = vmatprep.subr.bf16.mxu0 0
      %527 = vmatpush2.bf16.msra.mxu0 %v430
      %528 = vmatprep.subr.bf16.mxu0 0
      %529 = vmatpush2.bf16.msra.mxu0 %v429
      %530 = vmatprep.subr.bf16.mxu0 0
      %531 = vmatpush2.bf16.msra.mxu0 %v428
      %532 = vmatprep.subr.bf16.mxu0 0
      %533 = vmatpush2.bf16.msra.mxu0 %v427
      %534 = vmatprep.subr.bf16.mxu0 0
      %535 = vmatpush2.bf16.msra.mxu0 %v426
      %536 = vmatprep.subr.bf16.mxu0 0
      %537 = vmatpush2.bf16.msra.mxu0 %v425
      %538 = vmatprep.mubr.bf16.mxu0 %v268
      %539 = vmatmul.mubr.bf16.gmra.mxu0 %v267
      %v540 = vpop.f32.mrf.mxu0
      %v541 = vadd.f32 %v500, %v540
      %v542 = vpop.f32.mrf.mxu0
      %v543 = vpop.f32.mrf.mxu0
      %v544 = vadd.f32 %v503, %v543
      %v545 = vpop.f32.mrf.mxu0
      %546 = vdwg.mxu0
      %v547 = vmax.f32 %v541, 0.0
      %v548 = vmax.f32 %v544, 0.0
      %v549 = vpack.c.bf16 %v548, %v547
      %v551 = vunpack.c.l.b16 %v549
      %v552 = vunpack.c.h.b16 %v549
      %v553 = vpack.c.b16 %v551, %v551
      %v554 = vpack.c.b16 %v552, %v552
      %557 = vst [vmem:[%s175] sm:$0xf] %v553
      %558 = vst [vmem:[%s175 + $0x4] sm:$0xf] %v554
      %s559 = smul.u32 2, %s14
      %p560 = scmp.lt.s32.totalorder %s559, 3
      %s561 = scalar_select %p560, %s559, 3
      %s562 = smul.addr %s561, 4
      %s563 = scalar_lea.vmem %s3, %s562
      // Predicated region
      $region33: #{_lambda_.28} parent=31 // pred_check
        %p564 = pneg %p100
      $region34: #{_lambda_.28} parent=31 // pred_check_branch
        %566 = sbr.rel (%p564) target = $region36
      $region35: #{_lambda_.28} parent=31 // pred_region
        %s567 = smul.u32 2, %s14
      $region36: #{_lambda_.28} parent=31 // pred_fallthru
        _
    $region32: #{_lambda_.28} parent=5 // pred_fallthru
      _
    %p568 = scmp.le.s32.totalorder 2, %s9
    // Predicated region
    $region37: #{_lambda_.28} parent=5 // pred_check
      %p569 = pneg %p568
    $region38: #{_lambda_.28} parent=5 // pred_check_branch
      %571 = sbr.rel (%p569) target = $region40
    $region39: #{_lambda_.28} parent=5 // pred_region
      %s572 = ssub.s32 %s9, 2
      // Predicated region
      $region41: #{_lambda_.28} parent=39 // pred_check
        %p573 = pneg %p106
      $region42: #{_lambda_.28} parent=39 // pred_check_branch
        %575 = sbr.rel (%p573) target = $region44
      $region43: #{_lambda_.28} parent=39 // pred_region
        %s576 = smul.u32 2, %s15
        %p577 = scmp.lt.s32.totalorder %s576, 3
        %s578 = scalar_select %p577, %s576, 3
        %s579 = smul.addr %s578, 4
        %s580 = scalar_lea.vmem %s3, %s579
      $region44: #{_lambda_.28} parent=39 // pred_fallthru
        _
    $region40: #{_lambda_.28} parent=5 // pred_fallthru
      _
  $region6: #{_lambda_.28} parent=0 // loop_footer
    %s13 = sadd.s32 1, %s9
  $region7: #{_lambda_.28} parent=0 // loop_footer_branch
    %8 = sbr.rel target = $region3
  $region8: #{_lambda_.28} parent=0 // loop_exit
    _

// kernel: _lambda_.29
$region0: #{_lambda_.29}
  #allocation0 [shape = 'u32[]', space=smem, size = 0x4, offset = 0x4, fixed_abs, tag = 'smem constant byte address 0x4 - core index']
  #allocation1 [shape = 'u32[144,128]{1,0:T(1,128)}', space=vmem, size = 0x12000, scoped, tag = 'internal scratch']
  %s0 = inlined_call_operand.vmem [shape: bf16[32,144], index: 0, kind: input, shape index: {}]
  %s1 = inlined_call_operand.vmem [shape: bf16[144,128], index: 1, kind: input, shape index: {}]
  %s2 = inlined_call_operand.vmem [shape: f32[1,128], index: 2, kind: input, shape index: {}]
  %s3 = inlined_call_operand.vmem [shape: bf16[32,128], index: 3, kind: output, shape index: {}]
  %s4 = sld [smem:[#allocation0]]
  $region45: #{_lambda_.29} parent=0
    _
  %s6 = ssub.s32 1, %s4
  %s7 = scalar_select 0, %s6, %s4
  loop: start=0, step=1, limit=4
  $region2: #{_lambda_.29} parent=0 // loop_pre_header
    _
  $region3: #{_lambda_.29} parent=0 // loop_header
    %s9 = sphi 0, %s13
    %p10 = scmp.ge.s32.totalorder %s9, 4
    %s19 = sphi 0, %s21
    %s22 = sphi 0, %s19
    %s23 = sphi 0, %s22
    %s39 = sphi 0, %s23
    %s43 = sphi 0, %s43
    %s45 = sphi 0, %s43
    %s46 = sphi 0, %s45
    %s60 = sphi 0, %s46
    %s64 = sphi 0, %s64
    %s66 = sphi 0, %s64
    %s67 = sphi 0, %s66
    %s81 = sphi 0, %s67
    %s87 = sphi 0, %s89
    %s90 = sphi 0, %s87
    %s91 = sphi 0, %s90
    %s107 = sphi 0, %s91
  $region4: #{_lambda_.29} parent=0 // loop_header_branch
    %12 = sbr.rel (%p10) target = $region8
  $region5: #{_lambda_.29} parent=0 // loop_body
    %s14 = ssub.s32 %s9, 1
    %s15 = ssub.s32 %s9, 2
    %s16 = sadd.s32 %s9, 1
    %s17 = ssub.s32 %s9, %s16
    %p18 = scmp.eq.s32.totalorder %s17, 0
    %s20 = sadd.s32 %s19, 1
    %s21 = scalar_select %p18, %s19, %s20
    %p24 = pneg %p18
    %p25 = scmp.eq.s32.totalorder %s9, 1
    %p26 = por %p24, %p25
    %p27 = scmp.ne.s32.totalorder %s19, %s22
    %p28 = scmp.eq.s32.totalorder %s9, 0
    %p29 = por %p27, %p28
    %p30 = scmp.ne.s32.totalorder %s19, %s22
    %p31 = scmp.eq.s32.totalorder %s14, 1
    %p32 = por %p30, %p31
    %p33 = scmp.ne.s32.totalorder %s22, %s23
    %p34 = scmp.eq.s32.totalorder %s14, 0
    %p35 = por %p33, %p34
    %p36 = scmp.ne.s32.totalorder %s22, %s23
    %p37 = scmp.eq.s32.totalorder %s15, 1
    %p38 = por %p36, %p37
    %p40 = scmp.ne.s32.totalorder %s23, %s39
    %p41 = scmp.eq.s32.totalorder %s15, 0
    %p42 = por %p40, %p41
    %s44 = sadd.s32 %s43, 1
    %p47 = scmp.eq.s32.totalorder %s9, 1
    %p48 = scmp.ne.s32.totalorder %s43, %s45
    %p49 = scmp.eq.s32.totalorder %s9, 0
    %p50 = por %p48, %p49
    %p51 = scmp.ne.s32.totalorder %s43, %s45
    %p52 = scmp.eq.s32.totalorder %s14, 1
    %p53 = por %p51, %p52
    %p54 = scmp.ne.s32.totalorder %s45, %s46
    %p55 = scmp.eq.s32.totalorder %s14, 0
    %p56 = por %p54, %p55
    %p57 = scmp.ne.s32.totalorder %s45, %s46
    %p58 = scmp.eq.s32.totalorder %s15, 1
    %p59 = por %p57, %p58
    %p61 = scmp.ne.s32.totalorder %s46, %s60
    %p62 = scmp.eq.s32.totalorder %s15, 0
    %p63 = por %p61, %p62
    %s65 = sadd.s32 %s64, 1
    %p68 = scmp.eq.s32.totalorder %s9, 1
    %p69 = scmp.ne.s32.totalorder %s64, %s66
    %p70 = scmp.eq.s32.totalorder %s9, 0
    %p71 = por %p69, %p70
    %p72 = scmp.ne.s32.totalorder %s64, %s66
    %p73 = scmp.eq.s32.totalorder %s14, 1
    %p74 = por %p72, %p73
    %p75 = scmp.ne.s32.totalorder %s66, %s67
    %p76 = scmp.eq.s32.totalorder %s14, 0
    %p77 = por %p75, %p76
    %p78 = scmp.ne.s32.totalorder %s66, %s67
    %p79 = scmp.eq.s32.totalorder %s15, 1
    %p80 = por %p78, %p79
    %p82 = scmp.ne.s32.totalorder %s67, %s81
    %p83 = scmp.eq.s32.totalorder %s15, 0
    %p84 = por %p82, %p83
    %s85 = ssub.s32 %s9, %s16
    %p86 = scmp.eq.s32.totalorder %s85, 0
    %s88 = sadd.s32 %s87, 1
    %s89 = scalar_select %p86, %s87, %s88
    %p92 = pneg %p86
    %p93 = scmp.eq.s32.totalorder %s9, 1
    %p94 = por %p92, %p93
    %p95 = scmp.ne.s32.totalorder %s87, %s90
    %p96 = scmp.eq.s32.totalorder %s9, 0
    %p97 = por %p95, %p96
    %p98 = scmp.ne.s32.totalorder %s87, %s90
    %p99 = scmp.eq.s32.totalorder %s14, 1
    %p100 = por %p98, %p99
    %p101 = scmp.ne.s32.totalorder %s90, %s91
    %p102 = scmp.eq.s32.totalorder %s14, 0
    %p103 = por %p101, %p102
    %p104 = scmp.ne.s32.totalorder %s90, %s91
    %p105 = scmp.eq.s32.totalorder %s15, 1
    %p106 = por %p104, %p105
    %p108 = scmp.ne.s32.totalorder %s91, %s107
    %p109 = scmp.eq.s32.totalorder %s15, 0
    %p110 = por %p108, %p109
    %p111 = scmp.le.s32.totalorder 1, %s9
    %p112 = scmp.lt.s32.totalorder %s9, 3
    %p113 = pnand %p111, %p112
    %p114 = pneg %p113
    // Predicated region
    $region9: #{_lambda_.29} parent=5 // pred_check
      _
    $region10: #{_lambda_.29} parent=5 // pred_check_branch
      %116 = sbr.rel (%p113) target = $region12
    $region11: #{_lambda_.29} parent=5 // pred_region
      %s117 = ssub.s32 %s9, 1
      // Predicated region
      $region13: #{_lambda_.29} parent=11 // pred_check
        %p118 = pneg %p56
      $region14: #{_lambda_.29} parent=11 // pred_check_branch
        %120 = sbr.rel (%p118) target = $region16
      $region15: #{_lambda_.29} parent=11 // pred_region
        _
      $region16: #{_lambda_.29} parent=11 // pred_fallthru
        _
      // Predicated region
      $region17: #{_lambda_.29} parent=11 // pred_check
        %p121 = pneg %p77
      $region18: #{_lambda_.29} parent=11 // pred_check_branch
        %123 = sbr.rel (%p121) target = $region20
      $region19: #{_lambda_.29} parent=11 // pred_region
        _
      $region20: #{_lambda_.29} parent=11 // pred_fallthru
        _
    $region12: #{_lambda_.29} parent=5 // pred_fallthru
      _
    %p124 = scmp.lt.s32.totalorder %s9, 2
    // Predicated region
    $region21: #{_lambda_.29} parent=5 // pred_check
      %p125 = pneg %p124
    $region22: #{_lambda_.29} parent=5 // pred_check_branch
      %127 = sbr.rel (%p125) target = $region24
    $region23: #{_lambda_.29} parent=5 // pred_region
      // Predicated region
      $region25: #{_lambda_.29} parent=23 // pred_check
        %p128 = pneg %p29
      $region26: #{_lambda_.29} parent=23 // pred_check_branch
        %130 = sbr.rel (%p128) target = $region28
      $region27: #{_lambda_.29} parent=23 // pred_region
        %s131 = smul.u32 2, %s9
        %p132 = scmp.lt.s32.totalorder %s131, 3
        %s133 = scalar_select %p132, %s131, 3
        %s134 = smul.addr %s133, 2
        %s135 = smul.addr %s134, 4
        %s136 = scalar_lea.vmem %s0, %s135
        %s137 = smul.u32 2, %s9
      $region28: #{_lambda_.29} parent=23 // pred_fallthru
        _
    $region24: #{_lambda_.29} parent=5 // pred_fallthru
      _
    %p138 = scmp.le.s32.totalorder 1, %s9
    %p139 = scmp.lt.s32.totalorder %s9, 3
    %p140 = pnand %p138, %p139
    %p141 = pneg %p140
    // Predicated region
    $region29: #{_lambda_.29} parent=5 // pred_check
      _
    $region30: #{_lambda_.29} parent=5 // pred_check_branch
      %143 = sbr.rel (%p140) target = $region32
    $region31: #{_lambda_.29} parent=5 // pred_region
      %s144 = ssub.s32 %s9, 1
      %s145 = smul.u32 2, %s14
      %p146 = scmp.lt.s32.totalorder %s145, 3
      %s147 = scalar_select %p146, %s145, 3
      %s148 = smul.addr %s147, 2
      %s149 = smul.addr %s148, 4
      %s150 = scalar_lea.vmem %s0, %s149
      %p151 = pneg %p35
      %p152 = pneg %p32
      %p153 = pneg %p56
      %p154 = pneg %p53
      %p155 = pneg %p77
      %p156 = pneg %p74
      %p157 = pneg %p103
      %p158 = pneg %p100
      %s159 = smul.u32 2, %s14
      %p160 = scmp.lt.s32.totalorder %s159, 3
      %s161 = scalar_select %p160, %s159, 3
      %s162 = smul.addr %s161, 4
      %s163 = scalar_lea.vmem %s3, %s162
      %s164 = smul.u32 2, %s14
      %p165 = scmp.lt.s32.totalorder %s164, 3
      %s166 = scalar_select %p165, %s164, 3
      %s167 = smul.addr %s166, 2
      %s168 = smul.addr %s167, 4
      %s169 = scalar_lea.vmem %s0, %s168
      %s170 = smul.u32 2, %s14
      %s171 = smul.u32 2, %s14
      %p172 = scmp.lt.s32.totalorder %s171, 3
      %s173 = scalar_select %p172, %s171, 3
      %s174 = smul.addr %s173, 4
      %s175 = scalar_lea.vmem %s3, %s174
      %s176 = smul.u32 2, %s14
      %v178 = vld [vmem:[%s169] sm:$0xff]
      %v179 = vld [vmem:[%s169 + $0x8] sm:$0xff]
      %v180 = vld [vmem:[%s1] sm:$0xf]
      %v181 = vld [vmem:[%s1 + $0x4] sm:$0xf]
      %v182 = vld [vmem:[%s1 + $0x8] sm:$0xf]
      %v183 = vld [vmem:[%s1 + $0xc] sm:$0xf]
      %v184 = vld [vmem:[%s1 + $0x10] sm:$0xf]
      %v185 = vld [vmem:[%s1 + $0x14] sm:$0xf]
      %v186 = vld [vmem:[%s1 + $0x18] sm:$0xf]
      %v187 = vld [vmem:[%s1 + $0x1c] sm:$0xf]
      %v188 = vld [vmem:[%s1 + $0x20] sm:$0xf]
      %v189 = vld [vmem:[%s1 + $0x24] sm:$0xf]
      %v190 = vld [vmem:[%s1 + $0x28] sm:$0xf]
      %v191 = vld [vmem:[%s1 + $0x2c] sm:$0xf]
      %v192 = vld [vmem:[%s1 + $0x30] sm:$0xf]
      %v193 = vld [vmem:[%s1 + $0x34] sm:$0xf]
      %v194 = vld [vmem:[%s1 + $0x38] sm:$0xf]
      %v195 = vld [vmem:[%s1 + $0x3c] sm:$0xf]
      %v196 = vld [vmem:[%s1 + $0x40] sm:$0xf]
      %v197 = vld [vmem:[%s1 + $0x44] sm:$0xf]
      %v198 = vld [vmem:[%s2] sm:$0x1]
      %v200 = vlaneseq
      %v201 = vshrl.u32 %v200, 7
      %v202 = vsub.s32 0, %v201
      %v203 = vrot.slane %v198, %v202
      %v207 = vunpack.c.l.b16 %v178
      %v208 = vunpack.c.h.b16 %v178
      %v209 = vunpack.c.l.b16 %v179
      %v210 = vunpack.c.h.b16 %v179
      %v211 = vpack.c.b16 %v209, %v207
      %v212 = vpack.c.b16 %v210, %v208
      %v232 = vunpack.c.l.b16 %v180
      %v233 = vunpack.c.l.b16 %v181
      %v234 = vunpack.c.l.b16 %v182
      %v235 = vunpack.c.l.b16 %v183
      %v236 = vunpack.c.l.b16 %v184
      %v237 = vunpack.c.l.b16 %v185
      %v238 = vunpack.c.l.b16 %v186
      %v239 = vunpack.c.l.b16 %v187
      %v240 = vunpack.c.l.b16 %v188
      %v241 = vunpack.c.l.b16 %v189
      %v242 = vunpack.c.l.b16 %v190
      %v243 = vunpack.c.l.b16 %v191
      %v244 = vunpack.c.l.b16 %v192
      %v245 = vunpack.c.l.b16 %v193
      %v246 = vunpack.c.l.b16 %v194
      %v247 = vunpack.c.l.b16 %v195
      %v248 = vunpack.c.l.b16 %v196
      %v249 = vunpack.c.l.b16 %v197
      %v250 = vpack.c.b16 %v233, %v232
      %v251 = vpack.c.b16 %v235, %v234
      %v252 = vpack.c.b16 %v237, %v236
      %v253 = vpack.c.b16 %v239, %v238
      %v254 = vpack.c.b16 %v241, %v240
      %v255 = vpack.c.b16 %v243, %v242
      %v256 = vpack.c.b16 %v245, %v244
      %v257 = vpack.c.b16 %v247, %v246
      %v258 = vpack.c.b16 %v249, %v248
      %vm268 = vcmask 130048
      %v270 = vsel %vm268, %v212, 0
      %272 = vmatprep.subr.bf16.mxu0 0
      %273 = vmatpush1.bf16.msra.mxu0 %v257
      %274 = vmatprep.subr.bf16.mxu0 0
      %275 = vmatpush1.bf16.msra.mxu0 %v256
      %276 = vmatprep.subr.bf16.mxu0 0
      %277 = vmatpush1.bf16.msra.mxu0 %v255
      %278 = vmatprep.subr.bf16.mxu0 0
      %279 = vmatpush1.bf16.msra.mxu0 %v254
      %280 = vmatprep.subr.bf16.mxu0 0
      %281 = vmatpush1.bf16.msra.mxu0 %v253
      %282 = vmatprep.subr.bf16.mxu0 0
      %283 = vmatpush1.bf16.msra.mxu0 %v252
      %284 = vmatprep.subr.bf16.mxu0 0
      %285 = vmatpush1.bf16.msra.mxu0 %v251
      %286 = vmatprep.subr.bf16.mxu0 0
      %287 = vmatpush1.bf16.msra.mxu0 %v250
      %288 = vmatprep.subr.bf16.mxu0 0
      %289 = vmatpush2.bf16.msra.mxu0 0
      %290 = vmatprep.subr.bf16.mxu0 0
      %291 = vmatpush2.bf16.msra.mxu0 0
      %292 = vmatprep.subr.bf16.mxu0 0
      %293 = vmatpush2.bf16.msra.mxu0 0
      %294 = vmatprep.subr.bf16.mxu0 0
      %295 = vmatpush2.bf16.msra.mxu0 0
      %296 = vmatprep.subr.bf16.mxu0 0
      %297 = vmatpush2.bf16.msra.mxu0 0
      %298 = vmatprep.subr.bf16.mxu0 0
      %299 = vmatpush2.bf16.msra.mxu0 0
      %300 = vmatprep.subr.bf16.mxu0 0
      %301 = vmatpush2.bf16.msra.mxu0 0
      %302 = vmatprep.subr.bf16.mxu0 0
      %303 = vmatpush2.bf16.msra.mxu0 %v258
      %304 = vmatprep.mubr.bf16.mxu0 %v270
      %305 = vmatmul.mubr.bf16.gmra.mxu0 %v211
      %v306 = vpop.f32.mrf.mxu0
      %v307 = vadd.f32 %v203, %v306
      %v308 = vpop.f32.mrf.mxu0
      %v309 = vpop.f32.mrf.mxu0
      %v310 = vadd.f32 %v203, %v309
      %v311 = vpop.f32.mrf.mxu0
      %312 = vdwg.mxu0
      %v313 = vpack.c.bf16 %v310, %v307
      %v315 = vunpack.c.l.b16 %v313
      %v316 = vunpack.c.h.b16 %v313
      %v317 = vpack.c.b16 %v315, %v315
      %v318 = vpack.c.b16 %v316, %v316
      %321 = vst [vmem:[%s175] sm:$0xf] %v317
      %322 = vst [vmem:[%s175 + $0x4] sm:$0xf] %v318
      %s323 = smul.u32 2, %s14
      %p324 = scmp.lt.s32.totalorder %s323, 3
      %s325 = scalar_select %p324, %s323, 3
      %s326 = smul.addr %s325, 4
      %s327 = scalar_lea.vmem %s3, %s326
      // Predicated region
      $region33: #{_lambda_.29} parent=31 // pred_check
        %p328 = pneg %p100
      $region34: #{_lambda_.29} parent=31 // pred_check_branch
        %330 = sbr.rel (%p328) target = $region36
      $region35: #{_lambda_.29} parent=31 // pred_region
        %s331 = smul.u32 2, %s14
      $region36: #{_lambda_.29} parent=31 // pred_fallthru
        _
    $region32: #{_lambda_.29} parent=5 // pred_fallthru
      _
    %p332 = scmp.le.s32.totalorder 2, %s9
    // Predicated region
    $region37: #{_lambda_.29} parent=5 // pred_check
      %p333 = pneg %p332
    $region38: #{_lambda_.29} parent=5 // pred_check_branch
      %335 = sbr.rel (%p333) target = $region40
    $region39: #{_lambda_.29} parent=5 // pred_region
      %s336 = ssub.s32 %s9, 2
      // Predicated region
      $region41: #{_lambda_.29} parent=39 // pred_check
        %p337 = pneg %p106
      $region42: #{_lambda_.29} parent=39 // pred_check_branch
        %339 = sbr.rel (%p337) target = $region44
      $region43: #{_lambda_.29} parent=39 // pred_region
        %s340 = smul.u32 2, %s15
        %p341 = scmp.lt.s32.totalorder %s340, 3
        %s342 = scalar_select %p341, %s340, 3
        %s343 = smul.addr %s342, 4
        %s344 = scalar_lea.vmem %s3, %s343
      $region44: #{_lambda_.29} parent=39 // pred_fallthru
        _
    $region40: #{_lambda_.29} parent=5 // pred_fallthru
      _
  $region6: #{_lambda_.29} parent=0 // loop_footer
    %s13 = sadd.s32 1, %s9
  $region7: #{_lambda_.29} parent=0 // loop_footer_branch
    %8 = sbr.rel target = $region3
  $region8: #{_lambda_.29} parent=0 // loop_exit
    _

// kernel: _lambda_.30
$region0: #{_lambda_.30}
  #allocation0 [shape = 'u32[]', space=smem, size = 0x4, offset = 0x4, fixed_abs, tag = 'smem constant byte address 0x4 - core index']
  #allocation1 [shape = 'u32[144,128]{1,0:T(1,128)}', space=vmem, size = 0x12000, scoped, tag = 'internal scratch']
  %s0 = inlined_call_operand.vmem [shape: bf16[32,32], index: 0, kind: input, shape index: {}]
  %s1 = inlined_call_operand.vmem [shape: bf16[32,128], index: 1, kind: input, shape index: {}]
  %s2 = inlined_call_operand.vmem [shape: f32[1,128], index: 2, kind: input, shape index: {}]
  %s3 = inlined_call_operand.vmem [shape: bf16[128,128], index: 3, kind: input, shape index: {}]
  %s4 = inlined_call_operand.vmem [shape: bf16[128,128], index: 4, kind: input, shape index: {}]
  %s5 = inlined_call_operand.vmem [shape: f32[1,128], index: 5, kind: input, shape index: {}]
  %s6 = inlined_call_operand.vmem [shape: bf16[32,128], index: 6, kind: output, shape index: {0}]
  %s7 = inlined_call_operand.hbm [shape: f32[1,1], index: 7, kind: output, shape index: {1}]
  %8 = xla_tuple %s6, %s7
  %s9 = sld [smem:[#allocation0]]
  $region69: #{_lambda_.30} parent=0
    _
  %s11 = ssub.s32 1, %s9
  %s12 = scalar_select 0, %s11, %s9
  $region1: #{_lambda_.30} parent=0
    #allocation2 [shape = 'u8[512]{0}', space=vmem, size = 0x400, scoped, tag = 'output window, operand 1, single buffered']
    #allocation3 [shape = 's32[2]{0}', space=sflag, size = 0x8, scoped, tag = 'scoped memory for _lambda_.30']
    %13 = vsyncpa [#allocation3], 0
    loop: start=0, step=1, limit=4
    $region2: #{_lambda_.30} parent=1 // loop_pre_header
      _
    $region3: #{_lambda_.30} parent=1 // loop_header
      %s15 = sphi 0, %s19
      %p16 = scmp.ge.s32.totalorder %s15, 4
      %s25 = sphi 0, %s27
      %s28 = sphi 0, %s25
      %s29 = sphi 0, %s28
      %s45 = sphi 0, %s29
      %s49 = sphi 0, %s49
      %s51 = sphi 0, %s49
      %s52 = sphi 0, %s51
      %s66 = sphi 0, %s52
      %s70 = sphi 0, %s70
      %s72 = sphi 0, %s70
      %s73 = sphi 0, %s72
      %s87 = sphi 0, %s73
      %s91 = sphi 0, %s91
      %s93 = sphi 0, %s91
      %s94 = sphi 0, %s93
      %s108 = sphi 0, %s94
      %s112 = sphi 0, %s112
      %s114 = sphi 0, %s112
      %s115 = sphi 0, %s114
      %s129 = sphi 0, %s115
      %s133 = sphi 0, %s133
      %s135 = sphi 0, %s133
      %s136 = sphi 0, %s135
      %s150 = sphi 0, %s136
      %s156 = sphi 0, %s158
      %s159 = sphi 0, %s156
      %s160 = sphi 0, %s159
      %s176 = sphi 0, %s160
      %s180 = sphi 0, %s180
      %s182 = sphi 0, %s180
      %s183 = sphi 0, %s182
      %s197 = sphi 0, %s183
    $region4: #{_lambda_.30} parent=1 // loop_header_branch
      %18 = sbr.rel (%p16) target = $region8
    $region5: #{_lambda_.30} parent=1 // loop_body
      %s20 = ssub.s32 %s15, 1
      %s21 = ssub.s32 %s15, 2
      %s22 = sadd.s32 %s15, 1
      %s23 = ssub.s32 %s15, %s22
      %p24 = scmp.eq.s32.totalorder %s23, 0
      %s26 = sadd.s32 %s25, 1
      %s27 = scalar_select %p24, %s25, %s26
      %p30 = pneg %p24
      %p31 = scmp.eq.s32.totalorder %s15, 1
      %p32 = por %p30, %p31
      %p33 = scmp.ne.s32.totalorder %s25, %s28
      %p34 = scmp.eq.s32.totalorder %s15, 0
      %p35 = por %p33, %p34
      %p36 = scmp.ne.s32.totalorder %s25, %s28
      %p37 = scmp.eq.s32.totalorder %s20, 1
      %p38 = por %p36, %p37
      %p39 = scmp.ne.s32.totalorder %s28, %s29
      %p40 = scmp.eq.s32.totalorder %s20, 0
      %p41 = por %p39, %p40
      %p42 = scmp.ne.s32.totalorder %s28, %s29
      %p43 = scmp.eq.s32.totalorder %s21, 1
      %p44 = por %p42, %p43
      %p46 = scmp.ne.s32.totalorder %s29, %s45
      %p47 = scmp.eq.s32.totalorder %s21, 0
      %p48 = por %p46, %p47
      %s50 = sadd.s32 %s49, 1
      %p53 = scmp.eq.s32.totalorder %s15, 1
      %p54 = scmp.ne.s32.totalorder %s49, %s51
      %p55 = scmp.eq.s32.totalorder %s15, 0
      %p56 = por %p54, %p55
      %p57 = scmp.ne.s32.totalorder %s49, %s51
      %p58 = scmp.eq.s32.totalorder %s20, 1
      %p59 = por %p57, %p58
      %p60 = scmp.ne.s32.totalorder %s51, %s52
      %p61 = scmp.eq.s32.totalorder %s20, 0
      %p62 = por %p60, %p61
      %p63 = scmp.ne.s32.totalorder %s51, %s52
      %p64 = scmp.eq.s32.totalorder %s21, 1
      %p65 = por %p63, %p64
      %p67 = scmp.ne.s32.totalorder %s52, %s66
      %p68 = scmp.eq.s32.totalorder %s21, 0
      %p69 = por %p67, %p68
      %s71 = sadd.s32 %s70, 1
      %p74 = scmp.eq.s32.totalorder %s15, 1
      %p75 = scmp.ne.s32.totalorder %s70, %s72
      %p76 = scmp.eq.s32.totalorder %s15, 0
      %p77 = por %p75, %p76
      %p78 = scmp.ne.s32.totalorder %s70, %s72
      %p79 = scmp.eq.s32.totalorder %s20, 1
      %p80 = por %p78, %p79
      %p81 = scmp.ne.s32.totalorder %s72, %s73
      %p82 = scmp.eq.s32.totalorder %s20, 0
      %p83 = por %p81, %p82
      %p84 = scmp.ne.s32.totalorder %s72, %s73
      %p85 = scmp.eq.s32.totalorder %s21, 1
      %p86 = por %p84, %p85
      %p88 = scmp.ne.s32.totalorder %s73, %s87
      %p89 = scmp.eq.s32.totalorder %s21, 0
      %p90 = por %p88, %p89
      %s92 = sadd.s32 %s91, 1
      %p95 = scmp.eq.s32.totalorder %s15, 1
      %p96 = scmp.ne.s32.totalorder %s91, %s93
      %p97 = scmp.eq.s32.totalorder %s15, 0
      %p98 = por %p96, %p97
      %p99 = scmp.ne.s32.totalorder %s91, %s93
      %p100 = scmp.eq.s32.totalorder %s20, 1
      %p101 = por %p99, %p100
      %p102 = scmp.ne.s32.totalorder %s93, %s94
      %p103 = scmp.eq.s32.totalorder %s20, 0
      %p104 = por %p102, %p103
      %p105 = scmp.ne.s32.totalorder %s93, %s94
      %p106 = scmp.eq.s32.totalorder %s21, 1
      %p107 = por %p105, %p106
      %p109 = scmp.ne.s32.totalorder %s94, %s108
      %p110 = scmp.eq.s32.totalorder %s21, 0
      %p111 = por %p109, %p110
      %s113 = sadd.s32 %s112, 1
      %p116 = scmp.eq.s32.totalorder %s15, 1
      %p117 = scmp.ne.s32.totalorder %s112, %s114
      %p118 = scmp.eq.s32.totalorder %s15, 0
      %p119 = por %p117, %p118
      %p120 = scmp.ne.s32.totalorder %s112, %s114
      %p121 = scmp.eq.s32.totalorder %s20, 1
      %p122 = por %p120, %p121
      %p123 = scmp.ne.s32.totalorder %s114, %s115
      %p124 = scmp.eq.s32.totalorder %s20, 0
      %p125 = por %p123, %p124
      %p126 = scmp.ne.s32.totalorder %s114, %s115
      %p127 = scmp.eq.s32.totalorder %s21, 1
      %p128 = por %p126, %p127
      %p130 = scmp.ne.s32.totalorder %s115, %s129
      %p131 = scmp.eq.s32.totalorder %s21, 0
      %p132 = por %p130, %p131
      %s134 = sadd.s32 %s133, 1
      %p137 = scmp.eq.s32.totalorder %s15, 1
      %p138 = scmp.ne.s32.totalorder %s133, %s135
      %p139 = scmp.eq.s32.totalorder %s15, 0
      %p140 = por %p138, %p139
      %p141 = scmp.ne.s32.totalorder %s133, %s135
      %p142 = scmp.eq.s32.totalorder %s20, 1
      %p143 = por %p141, %p142
      %p144 = scmp.ne.s32.totalorder %s135, %s136
      %p145 = scmp.eq.s32.totalorder %s20, 0
      %p146 = por %p144, %p145
      %p147 = scmp.ne.s32.totalorder %s135, %s136
      %p148 = scmp.eq.s32.totalorder %s21, 1
      %p149 = por %p147, %p148
      %p151 = scmp.ne.s32.totalorder %s136, %s150
      %p152 = scmp.eq.s32.totalorder %s21, 0
      %p153 = por %p151, %p152
      %s154 = ssub.s32 %s15, %s22
      %p155 = scmp.eq.s32.totalorder %s154, 0
      %s157 = sadd.s32 %s156, 1
      %s158 = scalar_select %p155, %s156, %s157
      %p161 = pneg %p155
      %p162 = scmp.eq.s32.totalorder %s15, 1
      %p163 = por %p161, %p162
      %p164 = scmp.ne.s32.totalorder %s156, %s159
      %p165 = scmp.eq.s32.totalorder %s15, 0
      %p166 = por %p164, %p165
      %p167 = scmp.ne.s32.totalorder %s156, %s159
      %p168 = scmp.eq.s32.totalorder %s20, 1
      %p169 = por %p167, %p168
      %p170 = scmp.ne.s32.totalorder %s159, %s160
      %p171 = scmp.eq.s32.totalorder %s20, 0
      %p172 = por %p170, %p171
      %p173 = scmp.ne.s32.totalorder %s159, %s160
      %p174 = scmp.eq.s32.totalorder %s21, 1
      %p175 = por %p173, %p174
      %p177 = scmp.ne.s32.totalorder %s160, %s176
      %p178 = scmp.eq.s32.totalorder %s21, 0
      %p179 = por %p177, %p178
      %s181 = sadd.s32 %s180, 1
      %p184 = scmp.eq.s32.totalorder %s15, 1
      %p185 = scmp.ne.s32.totalorder %s180, %s182
      %p186 = scmp.eq.s32.totalorder %s15, 0
      %p187 = por %p185, %p186
      %p188 = scmp.ne.s32.totalorder %s180, %s182
      %p189 = scmp.eq.s32.totalorder %s20, 1
      %p190 = por %p188, %p189
      %p191 = scmp.ne.s32.totalorder %s182, %s183
      %p192 = scmp.eq.s32.totalorder %s20, 0
      %p193 = por %p191, %p192
      %p194 = scmp.ne.s32.totalorder %s182, %s183
      %p195 = scmp.eq.s32.totalorder %s21, 1
      %p196 = por %p194, %p195
      %p198 = scmp.ne.s32.totalorder %s183, %s197
      %p199 = scmp.eq.s32.totalorder %s21, 0
      %p200 = por %p198, %p199
      %p201 = scmp.le.s32.totalorder 1, %s15
      %p202 = scmp.lt.s32.totalorder %s15, 3
      %p203 = pnand %p201, %p202
      %p204 = pneg %p203
      // Predicated region
      $region9: #{_lambda_.30} parent=5 // pred_check
        _
      $region10: #{_lambda_.30} parent=5 // pred_check_branch
        %206 = sbr.rel (%p203) target = $region12
      $region11: #{_lambda_.30} parent=5 // pred_region
        %s207 = ssub.s32 %s15, 1
        // Predicated region
        $region13: #{_lambda_.30} parent=11 // pred_check
          %p208 = pneg %p62
        $region14: #{_lambda_.30} parent=11 // pred_check_branch
          %210 = sbr.rel (%p208) target = $region16
        $region15: #{_lambda_.30} parent=11 // pred_region
          _
        $region16: #{_lambda_.30} parent=11 // pred_fallthru
          _
        // Predicated region
        $region17: #{_lambda_.30} parent=11 // pred_check
          %p211 = pneg %p83
        $region18: #{_lambda_.30} parent=11 // pred_check_branch
          %213 = sbr.rel (%p211) target = $region20
        $region19: #{_lambda_.30} parent=11 // pred_region
          _
        $region20: #{_lambda_.30} parent=11 // pred_fallthru
          _
        // Predicated region
        $region21: #{_lambda_.30} parent=11 // pred_check
          %p214 = pneg %p104
        $region22: #{_lambda_.30} parent=11 // pred_check_branch
          %216 = sbr.rel (%p214) target = $region24
        $region23: #{_lambda_.30} parent=11 // pred_region
          _
        $region24: #{_lambda_.30} parent=11 // pred_fallthru
          _
        // Predicated region
        $region25: #{_lambda_.30} parent=11 // pred_check
          %p217 = pneg %p125
        $region26: #{_lambda_.30} parent=11 // pred_check_branch
          %219 = sbr.rel (%p217) target = $region28
        $region27: #{_lambda_.30} parent=11 // pred_region
          _
        $region28: #{_lambda_.30} parent=11 // pred_fallthru
          _
        // Predicated region
        $region29: #{_lambda_.30} parent=11 // pred_check
          %p220 = pneg %p146
        $region30: #{_lambda_.30} parent=11 // pred_check_branch
          %222 = sbr.rel (%p220) target = $region32
        $region31: #{_lambda_.30} parent=11 // pred_region
          _
        $region32: #{_lambda_.30} parent=11 // pred_fallthru
          _
      $region12: #{_lambda_.30} parent=5 // pred_fallthru
        _
      %p223 = scmp.lt.s32.totalorder %s15, 2
      // Predicated region
      $region33: #{_lambda_.30} parent=5 // pred_check
        %p224 = pneg %p223
      $region34: #{_lambda_.30} parent=5 // pred_check_branch
        %226 = sbr.rel (%p224) target = $region36
      $region35: #{_lambda_.30} parent=5 // pred_region
        // Predicated region
        $region37: #{_lambda_.30} parent=35 // pred_check
          %p227 = pneg %p35
        $region38: #{_lambda_.30} parent=35 // pred_check_branch
          %229 = sbr.rel (%p227) target = $region40
        $region39: #{_lambda_.30} parent=35 // pred_region
          %s230 = smul.u32 2, %s15
          %p231 = scmp.lt.s32.totalorder %s230, 3
          %s232 = scalar_select %p231, %s230, 3
          %s233 = smul.addr %s232, 4
          %s234 = scalar_lea.vmem %s0, %s233
          %s235 = smul.u32 2, %s15
        $region40: #{_lambda_.30} parent=35 // pred_fallthru
          _
      $region36: #{_lambda_.30} parent=5 // pred_fallthru
        _
      %p236 = scmp.le.s32.totalorder 1, %s15
      %p237 = scmp.lt.s32.totalorder %s15, 3
      %p238 = pnand %p236, %p237
      %p239 = pneg %p238
      // Predicated region
      $region41: #{_lambda_.30} parent=5 // pred_check
        _
      $region42: #{_lambda_.30} parent=5 // pred_check_branch
        %241 = sbr.rel (%p238) target = $region44
      $region43: #{_lambda_.30} parent=5 // pred_region
        %s242 = ssub.s32 %s15, 1
        %s243 = smul.u32 2, %s20
        %p244 = scmp.lt.s32.totalorder %s243, 3
        %s245 = scalar_select %p244, %s243, 3
        %s246 = smul.addr %s245, 4
        %s247 = scalar_lea.vmem %s0, %s246
        %p248 = pneg %p41
        %p249 = pneg %p38
        %p250 = pneg %p62
        %p251 = pneg %p59
        %p252 = pneg %p83
        %p253 = pneg %p80
        %p254 = pneg %p104
        %p255 = pneg %p101
        %p256 = pneg %p125
        %p257 = pneg %p122
        %p258 = pneg %p146
        %p259 = pneg %p143
        %p260 = pneg %p172
        %p261 = pneg %p169
        %s262 = smul.u32 2, %s20
        %p263 = scmp.lt.s32.totalorder %s262, 3
        %s264 = scalar_select %p263, %s262, 3
        %s265 = smul.addr %s264, 4
        %s266 = scalar_lea.vmem %s6, %s265
        %p267 = pneg %p193
        %p268 = pneg %p190
        %s269 = smul.u32 2, %s20
        %p270 = scmp.lt.s32.totalorder %s269, 3
        %s271 = scalar_select %p270, %s269, 3
        %s272 = smul.addr %s271, 4
        %s273 = scalar_lea.vmem %s0, %s272
        %s274 = smul.u32 2, %s20
        %s275 = smul.u32 2, %s20
        %p276 = scmp.lt.s32.totalorder %s275, 3
        %s277 = scalar_select %p276, %s275, 3
        %s278 = smul.addr %s277, 4
        %s279 = scalar_lea.vmem %s6, %s278
        %s280 = smul.u32 2, %s20
        %v282 = vld [vmem:[%s2] sm:$0x1]
        %v283 = vld [vmem:[%s273] sm:$0xf]
        %v284 = vld [vmem:[%s273 + $0x4] sm:$0xf]
        %v285 = vld [vmem:[%s1] sm:$0xf]
        %v286 = vld [vmem:[%s1 + $0x4] sm:$0xf]
        %v287 = vld [vmem:[%s1 + $0x8] sm:$0xf]
        %v288 = vld [vmem:[%s1 + $0xc] sm:$0xf]
        %v291 = vunpack.c.l.b16 %v283
        %v292 = vunpack.c.l.b16 %v284
        %v293 = vpack.c.b16 %v292, %v291
        %v298 = vunpack.c.l.b16 %v285
        %v299 = vunpack.c.l.b16 %v286
        %v300 = vunpack.c.l.b16 %v287
        %v301 = vunpack.c.l.b16 %v288
        %v302 = vpack.c.b16 %v299, %v298
        %v303 = vpack.c.b16 %v301, %v300
        %vm306 = vcmask 261120
        %v308 = vsel %vm306, %v293, 0
        %310 = vmatprep.subr.bf16.mxu0 0
        %311 = vmatpush1.bf16.msra.mxu0 0
        %312 = vmatprep.subr.bf16.mxu0 0
        %313 = vmatpush1.bf16.msra.mxu0 0
        %314 = vmatprep.subr.bf16.mxu0 0
        %315 = vmatpush1.bf16.msra.mxu0 0
        %316 = vmatprep.subr.bf16.mxu0 0
        %317 = vmatpush1.bf16.msra.mxu0 0
        %318 = vmatprep.subr.bf16.mxu0 0
        %319 = vmatpush1.bf16.msra.mxu0 0
        %320 = vmatprep.subr.bf16.mxu0 0
        %321 = vmatpush1.bf16.msra.mxu0 0
        %322 = vmatprep.subr.bf16.mxu0 0
        %323 = vmatpush1.bf16.msra.mxu0 %v303
        %324 = vmatprep.subr.bf16.mxu0 0
        %325 = vmatpush1.bf16.msra.mxu0 %v302
        %326 = vmatprep.subr.bf16.mxu0 0
        %327 = vmatpush2.bf16.msra.mxu0 0
        %328 = vmatprep.subr.bf16.mxu0 0
        %329 = vmatpush2.bf16.msra.mxu0 0
        %330 = vmatprep.subr.bf16.mxu0 0
        %331 = vmatpush2.bf16.msra.mxu0 0
        %332 = vmatprep.subr.bf16.mxu0 0
        %333 = vmatpush2.bf16.msra.mxu0 0
        %334 = vmatprep.subr.bf16.mxu0 0
        %335 = vmatpush2.bf16.msra.mxu0 0
        %336 = vmatprep.subr.bf16.mxu0 0
        %337 = vmatpush2.bf16.msra.mxu0 0
        %338 = vmatprep.subr.bf16.mxu0 0
        %339 = vmatpush2.bf16.msra.mxu0 0
        %340 = vmatprep.subr.bf16.mxu0 0
        %341 = vmatpush2.bf16.msra.mxu0 0
        %342 = vmatprep.mubr.bf16.mxu0 0
        %343 = vmatmul.mubr.bf16.gmra.mxu0 %v308
        %v344 = vpop.f32.mrf.mxu0
        %v345 = vadd.f32 0.0, %v344
        %v346 = vpop.f32.mrf.mxu0
        %v347 = vpop.f32.mrf.mxu0
        %v348 = vadd.f32 0.0, %v347
        %v349 = vpop.f32.mrf.mxu0
        %350 = vdwg.mxu0
        %v352 = vlaneseq
        %v353 = vshrl.u32 %v352, 7
        %v354 = vsub.s32 0, %v353
        %v355 = vrot.slane %v282, %v354
        %v357 = vadd.f32 %v355, %v345
        %v358 = vadd.f32 %v355, %v348
        %v359 = vpack.c.bf16 %v358, %v357
        %v360 = vld [vmem:[%s3] sm:$0xf]
        %v361 = vld [vmem:[%s3 + $0x4] sm:$0xf]
        %v362 = vld [vmem:[%s3 + $0x8] sm:$0xf]
        %v363 = vld [vmem:[%s3 + $0xc] sm:$0xf]
        %v364 = vld [vmem:[%s3 + $0x10] sm:$0xf]
        %v365 = vld [vmem:[%s3 + $0x14] sm:$0xf]
        %v366 = vld [vmem:[%s3 + $0x18] sm:$0xf]
        %v367 = vld [vmem:[%s3 + $0x1c] sm:$0xf]
        %v368 = vld [vmem:[%s3 + $0x20] sm:$0xf]
        %v369 = vld [vmem:[%s3 + $0x24] sm:$0xf]
        %v370 = vld [vmem:[%s3 + $0x28] sm:$0xf]
        %v371 = vld [vmem:[%s3 + $0x2c] sm:$0xf]
        %v372 = vld [vmem:[%s3 + $0x30] sm:$0xf]
        %v373 = vld [vmem:[%s3 + $0x34] sm:$0xf]
        %v374 = vld [vmem:[%s3 + $0x38] sm:$0xf]
        %v375 = vld [vmem:[%s3 + $0x3c] sm:$0xf]
        %v392 = vunpack.c.l.b16 %v360
        %v393 = vunpack.c.l.b16 %v361
        %v394 = vunpack.c.l.b16 %v362
        %v395 = vunpack.c.l.b16 %v363
        %v396 = vunpack.c.l.b16 %v364
        %v397 = vunpack.c.l.b16 %v365
        %v398 = vunpack.c.l.b16 %v366
        %v399 = vunpack.c.l.b16 %v367
        %v400 = vunpack.c.l.b16 %v368
        %v401 = vunpack.c.l.b16 %v369
        %v402 = vunpack.c.l.b16 %v370
        %v403 = vunpack.c.l.b16 %v371
        %v404 = vunpack.c.l.b16 %v372
        %v405 = vunpack.c.l.b16 %v373
        %v406 = vunpack.c.l.b16 %v374
        %v407 = vunpack.c.l.b16 %v375
        %v408 = vpack.c.b16 %v393, %v392
        %v409 = vpack.c.b16 %v395, %v394
        %v410 = vpack.c.b16 %v397, %v396
        %v411 = vpack.c.b16 %v399, %v398
        %v412 = vpack.c.b16 %v401, %v400
        %v413 = vpack.c.b16 %v403, %v402
        %v414 = vpack.c.b16 %v405, %v404
        %v415 = vpack.c.b16 %v407, %v406
        %424 = vmatprep.subr.bf16.mxu0 0
        %425 = vmatpush1.bf16.msra.mxu0 %v415
        %426 = vmatprep.subr.bf16.mxu0 0
        %427 = vmatpush1.bf16.msra.mxu0 %v414
        %428 = vmatprep.subr.bf16.mxu0 0
        %429 = vmatpush1.bf16.msra.mxu0 %v413
        %430 = vmatprep.subr.bf16.mxu0 0
        %431 = vmatpush1.bf16.msra.mxu0 %v412
        %432 = vmatprep.subr.bf16.mxu0 0
        %433 = vmatpush1.bf16.msra.mxu0 %v411
        %434 = vmatprep.subr.bf16.mxu0 0
        %435 = vmatpush1.bf16.msra.mxu0 %v410
        %436 = vmatprep.subr.bf16.mxu0 0
        %437 = vmatpush1.bf16.msra.mxu0 %v409
        %438 = vmatprep.subr.bf16.mxu0 0
        %439 = vmatpush1.bf16.msra.mxu0 %v408
        %440 = vmatprep.subr.bf16.mxu0 0
        %441 = vmatpush2.bf16.msra.mxu0 0
        %442 = vmatprep.subr.bf16.mxu0 0
        %443 = vmatpush2.bf16.msra.mxu0 0
        %444 = vmatprep.subr.bf16.mxu0 0
        %445 = vmatpush2.bf16.msra.mxu0 0
        %446 = vmatprep.subr.bf16.mxu0 0
        %447 = vmatpush2.bf16.msra.mxu0 0
        %448 = vmatprep.subr.bf16.mxu0 0
        %449 = vmatpush2.bf16.msra.mxu0 0
        %450 = vmatprep.subr.bf16.mxu0 0
        %451 = vmatpush2.bf16.msra.mxu0 0
        %452 = vmatprep.subr.bf16.mxu0 0
        %453 = vmatpush2.bf16.msra.mxu0 0
        %454 = vmatprep.subr.bf16.mxu0 0
        %455 = vmatpush2.bf16.msra.mxu0 0
        %456 = vmatprep.mubr.bf16.mxu0 0
        %457 = vmatmul.mubr.bf16.gmra.mxu0 %v359
        %v458 = vpop.f32.mrf.mxu0
        %v459 = vadd.f32 0.0, %v458
        %v460 = vpop.f32.mrf.mxu0
        %v461 = vpop.f32.mrf.mxu0
        %v462 = vadd.f32 0.0, %v461
        %v463 = vpop.f32.mrf.mxu0
        %464 = vdwg.mxu0
        %v465 = vld [vmem:[%s5] sm:$0x1]
        %v466 = vmul.f32 %v459, 2.0
        %v467 = vmul.f32 %v462, 2.0
        %v469 = vlaneseq
        %v470 = vshrl.u32 %v469, 7
        %v471 = vsub.s32 0, %v470
        %v472 = vrot.slane %v465, %v471
        %v474 = vsub.f32 %v472, %v466
        %v475 = vsub.f32 %v472, %v467
        %476 = vmin.xlane.f32.xlu0 %v474
        %v477 = vpop.xlane.xlu0 %476
        %478 = vmin.xlane.f32.xlu0 %v475
        %v479 = vpop.xlane.xlu0 %478
        %v480 = vlaneseq
        %v481 = vand.u32 %v480, 127
        %vm482 = vcmp.le.f32.partialorder %v474, %v477
        %vm483 = vcmp.le.f32.partialorder %v475, %v479
        %v484 = vsel %vm482, %v481, 128
        %v485 = vsel %vm483, %v481, 128
        %v486 = vand.u32 %v484, 65535
        %v487 = vshra.s32 %v484, 16
        %v488 = vcvt.s32.f32 %v486
        %v489 = vcvt.s32.f32 %v487
        %490 = vmin.xlane.f32.xlu0 %v489
        %v491 = vpop.xlane.xlu0 %490
        %vm492 = vcmp.eq.f32.partialorder %v489, %v491
        %v493 = vsel %vm492, %v488, inf
        %494 = vmin.xlane.f32.xlu0 %v493
        %v495 = vpop.xlane.xlu0 %494
        %v496 = vcvt.f32.s32 %v495
        %v497 = vcvt.f32.s32 %v491
        %v498 = vshll.u32 %v497, 16
        %v499 = vadd.s32 %v498, %v496
        %v500 = vand.u32 %v485, 65535
        %v501 = vshra.s32 %v485, 16
        %v502 = vcvt.s32.f32 %v500
        %v503 = vcvt.s32.f32 %v501
        %504 = vmin.xlane.f32.xlu0 %v503
        %v505 = vpop.xlane.xlu0 %504
        %vm506 = vcmp.eq.f32.partialorder %v503, %v505
        %v507 = vsel %vm506, %v502, inf
        %508 = vmin.xlane.f32.xlu0 %v507
        %v509 = vpop.xlane.xlu0 %508
        %v510 = vcvt.f32.s32 %v509
        %v511 = vcvt.f32.s32 %v505
        %v512 = vshll.u32 %v511, 16
        %v513 = vadd.s32 %v512, %v510
        %vm514 = vcmp.eq.s32.totalorder %v481, %v499
        %vm515 = vcmp.eq.s32.totalorder %v481, %v513
        %v516 = vsel %vm514, 1, 0
        %v517 = vsel %vm515, 1, 0
        %v518 = vcvt.s32.f32 %v516
        %v519 = vcvt.s32.f32 %v517
        %v520 = vpack.c.bf16 %v519, %v518
        %v521 = vld [vmem:[%s4] sm:$0xf]
        %v522 = vld [vmem:[%s4 + $0x4] sm:$0xf]
        %v523 = vld [vmem:[%s4 + $0x8] sm:$0xf]
        %v524 = vld [vmem:[%s4 + $0xc] sm:$0xf]
        %v525 = vld [vmem:[%s4 + $0x10] sm:$0xf]
        %v526 = vld [vmem:[%s4 + $0x14] sm:$0xf]
        %v527 = vld [vmem:[%s4 + $0x18] sm:$0xf]
        %v528 = vld [vmem:[%s4 + $0x1c] sm:$0xf]
        %v529 = vld [vmem:[%s4 + $0x20] sm:$0xf]
        %v530 = vld [vmem:[%s4 + $0x24] sm:$0xf]
        %v531 = vld [vmem:[%s4 + $0x28] sm:$0xf]
        %v532 = vld [vmem:[%s4 + $0x2c] sm:$0xf]
        %v533 = vld [vmem:[%s4 + $0x30] sm:$0xf]
        %v534 = vld [vmem:[%s4 + $0x34] sm:$0xf]
        %v535 = vld [vmem:[%s4 + $0x38] sm:$0xf]
        %v536 = vld [vmem:[%s4 + $0x3c] sm:$0xf]
        %v553 = vunpack.c.l.b16 %v521
        %v554 = vunpack.c.l.b16 %v522
        %v555 = vunpack.c.l.b16 %v523
        %v556 = vunpack.c.l.b16 %v524
        %v557 = vunpack.c.l.b16 %v525
        %v558 = vunpack.c.l.b16 %v526
        %v559 = vunpack.c.l.b16 %v527
        %v560 = vunpack.c.l.b16 %v528
        %v561 = vunpack.c.l.b16 %v529
        %v562 = vunpack.c.l.b16 %v530
        %v563 = vunpack.c.l.b16 %v531
        %v564 = vunpack.c.l.b16 %v532
        %v565 = vunpack.c.l.b16 %v533
        %v566 = vunpack.c.l.b16 %v534
        %v567 = vunpack.c.l.b16 %v535
        %v568 = vunpack.c.l.b16 %v536
        %v569 = vpack.c.b16 %v554, %v553
        %v570 = vpack.c.b16 %v556, %v555
        %v571 = vpack.c.b16 %v558, %v557
        %v572 = vpack.c.b16 %v560, %v559
        %v573 = vpack.c.b16 %v562, %v561
        %v574 = vpack.c.b16 %v564, %v563
        %v575 = vpack.c.b16 %v566, %v565
        %v576 = vpack.c.b16 %v568, %v567
        %585 = vmatprep.subr.bf16.mxu0 0
        %586 = vmatpush1.bf16.msra.mxu0 %v576
        %587 = vmatprep.subr.bf16.mxu0 0
        %588 = vmatpush1.bf16.msra.mxu0 %v575
        %589 = vmatprep.subr.bf16.mxu0 0
        %590 = vmatpush1.bf16.msra.mxu0 %v574
        %591 = vmatprep.subr.bf16.mxu0 0
        %592 = vmatpush1.bf16.msra.mxu0 %v573
        %593 = vmatprep.subr.bf16.mxu0 0
        %594 = vmatpush1.bf16.msra.mxu0 %v572
        %595 = vmatprep.subr.bf16.mxu0 0
        %596 = vmatpush1.bf16.msra.mxu0 %v571
        %597 = vmatprep.subr.bf16.mxu0 0
        %598 = vmatpush1.bf16.msra.mxu0 %v570
        %599 = vmatprep.subr.bf16.mxu0 0
        %600 = vmatpush1.bf16.msra.mxu0 %v569
        %601 = vmatprep.subr.bf16.mxu0 0
        %602 = vmatpush2.bf16.msra.mxu0 0
        %603 = vmatprep.subr.bf16.mxu0 0
        %604 = vmatpush2.bf16.msra.mxu0 0
        %605 = vmatprep.subr.bf16.mxu0 0
        %606 = vmatpush2.bf16.msra.mxu0 0
        %607 = vmatprep.subr.bf16.mxu0 0
        %608 = vmatpush2.bf16.msra.mxu0 0
        %609 = vmatprep.subr.bf16.mxu0 0
        %610 = vmatpush2.bf16.msra.mxu0 0
        %611 = vmatprep.subr.bf16.mxu0 0
        %612 = vmatpush2.bf16.msra.mxu0 0
        %613 = vmatprep.subr.bf16.mxu0 0
        %614 = vmatpush2.bf16.msra.mxu0 0
        %615 = vmatprep.subr.bf16.mxu0 0
        %616 = vmatpush2.bf16.msra.mxu0 0
        %617 = vmatprep.mubr.bf16.mxu0 0
        %618 = vmatmul.mubr.bf16.gmra.mxu0 %v520
        %v619 = vpop.f32.mrf.mxu0
        %v620 = vadd.f32 0.0, %v619
        %v621 = vpop.f32.mrf.mxu0
        %v622 = vpop.f32.mrf.mxu0
        %v623 = vadd.f32 0.0, %v622
        %v624 = vpop.f32.mrf.mxu0
        %625 = vdwg.mxu0
        %v626 = vpack.c.bf16 %v623, %v620
        %v628 = vunpack.c.l.b16 %v626
        %v629 = vunpack.c.h.b16 %v626
        %v630 = vpack.c.b16 %v628, %v628
        %v631 = vpack.c.b16 %v629, %v629
        %634 = vst [vmem:[%s279] sm:$0xf] %v630
        %635 = vst [vmem:[%s279 + $0x4] sm:$0xf] %v631
        %s636 = smul.u32 %s20, 16
        %v637 = vlaneseq
        %v638 = vshrl.u32 %v637, 7
        %v639 = vadd.s32 %v638, 8
        %v640 = vstv %s636
        %v641 = vadd.s32 %v640, %v638
        %v642 = vadd.s32 %v640, %v639
        %vm643 = vcmp.lt.s32.totalorder %v641, 32
        %vm644 = vcmp.lt.s32.totalorder %v642, 32
        %v645 = vsub.f32 %v620, %v357
        %v646 = vsub.f32 %v623, %v358
        %v647 = vmul.f32 %v645, %v645
        %v648 = vmul.f32 %v646, %v646
        %v649 = vsel %vm643, 1, 0
        %v650 = vsel %vm644, 1, 0
        %vm651 = vcmp.eq.s32.totalorder %v649, 1
        %vm652 = vcmp.eq.s32.totalorder %v650, 1
        %v653 = vsel %vm651, %v647, 0.0
        %v654 = vsel %vm652, %v648, 0.0
        %p655 = scmp.eq.s32.totalorder %s20, 0
        // Predicated region
        $region45: #{_lambda_.30} parent=43 // pred_check
          %p656 = pneg %p655
        $region46: #{_lambda_.30} parent=43 // pred_check_branch
          %658 = sbr.rel (%p656) target = $region48
        $region47: #{_lambda_.30} parent=43 // pred_region
          %vm659 = vcmask 0
          %660 = vst.msk [vmem:[#allocation2] sm:$0x1] %vm659, 0.0
        $region48: #{_lambda_.30} parent=43 // pred_fallthru
          _
        %v661 = vld [vmem:[#allocation2] sm:$0x1]
        %v662 = vadd.f32 %v653, %v654
        %663 = vadd.xlane.f32.xlu0 %v662
        %v664 = vpop.xlane.xlu0 %663
        %v665 = vrot.slane %v664, 4
        %v666 = vadd.f32 %v664, %v665
        %v667 = vrot.slane %v666, 2
        %v668 = vadd.f32 %v666, %v667
        %v669 = vrot.slane %v668, 1
        %v670 = vadd.f32 %v668, %v669
        %s671 = vtos %v670
        %v672 = vstv %s671
        %v673 = vadd.f32 %v661, %v672
        %vm674 = vcmask 0
        %675 = vst.msk [vmem:[#allocation2] sm:$0x1] %vm674, %v673
        %s676 = smul.u32 2, %s20
        %p677 = scmp.lt.s32.totalorder %s676, 3
        %s678 = scalar_select %p677, %s676, 3
        %s679 = smul.addr %s678, 4
        %s680 = scalar_lea.vmem %s6, %s679
        // Predicated region
        $region49: #{_lambda_.30} parent=43 // pred_check
          %p681 = pneg %p169
        $region50: #{_lambda_.30} parent=43 // pred_check_branch
          %683 = sbr.rel (%p681) target = $region52
        $region51: #{_lambda_.30} parent=43 // pred_region
          %s684 = smul.u32 2, %s20
        $region52: #{_lambda_.30} parent=43 // pred_fallthru
          _
        // Predicated region
        $region53: #{_lambda_.30} parent=43 // pred_check
          %p685 = pneg %p190
        $region54: #{_lambda_.30} parent=43 // pred_check_branch
          %687 = sbr.rel (%p685) target = $region56
        $region55: #{_lambda_.30} parent=43 // pred_region
          %s689 = ssub.s32 16, 16
          %690 = vsyncadd [#allocation3], %s689
          %s692 = sshll.u32 [#allocation2], 4
          %s693 = int_to_ptr.vmem [resolvable:$true] %s692
          %695 = dma.vmem_to_hbm [thread:$0]  %s693, 16, %s7, [#allocation3]
        $region56: #{_lambda_.30} parent=43 // pred_fallthru
          _
        // Predicated region
        $region57: #{_lambda_.30} parent=43 // pred_check
          %p696 = pneg %p190
        $region58: #{_lambda_.30} parent=43 // pred_check_branch
          %698 = sbr.rel (%p696) target = $region60
        $region59: #{_lambda_.30} parent=43 // pred_region
          %699 = dma.done [#allocation3], 16
        $region60: #{_lambda_.30} parent=43 // pred_fallthru
          _
      $region44: #{_lambda_.30} parent=5 // pred_fallthru
        _
      %p700 = scmp.le.s32.totalorder 2, %s15
      // Predicated region
      $region61: #{_lambda_.30} parent=5 // pred_check
        %p701 = pneg %p700
      $region62: #{_lambda_.30} parent=5 // pred_check_branch
        %703 = sbr.rel (%p701) target = $region64
      $region63: #{_lambda_.30} parent=5 // pred_region
        %s704 = ssub.s32 %s15, 2
        // Predicated region
        $region65: #{_lambda_.30} parent=63 // pred_check
          %p705 = pneg %p175
        $region66: #{_lambda_.30} parent=63 // pred_check_branch
          %707 = sbr.rel (%p705) target = $region68
        $region67: #{_lambda_.30} parent=63 // pred_region
          %s708 = smul.u32 2, %s21
          %p709 = scmp.lt.s32.totalorder %s708, 3
          %s710 = scalar_select %p709, %s708, 3
          %s711 = smul.addr %s710, 4
          %s712 = scalar_lea.vmem %s6, %s711
        $region68: #{_lambda_.30} parent=63 // pred_fallthru
          _
      $region64: #{_lambda_.30} parent=5 // pred_fallthru
        _
    $region6: #{_lambda_.30} parent=1 // loop_footer
      %s19 = sadd.s32 1, %s15
    $region7: #{_lambda_.30} parent=1 // loop_footer_branch
      %14 = sbr.rel target = $region3
    $region8: #{_lambda_.30} parent=1 // loop_exit
      _
    %713 = vsyncpa [#allocation3], 1
    %s714 = scalar_lea.sflag [#allocation3], 1
    %715 = vsyncpa %s714, 1

// kernel: _lambda_.37
$region0: #{_lambda_.37}
  #allocation0 [shape = 'u32[]', space=smem, size = 0x4, offset = 0x4, fixed_abs, tag = 'smem constant byte address 0x4 - core index']
  #allocation1 [shape = 'u32[144,128]{1,0:T(1,128)}', space=vmem, size = 0x12000, scoped, tag = 'internal scratch']
  %s0 = inlined_call_operand.vmem [shape: bf16[32,64], index: 0, kind: input, shape index: {}]
  %s1 = inlined_call_operand.vmem [shape: bf16[64,128], index: 1, kind: input, shape index: {}]
  %s2 = inlined_call_operand.vmem [shape: f32[1,128], index: 2, kind: input, shape index: {}]
  %s3 = inlined_call_operand.vmem [shape: bf16[32,128], index: 3, kind: output, shape index: {}]
  %s4 = sld [smem:[#allocation0]]
  $region45: #{_lambda_.37} parent=0
    _
  %s6 = ssub.s32 1, %s4
  %s7 = scalar_select 0, %s6, %s4
  loop: start=0, step=1, limit=4
  $region2: #{_lambda_.37} parent=0 // loop_pre_header
    _
  $region3: #{_lambda_.37} parent=0 // loop_header
    %s9 = sphi 0, %s13
    %p10 = scmp.ge.s32.totalorder %s9, 4
    %s19 = sphi 0, %s21
    %s22 = sphi 0, %s19
    %s23 = sphi 0, %s22
    %s39 = sphi 0, %s23
    %s43 = sphi 0, %s43
    %s45 = sphi 0, %s43
    %s46 = sphi 0, %s45
    %s60 = sphi 0, %s46
    %s64 = sphi 0, %s64
    %s66 = sphi 0, %s64
    %s67 = sphi 0, %s66
    %s81 = sphi 0, %s67
    %s87 = sphi 0, %s89
    %s90 = sphi 0, %s87
    %s91 = sphi 0, %s90
    %s107 = sphi 0, %s91
  $region4: #{_lambda_.37} parent=0 // loop_header_branch
    %12 = sbr.rel (%p10) target = $region8
  $region5: #{_lambda_.37} parent=0 // loop_body
    %s14 = ssub.s32 %s9, 1
    %s15 = ssub.s32 %s9, 2
    %s16 = sadd.s32 %s9, 1
    %s17 = ssub.s32 %s9, %s16
    %p18 = scmp.eq.s32.totalorder %s17, 0
    %s20 = sadd.s32 %s19, 1
    %s21 = scalar_select %p18, %s19, %s20
    %p24 = pneg %p18
    %p25 = scmp.eq.s32.totalorder %s9, 1
    %p26 = por %p24, %p25
    %p27 = scmp.ne.s32.totalorder %s19, %s22
    %p28 = scmp.eq.s32.totalorder %s9, 0
    %p29 = por %p27, %p28
    %p30 = scmp.ne.s32.totalorder %s19, %s22
    %p31 = scmp.eq.s32.totalorder %s14, 1
    %p32 = por %p30, %p31
    %p33 = scmp.ne.s32.totalorder %s22, %s23
    %p34 = scmp.eq.s32.totalorder %s14, 0
    %p35 = por %p33, %p34
    %p36 = scmp.ne.s32.totalorder %s22, %s23
    %p37 = scmp.eq.s32.totalorder %s15, 1
    %p38 = por %p36, %p37
    %p40 = scmp.ne.s32.totalorder %s23, %s39
    %p41 = scmp.eq.s32.totalorder %s15, 0
    %p42 = por %p40, %p41
    %s44 = sadd.s32 %s43, 1
    %p47 = scmp.eq.s32.totalorder %s9, 1
    %p48 = scmp.ne.s32.totalorder %s43, %s45
    %p49 = scmp.eq.s32.totalorder %s9, 0
    %p50 = por %p48, %p49
    %p51 = scmp.ne.s32.totalorder %s43, %s45
    %p52 = scmp.eq.s32.totalorder %s14, 1
    %p53 = por %p51, %p52
    %p54 = scmp.ne.s32.totalorder %s45, %s46
    %p55 = scmp.eq.s32.totalorder %s14, 0
    %p56 = por %p54, %p55
    %p57 = scmp.ne.s32.totalorder %s45, %s46
    %p58 = scmp.eq.s32.totalorder %s15, 1
    %p59 = por %p57, %p58
    %p61 = scmp.ne.s32.totalorder %s46, %s60
    %p62 = scmp.eq.s32.totalorder %s15, 0
    %p63 = por %p61, %p62
    %s65 = sadd.s32 %s64, 1
    %p68 = scmp.eq.s32.totalorder %s9, 1
    %p69 = scmp.ne.s32.totalorder %s64, %s66
    %p70 = scmp.eq.s32.totalorder %s9, 0
    %p71 = por %p69, %p70
    %p72 = scmp.ne.s32.totalorder %s64, %s66
    %p73 = scmp.eq.s32.totalorder %s14, 1
    %p74 = por %p72, %p73
    %p75 = scmp.ne.s32.totalorder %s66, %s67
    %p76 = scmp.eq.s32.totalorder %s14, 0
    %p77 = por %p75, %p76
    %p78 = scmp.ne.s32.totalorder %s66, %s67
    %p79 = scmp.eq.s32.totalorder %s15, 1
    %p80 = por %p78, %p79
    %p82 = scmp.ne.s32.totalorder %s67, %s81
    %p83 = scmp.eq.s32.totalorder %s15, 0
    %p84 = por %p82, %p83
    %s85 = ssub.s32 %s9, %s16
    %p86 = scmp.eq.s32.totalorder %s85, 0
    %s88 = sadd.s32 %s87, 1
    %s89 = scalar_select %p86, %s87, %s88
    %p92 = pneg %p86
    %p93 = scmp.eq.s32.totalorder %s9, 1
    %p94 = por %p92, %p93
    %p95 = scmp.ne.s32.totalorder %s87, %s90
    %p96 = scmp.eq.s32.totalorder %s9, 0
    %p97 = por %p95, %p96
    %p98 = scmp.ne.s32.totalorder %s87, %s90
    %p99 = scmp.eq.s32.totalorder %s14, 1
    %p100 = por %p98, %p99
    %p101 = scmp.ne.s32.totalorder %s90, %s91
    %p102 = scmp.eq.s32.totalorder %s14, 0
    %p103 = por %p101, %p102
    %p104 = scmp.ne.s32.totalorder %s90, %s91
    %p105 = scmp.eq.s32.totalorder %s15, 1
    %p106 = por %p104, %p105
    %p108 = scmp.ne.s32.totalorder %s91, %s107
    %p109 = scmp.eq.s32.totalorder %s15, 0
    %p110 = por %p108, %p109
    %p111 = scmp.le.s32.totalorder 1, %s9
    %p112 = scmp.lt.s32.totalorder %s9, 3
    %p113 = pnand %p111, %p112
    %p114 = pneg %p113
    // Predicated region
    $region9: #{_lambda_.37} parent=5 // pred_check
      _
    $region10: #{_lambda_.37} parent=5 // pred_check_branch
      %116 = sbr.rel (%p113) target = $region12
    $region11: #{_lambda_.37} parent=5 // pred_region
      %s117 = ssub.s32 %s9, 1
      // Predicated region
      $region13: #{_lambda_.37} parent=11 // pred_check
        %p118 = pneg %p56
      $region14: #{_lambda_.37} parent=11 // pred_check_branch
        %120 = sbr.rel (%p118) target = $region16
      $region15: #{_lambda_.37} parent=11 // pred_region
        _
      $region16: #{_lambda_.37} parent=11 // pred_fallthru
        _
      // Predicated region
      $region17: #{_lambda_.37} parent=11 // pred_check
        %p121 = pneg %p77
      $region18: #{_lambda_.37} parent=11 // pred_check_branch
        %123 = sbr.rel (%p121) target = $region20
      $region19: #{_lambda_.37} parent=11 // pred_region
        _
      $region20: #{_lambda_.37} parent=11 // pred_fallthru
        _
    $region12: #{_lambda_.37} parent=5 // pred_fallthru
      _
    %p124 = scmp.lt.s32.totalorder %s9, 2
    // Predicated region
    $region21: #{_lambda_.37} parent=5 // pred_check
      %p125 = pneg %p124
    $region22: #{_lambda_.37} parent=5 // pred_check_branch
      %127 = sbr.rel (%p125) target = $region24
    $region23: #{_lambda_.37} parent=5 // pred_region
      // Predicated region
      $region25: #{_lambda_.37} parent=23 // pred_check
        %p128 = pneg %p29
      $region26: #{_lambda_.37} parent=23 // pred_check_branch
        %130 = sbr.rel (%p128) target = $region28
      $region27: #{_lambda_.37} parent=23 // pred_region
        %s131 = smul.u32 2, %s9
        %p132 = scmp.lt.s32.totalorder %s131, 3
        %s133 = scalar_select %p132, %s131, 3
        %s134 = smul.addr %s133, 4
        %s135 = scalar_lea.vmem %s0, %s134
        %s136 = smul.u32 2, %s9
      $region28: #{_lambda_.37} parent=23 // pred_fallthru
        _
    $region24: #{_lambda_.37} parent=5 // pred_fallthru
      _
    %p137 = scmp.le.s32.totalorder 1, %s9
    %p138 = scmp.lt.s32.totalorder %s9, 3
    %p139 = pnand %p137, %p138
    %p140 = pneg %p139
    // Predicated region
    $region29: #{_lambda_.37} parent=5 // pred_check
      _
    $region30: #{_lambda_.37} parent=5 // pred_check_branch
      %142 = sbr.rel (%p139) target = $region32
    $region31: #{_lambda_.37} parent=5 // pred_region
      %s143 = ssub.s32 %s9, 1
      %s144 = smul.u32 2, %s14
      %p145 = scmp.lt.s32.totalorder %s144, 3
      %s146 = scalar_select %p145, %s144, 3
      %s147 = smul.addr %s146, 4
      %s148 = scalar_lea.vmem %s0, %s147
      %p149 = pneg %p35
      %p150 = pneg %p32
      %p151 = pneg %p56
      %p152 = pneg %p53
      %p153 = pneg %p77
      %p154 = pneg %p74
      %p155 = pneg %p103
      %p156 = pneg %p100
      %s157 = smul.u32 2, %s14
      %p158 = scmp.lt.s32.totalorder %s157, 3
      %s159 = scalar_select %p158, %s157, 3
      %s160 = smul.addr %s159, 4
      %s161 = scalar_lea.vmem %s3, %s160
      %s162 = smul.u32 2, %s14
      %p163 = scmp.lt.s32.totalorder %s162, 3
      %s164 = scalar_select %p163, %s162, 3
      %s165 = smul.addr %s164, 4
      %s166 = scalar_lea.vmem %s0, %s165
      %s167 = smul.u32 2, %s14
      %s168 = smul.u32 2, %s14
      %p169 = scmp.lt.s32.totalorder %s168, 3
      %s170 = scalar_select %p169, %s168, 3
      %s171 = smul.addr %s170, 4
      %s172 = scalar_lea.vmem %s3, %s171
      %s173 = smul.u32 2, %s14
      %v175 = vld [vmem:[%s166] sm:$0xf]
      %v176 = vld [vmem:[%s166 + $0x4] sm:$0xf]
      %v177 = vld [vmem:[%s1] sm:$0xf]
      %v178 = vld [vmem:[%s1 + $0x4] sm:$0xf]
      %v179 = vld [vmem:[%s1 + $0x8] sm:$0xf]
      %v180 = vld [vmem:[%s1 + $0xc] sm:$0xf]
      %v181 = vld [vmem:[%s1 + $0x10] sm:$0xf]
      %v182 = vld [vmem:[%s1 + $0x14] sm:$0xf]
      %v183 = vld [vmem:[%s1 + $0x18] sm:$0xf]
      %v184 = vld [vmem:[%s1 + $0x1c] sm:$0xf]
      %v185 = vld [vmem:[%s2] sm:$0x1]
      %v187 = vlaneseq
      %v188 = vshrl.u32 %v187, 7
      %v189 = vsub.s32 0, %v188
      %v190 = vrot.slane %v185, %v189
      %v194 = vunpack.c.l.b16 %v175
      %v195 = vunpack.c.l.b16 %v176
      %v196 = vpack.c.b16 %v195, %v194
      %v205 = vunpack.c.l.b16 %v177
      %v206 = vunpack.c.l.b16 %v178
      %v207 = vunpack.c.l.b16 %v179
      %v208 = vunpack.c.l.b16 %v180
      %v209 = vunpack.c.l.b16 %v181
      %v210 = vunpack.c.l.b16 %v182
      %v211 = vunpack.c.l.b16 %v183
      %v212 = vunpack.c.l.b16 %v184
      %v213 = vpack.c.b16 %v206, %v205
      %v214 = vpack.c.b16 %v208, %v207
      %v215 = vpack.c.b16 %v210, %v209
      %v216 = vpack.c.b16 %v212, %v211
      %vm221 = vcmask 523264
      %v223 = vsel %vm221, %v196, 0
      %225 = vmatprep.subr.bf16.mxu0 0
      %226 = vmatpush1.bf16.msra.mxu0 0
      %227 = vmatprep.subr.bf16.mxu0 0
      %228 = vmatpush1.bf16.msra.mxu0 0
      %229 = vmatprep.subr.bf16.mxu0 0
      %230 = vmatpush1.bf16.msra.mxu0 0
      %231 = vmatprep.subr.bf16.mxu0 0
      %232 = vmatpush1.bf16.msra.mxu0 0
      %233 = vmatprep.subr.bf16.mxu0 0
      %234 = vmatpush1.bf16.msra.mxu0 %v216
      %235 = vmatprep.subr.bf16.mxu0 0
      %236 = vmatpush1.bf16.msra.mxu0 %v215
      %237 = vmatprep.subr.bf16.mxu0 0
      %238 = vmatpush1.bf16.msra.mxu0 %v214
      %239 = vmatprep.subr.bf16.mxu0 0
      %240 = vmatpush1.bf16.msra.mxu0 %v213
      %241 = vmatprep.subr.bf16.mxu0 0
      %242 = vmatpush2.bf16.msra.mxu0 0
      %243 = vmatprep.subr.bf16.mxu0 0
      %244 = vmatpush2.bf16.msra.mxu0 0
      %245 = vmatprep.subr.bf16.mxu0 0
      %246 = vmatpush2.bf16.msra.mxu0 0
      %247 = vmatprep.subr.bf16.mxu0 0
      %248 = vmatpush2.bf16.msra.mxu0 0
      %249 = vmatprep.subr.bf16.mxu0 0
      %250 = vmatpush2.bf16.msra.mxu0 0
      %251 = vmatprep.subr.bf16.mxu0 0
      %252 = vmatpush2.bf16.msra.mxu0 0
      %253 = vmatprep.subr.bf16.mxu0 0
      %254 = vmatpush2.bf16.msra.mxu0 0
      %255 = vmatprep.subr.bf16.mxu0 0
      %256 = vmatpush2.bf16.msra.mxu0 0
      %257 = vmatprep.mubr.bf16.mxu0 0
      %258 = vmatmul.mubr.bf16.gmra.mxu0 %v223
      %v259 = vpop.f32.mrf.mxu0
      %v260 = vadd.f32 %v190, %v259
      %v261 = vpop.f32.mrf.mxu0
      %v262 = vpop.f32.mrf.mxu0
      %v263 = vadd.f32 %v190, %v262
      %v264 = vpop.f32.mrf.mxu0
      %265 = vdwg.mxu0
      %v266 = vpack.c.bf16 %v263, %v260
      %v268 = vunpack.c.l.b16 %v266
      %v269 = vunpack.c.h.b16 %v266
      %v270 = vpack.c.b16 %v268, %v268
      %v271 = vpack.c.b16 %v269, %v269
      %274 = vst [vmem:[%s172] sm:$0xf] %v270
      %275 = vst [vmem:[%s172 + $0x4] sm:$0xf] %v271
      %s276 = smul.u32 2, %s14
      %p277 = scmp.lt.s32.totalorder %s276, 3
      %s278 = scalar_select %p277, %s276, 3
      %s279 = smul.addr %s278, 4
      %s280 = scalar_lea.vmem %s3, %s279
      // Predicated region
      $region33: #{_lambda_.37} parent=31 // pred_check
        %p281 = pneg %p100
      $region34: #{_lambda_.37} parent=31 // pred_check_branch
        %283 = sbr.rel (%p281) target = $region36
      $region35: #{_lambda_.37} parent=31 // pred_region
        %s284 = smul.u32 2, %s14
      $region36: #{_lambda_.37} parent=31 // pred_fallthru
        _
    $region32: #{_lambda_.37} parent=5 // pred_fallthru
      _
    %p285 = scmp.le.s32.totalorder 2, %s9
    // Predicated region
    $region37: #{_lambda_.37} parent=5 // pred_check
      %p286 = pneg %p285
    $region38: #{_lambda_.37} parent=5 // pred_check_branch
      %288 = sbr.rel (%p286) target = $region40
    $region39: #{_lambda_.37} parent=5 // pred_region
      %s289 = ssub.s32 %s9, 2
      // Predicated region
      $region41: #{_lambda_.37} parent=39 // pred_check
        %p290 = pneg %p106
      $region42: #{_lambda_.37} parent=39 // pred_check_branch
        %292 = sbr.rel (%p290) target = $region44
      $region43: #{_lambda_.37} parent=39 // pred_region
        %s293 = smul.u32 2, %s15
        %p294 = scmp.lt.s32.totalorder %s293, 3
        %s295 = scalar_select %p294, %s293, 3
        %s296 = smul.addr %s295, 4
        %s297 = scalar_lea.vmem %s3, %s296
      $region44: #{_lambda_.37} parent=39 // pred_fallthru
        _
    $region40: #{_lambda_.37} parent=5 // pred_fallthru
      _
  $region6: #{_lambda_.37} parent=0 // loop_footer
    %s13 = sadd.s32 1, %s9
  $region7: #{_lambda_.37} parent=0 // loop_footer_branch
    %8 = sbr.rel target = $region3
  $region8: #{_lambda_.37} parent=0 // loop_exit
    _

// kernel: _lambda_.31
$region0: #{_lambda_.31}
  #allocation0 [shape = 'u32[]', space=smem, size = 0x4, offset = 0x4, fixed_abs, tag = 'smem constant byte address 0x4 - core index']
  #allocation1 [shape = 'u32[144,128]{1,0:T(1,128)}', space=vmem, size = 0x12000, scoped, tag = 'internal scratch']
  %s0 = inlined_call_operand.vmem [shape: bf16[32,144], index: 0, kind: input, shape index: {}]
  %s1 = inlined_call_operand.vmem [shape: bf16[144,128], index: 1, kind: input, shape index: {}]
  %s2 = inlined_call_operand.vmem [shape: f32[1,128], index: 2, kind: input, shape index: {}]
  %s3 = inlined_call_operand.vmem [shape: bf16[32,128], index: 3, kind: output, shape index: {}]
  %s4 = sld [smem:[#allocation0]]
  $region45: #{_lambda_.31} parent=0
    _
  %s6 = ssub.s32 1, %s4
  %s7 = scalar_select 0, %s6, %s4
  loop: start=0, step=1, limit=4
  $region2: #{_lambda_.31} parent=0 // loop_pre_header
    _
  $region3: #{_lambda_.31} parent=0 // loop_header
    %s9 = sphi 0, %s13
    %p10 = scmp.ge.s32.totalorder %s9, 4
    %s19 = sphi 0, %s21
    %s22 = sphi 0, %s19
    %s23 = sphi 0, %s22
    %s39 = sphi 0, %s23
    %s43 = sphi 0, %s43
    %s45 = sphi 0, %s43
    %s46 = sphi 0, %s45
    %s60 = sphi 0, %s46
    %s64 = sphi 0, %s64
    %s66 = sphi 0, %s64
    %s67 = sphi 0, %s66
    %s81 = sphi 0, %s67
    %s87 = sphi 0, %s89
    %s90 = sphi 0, %s87
    %s91 = sphi 0, %s90
    %s107 = sphi 0, %s91
  $region4: #{_lambda_.31} parent=0 // loop_header_branch
    %12 = sbr.rel (%p10) target = $region8
  $region5: #{_lambda_.31} parent=0 // loop_body
    %s14 = ssub.s32 %s9, 1
    %s15 = ssub.s32 %s9, 2
    %s16 = sadd.s32 %s9, 1
    %s17 = ssub.s32 %s9, %s16
    %p18 = scmp.eq.s32.totalorder %s17, 0
    %s20 = sadd.s32 %s19, 1
    %s21 = scalar_select %p18, %s19, %s20
    %p24 = pneg %p18
    %p25 = scmp.eq.s32.totalorder %s9, 1
    %p26 = por %p24, %p25
    %p27 = scmp.ne.s32.totalorder %s19, %s22
    %p28 = scmp.eq.s32.totalorder %s9, 0
    %p29 = por %p27, %p28
    %p30 = scmp.ne.s32.totalorder %s19, %s22
    %p31 = scmp.eq.s32.totalorder %s14, 1
    %p32 = por %p30, %p31
    %p33 = scmp.ne.s32.totalorder %s22, %s23
    %p34 = scmp.eq.s32.totalorder %s14, 0
    %p35 = por %p33, %p34
    %p36 = scmp.ne.s32.totalorder %s22, %s23
    %p37 = scmp.eq.s32.totalorder %s15, 1
    %p38 = por %p36, %p37
    %p40 = scmp.ne.s32.totalorder %s23, %s39
    %p41 = scmp.eq.s32.totalorder %s15, 0
    %p42 = por %p40, %p41
    %s44 = sadd.s32 %s43, 1
    %p47 = scmp.eq.s32.totalorder %s9, 1
    %p48 = scmp.ne.s32.totalorder %s43, %s45
    %p49 = scmp.eq.s32.totalorder %s9, 0
    %p50 = por %p48, %p49
    %p51 = scmp.ne.s32.totalorder %s43, %s45
    %p52 = scmp.eq.s32.totalorder %s14, 1
    %p53 = por %p51, %p52
    %p54 = scmp.ne.s32.totalorder %s45, %s46
    %p55 = scmp.eq.s32.totalorder %s14, 0
    %p56 = por %p54, %p55
    %p57 = scmp.ne.s32.totalorder %s45, %s46
    %p58 = scmp.eq.s32.totalorder %s15, 1
    %p59 = por %p57, %p58
    %p61 = scmp.ne.s32.totalorder %s46, %s60
    %p62 = scmp.eq.s32.totalorder %s15, 0
    %p63 = por %p61, %p62
    %s65 = sadd.s32 %s64, 1
    %p68 = scmp.eq.s32.totalorder %s9, 1
    %p69 = scmp.ne.s32.totalorder %s64, %s66
    %p70 = scmp.eq.s32.totalorder %s9, 0
    %p71 = por %p69, %p70
    %p72 = scmp.ne.s32.totalorder %s64, %s66
    %p73 = scmp.eq.s32.totalorder %s14, 1
    %p74 = por %p72, %p73
    %p75 = scmp.ne.s32.totalorder %s66, %s67
    %p76 = scmp.eq.s32.totalorder %s14, 0
    %p77 = por %p75, %p76
    %p78 = scmp.ne.s32.totalorder %s66, %s67
    %p79 = scmp.eq.s32.totalorder %s15, 1
    %p80 = por %p78, %p79
    %p82 = scmp.ne.s32.totalorder %s67, %s81
    %p83 = scmp.eq.s32.totalorder %s15, 0
    %p84 = por %p82, %p83
    %s85 = ssub.s32 %s9, %s16
    %p86 = scmp.eq.s32.totalorder %s85, 0
    %s88 = sadd.s32 %s87, 1
    %s89 = scalar_select %p86, %s87, %s88
    %p92 = pneg %p86
    %p93 = scmp.eq.s32.totalorder %s9, 1
    %p94 = por %p92, %p93
    %p95 = scmp.ne.s32.totalorder %s87, %s90
    %p96 = scmp.eq.s32.totalorder %s9, 0
    %p97 = por %p95, %p96
    %p98 = scmp.ne.s32.totalorder %s87, %s90
    %p99 = scmp.eq.s32.totalorder %s14, 1
    %p100 = por %p98, %p99
    %p101 = scmp.ne.s32.totalorder %s90, %s91
    %p102 = scmp.eq.s32.totalorder %s14, 0
    %p103 = por %p101, %p102
    %p104 = scmp.ne.s32.totalorder %s90, %s91
    %p105 = scmp.eq.s32.totalorder %s15, 1
    %p106 = por %p104, %p105
    %p108 = scmp.ne.s32.totalorder %s91, %s107
    %p109 = scmp.eq.s32.totalorder %s15, 0
    %p110 = por %p108, %p109
    %p111 = scmp.le.s32.totalorder 1, %s9
    %p112 = scmp.lt.s32.totalorder %s9, 3
    %p113 = pnand %p111, %p112
    %p114 = pneg %p113
    // Predicated region
    $region9: #{_lambda_.31} parent=5 // pred_check
      _
    $region10: #{_lambda_.31} parent=5 // pred_check_branch
      %116 = sbr.rel (%p113) target = $region12
    $region11: #{_lambda_.31} parent=5 // pred_region
      %s117 = ssub.s32 %s9, 1
      // Predicated region
      $region13: #{_lambda_.31} parent=11 // pred_check
        %p118 = pneg %p56
      $region14: #{_lambda_.31} parent=11 // pred_check_branch
        %120 = sbr.rel (%p118) target = $region16
      $region15: #{_lambda_.31} parent=11 // pred_region
        _
      $region16: #{_lambda_.31} parent=11 // pred_fallthru
        _
      // Predicated region
      $region17: #{_lambda_.31} parent=11 // pred_check
        %p121 = pneg %p77
      $region18: #{_lambda_.31} parent=11 // pred_check_branch
        %123 = sbr.rel (%p121) target = $region20
      $region19: #{_lambda_.31} parent=11 // pred_region
        _
      $region20: #{_lambda_.31} parent=11 // pred_fallthru
        _
    $region12: #{_lambda_.31} parent=5 // pred_fallthru
      _
    %p124 = scmp.lt.s32.totalorder %s9, 2
    // Predicated region
    $region21: #{_lambda_.31} parent=5 // pred_check
      %p125 = pneg %p124
    $region22: #{_lambda_.31} parent=5 // pred_check_branch
      %127 = sbr.rel (%p125) target = $region24
    $region23: #{_lambda_.31} parent=5 // pred_region
      // Predicated region
      $region25: #{_lambda_.31} parent=23 // pred_check
        %p128 = pneg %p29
      $region26: #{_lambda_.31} parent=23 // pred_check_branch
        %130 = sbr.rel (%p128) target = $region28
      $region27: #{_lambda_.31} parent=23 // pred_region
        %s131 = smul.u32 2, %s9
        %p132 = scmp.lt.s32.totalorder %s131, 3
        %s133 = scalar_select %p132, %s131, 3
        %s134 = smul.addr %s133, 2
        %s135 = smul.addr %s134, 4
        %s136 = scalar_lea.vmem %s0, %s135
        %s137 = smul.u32 2, %s9
      $region28: #{_lambda_.31} parent=23 // pred_fallthru
        _
    $region24: #{_lambda_.31} parent=5 // pred_fallthru
      _
    %p138 = scmp.le.s32.totalorder 1, %s9
    %p139 = scmp.lt.s32.totalorder %s9, 3
    %p140 = pnand %p138, %p139
    %p141 = pneg %p140
    // Predicated region
    $region29: #{_lambda_.31} parent=5 // pred_check
      _
    $region30: #{_lambda_.31} parent=5 // pred_check_branch
      %143 = sbr.rel (%p140) target = $region32
    $region31: #{_lambda_.31} parent=5 // pred_region
      %s144 = ssub.s32 %s9, 1
      %s145 = smul.u32 2, %s14
      %p146 = scmp.lt.s32.totalorder %s145, 3
      %s147 = scalar_select %p146, %s145, 3
      %s148 = smul.addr %s147, 2
      %s149 = smul.addr %s148, 4
      %s150 = scalar_lea.vmem %s0, %s149
      %p151 = pneg %p35
      %p152 = pneg %p32
      %p153 = pneg %p56
      %p154 = pneg %p53
      %p155 = pneg %p77
      %p156 = pneg %p74
      %p157 = pneg %p103
      %p158 = pneg %p100
      %s159 = smul.u32 2, %s14
      %p160 = scmp.lt.s32.totalorder %s159, 3
      %s161 = scalar_select %p160, %s159, 3
      %s162 = smul.addr %s161, 4
      %s163 = scalar_lea.vmem %s3, %s162
      %s164 = smul.u32 2, %s14
      %p165 = scmp.lt.s32.totalorder %s164, 3
      %s166 = scalar_select %p165, %s164, 3
      %s167 = smul.addr %s166, 2
      %s168 = smul.addr %s167, 4
      %s169 = scalar_lea.vmem %s0, %s168
      %s170 = smul.u32 2, %s14
      %s171 = smul.u32 2, %s14
      %p172 = scmp.lt.s32.totalorder %s171, 3
      %s173 = scalar_select %p172, %s171, 3
      %s174 = smul.addr %s173, 4
      %s175 = scalar_lea.vmem %s3, %s174
      %s176 = smul.u32 2, %s14
      %v178 = vld [vmem:[%s169] sm:$0xff]
      %v179 = vld [vmem:[%s169 + $0x8] sm:$0xff]
      %v180 = vld [vmem:[%s1] sm:$0xf]
      %v181 = vld [vmem:[%s1 + $0x4] sm:$0xf]
      %v182 = vld [vmem:[%s1 + $0x8] sm:$0xf]
      %v183 = vld [vmem:[%s1 + $0xc] sm:$0xf]
      %v184 = vld [vmem:[%s1 + $0x10] sm:$0xf]
      %v185 = vld [vmem:[%s1 + $0x14] sm:$0xf]
      %v186 = vld [vmem:[%s1 + $0x18] sm:$0xf]
      %v187 = vld [vmem:[%s1 + $0x1c] sm:$0xf]
      %v188 = vld [vmem:[%s1 + $0x20] sm:$0xf]
      %v189 = vld [vmem:[%s1 + $0x24] sm:$0xf]
      %v190 = vld [vmem:[%s1 + $0x28] sm:$0xf]
      %v191 = vld [vmem:[%s1 + $0x2c] sm:$0xf]
      %v192 = vld [vmem:[%s1 + $0x30] sm:$0xf]
      %v193 = vld [vmem:[%s1 + $0x34] sm:$0xf]
      %v194 = vld [vmem:[%s1 + $0x38] sm:$0xf]
      %v195 = vld [vmem:[%s1 + $0x3c] sm:$0xf]
      %v196 = vld [vmem:[%s1 + $0x40] sm:$0xf]
      %v197 = vld [vmem:[%s1 + $0x44] sm:$0xf]
      %v198 = vld [vmem:[%s2] sm:$0x1]
      %v200 = vlaneseq
      %v201 = vshrl.u32 %v200, 7
      %v202 = vsub.s32 0, %v201
      %v203 = vrot.slane %v198, %v202
      %v207 = vunpack.c.l.b16 %v178
      %v208 = vunpack.c.h.b16 %v178
      %v209 = vunpack.c.l.b16 %v179
      %v210 = vunpack.c.h.b16 %v179
      %v211 = vpack.c.b16 %v209, %v207
      %v212 = vpack.c.b16 %v210, %v208
      %v232 = vunpack.c.l.b16 %v180
      %v233 = vunpack.c.l.b16 %v181
      %v234 = vunpack.c.l.b16 %v182
      %v235 = vunpack.c.l.b16 %v183
      %v236 = vunpack.c.l.b16 %v184
      %v237 = vunpack.c.l.b16 %v185
      %v238 = vunpack.c.l.b16 %v186
      %v239 = vunpack.c.l.b16 %v187
      %v240 = vunpack.c.l.b16 %v188
      %v241 = vunpack.c.l.b16 %v189
      %v242 = vunpack.c.l.b16 %v190
      %v243 = vunpack.c.l.b16 %v191
      %v244 = vunpack.c.l.b16 %v192
      %v245 = vunpack.c.l.b16 %v193
      %v246 = vunpack.c.l.b16 %v194
      %v247 = vunpack.c.l.b16 %v195
      %v248 = vunpack.c.l.b16 %v196
      %v249 = vunpack.c.l.b16 %v197
      %v250 = vpack.c.b16 %v233, %v232
      %v251 = vpack.c.b16 %v235, %v234
      %v252 = vpack.c.b16 %v237, %v236
      %v253 = vpack.c.b16 %v239, %v238
      %v254 = vpack.c.b16 %v241, %v240
      %v255 = vpack.c.b16 %v243, %v242
      %v256 = vpack.c.b16 %v245, %v244
      %v257 = vpack.c.b16 %v247, %v246
      %v258 = vpack.c.b16 %v249, %v248
      %vm268 = vcmask 130048
      %v270 = vsel %vm268, %v212, 0
      %272 = vmatprep.subr.bf16.mxu0 0
      %273 = vmatpush1.bf16.msra.mxu0 %v257
      %274 = vmatprep.subr.bf16.mxu0 0
      %275 = vmatpush1.bf16.msra.mxu0 %v256
      %276 = vmatprep.subr.bf16.mxu0 0
      %277 = vmatpush1.bf16.msra.mxu0 %v255
      %278 = vmatprep.subr.bf16.mxu0 0
      %279 = vmatpush1.bf16.msra.mxu0 %v254
      %280 = vmatprep.subr.bf16.mxu0 0
      %281 = vmatpush1.bf16.msra.mxu0 %v253
      %282 = vmatprep.subr.bf16.mxu0 0
      %283 = vmatpush1.bf16.msra.mxu0 %v252
      %284 = vmatprep.subr.bf16.mxu0 0
      %285 = vmatpush1.bf16.msra.mxu0 %v251
      %286 = vmatprep.subr.bf16.mxu0 0
      %287 = vmatpush1.bf16.msra.mxu0 %v250
      %288 = vmatprep.subr.bf16.mxu0 0
      %289 = vmatpush2.bf16.msra.mxu0 0
      %290 = vmatprep.subr.bf16.mxu0 0
      %291 = vmatpush2.bf16.msra.mxu0 0
      %292 = vmatprep.subr.bf16.mxu0 0
      %293 = vmatpush2.bf16.msra.mxu0 0
      %294 = vmatprep.subr.bf16.mxu0 0
      %295 = vmatpush2.bf16.msra.mxu0 0
      %296 = vmatprep.subr.bf16.mxu0 0
      %297 = vmatpush2.bf16.msra.mxu0 0
      %298 = vmatprep.subr.bf16.mxu0 0
      %299 = vmatpush2.bf16.msra.mxu0 0
      %300 = vmatprep.subr.bf16.mxu0 0
      %301 = vmatpush2.bf16.msra.mxu0 0
      %302 = vmatprep.subr.bf16.mxu0 0
      %303 = vmatpush2.bf16.msra.mxu0 %v258
      %304 = vmatprep.mubr.bf16.mxu0 %v270
      %305 = vmatmul.mubr.bf16.gmra.mxu0 %v211
      %v306 = vpop.f32.mrf.mxu0
      %v307 = vadd.f32 %v203, %v306
      %v308 = vpop.f32.mrf.mxu0
      %v309 = vpop.f32.mrf.mxu0
      %v310 = vadd.f32 %v203, %v309
      %v311 = vpop.f32.mrf.mxu0
      %312 = vdwg.mxu0
      %v313 = vmax.f32 %v307, 0.0
      %v314 = vmax.f32 %v310, 0.0
      %v315 = vpack.c.bf16 %v314, %v313
      %v317 = vunpack.c.l.b16 %v315
      %v318 = vunpack.c.h.b16 %v315
      %v319 = vpack.c.b16 %v317, %v317
      %v320 = vpack.c.b16 %v318, %v318
      %323 = vst [vmem:[%s175] sm:$0xf] %v319
      %324 = vst [vmem:[%s175 + $0x4] sm:$0xf] %v320
      %s325 = smul.u32 2, %s14
      %p326 = scmp.lt.s32.totalorder %s325, 3
      %s327 = scalar_select %p326, %s325, 3
      %s328 = smul.addr %s327, 4
      %s329 = scalar_lea.vmem %s3, %s328
      // Predicated region
      $region33: #{_lambda_.31} parent=31 // pred_check
        %p330 = pneg %p100
      $region34: #{_lambda_.31} parent=31 // pred_check_branch
        %332 = sbr.rel (%p330) target = $region36
      $region35: #{_lambda_.31} parent=31 // pred_region
        %s333 = smul.u32 2, %s14
      $region36: #{_lambda_.31} parent=31 // pred_fallthru
        _
    $region32: #{_lambda_.31} parent=5 // pred_fallthru
      _
    %p334 = scmp.le.s32.totalorder 2, %s9
    // Predicated region
    $region37: #{_lambda_.31} parent=5 // pred_check
      %p335 = pneg %p334
    $region38: #{_lambda_.31} parent=5 // pred_check_branch
      %337 = sbr.rel (%p335) target = $region40
    $region39: #{_lambda_.31} parent=5 // pred_region
      %s338 = ssub.s32 %s9, 2
      // Predicated region
      $region41: #{_lambda_.31} parent=39 // pred_check
        %p339 = pneg %p106
      $region42: #{_lambda_.31} parent=39 // pred_check_branch
        %341 = sbr.rel (%p339) target = $region44
      $region43: #{_lambda_.31} parent=39 // pred_region
        %s342 = smul.u32 2, %s15
        %p343 = scmp.lt.s32.totalorder %s342, 3
        %s344 = scalar_select %p343, %s342, 3
        %s345 = smul.addr %s344, 4
        %s346 = scalar_lea.vmem %s3, %s345
      $region44: #{_lambda_.31} parent=39 // pred_fallthru
        _
    $region40: #{_lambda_.31} parent=5 // pred_fallthru
      _
  $region6: #{_lambda_.31} parent=0 // loop_footer
    %s13 = sadd.s32 1, %s9
  $region7: #{_lambda_.31} parent=0 // loop_footer_branch
    %8 = sbr.rel target = $region3
  $region8: #{_lambda_.31} parent=0 // loop_exit
    _

// kernel: _lambda_.32
$region0: #{_lambda_.32}
  #allocation0 [shape = 'u32[]', space=smem, size = 0x4, offset = 0x4, fixed_abs, tag = 'smem constant byte address 0x4 - core index']
  #allocation1 [shape = 'u32[144,128]{1,0:T(1,128)}', space=vmem, size = 0x12000, scoped, tag = 'internal scratch']
  %s0 = inlined_call_operand.vmem [shape: bf16[32,128], index: 0, kind: input, shape index: {}]
  %s1 = inlined_call_operand.vmem [shape: bf16[128,128], index: 1, kind: input, shape index: {}]
  %s2 = inlined_call_operand.vmem [shape: f32[1,128], index: 2, kind: input, shape index: {}]
  %s3 = inlined_call_operand.vmem [shape: bf16[32,128], index: 3, kind: output, shape index: {}]
  %s4 = sld [smem:[#allocation0]]
  $region45: #{_lambda_.32} parent=0
    _
  %s6 = ssub.s32 1, %s4
  %s7 = scalar_select 0, %s6, %s4
  loop: start=0, step=1, limit=4
  $region2: #{_lambda_.32} parent=0 // loop_pre_header
    _
  $region3: #{_lambda_.32} parent=0 // loop_header
    %s9 = sphi 0, %s13
    %p10 = scmp.ge.s32.totalorder %s9, 4
    %s19 = sphi 0, %s21
    %s22 = sphi 0, %s19
    %s23 = sphi 0, %s22
    %s39 = sphi 0, %s23
    %s43 = sphi 0, %s43
    %s45 = sphi 0, %s43
    %s46 = sphi 0, %s45
    %s60 = sphi 0, %s46
    %s64 = sphi 0, %s64
    %s66 = sphi 0, %s64
    %s67 = sphi 0, %s66
    %s81 = sphi 0, %s67
    %s87 = sphi 0, %s89
    %s90 = sphi 0, %s87
    %s91 = sphi 0, %s90
    %s107 = sphi 0, %s91
  $region4: #{_lambda_.32} parent=0 // loop_header_branch
    %12 = sbr.rel (%p10) target = $region8
  $region5: #{_lambda_.32} parent=0 // loop_body
    %s14 = ssub.s32 %s9, 1
    %s15 = ssub.s32 %s9, 2
    %s16 = sadd.s32 %s9, 1
    %s17 = ssub.s32 %s9, %s16
    %p18 = scmp.eq.s32.totalorder %s17, 0
    %s20 = sadd.s32 %s19, 1
    %s21 = scalar_select %p18, %s19, %s20
    %p24 = pneg %p18
    %p25 = scmp.eq.s32.totalorder %s9, 1
    %p26 = por %p24, %p25
    %p27 = scmp.ne.s32.totalorder %s19, %s22
    %p28 = scmp.eq.s32.totalorder %s9, 0
    %p29 = por %p27, %p28
    %p30 = scmp.ne.s32.totalorder %s19, %s22
    %p31 = scmp.eq.s32.totalorder %s14, 1
    %p32 = por %p30, %p31
    %p33 = scmp.ne.s32.totalorder %s22, %s23
    %p34 = scmp.eq.s32.totalorder %s14, 0
    %p35 = por %p33, %p34
    %p36 = scmp.ne.s32.totalorder %s22, %s23
    %p37 = scmp.eq.s32.totalorder %s15, 1
    %p38 = por %p36, %p37
    %p40 = scmp.ne.s32.totalorder %s23, %s39
    %p41 = scmp.eq.s32.totalorder %s15, 0
    %p42 = por %p40, %p41
    %s44 = sadd.s32 %s43, 1
    %p47 = scmp.eq.s32.totalorder %s9, 1
    %p48 = scmp.ne.s32.totalorder %s43, %s45
    %p49 = scmp.eq.s32.totalorder %s9, 0
    %p50 = por %p48, %p49
    %p51 = scmp.ne.s32.totalorder %s43, %s45
    %p52 = scmp.eq.s32.totalorder %s14, 1
    %p53 = por %p51, %p52
    %p54 = scmp.ne.s32.totalorder %s45, %s46
    %p55 = scmp.eq.s32.totalorder %s14, 0
    %p56 = por %p54, %p55
    %p57 = scmp.ne.s32.totalorder %s45, %s46
    %p58 = scmp.eq.s32.totalorder %s15, 1
    %p59 = por %p57, %p58
    %p61 = scmp.ne.s32.totalorder %s46, %s60
    %p62 = scmp.eq.s32.totalorder %s15, 0
    %p63 = por %p61, %p62
    %s65 = sadd.s32 %s64, 1
    %p68 = scmp.eq.s32.totalorder %s9, 1
    %p69 = scmp.ne.s32.totalorder %s64, %s66
    %p70 = scmp.eq.s32.totalorder %s9, 0
    %p71 = por %p69, %p70
    %p72 = scmp.ne.s32.totalorder %s64, %s66
    %p73 = scmp.eq.s32.totalorder %s14, 1
    %p74 = por %p72, %p73
    %p75 = scmp.ne.s32.totalorder %s66, %s67
    %p76 = scmp.eq.s32.totalorder %s14, 0
    %p77 = por %p75, %p76
    %p78 = scmp.ne.s32.totalorder %s66, %s67
    %p79 = scmp.eq.s32.totalorder %s15, 1
    %p80 = por %p78, %p79
    %p82 = scmp.ne.s32.totalorder %s67, %s81
    %p83 = scmp.eq.s32.totalorder %s15, 0
    %p84 = por %p82, %p83
    %s85 = ssub.s32 %s9, %s16
    %p86 = scmp.eq.s32.totalorder %s85, 0
    %s88 = sadd.s32 %s87, 1
    %s89 = scalar_select %p86, %s87, %s88
    %p92 = pneg %p86
    %p93 = scmp.eq.s32.totalorder %s9, 1
    %p94 = por %p92, %p93
    %p95 = scmp.ne.s32.totalorder %s87, %s90
    %p96 = scmp.eq.s32.totalorder %s9, 0
    %p97 = por %p95, %p96
    %p98 = scmp.ne.s32.totalorder %s87, %s90
    %p99 = scmp.eq.s32.totalorder %s14, 1
    %p100 = por %p98, %p99
    %p101 = scmp.ne.s32.totalorder %s90, %s91
    %p102 = scmp.eq.s32.totalorder %s14, 0
    %p103 = por %p101, %p102
    %p104 = scmp.ne.s32.totalorder %s90, %s91
    %p105 = scmp.eq.s32.totalorder %s15, 1
    %p106 = por %p104, %p105
    %p108 = scmp.ne.s32.totalorder %s91, %s107
    %p109 = scmp.eq.s32.totalorder %s15, 0
    %p110 = por %p108, %p109
    %p111 = scmp.le.s32.totalorder 1, %s9
    %p112 = scmp.lt.s32.totalorder %s9, 3
    %p113 = pnand %p111, %p112
    %p114 = pneg %p113
    // Predicated region
    $region9: #{_lambda_.32} parent=5 // pred_check
      _
    $region10: #{_lambda_.32} parent=5 // pred_check_branch
      %116 = sbr.rel (%p113) target = $region12
    $region11: #{_lambda_.32} parent=5 // pred_region
      %s117 = ssub.s32 %s9, 1
      // Predicated region
      $region13: #{_lambda_.32} parent=11 // pred_check
        %p118 = pneg %p56
      $region14: #{_lambda_.32} parent=11 // pred_check_branch
        %120 = sbr.rel (%p118) target = $region16
      $region15: #{_lambda_.32} parent=11 // pred_region
        _
      $region16: #{_lambda_.32} parent=11 // pred_fallthru
        _
      // Predicated region
      $region17: #{_lambda_.32} parent=11 // pred_check
        %p121 = pneg %p77
      $region18: #{_lambda_.32} parent=11 // pred_check_branch
        %123 = sbr.rel (%p121) target = $region20
      $region19: #{_lambda_.32} parent=11 // pred_region
        _
      $region20: #{_lambda_.32} parent=11 // pred_fallthru
        _
    $region12: #{_lambda_.32} parent=5 // pred_fallthru
      _
    %p124 = scmp.lt.s32.totalorder %s9, 2
    // Predicated region
    $region21: #{_lambda_.32} parent=5 // pred_check
      %p125 = pneg %p124
    $region22: #{_lambda_.32} parent=5 // pred_check_branch
      %127 = sbr.rel (%p125) target = $region24
    $region23: #{_lambda_.32} parent=5 // pred_region
      // Predicated region
      $region25: #{_lambda_.32} parent=23 // pred_check
        %p128 = pneg %p29
      $region26: #{_lambda_.32} parent=23 // pred_check_branch
        %130 = sbr.rel (%p128) target = $region28
      $region27: #{_lambda_.32} parent=23 // pred_region
        %s131 = smul.u32 2, %s9
        %p132 = scmp.lt.s32.totalorder %s131, 3
        %s133 = scalar_select %p132, %s131, 3
        %s134 = smul.addr %s133, 4
        %s135 = scalar_lea.vmem %s0, %s134
        %s136 = smul.u32 2, %s9
      $region28: #{_lambda_.32} parent=23 // pred_fallthru
        _
    $region24: #{_lambda_.32} parent=5 // pred_fallthru
      _
    %p137 = scmp.le.s32.totalorder 1, %s9
    %p138 = scmp.lt.s32.totalorder %s9, 3
    %p139 = pnand %p137, %p138
    %p140 = pneg %p139
    // Predicated region
    $region29: #{_lambda_.32} parent=5 // pred_check
      _
    $region30: #{_lambda_.32} parent=5 // pred_check_branch
      %142 = sbr.rel (%p139) target = $region32
    $region31: #{_lambda_.32} parent=5 // pred_region
      %s143 = ssub.s32 %s9, 1
      %s144 = smul.u32 2, %s14
      %p145 = scmp.lt.s32.totalorder %s144, 3
      %s146 = scalar_select %p145, %s144, 3
      %s147 = smul.addr %s146, 4
      %s148 = scalar_lea.vmem %s0, %s147
      %p149 = pneg %p35
      %p150 = pneg %p32
      %p151 = pneg %p56
      %p152 = pneg %p53
      %p153 = pneg %p77
      %p154 = pneg %p74
      %p155 = pneg %p103
      %p156 = pneg %p100
      %s157 = smul.u32 2, %s14
      %p158 = scmp.lt.s32.totalorder %s157, 3
      %s159 = scalar_select %p158, %s157, 3
      %s160 = smul.addr %s159, 4
      %s161 = scalar_lea.vmem %s3, %s160
      %s162 = smul.u32 2, %s14
      %p163 = scmp.lt.s32.totalorder %s162, 3
      %s164 = scalar_select %p163, %s162, 3
      %s165 = smul.addr %s164, 4
      %s166 = scalar_lea.vmem %s0, %s165
      %s167 = smul.u32 2, %s14
      %s168 = smul.u32 2, %s14
      %p169 = scmp.lt.s32.totalorder %s168, 3
      %s170 = scalar_select %p169, %s168, 3
      %s171 = smul.addr %s170, 4
      %s172 = scalar_lea.vmem %s3, %s171
      %s173 = smul.u32 2, %s14
      %v175 = vld [vmem:[%s166] sm:$0xf]
      %v176 = vld [vmem:[%s166 + $0x4] sm:$0xf]
      %v177 = vld [vmem:[%s1] sm:$0xf]
      %v178 = vld [vmem:[%s1 + $0x4] sm:$0xf]
      %v179 = vld [vmem:[%s1 + $0x8] sm:$0xf]
      %v180 = vld [vmem:[%s1 + $0xc] sm:$0xf]
      %v181 = vld [vmem:[%s1 + $0x10] sm:$0xf]
      %v182 = vld [vmem:[%s1 + $0x14] sm:$0xf]
      %v183 = vld [vmem:[%s1 + $0x18] sm:$0xf]
      %v184 = vld [vmem:[%s1 + $0x1c] sm:$0xf]
      %v185 = vld [vmem:[%s1 + $0x20] sm:$0xf]
      %v186 = vld [vmem:[%s1 + $0x24] sm:$0xf]
      %v187 = vld [vmem:[%s1 + $0x28] sm:$0xf]
      %v188 = vld [vmem:[%s1 + $0x2c] sm:$0xf]
      %v189 = vld [vmem:[%s1 + $0x30] sm:$0xf]
      %v190 = vld [vmem:[%s1 + $0x34] sm:$0xf]
      %v191 = vld [vmem:[%s1 + $0x38] sm:$0xf]
      %v192 = vld [vmem:[%s1 + $0x3c] sm:$0xf]
      %v193 = vld [vmem:[%s2] sm:$0x1]
      %v195 = vlaneseq
      %v196 = vshrl.u32 %v195, 7
      %v197 = vsub.s32 0, %v196
      %v198 = vrot.slane %v193, %v197
      %v202 = vunpack.c.l.b16 %v175
      %v203 = vunpack.c.l.b16 %v176
      %v204 = vpack.c.b16 %v203, %v202
      %v222 = vunpack.c.l.b16 %v177
      %v223 = vunpack.c.l.b16 %v178
      %v224 = vunpack.c.l.b16 %v179
      %v225 = vunpack.c.l.b16 %v180
      %v226 = vunpack.c.l.b16 %v181
      %v227 = vunpack.c.l.b16 %v182
      %v228 = vunpack.c.l.b16 %v183
      %v229 = vunpack.c.l.b16 %v184
      %v230 = vunpack.c.l.b16 %v185
      %v231 = vunpack.c.l.b16 %v186
      %v232 = vunpack.c.l.b16 %v187
      %v233 = vunpack.c.l.b16 %v188
      %v234 = vunpack.c.l.b16 %v189
      %v235 = vunpack.c.l.b16 %v190
      %v236 = vunpack.c.l.b16 %v191
      %v237 = vunpack.c.l.b16 %v192
      %v238 = vpack.c.b16 %v223, %v222
      %v239 = vpack.c.b16 %v225, %v224
      %v240 = vpack.c.b16 %v227, %v226
      %v241 = vpack.c.b16 %v229, %v228
      %v242 = vpack.c.b16 %v231, %v230
      %v243 = vpack.c.b16 %v233, %v232
      %v244 = vpack.c.b16 %v235, %v234
      %v245 = vpack.c.b16 %v237, %v236
      %254 = vmatprep.subr.bf16.mxu0 0
      %255 = vmatpush1.bf16.msra.mxu0 %v245
      %256 = vmatprep.subr.bf16.mxu0 0
      %257 = vmatpush1.bf16.msra.mxu0 %v244
      %258 = vmatprep.subr.bf16.mxu0 0
      %259 = vmatpush1.bf16.msra.mxu0 %v243
      %260 = vmatprep.subr.bf16.mxu0 0
      %261 = vmatpush1.bf16.msra.mxu0 %v242
      %262 = vmatprep.subr.bf16.mxu0 0
      %263 = vmatpush1.bf16.msra.mxu0 %v241
      %264 = vmatprep.subr.bf16.mxu0 0
      %265 = vmatpush1.bf16.msra.mxu0 %v240
      %266 = vmatprep.subr.bf16.mxu0 0
      %267 = vmatpush1.bf16.msra.mxu0 %v239
      %268 = vmatprep.subr.bf16.mxu0 0
      %269 = vmatpush1.bf16.msra.mxu0 %v238
      %270 = vmatprep.subr.bf16.mxu0 0
      %271 = vmatpush2.bf16.msra.mxu0 0
      %272 = vmatprep.subr.bf16.mxu0 0
      %273 = vmatpush2.bf16.msra.mxu0 0
      %274 = vmatprep.subr.bf16.mxu0 0
      %275 = vmatpush2.bf16.msra.mxu0 0
      %276 = vmatprep.subr.bf16.mxu0 0
      %277 = vmatpush2.bf16.msra.mxu0 0
      %278 = vmatprep.subr.bf16.mxu0 0
      %279 = vmatpush2.bf16.msra.mxu0 0
      %280 = vmatprep.subr.bf16.mxu0 0
      %281 = vmatpush2.bf16.msra.mxu0 0
      %282 = vmatprep.subr.bf16.mxu0 0
      %283 = vmatpush2.bf16.msra.mxu0 0
      %284 = vmatprep.subr.bf16.mxu0 0
      %285 = vmatpush2.bf16.msra.mxu0 0
      %286 = vmatprep.mubr.bf16.mxu0 0
      %287 = vmatmul.mubr.bf16.gmra.mxu0 %v204
      %v288 = vpop.f32.mrf.mxu0
      %v289 = vadd.f32 %v198, %v288
      %v290 = vpop.f32.mrf.mxu0
      %v291 = vpop.f32.mrf.mxu0
      %v292 = vadd.f32 %v198, %v291
      %v293 = vpop.f32.mrf.mxu0
      %294 = vdwg.mxu0
      %v295 = vpack.c.bf16 %v292, %v289
      %v297 = vunpack.c.l.b16 %v295
      %v298 = vunpack.c.h.b16 %v295
      %v299 = vpack.c.b16 %v297, %v297
      %v300 = vpack.c.b16 %v298, %v298
      %303 = vst [vmem:[%s172] sm:$0xf] %v299
      %304 = vst [vmem:[%s172 + $0x4] sm:$0xf] %v300
      %s305 = smul.u32 2, %s14
      %p306 = scmp.lt.s32.totalorder %s305, 3
      %s307 = scalar_select %p306, %s305, 3
      %s308 = smul.addr %s307, 4
      %s309 = scalar_lea.vmem %s3, %s308
      // Predicated region
      $region33: #{_lambda_.32} parent=31 // pred_check
        %p310 = pneg %p100
      $region34: #{_lambda_.32} parent=31 // pred_check_branch
        %312 = sbr.rel (%p310) target = $region36
      $region35: #{_lambda_.32} parent=31 // pred_region
        %s313 = smul.u32 2, %s14
      $region36: #{_lambda_.32} parent=31 // pred_fallthru
        _
    $region32: #{_lambda_.32} parent=5 // pred_fallthru
      _
    %p314 = scmp.le.s32.totalorder 2, %s9
    // Predicated region
    $region37: #{_lambda_.32} parent=5 // pred_check
      %p315 = pneg %p314
    $region38: #{_lambda_.32} parent=5 // pred_check_branch
      %317 = sbr.rel (%p315) target = $region40
    $region39: #{_lambda_.32} parent=5 // pred_region
      %s318 = ssub.s32 %s9, 2
      // Predicated region
      $region41: #{_lambda_.32} parent=39 // pred_check
        %p319 = pneg %p106
      $region42: #{_lambda_.32} parent=39 // pred_check_branch
        %321 = sbr.rel (%p319) target = $region44
      $region43: #{_lambda_.32} parent=39 // pred_region
        %s322 = smul.u32 2, %s15
        %p323 = scmp.lt.s32.totalorder %s322, 3
        %s324 = scalar_select %p323, %s322, 3
        %s325 = smul.addr %s324, 4
        %s326 = scalar_lea.vmem %s3, %s325
      $region44: #{_lambda_.32} parent=39 // pred_fallthru
        _
    $region40: #{_lambda_.32} parent=5 // pred_fallthru
      _
  $region6: #{_lambda_.32} parent=0 // loop_footer
    %s13 = sadd.s32 1, %s9
  $region7: #{_lambda_.32} parent=0 // loop_footer_branch
    %8 = sbr.rel target = $region3
  $region8: #{_lambda_.32} parent=0 // loop_exit
    _

// kernel: _lambda_.36
$region0: #{_lambda_.36}
  #allocation0 [shape = 'u32[]', space=smem, size = 0x4, offset = 0x4, fixed_abs, tag = 'smem constant byte address 0x4 - core index']
  #allocation1 [shape = 'u32[144,128]{1,0:T(1,128)}', space=vmem, size = 0x12000, scoped, tag = 'internal scratch']
  %s0 = inlined_call_operand.vmem [shape: bf16[128,16], index: 0, kind: input, shape index: {}]
  %s1 = inlined_call_operand.vmem [shape: bf16[128,32], index: 1, kind: input, shape index: {}]
  %s2 = inlined_call_operand.vmem [shape: bf16[16,128], index: 2, kind: input, shape index: {}]
  %s3 = inlined_call_operand.vmem [shape: bf16[32,128], index: 3, kind: input, shape index: {}]
  %s4 = inlined_call_operand.vmem [shape: f32[1,128], index: 4, kind: input, shape index: {}]
  %s5 = inlined_call_operand.vmem [shape: bf16[128,128], index: 5, kind: input, shape index: {}]
  %s6 = inlined_call_operand.vmem [shape: bf16[128,128], index: 6, kind: input, shape index: {}]
  %s7 = inlined_call_operand.vmem [shape: f32[1,128], index: 7, kind: input, shape index: {}]
  %s8 = inlined_call_operand.vmem [shape: bf16[128,128], index: 8, kind: output, shape index: {0}]
  %s9 = inlined_call_operand.hbm [shape: f32[1,1], index: 9, kind: output, shape index: {1}]
  %10 = xla_tuple %s8, %s9
  %s11 = sld [smem:[#allocation0]]
  $region77: #{_lambda_.36} parent=0
    _
  %s13 = ssub.s32 1, %s11
  %s14 = scalar_select 0, %s13, %s11
  $region1: #{_lambda_.36} parent=0
    #allocation2 [shape = 'u8[512]{0}', space=vmem, size = 0x400, scoped, tag = 'output window, operand 1, single buffered']
    #allocation3 [shape = 's32[2]{0}', space=sflag, size = 0x8, scoped, tag = 'scoped memory for _lambda_.36']
    %15 = vsyncpa [#allocation3], 0
    loop: start=0, step=1, limit=4
    $region2: #{_lambda_.36} parent=1 // loop_pre_header
      _
    $region3: #{_lambda_.36} parent=1 // loop_header
      %s17 = sphi 0, %s21
      %p18 = scmp.ge.s32.totalorder %s17, 4
      %s27 = sphi 0, %s29
      %s30 = sphi 0, %s27
      %s31 = sphi 0, %s30
      %s47 = sphi 0, %s31
      %s53 = sphi 0, %s55
      %s56 = sphi 0, %s53
      %s57 = sphi 0, %s56
      %s73 = sphi 0, %s57
      %s77 = sphi 0, %s77
      %s79 = sphi 0, %s77
      %s80 = sphi 0, %s79
      %s94 = sphi 0, %s80
      %s98 = sphi 0, %s98
      %s100 = sphi 0, %s98
      %s101 = sphi 0, %s100
      %s115 = sphi 0, %s101
      %s119 = sphi 0, %s119
      %s121 = sphi 0, %s119
      %s122 = sphi 0, %s121
      %s136 = sphi 0, %s122
      %s140 = sphi 0, %s140
      %s142 = sphi 0, %s140
      %s143 = sphi 0, %s142
      %s157 = sphi 0, %s143
      %s161 = sphi 0, %s161
      %s163 = sphi 0, %s161
      %s164 = sphi 0, %s163
      %s178 = sphi 0, %s164
      %s182 = sphi 0, %s182
      %s184 = sphi 0, %s182
      %s185 = sphi 0, %s184
      %s199 = sphi 0, %s185
      %s205 = sphi 0, %s207
      %s208 = sphi 0, %s205
      %s209 = sphi 0, %s208
      %s225 = sphi 0, %s209
      %s229 = sphi 0, %s229
      %s231 = sphi 0, %s229
      %s232 = sphi 0, %s231
      %s246 = sphi 0, %s232
    $region4: #{_lambda_.36} parent=1 // loop_header_branch
      %20 = sbr.rel (%p18) target = $region8
    $region5: #{_lambda_.36} parent=1 // loop_body
      %s22 = ssub.s32 %s17, 1
      %s23 = ssub.s32 %s17, 2
      %s24 = sadd.s32 %s17, 1
      %s25 = ssub.s32 %s17, %s24
      %p26 = scmp.eq.s32.totalorder %s25, 0
      %s28 = sadd.s32 %s27, 1
      %s29 = scalar_select %p26, %s27, %s28
      %p32 = pneg %p26
      %p33 = scmp.eq.s32.totalorder %s17, 1
      %p34 = por %p32, %p33
      %p35 = scmp.ne.s32.totalorder %s27, %s30
      %p36 = scmp.eq.s32.totalorder %s17, 0
      %p37 = por %p35, %p36
      %p38 = scmp.ne.s32.totalorder %s27, %s30
      %p39 = scmp.eq.s32.totalorder %s22, 1
      %p40 = por %p38, %p39
      %p41 = scmp.ne.s32.totalorder %s30, %s31
      %p42 = scmp.eq.s32.totalorder %s22, 0
      %p43 = por %p41, %p42
      %p44 = scmp.ne.s32.totalorder %s30, %s31
      %p45 = scmp.eq.s32.totalorder %s23, 1
      %p46 = por %p44, %p45
      %p48 = scmp.ne.s32.totalorder %s31, %s47
      %p49 = scmp.eq.s32.totalorder %s23, 0
      %p50 = por %p48, %p49
      %s51 = ssub.s32 %s17, %s24
      %p52 = scmp.eq.s32.totalorder %s51, 0
      %s54 = sadd.s32 %s53, 1
      %s55 = scalar_select %p52, %s53, %s54
      %p58 = pneg %p52
      %p59 = scmp.eq.s32.totalorder %s17, 1
      %p60 = por %p58, %p59
      %p61 = scmp.ne.s32.totalorder %s53, %s56
      %p62 = scmp.eq.s32.totalorder %s17, 0
      %p63 = por %p61, %p62
      %p64 = scmp.ne.s32.totalorder %s53, %s56
      %p65 = scmp.eq.s32.totalorder %s22, 1
      %p66 = por %p64, %p65
      %p67 = scmp.ne.s32.totalorder %s56, %s57
      %p68 = scmp.eq.s32.totalorder %s22, 0
      %p69 = por %p67, %p68
      %p70 = scmp.ne.s32.totalorder %s56, %s57
      %p71 = scmp.eq.s32.totalorder %s23, 1
      %p72 = por %p70, %p71
      %p74 = scmp.ne.s32.totalorder %s57, %s73
      %p75 = scmp.eq.s32.totalorder %s23, 0
      %p76 = por %p74, %p75
      %s78 = sadd.s32 %s77, 1
      %p81 = scmp.eq.s32.totalorder %s17, 1
      %p82 = scmp.ne.s32.totalorder %s77, %s79
      %p83 = scmp.eq.s32.totalorder %s17, 0
      %p84 = por %p82, %p83
      %p85 = scmp.ne.s32.totalorder %s77, %s79
      %p86 = scmp.eq.s32.totalorder %s22, 1
      %p87 = por %p85, %p86
      %p88 = scmp.ne.s32.totalorder %s79, %s80
      %p89 = scmp.eq.s32.totalorder %s22, 0
      %p90 = por %p88, %p89
      %p91 = scmp.ne.s32.totalorder %s79, %s80
      %p92 = scmp.eq.s32.totalorder %s23, 1
      %p93 = por %p91, %p92
      %p95 = scmp.ne.s32.totalorder %s80, %s94
      %p96 = scmp.eq.s32.totalorder %s23, 0
      %p97 = por %p95, %p96
      %s99 = sadd.s32 %s98, 1
      %p102 = scmp.eq.s32.totalorder %s17, 1
      %p103 = scmp.ne.s32.totalorder %s98, %s100
      %p104 = scmp.eq.s32.totalorder %s17, 0
      %p105 = por %p103, %p104
      %p106 = scmp.ne.s32.totalorder %s98, %s100
      %p107 = scmp.eq.s32.totalorder %s22, 1
      %p108 = por %p106, %p107
      %p109 = scmp.ne.s32.totalorder %s100, %s101
      %p110 = scmp.eq.s32.totalorder %s22, 0
      %p111 = por %p109, %p110
      %p112 = scmp.ne.s32.totalorder %s100, %s101
      %p113 = scmp.eq.s32.totalorder %s23, 1
      %p114 = por %p112, %p113
      %p116 = scmp.ne.s32.totalorder %s101, %s115
      %p117 = scmp.eq.s32.totalorder %s23, 0
      %p118 = por %p116, %p117
      %s120 = sadd.s32 %s119, 1
      %p123 = scmp.eq.s32.totalorder %s17, 1
      %p124 = scmp.ne.s32.totalorder %s119, %s121
      %p125 = scmp.eq.s32.totalorder %s17, 0
      %p126 = por %p124, %p125
      %p127 = scmp.ne.s32.totalorder %s119, %s121
      %p128 = scmp.eq.s32.totalorder %s22, 1
      %p129 = por %p127, %p128
      %p130 = scmp.ne.s32.totalorder %s121, %s122
      %p131 = scmp.eq.s32.totalorder %s22, 0
      %p132 = por %p130, %p131
      %p133 = scmp.ne.s32.totalorder %s121, %s122
      %p134 = scmp.eq.s32.totalorder %s23, 1
      %p135 = por %p133, %p134
      %p137 = scmp.ne.s32.totalorder %s122, %s136
      %p138 = scmp.eq.s32.totalorder %s23, 0
      %p139 = por %p137, %p138
      %s141 = sadd.s32 %s140, 1
      %p144 = scmp.eq.s32.totalorder %s17, 1
      %p145 = scmp.ne.s32.totalorder %s140, %s142
      %p146 = scmp.eq.s32.totalorder %s17, 0
      %p147 = por %p145, %p146
      %p148 = scmp.ne.s32.totalorder %s140, %s142
      %p149 = scmp.eq.s32.totalorder %s22, 1
      %p150 = por %p148, %p149
      %p151 = scmp.ne.s32.totalorder %s142, %s143
      %p152 = scmp.eq.s32.totalorder %s22, 0
      %p153 = por %p151, %p152
      %p154 = scmp.ne.s32.totalorder %s142, %s143
      %p155 = scmp.eq.s32.totalorder %s23, 1
      %p156 = por %p154, %p155
      %p158 = scmp.ne.s32.totalorder %s143, %s157
      %p159 = scmp.eq.s32.totalorder %s23, 0
      %p160 = por %p158, %p159
      %s162 = sadd.s32 %s161, 1
      %p165 = scmp.eq.s32.totalorder %s17, 1
      %p166 = scmp.ne.s32.totalorder %s161, %s163
      %p167 = scmp.eq.s32.totalorder %s17, 0
      %p168 = por %p166, %p167
      %p169 = scmp.ne.s32.totalorder %s161, %s163
      %p170 = scmp.eq.s32.totalorder %s22, 1
      %p171 = por %p169, %p170
      %p172 = scmp.ne.s32.totalorder %s163, %s164
      %p173 = scmp.eq.s32.totalorder %s22, 0
      %p174 = por %p172, %p173
      %p175 = scmp.ne.s32.totalorder %s163, %s164
      %p176 = scmp.eq.s32.totalorder %s23, 1
      %p177 = por %p175, %p176
      %p179 = scmp.ne.s32.totalorder %s164, %s178
      %p180 = scmp.eq.s32.totalorder %s23, 0
      %p181 = por %p179, %p180
      %s183 = sadd.s32 %s182, 1
      %p186 = scmp.eq.s32.totalorder %s17, 1
      %p187 = scmp.ne.s32.totalorder %s182, %s184
      %p188 = scmp.eq.s32.totalorder %s17, 0
      %p189 = por %p187, %p188
      %p190 = scmp.ne.s32.totalorder %s182, %s184
      %p191 = scmp.eq.s32.totalorder %s22, 1
      %p192 = por %p190, %p191
      %p193 = scmp.ne.s32.totalorder %s184, %s185
      %p194 = scmp.eq.s32.totalorder %s22, 0
      %p195 = por %p193, %p194
      %p196 = scmp.ne.s32.totalorder %s184, %s185
      %p197 = scmp.eq.s32.totalorder %s23, 1
      %p198 = por %p196, %p197
      %p200 = scmp.ne.s32.totalorder %s185, %s199
      %p201 = scmp.eq.s32.totalorder %s23, 0
      %p202 = por %p200, %p201
      %s203 = ssub.s32 %s17, %s24
      %p204 = scmp.eq.s32.totalorder %s203, 0
      %s206 = sadd.s32 %s205, 1
      %s207 = scalar_select %p204, %s205, %s206
      %p210 = pneg %p204
      %p211 = scmp.eq.s32.totalorder %s17, 1
      %p212 = por %p210, %p211
      %p213 = scmp.ne.s32.totalorder %s205, %s208
      %p214 = scmp.eq.s32.totalorder %s17, 0
      %p215 = por %p213, %p214
      %p216 = scmp.ne.s32.totalorder %s205, %s208
      %p217 = scmp.eq.s32.totalorder %s22, 1
      %p218 = por %p216, %p217
      %p219 = scmp.ne.s32.totalorder %s208, %s209
      %p220 = scmp.eq.s32.totalorder %s22, 0
      %p221 = por %p219, %p220
      %p222 = scmp.ne.s32.totalorder %s208, %s209
      %p223 = scmp.eq.s32.totalorder %s23, 1
      %p224 = por %p222, %p223
      %p226 = scmp.ne.s32.totalorder %s209, %s225
      %p227 = scmp.eq.s32.totalorder %s23, 0
      %p228 = por %p226, %p227
      %s230 = sadd.s32 %s229, 1
      %p233 = scmp.eq.s32.totalorder %s17, 1
      %p234 = scmp.ne.s32.totalorder %s229, %s231
      %p235 = scmp.eq.s32.totalorder %s17, 0
      %p236 = por %p234, %p235
      %p237 = scmp.ne.s32.totalorder %s229, %s231
      %p238 = scmp.eq.s32.totalorder %s22, 1
      %p239 = por %p237, %p238
      %p240 = scmp.ne.s32.totalorder %s231, %s232
      %p241 = scmp.eq.s32.totalorder %s22, 0
      %p242 = por %p240, %p241
      %p243 = scmp.ne.s32.totalorder %s231, %s232
      %p244 = scmp.eq.s32.totalorder %s23, 1
      %p245 = por %p243, %p244
      %p247 = scmp.ne.s32.totalorder %s232, %s246
      %p248 = scmp.eq.s32.totalorder %s23, 0
      %p249 = por %p247, %p248
      %p250 = scmp.le.s32.totalorder 1, %s17
      %p251 = scmp.lt.s32.totalorder %s17, 3
      %p252 = pnand %p250, %p251
      %p253 = pneg %p252
      // Predicated region
      $region9: #{_lambda_.36} parent=5 // pred_check
        _
      $region10: #{_lambda_.36} parent=5 // pred_check_branch
        %255 = sbr.rel (%p252) target = $region12
      $region11: #{_lambda_.36} parent=5 // pred_region
        %s256 = ssub.s32 %s17, 1
        // Predicated region
        $region13: #{_lambda_.36} parent=11 // pred_check
          %p257 = pneg %p90
        $region14: #{_lambda_.36} parent=11 // pred_check_branch
          %259 = sbr.rel (%p257) target = $region16
        $region15: #{_lambda_.36} parent=11 // pred_region
          _
        $region16: #{_lambda_.36} parent=11 // pred_fallthru
          _
        // Predicated region
        $region17: #{_lambda_.36} parent=11 // pred_check
          %p260 = pneg %p111
        $region18: #{_lambda_.36} parent=11 // pred_check_branch
          %262 = sbr.rel (%p260) target = $region20
        $region19: #{_lambda_.36} parent=11 // pred_region
          _
        $region20: #{_lambda_.36} parent=11 // pred_fallthru
          _
        // Predicated region
        $region21: #{_lambda_.36} parent=11 // pred_check
          %p263 = pneg %p132
        $region22: #{_lambda_.36} parent=11 // pred_check_branch
          %265 = sbr.rel (%p263) target = $region24
        $region23: #{_lambda_.36} parent=11 // pred_region
          _
        $region24: #{_lambda_.36} parent=11 // pred_fallthru
          _
        // Predicated region
        $region25: #{_lambda_.36} parent=11 // pred_check
          %p266 = pneg %p153
        $region26: #{_lambda_.36} parent=11 // pred_check_branch
          %268 = sbr.rel (%p266) target = $region28
        $region27: #{_lambda_.36} parent=11 // pred_region
          _
        $region28: #{_lambda_.36} parent=11 // pred_fallthru
          _
        // Predicated region
        $region29: #{_lambda_.36} parent=11 // pred_check
          %p269 = pneg %p174
        $region30: #{_lambda_.36} parent=11 // pred_check_branch
          %271 = sbr.rel (%p269) target = $region32
        $region31: #{_lambda_.36} parent=11 // pred_region
          _
        $region32: #{_lambda_.36} parent=11 // pred_fallthru
          _
        // Predicated region
        $region33: #{_lambda_.36} parent=11 // pred_check
          %p272 = pneg %p195
        $region34: #{_lambda_.36} parent=11 // pred_check_branch
          %274 = sbr.rel (%p272) target = $region36
        $region35: #{_lambda_.36} parent=11 // pred_region
          _
        $region36: #{_lambda_.36} parent=11 // pred_fallthru
          _
      $region12: #{_lambda_.36} parent=5 // pred_fallthru
        _
      %p275 = scmp.lt.s32.totalorder %s17, 2
      // Predicated region
      $region37: #{_lambda_.36} parent=5 // pred_check
        %p276 = pneg %p275
      $region38: #{_lambda_.36} parent=5 // pred_check_branch
        %278 = sbr.rel (%p276) target = $region40
      $region39: #{_lambda_.36} parent=5 // pred_region
        // Predicated region
        $region41: #{_lambda_.36} parent=39 // pred_check
          %p279 = pneg %p37
        $region42: #{_lambda_.36} parent=39 // pred_check_branch
          %281 = sbr.rel (%p279) target = $region44
        $region43: #{_lambda_.36} parent=39 // pred_region
          %s282 = smul.u32 8, %s17
          %p283 = scmp.lt.s32.totalorder %s282, 15
          %s284 = scalar_select %p283, %s282, 15
          %s285 = smul.addr %s284, 4
          %s286 = scalar_lea.vmem %s0, %s285
          %s287 = smul.u32 8, %s17
        $region44: #{_lambda_.36} parent=39 // pred_fallthru
          _
        // Predicated region
        $region45: #{_lambda_.36} parent=39 // pred_check
          %p288 = pneg %p63
        $region46: #{_lambda_.36} parent=39 // pred_check_branch
          %290 = sbr.rel (%p288) target = $region48
        $region47: #{_lambda_.36} parent=39 // pred_region
          %s291 = smul.u32 8, %s17
          %p292 = scmp.lt.s32.totalorder %s291, 15
          %s293 = scalar_select %p292, %s291, 15
          %s294 = smul.addr %s293, 4
          %s295 = scalar_lea.vmem %s1, %s294
          %s296 = smul.u32 8, %s17
        $region48: #{_lambda_.36} parent=39 // pred_fallthru
          _
      $region40: #{_lambda_.36} parent=5 // pred_fallthru
        _
      %p297 = scmp.le.s32.totalorder 1, %s17
      %p298 = scmp.lt.s32.totalorder %s17, 3
      %p299 = pnand %p297, %p298
      %p300 = pneg %p299
      // Predicated region
      $region49: #{_lambda_.36} parent=5 // pred_check
        _
      $region50: #{_lambda_.36} parent=5 // pred_check_branch
        %302 = sbr.rel (%p299) target = $region52
      $region51: #{_lambda_.36} parent=5 // pred_region
        %s303 = ssub.s32 %s17, 1
        %s304 = smul.u32 8, %s22
        %p305 = scmp.lt.s32.totalorder %s304, 15
        %s306 = scalar_select %p305, %s304, 15
        %s307 = smul.addr %s306, 4
        %s308 = scalar_lea.vmem %s0, %s307
        %p309 = pneg %p43
        %p310 = pneg %p40
        %s311 = smul.u32 8, %s22
        %p312 = scmp.lt.s32.totalorder %s311, 15
        %s313 = scalar_select %p312, %s311, 15
        %s314 = smul.addr %s313, 4
        %s315 = scalar_lea.vmem %s1, %s314
        %p316 = pneg %p69
        %p317 = pneg %p66
        %p318 = pneg %p90
        %p319 = pneg %p87
        %p320 = pneg %p111
        %p321 = pneg %p108
        %p322 = pneg %p132
        %p323 = pneg %p129
        %p324 = pneg %p153
        %p325 = pneg %p150
        %p326 = pneg %p174
        %p327 = pneg %p171
        %p328 = pneg %p195
        %p329 = pneg %p192
        %p330 = pneg %p221
        %p331 = pneg %p218
        %s332 = smul.u32 8, %s22
        %p333 = scmp.lt.s32.totalorder %s332, 15
        %s334 = scalar_select %p333, %s332, 15
        %s335 = smul.addr %s334, 4
        %s336 = scalar_lea.vmem %s8, %s335
        %p337 = pneg %p242
        %p338 = pneg %p239
        %s339 = smul.u32 8, %s22
        %p340 = scmp.lt.s32.totalorder %s339, 15
        %s341 = scalar_select %p340, %s339, 15
        %s342 = smul.addr %s341, 4
        %s343 = scalar_lea.vmem %s0, %s342
        %s344 = smul.u32 8, %s22
        %s345 = smul.u32 8, %s22
        %p346 = scmp.lt.s32.totalorder %s345, 15
        %s347 = scalar_select %p346, %s345, 15
        %s348 = smul.addr %s347, 4
        %s349 = scalar_lea.vmem %s1, %s348
        %s350 = smul.u32 8, %s22
        %s351 = smul.u32 8, %s22
        %p352 = scmp.lt.s32.totalorder %s351, 15
        %s353 = scalar_select %p352, %s351, 15
        %s354 = smul.addr %s353, 4
        %s355 = scalar_lea.vmem %s8, %s354
        %s356 = smul.u32 8, %s22
        %v358 = vld [vmem:[%s4] sm:$0x1]
        %v359 = vld [vmem:[%s343] sm:$0xf]
        %v360 = vld [vmem:[%s343 + $0x4] sm:$0xf]
        %v361 = vld [vmem:[%s343 + $0x8] sm:$0xf]
        %v362 = vld [vmem:[%s343 + $0xc] sm:$0xf]
        %v363 = vld [vmem:[%s343 + $0x10] sm:$0xf]
        %v364 = vld [vmem:[%s343 + $0x14] sm:$0xf]
        %v365 = vld [vmem:[%s343 + $0x18] sm:$0xf]
        %v366 = vld [vmem:[%s343 + $0x1c] sm:$0xf]
        %v367 = vld [vmem:[%s2] sm:$0xf]
        %v368 = vld [vmem:[%s2 + $0x4] sm:$0xf]
        %v377 = vunpack.c.l.b16 %v359
        %v378 = vunpack.c.l.b16 %v360
        %v379 = vunpack.c.l.b16 %v361
        %v380 = vunpack.c.l.b16 %v362
        %v381 = vunpack.c.l.b16 %v363
        %v382 = vunpack.c.l.b16 %v364
        %v383 = vunpack.c.l.b16 %v365
        %v384 = vunpack.c.l.b16 %v366
        %v385 = vpack.c.b16 %v378, %v377
        %v386 = vpack.c.b16 %v380, %v379
        %v387 = vpack.c.b16 %v382, %v381
        %v388 = vpack.c.b16 %v384, %v383
        %v391 = vunpack.c.l.b16 %v367
        %v392 = vunpack.c.l.b16 %v368
        %v393 = vpack.c.b16 %v392, %v391
        %vm395 = vcmask 130048
        %v397 = vsel %vm395, %v385, 0
        %v400 = vsel %vm395, %v386, 0
        %v403 = vsel %vm395, %v387, 0
        %v406 = vsel %vm395, %v388, 0
        %408 = vmatprep.subr.bf16.mxu0 0
        %409 = vmatpush1.bf16.msra.mxu0 0
        %410 = vmatprep.subr.bf16.mxu0 0
        %411 = vmatpush1.bf16.msra.mxu0 0
        %412 = vmatprep.subr.bf16.mxu0 0
        %413 = vmatpush1.bf16.msra.mxu0 0
        %414 = vmatprep.subr.bf16.mxu0 0
        %415 = vmatpush1.bf16.msra.mxu0 0
        %416 = vmatprep.subr.bf16.mxu0 0
        %417 = vmatpush1.bf16.msra.mxu0 0
        %418 = vmatprep.subr.bf16.mxu0 0
        %419 = vmatpush1.bf16.msra.mxu0 0
        %420 = vmatprep.subr.bf16.mxu0 0
        %421 = vmatpush1.bf16.msra.mxu0 0
        %422 = vmatprep.subr.bf16.mxu0 0
        %423 = vmatpush1.bf16.msra.mxu0 %v393
        %424 = vmatprep.subr.bf16.mxu0 0
        %425 = vmatpush2.bf16.msra.mxu0 0
        %426 = vmatprep.subr.bf16.mxu0 0
        %427 = vmatpush2.bf16.msra.mxu0 0
        %428 = vmatprep.subr.bf16.mxu0 0
        %429 = vmatpush2.bf16.msra.mxu0 0
        %430 = vmatprep.subr.bf16.mxu0 0
        %431 = vmatpush2.bf16.msra.mxu0 0
        %432 = vmatprep.subr.bf16.mxu0 0
        %433 = vmatpush2.bf16.msra.mxu0 0
        %434 = vmatprep.subr.bf16.mxu0 0
        %435 = vmatpush2.bf16.msra.mxu0 0
        %436 = vmatprep.subr.bf16.mxu0 0
        %437 = vmatpush2.bf16.msra.mxu0 0
        %438 = vmatprep.subr.bf16.mxu0 0
        %439 = vmatpush2.bf16.msra.mxu0 0
        %440 = vmatprep.mubr.bf16.mxu0 0
        %441 = vmatmul.mubr.bf16.gmra.mxu0 %v397
        %v442 = vpop.f32.mrf.mxu0
        %v443 = vadd.f32 0.0, %v442
        %v444 = vpop.f32.mrf.mxu0
        %v445 = vpop.f32.mrf.mxu0
        %v446 = vadd.f32 0.0, %v445
        %v447 = vpop.f32.mrf.mxu0
        %448 = vmatprep.mubr.bf16.mxu0 0
        %449 = vmatmul.mubr.bf16.gmra.mxu0 %v400
        %v450 = vpop.f32.mrf.mxu0
        %v451 = vadd.f32 0.0, %v450
        %v452 = vpop.f32.mrf.mxu0
        %v453 = vpop.f32.mrf.mxu0
        %v454 = vadd.f32 0.0, %v453
        %v455 = vpop.f32.mrf.mxu0
        %456 = vmatprep.mubr.bf16.mxu0 0
        %457 = vmatmul.mubr.bf16.gmra.mxu0 %v403
        %v458 = vpop.f32.mrf.mxu0
        %v459 = vadd.f32 0.0, %v458
        %v460 = vpop.f32.mrf.mxu0
        %v461 = vpop.f32.mrf.mxu0
        %v462 = vadd.f32 0.0, %v461
        %v463 = vpop.f32.mrf.mxu0
        %464 = vmatprep.mubr.bf16.mxu0 0
        %465 = vmatmul.mubr.bf16.gmra.mxu0 %v406
        %v466 = vpop.f32.mrf.mxu0
        %v467 = vadd.f32 0.0, %v466
        %v468 = vpop.f32.mrf.mxu0
        %v469 = vpop.f32.mrf.mxu0
        %v470 = vadd.f32 0.0, %v469
        %v471 = vpop.f32.mrf.mxu0
        %472 = vdwg.mxu0
        %v474 = vlaneseq
        %v475 = vshrl.u32 %v474, 7
        %v476 = vsub.s32 0, %v475
        %v477 = vrot.slane %v358, %v476
        %v479 = vadd.f32 %v477, %v443
        %v480 = vadd.f32 %v477, %v446
        %v481 = vadd.f32 %v477, %v451
        %v482 = vadd.f32 %v477, %v454
        %v483 = vadd.f32 %v477, %v459
        %v484 = vadd.f32 %v477, %v462
        %v485 = vadd.f32 %v477, %v467
        %v486 = vadd.f32 %v477, %v470
        %v487 = vld [vmem:[%s349] sm:$0xf]
        %v488 = vld [vmem:[%s349 + $0x4] sm:$0xf]
        %v489 = vld [vmem:[%s349 + $0x8] sm:$0xf]
        %v490 = vld [vmem:[%s349 + $0xc] sm:$0xf]
        %v491 = vld [vmem:[%s349 + $0x10] sm:$0xf]
        %v492 = vld [vmem:[%s349 + $0x14] sm:$0xf]
        %v493 = vld [vmem:[%s349 + $0x18] sm:$0xf]
        %v494 = vld [vmem:[%s349 + $0x1c] sm:$0xf]
        %v495 = vld [vmem:[%s3] sm:$0xf]
        %v496 = vld [vmem:[%s3 + $0x4] sm:$0xf]
        %v497 = vld [vmem:[%s3 + $0x8] sm:$0xf]
        %v498 = vld [vmem:[%s3 + $0xc] sm:$0xf]
        %v507 = vunpack.c.l.b16 %v487
        %v508 = vunpack.c.l.b16 %v488
        %v509 = vunpack.c.l.b16 %v489
        %v510 = vunpack.c.l.b16 %v490
        %v511 = vunpack.c.l.b16 %v491
        %v512 = vunpack.c.l.b16 %v492
        %v513 = vunpack.c.l.b16 %v493
        %v514 = vunpack.c.l.b16 %v494
        %v515 = vpack.c.b16 %v508, %v507
        %v516 = vpack.c.b16 %v510, %v509
        %v517 = vpack.c.b16 %v512, %v511
        %v518 = vpack.c.b16 %v514, %v513
        %v523 = vunpack.c.l.b16 %v495
        %v524 = vunpack.c.l.b16 %v496
        %v525 = vunpack.c.l.b16 %v497
        %v526 = vunpack.c.l.b16 %v498
        %v527 = vpack.c.b16 %v524, %v523
        %v528 = vpack.c.b16 %v526, %v525
        %vm531 = vcmask 261120
        %v533 = vsel %vm531, %v515, 0
        %v536 = vsel %vm531, %v516, 0
        %v539 = vsel %vm531, %v517, 0
        %v542 = vsel %vm531, %v518, 0
        %544 = vmatprep.subr.bf16.mxu0 0
        %545 = vmatpush1.bf16.msra.mxu0 0
        %546 = vmatprep.subr.bf16.mxu0 0
        %547 = vmatpush1.bf16.msra.mxu0 0
        %548 = vmatprep.subr.bf16.mxu0 0
        %549 = vmatpush1.bf16.msra.mxu0 0
        %550 = vmatprep.subr.bf16.mxu0 0
        %551 = vmatpush1.bf16.msra.mxu0 0
        %552 = vmatprep.subr.bf16.mxu0 0
        %553 = vmatpush1.bf16.msra.mxu0 0
        %554 = vmatprep.subr.bf16.mxu0 0
        %555 = vmatpush1.bf16.msra.mxu0 0
        %556 = vmatprep.subr.bf16.mxu0 0
        %557 = vmatpush1.bf16.msra.mxu0 %v528
        %558 = vmatprep.subr.bf16.mxu0 0
        %559 = vmatpush1.bf16.msra.mxu0 %v527
        %560 = vmatprep.subr.bf16.mxu0 0
        %561 = vmatpush2.bf16.msra.mxu0 0
        %562 = vmatprep.subr.bf16.mxu0 0
        %563 = vmatpush2.bf16.msra.mxu0 0
        %564 = vmatprep.subr.bf16.mxu0 0
        %565 = vmatpush2.bf16.msra.mxu0 0
        %566 = vmatprep.subr.bf16.mxu0 0
        %567 = vmatpush2.bf16.msra.mxu0 0
        %568 = vmatprep.subr.bf16.mxu0 0
        %569 = vmatpush2.bf16.msra.mxu0 0
        %570 = vmatprep.subr.bf16.mxu0 0
        %571 = vmatpush2.bf16.msra.mxu0 0
        %572 = vmatprep.subr.bf16.mxu0 0
        %573 = vmatpush2.bf16.msra.mxu0 0
        %574 = vmatprep.subr.bf16.mxu0 0
        %575 = vmatpush2.bf16.msra.mxu0 0
        %576 = vmatprep.mubr.bf16.mxu0 0
        %577 = vmatmul.mubr.bf16.gmra.mxu0 %v533
        %v578 = vpop.f32.mrf.mxu0
        %v579 = vadd.f32 0.0, %v578
        %v580 = vpop.f32.mrf.mxu0
        %v581 = vpop.f32.mrf.mxu0
        %v582 = vadd.f32 0.0, %v581
        %v583 = vpop.f32.mrf.mxu0
        %584 = vmatprep.mubr.bf16.mxu0 0
        %585 = vmatmul.mubr.bf16.gmra.mxu0 %v536
        %v586 = vpop.f32.mrf.mxu0
        %v587 = vadd.f32 0.0, %v586
        %v588 = vpop.f32.mrf.mxu0
        %v589 = vpop.f32.mrf.mxu0
        %v590 = vadd.f32 0.0, %v589
        %v591 = vpop.f32.mrf.mxu0
        %592 = vmatprep.mubr.bf16.mxu0 0
        %593 = vmatmul.mubr.bf16.gmra.mxu0 %v539
        %v594 = vpop.f32.mrf.mxu0
        %v595 = vadd.f32 0.0, %v594
        %v596 = vpop.f32.mrf.mxu0
        %v597 = vpop.f32.mrf.mxu0
        %v598 = vadd.f32 0.0, %v597
        %v599 = vpop.f32.mrf.mxu0
        %600 = vmatprep.mubr.bf16.mxu0 0
        %601 = vmatmul.mubr.bf16.gmra.mxu0 %v542
        %v602 = vpop.f32.mrf.mxu0
        %v603 = vadd.f32 0.0, %v602
        %v604 = vpop.f32.mrf.mxu0
        %v605 = vpop.f32.mrf.mxu0
        %v606 = vadd.f32 0.0, %v605
        %v607 = vpop.f32.mrf.mxu0
        %608 = vdwg.mxu0
        %v609 = vadd.f32 %v479, %v579
        %v610 = vadd.f32 %v480, %v582
        %v611 = vadd.f32 %v481, %v587
        %v612 = vadd.f32 %v482, %v590
        %v613 = vadd.f32 %v483, %v595
        %v614 = vadd.f32 %v484, %v598
        %v615 = vadd.f32 %v485, %v603
        %v616 = vadd.f32 %v486, %v606
        %v617 = vpack.c.bf16 %v610, %v609
        %v618 = vpack.c.bf16 %v612, %v611
        %v619 = vpack.c.bf16 %v614, %v613
        %v620 = vpack.c.bf16 %v616, %v615
        %v621 = vld [vmem:[%s5] sm:$0xf]
        %v622 = vld [vmem:[%s5 + $0x4] sm:$0xf]
        %v623 = vld [vmem:[%s5 + $0x8] sm:$0xf]
        %v624 = vld [vmem:[%s5 + $0xc] sm:$0xf]
        %v625 = vld [vmem:[%s5 + $0x10] sm:$0xf]
        %v626 = vld [vmem:[%s5 + $0x14] sm:$0xf]
        %v627 = vld [vmem:[%s5 + $0x18] sm:$0xf]
        %v628 = vld [vmem:[%s5 + $0x1c] sm:$0xf]
        %v629 = vld [vmem:[%s5 + $0x20] sm:$0xf]
        %v630 = vld [vmem:[%s5 + $0x24] sm:$0xf]
        %v631 = vld [vmem:[%s5 + $0x28] sm:$0xf]
        %v632 = vld [vmem:[%s5 + $0x2c] sm:$0xf]
        %v633 = vld [vmem:[%s5 + $0x30] sm:$0xf]
        %v634 = vld [vmem:[%s5 + $0x34] sm:$0xf]
        %v635 = vld [vmem:[%s5 + $0x38] sm:$0xf]
        %v636 = vld [vmem:[%s5 + $0x3c] sm:$0xf]
        %v653 = vunpack.c.l.b16 %v621
        %v654 = vunpack.c.l.b16 %v622
        %v655 = vunpack.c.l.b16 %v623
        %v656 = vunpack.c.l.b16 %v624
        %v657 = vunpack.c.l.b16 %v625
        %v658 = vunpack.c.l.b16 %v626
        %v659 = vunpack.c.l.b16 %v627
        %v660 = vunpack.c.l.b16 %v628
        %v661 = vunpack.c.l.b16 %v629
        %v662 = vunpack.c.l.b16 %v630
        %v663 = vunpack.c.l.b16 %v631
        %v664 = vunpack.c.l.b16 %v632
        %v665 = vunpack.c.l.b16 %v633
        %v666 = vunpack.c.l.b16 %v634
        %v667 = vunpack.c.l.b16 %v635
        %v668 = vunpack.c.l.b16 %v636
        %v669 = vpack.c.b16 %v654, %v653
        %v670 = vpack.c.b16 %v656, %v655
        %v671 = vpack.c.b16 %v658, %v657
        %v672 = vpack.c.b16 %v660, %v659
        %v673 = vpack.c.b16 %v662, %v661
        %v674 = vpack.c.b16 %v664, %v663
        %v675 = vpack.c.b16 %v666, %v665
        %v676 = vpack.c.b16 %v668, %v667
        %685 = vmatprep.subr.bf16.mxu0 0
        %686 = vmatpush1.bf16.msra.mxu0 %v676
        %687 = vmatprep.subr.bf16.mxu0 0
        %688 = vmatpush1.bf16.msra.mxu0 %v675
        %689 = vmatprep.subr.bf16.mxu0 0
        %690 = vmatpush1.bf16.msra.mxu0 %v674
        %691 = vmatprep.subr.bf16.mxu0 0
        %692 = vmatpush1.bf16.msra.mxu0 %v673
        %693 = vmatprep.subr.bf16.mxu0 0
        %694 = vmatpush1.bf16.msra.mxu0 %v672
        %695 = vmatprep.subr.bf16.mxu0 0
        %696 = vmatpush1.bf16.msra.mxu0 %v671
        %697 = vmatprep.subr.bf16.mxu0 0
        %698 = vmatpush1.bf16.msra.mxu0 %v670
        %699 = vmatprep.subr.bf16.mxu0 0
        %700 = vmatpush1.bf16.msra.mxu0 %v669
        %701 = vmatprep.subr.bf16.mxu0 0
        %702 = vmatpush2.bf16.msra.mxu0 0
        %703 = vmatprep.subr.bf16.mxu0 0
        %704 = vmatpush2.bf16.msra.mxu0 0
        %705 = vmatprep.subr.bf16.mxu0 0
        %706 = vmatpush2.bf16.msra.mxu0 0
        %707 = vmatprep.subr.bf16.mxu0 0
        %708 = vmatpush2.bf16.msra.mxu0 0
        %709 = vmatprep.subr.bf16.mxu0 0
        %710 = vmatpush2.bf16.msra.mxu0 0
        %711 = vmatprep.subr.bf16.mxu0 0
        %712 = vmatpush2.bf16.msra.mxu0 0
        %713 = vmatprep.subr.bf16.mxu0 0
        %714 = vmatpush2.bf16.msra.mxu0 0
        %715 = vmatprep.subr.bf16.mxu0 0
        %716 = vmatpush2.bf16.msra.mxu0 0
        %717 = vmatprep.mubr.bf16.mxu0 0
        %718 = vmatmul.mubr.bf16.gmra.mxu0 %v617
        %v719 = vpop.f32.mrf.mxu0
        %v720 = vadd.f32 0.0, %v719
        %v721 = vpop.f32.mrf.mxu0
        %v722 = vpop.f32.mrf.mxu0
        %v723 = vadd.f32 0.0, %v722
        %v724 = vpop.f32.mrf.mxu0
        %725 = vmatprep.mubr.bf16.mxu0 0
        %726 = vmatmul.mubr.bf16.gmra.mxu0 %v618
        %v727 = vpop.f32.mrf.mxu0
        %v728 = vadd.f32 0.0, %v727
        %v729 = vpop.f32.mrf.mxu0
        %v730 = vpop.f32.mrf.mxu0
        %v731 = vadd.f32 0.0, %v730
        %v732 = vpop.f32.mrf.mxu0
        %733 = vmatprep.mubr.bf16.mxu0 0
        %734 = vmatmul.mubr.bf16.gmra.mxu0 %v619
        %v735 = vpop.f32.mrf.mxu0
        %v736 = vadd.f32 0.0, %v735
        %v737 = vpop.f32.mrf.mxu0
        %v738 = vpop.f32.mrf.mxu0
        %v739 = vadd.f32 0.0, %v738
        %v740 = vpop.f32.mrf.mxu0
        %741 = vmatprep.mubr.bf16.mxu0 0
        %742 = vmatmul.mubr.bf16.gmra.mxu0 %v620
        %v743 = vpop.f32.mrf.mxu0
        %v744 = vadd.f32 0.0, %v743
        %v745 = vpop.f32.mrf.mxu0
        %v746 = vpop.f32.mrf.mxu0
        %v747 = vadd.f32 0.0, %v746
        %v748 = vpop.f32.mrf.mxu0
        %749 = vdwg.mxu0
        %v750 = vld [vmem:[%s7] sm:$0x1]
        %v751 = vmul.f32 %v720, 2.0
        %v752 = vmul.f32 %v723, 2.0
        %v753 = vmul.f32 %v728, 2.0
        %v754 = vmul.f32 %v731, 2.0
        %v755 = vmul.f32 %v736, 2.0
        %v756 = vmul.f32 %v739, 2.0
        %v757 = vmul.f32 %v744, 2.0
        %v758 = vmul.f32 %v747, 2.0
        %v760 = vlaneseq
        %v761 = vshrl.u32 %v760, 7
        %v762 = vsub.s32 0, %v761
        %v763 = vrot.slane %v750, %v762
        %v765 = vsub.f32 %v763, %v751
        %v766 = vsub.f32 %v763, %v752
        %v767 = vsub.f32 %v763, %v753
        %v768 = vsub.f32 %v763, %v754
        %v769 = vsub.f32 %v763, %v755
        %v770 = vsub.f32 %v763, %v756
        %v771 = vsub.f32 %v763, %v757
        %v772 = vsub.f32 %v763, %v758
        %773 = vmin.xlane.f32.xlu0 %v765
        %v774 = vpop.xlane.xlu0 %773
        %775 = vmin.xlane.f32.xlu0 %v766
        %v776 = vpop.xlane.xlu0 %775
        %777 = vmin.xlane.f32.xlu0 %v767
        %v778 = vpop.xlane.xlu0 %777
        %779 = vmin.xlane.f32.xlu0 %v768
        %v780 = vpop.xlane.xlu0 %779
        %781 = vmin.xlane.f32.xlu0 %v769
        %v782 = vpop.xlane.xlu0 %781
        %783 = vmin.xlane.f32.xlu0 %v770
        %v784 = vpop.xlane.xlu0 %783
        %785 = vmin.xlane.f32.xlu0 %v771
        %v786 = vpop.xlane.xlu0 %785
        %787 = vmin.xlane.f32.xlu0 %v772
        %v788 = vpop.xlane.xlu0 %787
        %v789 = vlaneseq
        %v790 = vand.u32 %v789, 127
        %vm791 = vcmp.le.f32.partialorder %v765, %v774
        %vm792 = vcmp.le.f32.partialorder %v766, %v776
        %vm793 = vcmp.le.f32.partialorder %v767, %v778
        %vm794 = vcmp.le.f32.partialorder %v768, %v780
        %vm795 = vcmp.le.f32.partialorder %v769, %v782
        %vm796 = vcmp.le.f32.partialorder %v770, %v784
        %vm797 = vcmp.le.f32.partialorder %v771, %v786
        %vm798 = vcmp.le.f32.partialorder %v772, %v788
        %v799 = vsel %vm791, %v790, 128
        %v800 = vsel %vm792, %v790, 128
        %v801 = vsel %vm793, %v790, 128
        %v802 = vsel %vm794, %v790, 128
        %v803 = vsel %vm795, %v790, 128
        %v804 = vsel %vm796, %v790, 128
        %v805 = vsel %vm797, %v790, 128
        %v806 = vsel %vm798, %v790, 128
        %v807 = vand.u32 %v799, 65535
        %v808 = vshra.s32 %v799, 16
        %v809 = vcvt.s32.f32 %v807
        %v810 = vcvt.s32.f32 %v808
        %811 = vmin.xlane.f32.xlu0 %v810
        %v812 = vpop.xlane.xlu0 %811
        %vm813 = vcmp.eq.f32.partialorder %v810, %v812
        %v814 = vsel %vm813, %v809, inf
        %815 = vmin.xlane.f32.xlu0 %v814
        %v816 = vpop.xlane.xlu0 %815
        %v817 = vcvt.f32.s32 %v816
        %v818 = vcvt.f32.s32 %v812
        %v819 = vshll.u32 %v818, 16
        %v820 = vadd.s32 %v819, %v817
        %v821 = vand.u32 %v800, 65535
        %v822 = vshra.s32 %v800, 16
        %v823 = vcvt.s32.f32 %v821
        %v824 = vcvt.s32.f32 %v822
        %825 = vmin.xlane.f32.xlu0 %v824
        %v826 = vpop.xlane.xlu0 %825
        %vm827 = vcmp.eq.f32.partialorder %v824, %v826
        %v828 = vsel %vm827, %v823, inf
        %829 = vmin.xlane.f32.xlu0 %v828
        %v830 = vpop.xlane.xlu0 %829
        %v831 = vcvt.f32.s32 %v830
        %v832 = vcvt.f32.s32 %v826
        %v833 = vshll.u32 %v832, 16
        %v834 = vadd.s32 %v833, %v831
        %v835 = vand.u32 %v801, 65535
        %v836 = vshra.s32 %v801, 16
        %v837 = vcvt.s32.f32 %v835
        %v838 = vcvt.s32.f32 %v836
        %839 = vmin.xlane.f32.xlu0 %v838
        %v840 = vpop.xlane.xlu0 %839
        %vm841 = vcmp.eq.f32.partialorder %v838, %v840
        %v842 = vsel %vm841, %v837, inf
        %843 = vmin.xlane.f32.xlu0 %v842
        %v844 = vpop.xlane.xlu0 %843
        %v845 = vcvt.f32.s32 %v844
        %v846 = vcvt.f32.s32 %v840
        %v847 = vshll.u32 %v846, 16
        %v848 = vadd.s32 %v847, %v845
        %v849 = vand.u32 %v802, 65535
        %v850 = vshra.s32 %v802, 16
        %v851 = vcvt.s32.f32 %v849
        %v852 = vcvt.s32.f32 %v850
        %853 = vmin.xlane.f32.xlu0 %v852
        %v854 = vpop.xlane.xlu0 %853
        %vm855 = vcmp.eq.f32.partialorder %v852, %v854
        %v856 = vsel %vm855, %v851, inf
        %857 = vmin.xlane.f32.xlu0 %v856
        %v858 = vpop.xlane.xlu0 %857
        %v859 = vcvt.f32.s32 %v858
        %v860 = vcvt.f32.s32 %v854
        %v861 = vshll.u32 %v860, 16
        %v862 = vadd.s32 %v861, %v859
        %v863 = vand.u32 %v803, 65535
        %v864 = vshra.s32 %v803, 16
        %v865 = vcvt.s32.f32 %v863
        %v866 = vcvt.s32.f32 %v864
        %867 = vmin.xlane.f32.xlu0 %v866
        %v868 = vpop.xlane.xlu0 %867
        %vm869 = vcmp.eq.f32.partialorder %v866, %v868
        %v870 = vsel %vm869, %v865, inf
        %871 = vmin.xlane.f32.xlu0 %v870
        %v872 = vpop.xlane.xlu0 %871
        %v873 = vcvt.f32.s32 %v872
        %v874 = vcvt.f32.s32 %v868
        %v875 = vshll.u32 %v874, 16
        %v876 = vadd.s32 %v875, %v873
        %v877 = vand.u32 %v804, 65535
        %v878 = vshra.s32 %v804, 16
        %v879 = vcvt.s32.f32 %v877
        %v880 = vcvt.s32.f32 %v878
        %881 = vmin.xlane.f32.xlu0 %v880
        %v882 = vpop.xlane.xlu0 %881
        %vm883 = vcmp.eq.f32.partialorder %v880, %v882
        %v884 = vsel %vm883, %v879, inf
        %885 = vmin.xlane.f32.xlu0 %v884
        %v886 = vpop.xlane.xlu0 %885
        %v887 = vcvt.f32.s32 %v886
        %v888 = vcvt.f32.s32 %v882
        %v889 = vshll.u32 %v888, 16
        %v890 = vadd.s32 %v889, %v887
        %v891 = vand.u32 %v805, 65535
        %v892 = vshra.s32 %v805, 16
        %v893 = vcvt.s32.f32 %v891
        %v894 = vcvt.s32.f32 %v892
        %895 = vmin.xlane.f32.xlu0 %v894
        %v896 = vpop.xlane.xlu0 %895
        %vm897 = vcmp.eq.f32.partialorder %v894, %v896
        %v898 = vsel %vm897, %v893, inf
        %899 = vmin.xlane.f32.xlu0 %v898
        %v900 = vpop.xlane.xlu0 %899
        %v901 = vcvt.f32.s32 %v900
        %v902 = vcvt.f32.s32 %v896
        %v903 = vshll.u32 %v902, 16
        %v904 = vadd.s32 %v903, %v901
        %v905 = vand.u32 %v806, 65535
        %v906 = vshra.s32 %v806, 16
        %v907 = vcvt.s32.f32 %v905
        %v908 = vcvt.s32.f32 %v906
        %909 = vmin.xlane.f32.xlu0 %v908
        %v910 = vpop.xlane.xlu0 %909
        %vm911 = vcmp.eq.f32.partialorder %v908, %v910
        %v912 = vsel %vm911, %v907, inf
        %913 = vmin.xlane.f32.xlu0 %v912
        %v914 = vpop.xlane.xlu0 %913
        %v915 = vcvt.f32.s32 %v914
        %v916 = vcvt.f32.s32 %v910
        %v917 = vshll.u32 %v916, 16
        %v918 = vadd.s32 %v917, %v915
        %vm919 = vcmp.eq.s32.totalorder %v790, %v820
        %vm920 = vcmp.eq.s32.totalorder %v790, %v834
        %vm921 = vcmp.eq.s32.totalorder %v790, %v848
        %vm922 = vcmp.eq.s32.totalorder %v790, %v862
        %vm923 = vcmp.eq.s32.totalorder %v790, %v876
        %vm924 = vcmp.eq.s32.totalorder %v790, %v890
        %vm925 = vcmp.eq.s32.totalorder %v790, %v904
        %vm926 = vcmp.eq.s32.totalorder %v790, %v918
        %v927 = vsel %vm919, 1, 0
        %v928 = vsel %vm920, 1, 0
        %v929 = vsel %vm921, 1, 0
        %v930 = vsel %vm922, 1, 0
        %v931 = vsel %vm923, 1, 0
        %v932 = vsel %vm924, 1, 0
        %v933 = vsel %vm925, 1, 0
        %v934 = vsel %vm926, 1, 0
        %v935 = vcvt.s32.f32 %v927
        %v936 = vcvt.s32.f32 %v928
        %v937 = vcvt.s32.f32 %v929
        %v938 = vcvt.s32.f32 %v930
        %v939 = vcvt.s32.f32 %v931
        %v940 = vcvt.s32.f32 %v932
        %v941 = vcvt.s32.f32 %v933
        %v942 = vcvt.s32.f32 %v934
        %v943 = vpack.c.bf16 %v936, %v935
        %v944 = vpack.c.bf16 %v938, %v937
        %v945 = vpack.c.bf16 %v940, %v939
        %v946 = vpack.c.bf16 %v942, %v941
        %v947 = vld [vmem:[%s6] sm:$0xf]
        %v948 = vld [vmem:[%s6 + $0x4] sm:$0xf]
        %v949 = vld [vmem:[%s6 + $0x8] sm:$0xf]
        %v950 = vld [vmem:[%s6 + $0xc] sm:$0xf]
        %v951 = vld [vmem:[%s6 + $0x10] sm:$0xf]
        %v952 = vld [vmem:[%s6 + $0x14] sm:$0xf]
        %v953 = vld [vmem:[%s6 + $0x18] sm:$0xf]
        %v954 = vld [vmem:[%s6 + $0x1c] sm:$0xf]
        %v955 = vld [vmem:[%s6 + $0x20] sm:$0xf]
        %v956 = vld [vmem:[%s6 + $0x24] sm:$0xf]
        %v957 = vld [vmem:[%s6 + $0x28] sm:$0xf]
        %v958 = vld [vmem:[%s6 + $0x2c] sm:$0xf]
        %v959 = vld [vmem:[%s6 + $0x30] sm:$0xf]
        %v960 = vld [vmem:[%s6 + $0x34] sm:$0xf]
        %v961 = vld [vmem:[%s6 + $0x38] sm:$0xf]
        %v962 = vld [vmem:[%s6 + $0x3c] sm:$0xf]
        %v979 = vunpack.c.l.b16 %v947
        %v980 = vunpack.c.l.b16 %v948
        %v981 = vunpack.c.l.b16 %v949
        %v982 = vunpack.c.l.b16 %v950
        %v983 = vunpack.c.l.b16 %v951
        %v984 = vunpack.c.l.b16 %v952
        %v985 = vunpack.c.l.b16 %v953
        %v986 = vunpack.c.l.b16 %v954
        %v987 = vunpack.c.l.b16 %v955
        %v988 = vunpack.c.l.b16 %v956
        %v989 = vunpack.c.l.b16 %v957
        %v990 = vunpack.c.l.b16 %v958
        %v991 = vunpack.c.l.b16 %v959
        %v992 = vunpack.c.l.b16 %v960
        %v993 = vunpack.c.l.b16 %v961
        %v994 = vunpack.c.l.b16 %v962
        %v995 = vpack.c.b16 %v980, %v979
        %v996 = vpack.c.b16 %v982, %v981
        %v997 = vpack.c.b16 %v984, %v983
        %v998 = vpack.c.b16 %v986, %v985
        %v999 = vpack.c.b16 %v988, %v987
        %v1000 = vpack.c.b16 %v990, %v989
        %v1001 = vpack.c.b16 %v992, %v991
        %v1002 = vpack.c.b16 %v994, %v993
        %1011 = vmatprep.subr.bf16.mxu0 0
        %1012 = vmatpush1.bf16.msra.mxu0 %v1002
        %1013 = vmatprep.subr.bf16.mxu0 0
        %1014 = vmatpush1.bf16.msra.mxu0 %v1001
        %1015 = vmatprep.subr.bf16.mxu0 0
        %1016 = vmatpush1.bf16.msra.mxu0 %v1000
        %1017 = vmatprep.subr.bf16.mxu0 0
        %1018 = vmatpush1.bf16.msra.mxu0 %v999
        %1019 = vmatprep.subr.bf16.mxu0 0
        %1020 = vmatpush1.bf16.msra.mxu0 %v998
        %1021 = vmatprep.subr.bf16.mxu0 0
        %1022 = vmatpush1.bf16.msra.mxu0 %v997
        %1023 = vmatprep.subr.bf16.mxu0 0
        %1024 = vmatpush1.bf16.msra.mxu0 %v996
        %1025 = vmatprep.subr.bf16.mxu0 0
        %1026 = vmatpush1.bf16.msra.mxu0 %v995
        %1027 = vmatprep.subr.bf16.mxu0 0
        %1028 = vmatpush2.bf16.msra.mxu0 0
        %1029 = vmatprep.subr.bf16.mxu0 0
        %1030 = vmatpush2.bf16.msra.mxu0 0
        %1031 = vmatprep.subr.bf16.mxu0 0
        %1032 = vmatpush2.bf16.msra.mxu0 0
        %1033 = vmatprep.subr.bf16.mxu0 0
        %1034 = vmatpush2.bf16.msra.mxu0 0
        %1035 = vmatprep.subr.bf16.mxu0 0
        %1036 = vmatpush2.bf16.msra.mxu0 0
        %1037 = vmatprep.subr.bf16.mxu0 0
        %1038 = vmatpush2.bf16.msra.mxu0 0
        %1039 = vmatprep.subr.bf16.mxu0 0
        %1040 = vmatpush2.bf16.msra.mxu0 0
        %1041 = vmatprep.subr.bf16.mxu0 0
        %1042 = vmatpush2.bf16.msra.mxu0 0
        %1043 = vmatprep.mubr.bf16.mxu0 0
        %1044 = vmatmul.mubr.bf16.gmra.mxu0 %v943
        %v1045 = vpop.f32.mrf.mxu0
        %v1046 = vadd.f32 0.0, %v1045
        %v1047 = vpop.f32.mrf.mxu0
        %v1048 = vpop.f32.mrf.mxu0
        %v1049 = vadd.f32 0.0, %v1048
        %v1050 = vpop.f32.mrf.mxu0
        %1051 = vmatprep.mubr.bf16.mxu0 0
        %1052 = vmatmul.mubr.bf16.gmra.mxu0 %v944
        %v1053 = vpop.f32.mrf.mxu0
        %v1054 = vadd.f32 0.0, %v1053
        %v1055 = vpop.f32.mrf.mxu0
        %v1056 = vpop.f32.mrf.mxu0
        %v1057 = vadd.f32 0.0, %v1056
        %v1058 = vpop.f32.mrf.mxu0
        %1059 = vmatprep.mubr.bf16.mxu0 0
        %1060 = vmatmul.mubr.bf16.gmra.mxu0 %v945
        %v1061 = vpop.f32.mrf.mxu0
        %v1062 = vadd.f32 0.0, %v1061
        %v1063 = vpop.f32.mrf.mxu0
        %v1064 = vpop.f32.mrf.mxu0
        %v1065 = vadd.f32 0.0, %v1064
        %v1066 = vpop.f32.mrf.mxu0
        %1067 = vmatprep.mubr.bf16.mxu0 0
        %1068 = vmatmul.mubr.bf16.gmra.mxu0 %v946
        %v1069 = vpop.f32.mrf.mxu0
        %v1070 = vadd.f32 0.0, %v1069
        %v1071 = vpop.f32.mrf.mxu0
        %v1072 = vpop.f32.mrf.mxu0
        %v1073 = vadd.f32 0.0, %v1072
        %v1074 = vpop.f32.mrf.mxu0
        %1075 = vdwg.mxu0
        %v1076 = vpack.c.bf16 %v1049, %v1046
        %v1077 = vpack.c.bf16 %v1057, %v1054
        %v1078 = vpack.c.bf16 %v1065, %v1062
        %v1079 = vpack.c.bf16 %v1073, %v1070
        %v1084 = vunpack.c.l.b16 %v1076
        %v1085 = vunpack.c.h.b16 %v1076
        %v1086 = vunpack.c.l.b16 %v1077
        %v1087 = vunpack.c.h.b16 %v1077
        %v1088 = vunpack.c.l.b16 %v1078
        %v1089 = vunpack.c.h.b16 %v1078
        %v1090 = vunpack.c.l.b16 %v1079
        %v1091 = vunpack.c.h.b16 %v1079
        %v1092 = vpack.c.b16 %v1084, %v1084
        %v1093 = vpack.c.b16 %v1085, %v1085
        %v1094 = vpack.c.b16 %v1086, %v1086
        %v1095 = vpack.c.b16 %v1087, %v1087
        %v1096 = vpack.c.b16 %v1088, %v1088
        %v1097 = vpack.c.b16 %v1089, %v1089
        %v1098 = vpack.c.b16 %v1090, %v1090
        %v1099 = vpack.c.b16 %v1091, %v1091
        %1108 = vst [vmem:[%s355] sm:$0xf] %v1092
        %1109 = vst [vmem:[%s355 + $0x4] sm:$0xf] %v1093
        %1110 = vst [vmem:[%s355 + $0x8] sm:$0xf] %v1094
        %1111 = vst [vmem:[%s355 + $0xc] sm:$0xf] %v1095
        %1112 = vst [vmem:[%s355 + $0x10] sm:$0xf] %v1096
        %1113 = vst [vmem:[%s355 + $0x14] sm:$0xf] %v1097
        %1114 = vst [vmem:[%s355 + $0x18] sm:$0xf] %v1098
        %1115 = vst [vmem:[%s355 + $0x1c] sm:$0xf] %v1099
        %s1116 = smul.u32 %s22, 64
        %v1117 = vlaneseq
        %v1118 = vshrl.u32 %v1117, 7
        %v1119 = vadd.s32 %v1118, 8
        %v1120 = vadd.s32 %v1118, 16
        %v1121 = vadd.s32 %v1118, 24
        %v1122 = vadd.s32 %v1118, 32
        %v1123 = vadd.s32 %v1118, 40
        %v1124 = vadd.s32 %v1118, 48
        %v1125 = vadd.s32 %v1118, 56
        %v1126 = vstv %s1116
        %v1127 = vadd.s32 %v1126, %v1118
        %v1128 = vadd.s32 %v1126, %v1119
        %v1129 = vadd.s32 %v1126, %v1120
        %v1130 = vadd.s32 %v1126, %v1121
        %v1131 = vadd.s32 %v1126, %v1122
        %v1132 = vadd.s32 %v1126, %v1123
        %v1133 = vadd.s32 %v1126, %v1124
        %v1134 = vadd.s32 %v1126, %v1125
        %vm1135 = vcmp.lt.s32.totalorder %v1127, 128
        %vm1136 = vcmp.lt.s32.totalorder %v1128, 128
        %vm1137 = vcmp.lt.s32.totalorder %v1129, 128
        %vm1138 = vcmp.lt.s32.totalorder %v1130, 128
        %vm1139 = vcmp.lt.s32.totalorder %v1131, 128
        %vm1140 = vcmp.lt.s32.totalorder %v1132, 128
        %vm1141 = vcmp.lt.s32.totalorder %v1133, 128
        %vm1142 = vcmp.lt.s32.totalorder %v1134, 128
        %v1143 = vsub.f32 %v1046, %v609
        %v1144 = vsub.f32 %v1049, %v610
        %v1145 = vsub.f32 %v1054, %v611
        %v1146 = vsub.f32 %v1057, %v612
        %v1147 = vsub.f32 %v1062, %v613
        %v1148 = vsub.f32 %v1065, %v614
        %v1149 = vsub.f32 %v1070, %v615
        %v1150 = vsub.f32 %v1073, %v616
        %v1151 = vmul.f32 %v1143, %v1143
        %v1152 = vmul.f32 %v1144, %v1144
        %v1153 = vmul.f32 %v1145, %v1145
        %v1154 = vmul.f32 %v1146, %v1146
        %v1155 = vmul.f32 %v1147, %v1147
        %v1156 = vmul.f32 %v1148, %v1148
        %v1157 = vmul.f32 %v1149, %v1149
        %v1158 = vmul.f32 %v1150, %v1150
        %v1159 = vsel %vm1135, 1, 0
        %v1160 = vsel %vm1136, 1, 0
        %v1161 = vsel %vm1137, 1, 0
        %v1162 = vsel %vm1138, 1, 0
        %v1163 = vsel %vm1139, 1, 0
        %v1164 = vsel %vm1140, 1, 0
        %v1165 = vsel %vm1141, 1, 0
        %v1166 = vsel %vm1142, 1, 0
        %vm1167 = vcmp.eq.s32.totalorder %v1159, 1
        %vm1168 = vcmp.eq.s32.totalorder %v1160, 1
        %vm1169 = vcmp.eq.s32.totalorder %v1161, 1
        %vm1170 = vcmp.eq.s32.totalorder %v1162, 1
        %vm1171 = vcmp.eq.s32.totalorder %v1163, 1
        %vm1172 = vcmp.eq.s32.totalorder %v1164, 1
        %vm1173 = vcmp.eq.s32.totalorder %v1165, 1
        %vm1174 = vcmp.eq.s32.totalorder %v1166, 1
        %v1175 = vsel %vm1167, %v1151, 0.0
        %v1176 = vsel %vm1168, %v1152, 0.0
        %v1177 = vsel %vm1169, %v1153, 0.0
        %v1178 = vsel %vm1170, %v1154, 0.0
        %v1179 = vsel %vm1171, %v1155, 0.0
        %v1180 = vsel %vm1172, %v1156, 0.0
        %v1181 = vsel %vm1173, %v1157, 0.0
        %v1182 = vsel %vm1174, %v1158, 0.0
        %p1183 = scmp.eq.s32.totalorder %s22, 0
        // Predicated region
        $region53: #{_lambda_.36} parent=51 // pred_check
          %p1184 = pneg %p1183
        $region54: #{_lambda_.36} parent=51 // pred_check_branch
          %1186 = sbr.rel (%p1184) target = $region56
        $region55: #{_lambda_.36} parent=51 // pred_region
          %vm1187 = vcmask 0
          %1188 = vst.msk [vmem:[#allocation2] sm:$0x1] %vm1187, 0.0
        $region56: #{_lambda_.36} parent=51 // pred_fallthru
          _
        %v1189 = vld [vmem:[#allocation2] sm:$0x1]
        %v1190 = vadd.f32 %v1175, %v1176
        %v1191 = vadd.f32 %v1190, %v1177
        %v1192 = vadd.f32 %v1191, %v1178
        %v1193 = vadd.f32 %v1192, %v1179
        %v1194 = vadd.f32 %v1193, %v1180
        %v1195 = vadd.f32 %v1194, %v1181
        %v1196 = vadd.f32 %v1195, %v1182
        %1197 = vadd.xlane.f32.xlu0 %v1196
        %v1198 = vpop.xlane.xlu0 %1197
        %v1199 = vrot.slane %v1198, 4
        %v1200 = vadd.f32 %v1198, %v1199
        %v1201 = vrot.slane %v1200, 2
        %v1202 = vadd.f32 %v1200, %v1201
        %v1203 = vrot.slane %v1202, 1
        %v1204 = vadd.f32 %v1202, %v1203
        %s1205 = vtos %v1204
        %v1206 = vstv %s1205
        %v1207 = vadd.f32 %v1189, %v1206
        %vm1208 = vcmask 0
        %1209 = vst.msk [vmem:[#allocation2] sm:$0x1] %vm1208, %v1207
        %s1210 = smul.u32 8, %s22
        %p1211 = scmp.lt.s32.totalorder %s1210, 15
        %s1212 = scalar_select %p1211, %s1210, 15
        %s1213 = smul.addr %s1212, 4
        %s1214 = scalar_lea.vmem %s8, %s1213
        // Predicated region
        $region57: #{_lambda_.36} parent=51 // pred_check
          %p1215 = pneg %p218
        $region58: #{_lambda_.36} parent=51 // pred_check_branch
          %1217 = sbr.rel (%p1215) target = $region60
        $region59: #{_lambda_.36} parent=51 // pred_region
          %s1218 = smul.u32 8, %s22
        $region60: #{_lambda_.36} parent=51 // pred_fallthru
          _
        // Predicated region
        $region61: #{_lambda_.36} parent=51 // pred_check
          %p1219 = pneg %p239
        $region62: #{_lambda_.36} parent=51 // pred_check_branch
          %1221 = sbr.rel (%p1219) target = $region64
        $region63: #{_lambda_.36} parent=51 // pred_region
          %s1223 = ssub.s32 16, 16
          %1224 = vsyncadd [#allocation3], %s1223
          %s1226 = sshll.u32 [#allocation2], 4
          %s1227 = int_to_ptr.vmem [resolvable:$true] %s1226
          %1229 = dma.vmem_to_hbm [thread:$0]  %s1227, 16, %s9, [#allocation3]
        $region64: #{_lambda_.36} parent=51 // pred_fallthru
          _
        // Predicated region
        $region65: #{_lambda_.36} parent=51 // pred_check
          %p1230 = pneg %p239
        $region66: #{_lambda_.36} parent=51 // pred_check_branch
          %1232 = sbr.rel (%p1230) target = $region68
        $region67: #{_lambda_.36} parent=51 // pred_region
          %1233 = dma.done [#allocation3], 16
        $region68: #{_lambda_.36} parent=51 // pred_fallthru
          _
      $region52: #{_lambda_.36} parent=5 // pred_fallthru
        _
      %p1234 = scmp.le.s32.totalorder 2, %s17
      // Predicated region
      $region69: #{_lambda_.36} parent=5 // pred_check
        %p1235 = pneg %p1234
      $region70: #{_lambda_.36} parent=5 // pred_check_branch
        %1237 = sbr.rel (%p1235) target = $region72
      $region71: #{_lambda_.36} parent=5 // pred_region
        %s1238 = ssub.s32 %s17, 2
        // Predicated region
        $region73: #{_lambda_.36} parent=71 // pred_check
          %p1239 = pneg %p224
        $region74: #{_lambda_.36} parent=71 // pred_check_branch
          %1241 = sbr.rel (%p1239) target = $region76
        $region75: #{_lambda_.36} parent=71 // pred_region
          %s1242 = smul.u32 8, %s23
          %p1243 = scmp.lt.s32.totalorder %s1242, 15
          %s1244 = scalar_select %p1243, %s1242, 15
          %s1245 = smul.addr %s1244, 4
          %s1246 = scalar_lea.vmem %s8, %s1245
        $region76: #{_lambda_.36} parent=71 // pred_fallthru
          _
      $region72: #{_lambda_.36} parent=5 // pred_fallthru
        _
    $region6: #{_lambda_.36} parent=1 // loop_footer
      %s21 = sadd.s32 1, %s17
    $region7: #{_lambda_.36} parent=1 // loop_footer_branch
      %16 = sbr.rel target = $region3
    $region8: #{_lambda_.36} parent=1 // loop_exit
      _
    %1247 = vsyncpa [#allocation3], 1
    %s1248 = scalar_lea.sflag [#allocation3], 1
    %1249 = vsyncpa %s1248, 1

// kernel: _lambda_.41
$region0: #{_lambda_.41}
  #allocation0 [shape = 'u32[]', space=smem, size = 0x4, offset = 0x4, fixed_abs, tag = 'smem constant byte address 0x4 - core index']
  #allocation1 [shape = 'u32[144,128]{1,0:T(1,128)}', space=vmem, size = 0x12000, scoped, tag = 'internal scratch']
  %s0 = inlined_call_operand.vmem [shape: bf16[128,288], index: 0, kind: input, shape index: {}]
  %s1 = inlined_call_operand.vmem [shape: bf16[288,128], index: 1, kind: input, shape index: {}]
  %s2 = inlined_call_operand.vmem [shape: f32[1,128], index: 2, kind: input, shape index: {}]
  %s3 = inlined_call_operand.vmem [shape: bf16[128,128], index: 3, kind: output, shape index: {}]
  %s4 = sld [smem:[#allocation0]]
  $region45: #{_lambda_.41} parent=0
    _
  %s6 = ssub.s32 1, %s4
  %s7 = scalar_select 0, %s6, %s4
  loop: start=0, step=1, limit=4
  $region2: #{_lambda_.41} parent=0 // loop_pre_header
    _
  $region3: #{_lambda_.41} parent=0 // loop_header
    %s9 = sphi 0, %s13
    %p10 = scmp.ge.s32.totalorder %s9, 4
    %s19 = sphi 0, %s21
    %s22 = sphi 0, %s19
    %s23 = sphi 0, %s22
    %s39 = sphi 0, %s23
    %s43 = sphi 0, %s43
    %s45 = sphi 0, %s43
    %s46 = sphi 0, %s45
    %s60 = sphi 0, %s46
    %s64 = sphi 0, %s64
    %s66 = sphi 0, %s64
    %s67 = sphi 0, %s66
    %s81 = sphi 0, %s67
    %s87 = sphi 0, %s89
    %s90 = sphi 0, %s87
    %s91 = sphi 0, %s90
    %s107 = sphi 0, %s91
  $region4: #{_lambda_.41} parent=0 // loop_header_branch
    %12 = sbr.rel (%p10) target = $region8
  $region5: #{_lambda_.41} parent=0 // loop_body
    %s14 = ssub.s32 %s9, 1
    %s15 = ssub.s32 %s9, 2
    %s16 = sadd.s32 %s9, 1
    %s17 = ssub.s32 %s9, %s16
    %p18 = scmp.eq.s32.totalorder %s17, 0
    %s20 = sadd.s32 %s19, 1
    %s21 = scalar_select %p18, %s19, %s20
    %p24 = pneg %p18
    %p25 = scmp.eq.s32.totalorder %s9, 1
    %p26 = por %p24, %p25
    %p27 = scmp.ne.s32.totalorder %s19, %s22
    %p28 = scmp.eq.s32.totalorder %s9, 0
    %p29 = por %p27, %p28
    %p30 = scmp.ne.s32.totalorder %s19, %s22
    %p31 = scmp.eq.s32.totalorder %s14, 1
    %p32 = por %p30, %p31
    %p33 = scmp.ne.s32.totalorder %s22, %s23
    %p34 = scmp.eq.s32.totalorder %s14, 0
    %p35 = por %p33, %p34
    %p36 = scmp.ne.s32.totalorder %s22, %s23
    %p37 = scmp.eq.s32.totalorder %s15, 1
    %p38 = por %p36, %p37
    %p40 = scmp.ne.s32.totalorder %s23, %s39
    %p41 = scmp.eq.s32.totalorder %s15, 0
    %p42 = por %p40, %p41
    %s44 = sadd.s32 %s43, 1
    %p47 = scmp.eq.s32.totalorder %s9, 1
    %p48 = scmp.ne.s32.totalorder %s43, %s45
    %p49 = scmp.eq.s32.totalorder %s9, 0
    %p50 = por %p48, %p49
    %p51 = scmp.ne.s32.totalorder %s43, %s45
    %p52 = scmp.eq.s32.totalorder %s14, 1
    %p53 = por %p51, %p52
    %p54 = scmp.ne.s32.totalorder %s45, %s46
    %p55 = scmp.eq.s32.totalorder %s14, 0
    %p56 = por %p54, %p55
    %p57 = scmp.ne.s32.totalorder %s45, %s46
    %p58 = scmp.eq.s32.totalorder %s15, 1
    %p59 = por %p57, %p58
    %p61 = scmp.ne.s32.totalorder %s46, %s60
    %p62 = scmp.eq.s32.totalorder %s15, 0
    %p63 = por %p61, %p62
    %s65 = sadd.s32 %s64, 1
    %p68 = scmp.eq.s32.totalorder %s9, 1
    %p69 = scmp.ne.s32.totalorder %s64, %s66
    %p70 = scmp.eq.s32.totalorder %s9, 0
    %p71 = por %p69, %p70
    %p72 = scmp.ne.s32.totalorder %s64, %s66
    %p73 = scmp.eq.s32.totalorder %s14, 1
    %p74 = por %p72, %p73
    %p75 = scmp.ne.s32.totalorder %s66, %s67
    %p76 = scmp.eq.s32.totalorder %s14, 0
    %p77 = por %p75, %p76
    %p78 = scmp.ne.s32.totalorder %s66, %s67
    %p79 = scmp.eq.s32.totalorder %s15, 1
    %p80 = por %p78, %p79
    %p82 = scmp.ne.s32.totalorder %s67, %s81
    %p83 = scmp.eq.s32.totalorder %s15, 0
    %p84 = por %p82, %p83
    %s85 = ssub.s32 %s9, %s16
    %p86 = scmp.eq.s32.totalorder %s85, 0
    %s88 = sadd.s32 %s87, 1
    %s89 = scalar_select %p86, %s87, %s88
    %p92 = pneg %p86
    %p93 = scmp.eq.s32.totalorder %s9, 1
    %p94 = por %p92, %p93
    %p95 = scmp.ne.s32.totalorder %s87, %s90
    %p96 = scmp.eq.s32.totalorder %s9, 0
    %p97 = por %p95, %p96
    %p98 = scmp.ne.s32.totalorder %s87, %s90
    %p99 = scmp.eq.s32.totalorder %s14, 1
    %p100 = por %p98, %p99
    %p101 = scmp.ne.s32.totalorder %s90, %s91
    %p102 = scmp.eq.s32.totalorder %s14, 0
    %p103 = por %p101, %p102
    %p104 = scmp.ne.s32.totalorder %s90, %s91
    %p105 = scmp.eq.s32.totalorder %s15, 1
    %p106 = por %p104, %p105
    %p108 = scmp.ne.s32.totalorder %s91, %s107
    %p109 = scmp.eq.s32.totalorder %s15, 0
    %p110 = por %p108, %p109
    %p111 = scmp.le.s32.totalorder 1, %s9
    %p112 = scmp.lt.s32.totalorder %s9, 3
    %p113 = pnand %p111, %p112
    %p114 = pneg %p113
    // Predicated region
    $region9: #{_lambda_.41} parent=5 // pred_check
      _
    $region10: #{_lambda_.41} parent=5 // pred_check_branch
      %116 = sbr.rel (%p113) target = $region12
    $region11: #{_lambda_.41} parent=5 // pred_region
      %s117 = ssub.s32 %s9, 1
      // Predicated region
      $region13: #{_lambda_.41} parent=11 // pred_check
        %p118 = pneg %p56
      $region14: #{_lambda_.41} parent=11 // pred_check_branch
        %120 = sbr.rel (%p118) target = $region16
      $region15: #{_lambda_.41} parent=11 // pred_region
        _
      $region16: #{_lambda_.41} parent=11 // pred_fallthru
        _
      // Predicated region
      $region17: #{_lambda_.41} parent=11 // pred_check
        %p121 = pneg %p77
      $region18: #{_lambda_.41} parent=11 // pred_check_branch
        %123 = sbr.rel (%p121) target = $region20
      $region19: #{_lambda_.41} parent=11 // pred_region
        _
      $region20: #{_lambda_.41} parent=11 // pred_fallthru
        _
    $region12: #{_lambda_.41} parent=5 // pred_fallthru
      _
    %p124 = scmp.lt.s32.totalorder %s9, 2
    // Predicated region
    $region21: #{_lambda_.41} parent=5 // pred_check
      %p125 = pneg %p124
    $region22: #{_lambda_.41} parent=5 // pred_check_branch
      %127 = sbr.rel (%p125) target = $region24
    $region23: #{_lambda_.41} parent=5 // pred_region
      // Predicated region
      $region25: #{_lambda_.41} parent=23 // pred_check
        %p128 = pneg %p29
      $region26: #{_lambda_.41} parent=23 // pred_check_branch
        %130 = sbr.rel (%p128) target = $region28
      $region27: #{_lambda_.41} parent=23 // pred_region
        %s131 = smul.u32 8, %s9
        %p132 = scmp.lt.s32.totalorder %s131, 15
        %s133 = scalar_select %p132, %s131, 15
        %s134 = smul.addr %s133, 3
        %s135 = smul.addr %s134, 4
        %s136 = scalar_lea.vmem %s0, %s135
        %s137 = smul.u32 8, %s9
      $region28: #{_lambda_.41} parent=23 // pred_fallthru
        _
    $region24: #{_lambda_.41} parent=5 // pred_fallthru
      _
    %p138 = scmp.le.s32.totalorder 1, %s9
    %p139 = scmp.lt.s32.totalorder %s9, 3
    %p140 = pnand %p138, %p139
    %p141 = pneg %p140
    // Predicated region
    $region29: #{_lambda_.41} parent=5 // pred_check
      _
    $region30: #{_lambda_.41} parent=5 // pred_check_branch
      %143 = sbr.rel (%p140) target = $region32
    $region31: #{_lambda_.41} parent=5 // pred_region
      %s144 = ssub.s32 %s9, 1
      %s145 = smul.u32 8, %s14
      %p146 = scmp.lt.s32.totalorder %s145, 15
      %s147 = scalar_select %p146, %s145, 15
      %s148 = smul.addr %s147, 3
      %s149 = smul.addr %s148, 4
      %s150 = scalar_lea.vmem %s0, %s149
      %p151 = pneg %p35
      %p152 = pneg %p32
      %p153 = pneg %p56
      %p154 = pneg %p53
      %p155 = pneg %p77
      %p156 = pneg %p74
      %p157 = pneg %p103
      %p158 = pneg %p100
      %s159 = smul.u32 8, %s14
      %p160 = scmp.lt.s32.totalorder %s159, 15
      %s161 = scalar_select %p160, %s159, 15
      %s162 = smul.addr %s161, 4
      %s163 = scalar_lea.vmem %s3, %s162
      %s164 = smul.u32 8, %s14
      %p165 = scmp.lt.s32.totalorder %s164, 15
      %s166 = scalar_select %p165, %s164, 15
      %s167 = smul.addr %s166, 3
      %s168 = smul.addr %s167, 4
      %s169 = scalar_lea.vmem %s0, %s168
      %s170 = smul.u32 8, %s14
      %s171 = smul.u32 8, %s14
      %p172 = scmp.lt.s32.totalorder %s171, 15
      %s173 = scalar_select %p172, %s171, 15
      %s174 = smul.addr %s173, 4
      %s175 = scalar_lea.vmem %s3, %s174
      %s176 = smul.u32 8, %s14
      %v178 = vld [vmem:[%s169] sm:$0xff]
      %v179 = vld [vmem:[%s169 + $0x8] sm:$0xf]
      %v180 = vld [vmem:[%s169 + $0xc] sm:$0xff]
      %v181 = vld [vmem:[%s169 + $0x14] sm:$0xf]
      %v182 = vld [vmem:[%s169 + $0x18] sm:$0xff]
      %v183 = vld [vmem:[%s169 + $0x20] sm:$0xf]
      %v184 = vld [vmem:[%s169 + $0x24] sm:$0xff]
      %v185 = vld [vmem:[%s169 + $0x2c] sm:$0xf]
      %v186 = vld [vmem:[%s169 + $0x30] sm:$0xff]
      %v187 = vld [vmem:[%s169 + $0x38] sm:$0xf]
      %v188 = vld [vmem:[%s169 + $0x3c] sm:$0xff]
      %v189 = vld [vmem:[%s169 + $0x44] sm:$0xf]
      %v190 = vld [vmem:[%s169 + $0x48] sm:$0xff]
      %v191 = vld [vmem:[%s169 + $0x50] sm:$0xf]
      %v192 = vld [vmem:[%s169 + $0x54] sm:$0xff]
      %v193 = vld [vmem:[%s169 + $0x5c] sm:$0xf]
      %v194 = vld [vmem:[%s1] sm:$0xf]
      %v195 = vld [vmem:[%s1 + $0x4] sm:$0xf]
      %v196 = vld [vmem:[%s1 + $0x8] sm:$0xf]
      %v197 = vld [vmem:[%s1 + $0xc] sm:$0xf]
      %v198 = vld [vmem:[%s1 + $0x10] sm:$0xf]
      %v199 = vld [vmem:[%s1 + $0x14] sm:$0xf]
      %v200 = vld [vmem:[%s1 + $0x18] sm:$0xf]
      %v201 = vld [vmem:[%s1 + $0x1c] sm:$0xf]
      %v202 = vld [vmem:[%s1 + $0x20] sm:$0xf]
      %v203 = vld [vmem:[%s1 + $0x24] sm:$0xf]
      %v204 = vld [vmem:[%s1 + $0x28] sm:$0xf]
      %v205 = vld [vmem:[%s1 + $0x2c] sm:$0xf]
      %v206 = vld [vmem:[%s1 + $0x30] sm:$0xf]
      %v207 = vld [vmem:[%s1 + $0x34] sm:$0xf]
      %v208 = vld [vmem:[%s1 + $0x38] sm:$0xf]
      %v209 = vld [vmem:[%s1 + $0x3c] sm:$0xf]
      %v210 = vld [vmem:[%s1 + $0x40] sm:$0xf]
      %v211 = vld [vmem:[%s1 + $0x44] sm:$0xf]
      %v212 = vld [vmem:[%s1 + $0x48] sm:$0xf]
      %v213 = vld [vmem:[%s1 + $0x4c] sm:$0xf]
      %v214 = vld [vmem:[%s1 + $0x50] sm:$0xf]
      %v215 = vld [vmem:[%s1 + $0x54] sm:$0xf]
      %v216 = vld [vmem:[%s1 + $0x58] sm:$0xf]
      %v217 = vld [vmem:[%s1 + $0x5c] sm:$0xf]
      %v218 = vld [vmem:[%s1 + $0x60] sm:$0xf]
      %v219 = vld [vmem:[%s1 + $0x64] sm:$0xf]
      %v220 = vld [vmem:[%s1 + $0x68] sm:$0xf]
      %v221 = vld [vmem:[%s1 + $0x6c] sm:$0xf]
      %v222 = vld [vmem:[%s1 + $0x70] sm:$0xf]
      %v223 = vld [vmem:[%s1 + $0x74] sm:$0xf]
      %v224 = vld [vmem:[%s1 + $0x78] sm:$0xf]
      %v225 = vld [vmem:[%s1 + $0x7c] sm:$0xf]
      %v226 = vld [vmem:[%s1 + $0x80] sm:$0xf]
      %v227 = vld [vmem:[%s1 + $0x84] sm:$0xf]
      %v228 = vld [vmem:[%s1 + $0x88] sm:$0xf]
      %v229 = vld [vmem:[%s1 + $0x8c] sm:$0xf]
      %v230 = vld [vmem:[%s2] sm:$0x1]
      %v232 = vlaneseq
      %v233 = vshrl.u32 %v232, 7
      %v234 = vsub.s32 0, %v233
      %v235 = vrot.slane %v230, %v234
      %v253 = vunpack.c.l.b16 %v178
      %v254 = vunpack.c.h.b16 %v178
      %v255 = vunpack.c.l.b16 %v179
      %v256 = vunpack.c.l.b16 %v180
      %v257 = vunpack.c.h.b16 %v180
      %v258 = vunpack.c.l.b16 %v181
      %v259 = vunpack.c.l.b16 %v182
      %v260 = vunpack.c.h.b16 %v182
      %v261 = vunpack.c.l.b16 %v183
      %v262 = vunpack.c.l.b16 %v184
      %v263 = vunpack.c.h.b16 %v184
      %v264 = vunpack.c.l.b16 %v185
      %v265 = vunpack.c.l.b16 %v186
      %v266 = vunpack.c.h.b16 %v186
      %v267 = vunpack.c.l.b16 %v187
      %v268 = vunpack.c.l.b16 %v188
      %v269 = vunpack.c.h.b16 %v188
      %v270 = vunpack.c.l.b16 %v189
      %v271 = vunpack.c.l.b16 %v190
      %v272 = vunpack.c.h.b16 %v190
      %v273 = vunpack.c.l.b16 %v191
      %v274 = vunpack.c.l.b16 %v192
      %v275 = vunpack.c.h.b16 %v192
      %v276 = vunpack.c.l.b16 %v193
      %v277 = vpack.c.b16 %v256, %v253
      %v278 = vpack.c.b16 %v257, %v254
      %v279 = vpack.c.b16 %v258, %v255
      %v280 = vpack.c.b16 %v262, %v259
      %v281 = vpack.c.b16 %v263, %v260
      %v282 = vpack.c.b16 %v264, %v261
      %v283 = vpack.c.b16 %v268, %v265
      %v284 = vpack.c.b16 %v269, %v266
      %v285 = vpack.c.b16 %v270, %v267
      %v286 = vpack.c.b16 %v274, %v271
      %v287 = vpack.c.b16 %v275, %v272
      %v288 = vpack.c.b16 %v276, %v273
      %v333 = vunpack.c.l.b16 %v194
      %v334 = vunpack.c.l.b16 %v195
      %v335 = vunpack.c.l.b16 %v196
      %v336 = vunpack.c.l.b16 %v197
      %v337 = vunpack.c.l.b16 %v198
      %v338 = vunpack.c.l.b16 %v199
      %v339 = vunpack.c.l.b16 %v200
      %v340 = vunpack.c.l.b16 %v201
      %v341 = vunpack.c.l.b16 %v202
      %v342 = vunpack.c.l.b16 %v203
      %v343 = vunpack.c.l.b16 %v204
      %v344 = vunpack.c.l.b16 %v205
      %v345 = vunpack.c.l.b16 %v206
      %v346 = vunpack.c.l.b16 %v207
      %v347 = vunpack.c.l.b16 %v208
      %v348 = vunpack.c.l.b16 %v209
      %v349 = vunpack.c.l.b16 %v210
      %v350 = vunpack.c.l.b16 %v211
      %v351 = vunpack.c.l.b16 %v212
      %v352 = vunpack.c.l.b16 %v213
      %v353 = vunpack.c.l.b16 %v214
      %v354 = vunpack.c.l.b16 %v215
      %v355 = vunpack.c.l.b16 %v216
      %v356 = vunpack.c.l.b16 %v217
      %v357 = vunpack.c.l.b16 %v218
      %v358 = vunpack.c.l.b16 %v219
      %v359 = vunpack.c.l.b16 %v220
      %v360 = vunpack.c.l.b16 %v221
      %v361 = vunpack.c.l.b16 %v222
      %v362 = vunpack.c.l.b16 %v223
      %v363 = vunpack.c.l.b16 %v224
      %v364 = vunpack.c.l.b16 %v225
      %v365 = vunpack.c.l.b16 %v226
      %v366 = vunpack.c.l.b16 %v227
      %v367 = vunpack.c.l.b16 %v228
      %v368 = vunpack.c.l.b16 %v229
      %v369 = vpack.c.b16 %v334, %v333
      %v370 = vpack.c.b16 %v336, %v335
      %v371 = vpack.c.b16 %v338, %v337
      %v372 = vpack.c.b16 %v340, %v339
      %v373 = vpack.c.b16 %v342, %v341
      %v374 = vpack.c.b16 %v344, %v343
      %v375 = vpack.c.b16 %v346, %v345
      %v376 = vpack.c.b16 %v348, %v347
      %v377 = vpack.c.b16 %v350, %v349
      %v378 = vpack.c.b16 %v352, %v351
      %v379 = vpack.c.b16 %v354, %v353
      %v380 = vpack.c.b16 %v356, %v355
      %v381 = vpack.c.b16 %v358, %v357
      %v382 = vpack.c.b16 %v360, %v359
      %v383 = vpack.c.b16 %v362, %v361
      %v384 = vpack.c.b16 %v364, %v363
      %v385 = vpack.c.b16 %v366, %v365
      %v386 = vpack.c.b16 %v368, %v367
      %vm405 = vcmask 261120
      %v407 = vsel %vm405, %v279, 0
      %v410 = vsel %vm405, %v282, 0
      %v413 = vsel %vm405, %v285, 0
      %v416 = vsel %vm405, %v288, 0
      %418 = vmatprep.subr.bf16.mxu0 0
      %419 = vmatpush1.bf16.msra.mxu0 %v376
      %420 = vmatprep.subr.bf16.mxu0 0
      %421 = vmatpush1.bf16.msra.mxu0 %v375
      %422 = vmatprep.subr.bf16.mxu0 0
      %423 = vmatpush1.bf16.msra.mxu0 %v374
      %424 = vmatprep.subr.bf16.mxu0 0
      %425 = vmatpush1.bf16.msra.mxu0 %v373
      %426 = vmatprep.subr.bf16.mxu0 0
      %427 = vmatpush1.bf16.msra.mxu0 %v372
      %428 = vmatprep.subr.bf16.mxu0 0
      %429 = vmatpush1.bf16.msra.mxu0 %v371
      %430 = vmatprep.subr.bf16.mxu0 0
      %431 = vmatpush1.bf16.msra.mxu0 %v370
      %432 = vmatprep.subr.bf16.mxu0 0
      %433 = vmatpush1.bf16.msra.mxu0 %v369
      %434 = vmatprep.subr.bf16.mxu0 0
      %435 = vmatpush2.bf16.msra.mxu0 %v384
      %436 = vmatprep.subr.bf16.mxu0 0
      %437 = vmatpush2.bf16.msra.mxu0 %v383
      %438 = vmatprep.subr.bf16.mxu0 0
      %439 = vmatpush2.bf16.msra.mxu0 %v382
      %440 = vmatprep.subr.bf16.mxu0 0
      %441 = vmatpush2.bf16.msra.mxu0 %v381
      %442 = vmatprep.subr.bf16.mxu0 0
      %443 = vmatpush2.bf16.msra.mxu0 %v380
      %444 = vmatprep.subr.bf16.mxu0 0
      %445 = vmatpush2.bf16.msra.mxu0 %v379
      %446 = vmatprep.subr.bf16.mxu0 0
      %447 = vmatpush2.bf16.msra.mxu0 %v378
      %448 = vmatprep.subr.bf16.mxu0 0
      %449 = vmatpush2.bf16.msra.mxu0 %v377
      %450 = vmatprep.mubr.bf16.mxu0 %v278
      %451 = vmatmul.mubr.bf16.gmra.mxu0 %v277
      %v452 = vpop.f32.mrf.mxu0
      %v453 = vadd.f32 %v235, %v452
      %v454 = vpop.f32.mrf.mxu0
      %v455 = vpop.f32.mrf.mxu0
      %v456 = vadd.f32 %v235, %v455
      %v457 = vpop.f32.mrf.mxu0
      %458 = vmatprep.mubr.bf16.mxu0 %v281
      %459 = vmatmul.mubr.bf16.gmra.mxu0 %v280
      %v460 = vpop.f32.mrf.mxu0
      %v461 = vadd.f32 %v235, %v460
      %v462 = vpop.f32.mrf.mxu0
      %v463 = vpop.f32.mrf.mxu0
      %v464 = vadd.f32 %v235, %v463
      %v465 = vpop.f32.mrf.mxu0
      %466 = vmatprep.mubr.bf16.mxu0 %v284
      %467 = vmatmul.mubr.bf16.gmra.mxu0 %v283
      %v468 = vpop.f32.mrf.mxu0
      %v469 = vadd.f32 %v235, %v468
      %v470 = vpop.f32.mrf.mxu0
      %v471 = vpop.f32.mrf.mxu0
      %v472 = vadd.f32 %v235, %v471
      %v473 = vpop.f32.mrf.mxu0
      %474 = vmatprep.mubr.bf16.mxu0 %v287
      %475 = vmatmul.mubr.bf16.gmra.mxu0 %v286
      %v476 = vpop.f32.mrf.mxu0
      %v477 = vadd.f32 %v235, %v476
      %v478 = vpop.f32.mrf.mxu0
      %v479 = vpop.f32.mrf.mxu0
      %v480 = vadd.f32 %v235, %v479
      %v481 = vpop.f32.mrf.mxu0
      %482 = vdwg.mxu0
      %483 = vmatprep.subr.bf16.mxu0 0
      %484 = vmatpush1.bf16.msra.mxu0 0
      %485 = vmatprep.subr.bf16.mxu0 0
      %486 = vmatpush1.bf16.msra.mxu0 0
      %487 = vmatprep.subr.bf16.mxu0 0
      %488 = vmatpush1.bf16.msra.mxu0 0
      %489 = vmatprep.subr.bf16.mxu0 0
      %490 = vmatpush1.bf16.msra.mxu0 0
      %491 = vmatprep.subr.bf16.mxu0 0
      %492 = vmatpush1.bf16.msra.mxu0 0
      %493 = vmatprep.subr.bf16.mxu0 0
      %494 = vmatpush1.bf16.msra.mxu0 0
      %495 = vmatprep.subr.bf16.mxu0 0
      %496 = vmatpush1.bf16.msra.mxu0 %v386
      %497 = vmatprep.subr.bf16.mxu0 0
      %498 = vmatpush1.bf16.msra.mxu0 %v385
      %499 = vmatprep.subr.bf16.mxu0 0
      %500 = vmatpush2.bf16.msra.mxu0 0
      %501 = vmatprep.subr.bf16.mxu0 0
      %502 = vmatpush2.bf16.msra.mxu0 0
      %503 = vmatprep.subr.bf16.mxu0 0
      %504 = vmatpush2.bf16.msra.mxu0 0
      %505 = vmatprep.subr.bf16.mxu0 0
      %506 = vmatpush2.bf16.msra.mxu0 0
      %507 = vmatprep.subr.bf16.mxu0 0
      %508 = vmatpush2.bf16.msra.mxu0 0
      %509 = vmatprep.subr.bf16.mxu0 0
      %510 = vmatpush2.bf16.msra.mxu0 0
      %511 = vmatprep.subr.bf16.mxu0 0
      %512 = vmatpush2.bf16.msra.mxu0 0
      %513 = vmatprep.subr.bf16.mxu0 0
      %514 = vmatpush2.bf16.msra.mxu0 0
      %515 = vmatprep.mubr.bf16.mxu0 0
      %516 = vmatmul.mubr.bf16.gmra.mxu0 %v407
      %v517 = vpop.f32.mrf.mxu0
      %v518 = vadd.f32 %v453, %v517
      %v519 = vpop.f32.mrf.mxu0
      %v520 = vpop.f32.mrf.mxu0
      %v521 = vadd.f32 %v456, %v520
      %v522 = vpop.f32.mrf.mxu0
      %523 = vmatprep.mubr.bf16.mxu0 0
      %524 = vmatmul.mubr.bf16.gmra.mxu0 %v410
      %v525 = vpop.f32.mrf.mxu0
      %v526 = vadd.f32 %v461, %v525
      %v527 = vpop.f32.mrf.mxu0
      %v528 = vpop.f32.mrf.mxu0
      %v529 = vadd.f32 %v464, %v528
      %v530 = vpop.f32.mrf.mxu0
      %531 = vmatprep.mubr.bf16.mxu0 0
      %532 = vmatmul.mubr.bf16.gmra.mxu0 %v413
      %v533 = vpop.f32.mrf.mxu0
      %v534 = vadd.f32 %v469, %v533
      %v535 = vpop.f32.mrf.mxu0
      %v536 = vpop.f32.mrf.mxu0
      %v537 = vadd.f32 %v472, %v536
      %v538 = vpop.f32.mrf.mxu0
      %539 = vmatprep.mubr.bf16.mxu0 0
      %540 = vmatmul.mubr.bf16.gmra.mxu0 %v416
      %v541 = vpop.f32.mrf.mxu0
      %v542 = vadd.f32 %v477, %v541
      %v543 = vpop.f32.mrf.mxu0
      %v544 = vpop.f32.mrf.mxu0
      %v545 = vadd.f32 %v480, %v544
      %v546 = vpop.f32.mrf.mxu0
      %547 = vdwg.mxu0
      %v548 = vmax.f32 %v518, 0.0
      %v549 = vmax.f32 %v521, 0.0
      %v550 = vmax.f32 %v526, 0.0
      %v551 = vmax.f32 %v529, 0.0
      %v552 = vmax.f32 %v534, 0.0
      %v553 = vmax.f32 %v537, 0.0
      %v554 = vmax.f32 %v542, 0.0
      %v555 = vmax.f32 %v545, 0.0
      %v556 = vpack.c.bf16 %v549, %v548
      %v557 = vpack.c.bf16 %v551, %v550
      %v558 = vpack.c.bf16 %v553, %v552
      %v559 = vpack.c.bf16 %v555, %v554
      %v564 = vunpack.c.l.b16 %v556
      %v565 = vunpack.c.h.b16 %v556
      %v566 = vunpack.c.l.b16 %v557
      %v567 = vunpack.c.h.b16 %v557
      %v568 = vunpack.c.l.b16 %v558
      %v569 = vunpack.c.h.b16 %v558
      %v570 = vunpack.c.l.b16 %v559
      %v571 = vunpack.c.h.b16 %v559
      %v572 = vpack.c.b16 %v564, %v564
      %v573 = vpack.c.b16 %v565, %v565
      %v574 = vpack.c.b16 %v566, %v566
      %v575 = vpack.c.b16 %v567, %v567
      %v576 = vpack.c.b16 %v568, %v568
      %v577 = vpack.c.b16 %v569, %v569
      %v578 = vpack.c.b16 %v570, %v570
      %v579 = vpack.c.b16 %v571, %v571
      %588 = vst [vmem:[%s175] sm:$0xf] %v572
      %589 = vst [vmem:[%s175 + $0x4] sm:$0xf] %v573
      %590 = vst [vmem:[%s175 + $0x8] sm:$0xf] %v574
      %591 = vst [vmem:[%s175 + $0xc] sm:$0xf] %v575
      %592 = vst [vmem:[%s175 + $0x10] sm:$0xf] %v576
      %593 = vst [vmem:[%s175 + $0x14] sm:$0xf] %v577
      %594 = vst [vmem:[%s175 + $0x18] sm:$0xf] %v578
      %595 = vst [vmem:[%s175 + $0x1c] sm:$0xf] %v579
      %s596 = smul.u32 8, %s14
      %p597 = scmp.lt.s32.totalorder %s596, 15
      %s598 = scalar_select %p597, %s596, 15
      %s599 = smul.addr %s598, 4
      %s600 = scalar_lea.vmem %s3, %s599
      // Predicated region
      $region33: #{_lambda_.41} parent=31 // pred_check
        %p601 = pneg %p100
      $region34: #{_lambda_.41} parent=31 // pred_check_branch
        %603 = sbr.rel (%p601) target = $region36
      $region35: #{_lambda_.41} parent=31 // pred_region
        %s604 = smul.u32 8, %s14
      $region36: #{_lambda_.41} parent=31 // pred_fallthru
        _
    $region32: #{_lambda_.41} parent=5 // pred_fallthru
      _
    %p605 = scmp.le.s32.totalorder 2, %s9
    // Predicated region
    $region37: #{_lambda_.41} parent=5 // pred_check
      %p606 = pneg %p605
    $region38: #{_lambda_.41} parent=5 // pred_check_branch
      %608 = sbr.rel (%p606) target = $region40
    $region39: #{_lambda_.41} parent=5 // pred_region
      %s609 = ssub.s32 %s9, 2
      // Predicated region
      $region41: #{_lambda_.41} parent=39 // pred_check
        %p610 = pneg %p106
      $region42: #{_lambda_.41} parent=39 // pred_check_branch
        %612 = sbr.rel (%p610) target = $region44
      $region43: #{_lambda_.41} parent=39 // pred_region
        %s613 = smul.u32 8, %s15
        %p614 = scmp.lt.s32.totalorder %s613, 15
        %s615 = scalar_select %p614, %s613, 15
        %s616 = smul.addr %s615, 4
        %s617 = scalar_lea.vmem %s3, %s616
      $region44: #{_lambda_.41} parent=39 // pred_fallthru
        _
    $region40: #{_lambda_.41} parent=5 // pred_fallthru
      _
  $region6: #{_lambda_.41} parent=0 // loop_footer
    %s13 = sadd.s32 1, %s9
  $region7: #{_lambda_.41} parent=0 // loop_footer_branch
    %8 = sbr.rel target = $region3
  $region8: #{_lambda_.41} parent=0 // loop_exit
    _

// kernel: _lambda_.42
$region0: #{_lambda_.42}
  #allocation0 [shape = 'u32[]', space=smem, size = 0x4, offset = 0x4, fixed_abs, tag = 'smem constant byte address 0x4 - core index']
  #allocation1 [shape = 'u32[144,128]{1,0:T(1,128)}', space=vmem, size = 0x12000, scoped, tag = 'internal scratch']
  %s0 = inlined_call_operand.vmem [shape: bf16[128,128], index: 0, kind: input, shape index: {}]
  %s1 = inlined_call_operand.vmem [shape: bf16[128,128], index: 1, kind: input, shape index: {}]
  %s2 = inlined_call_operand.vmem [shape: f32[1,128], index: 2, kind: input, shape index: {}]
  %s3 = inlined_call_operand.vmem [shape: bf16[128,128], index: 3, kind: output, shape index: {}]
  %s4 = sld [smem:[#allocation0]]
  $region45: #{_lambda_.42} parent=0
    _
  %s6 = ssub.s32 1, %s4
  %s7 = scalar_select 0, %s6, %s4
  loop: start=0, step=1, limit=4
  $region2: #{_lambda_.42} parent=0 // loop_pre_header
    _
  $region3: #{_lambda_.42} parent=0 // loop_header
    %s9 = sphi 0, %s13
    %p10 = scmp.ge.s32.totalorder %s9, 4
    %s19 = sphi 0, %s21
    %s22 = sphi 0, %s19
    %s23 = sphi 0, %s22
    %s39 = sphi 0, %s23
    %s43 = sphi 0, %s43
    %s45 = sphi 0, %s43
    %s46 = sphi 0, %s45
    %s60 = sphi 0, %s46
    %s64 = sphi 0, %s64
    %s66 = sphi 0, %s64
    %s67 = sphi 0, %s66
    %s81 = sphi 0, %s67
    %s87 = sphi 0, %s89
    %s90 = sphi 0, %s87
    %s91 = sphi 0, %s90
    %s107 = sphi 0, %s91
  $region4: #{_lambda_.42} parent=0 // loop_header_branch
    %12 = sbr.rel (%p10) target = $region8
  $region5: #{_lambda_.42} parent=0 // loop_body
    %s14 = ssub.s32 %s9, 1
    %s15 = ssub.s32 %s9, 2
    %s16 = sadd.s32 %s9, 1
    %s17 = ssub.s32 %s9, %s16
    %p18 = scmp.eq.s32.totalorder %s17, 0
    %s20 = sadd.s32 %s19, 1
    %s21 = scalar_select %p18, %s19, %s20
    %p24 = pneg %p18
    %p25 = scmp.eq.s32.totalorder %s9, 1
    %p26 = por %p24, %p25
    %p27 = scmp.ne.s32.totalorder %s19, %s22
    %p28 = scmp.eq.s32.totalorder %s9, 0
    %p29 = por %p27, %p28
    %p30 = scmp.ne.s32.totalorder %s19, %s22
    %p31 = scmp.eq.s32.totalorder %s14, 1
    %p32 = por %p30, %p31
    %p33 = scmp.ne.s32.totalorder %s22, %s23
    %p34 = scmp.eq.s32.totalorder %s14, 0
    %p35 = por %p33, %p34
    %p36 = scmp.ne.s32.totalorder %s22, %s23
    %p37 = scmp.eq.s32.totalorder %s15, 1
    %p38 = por %p36, %p37
    %p40 = scmp.ne.s32.totalorder %s23, %s39
    %p41 = scmp.eq.s32.totalorder %s15, 0
    %p42 = por %p40, %p41
    %s44 = sadd.s32 %s43, 1
    %p47 = scmp.eq.s32.totalorder %s9, 1
    %p48 = scmp.ne.s32.totalorder %s43, %s45
    %p49 = scmp.eq.s32.totalorder %s9, 0
    %p50 = por %p48, %p49
    %p51 = scmp.ne.s32.totalorder %s43, %s45
    %p52 = scmp.eq.s32.totalorder %s14, 1
    %p53 = por %p51, %p52
    %p54 = scmp.ne.s32.totalorder %s45, %s46
    %p55 = scmp.eq.s32.totalorder %s14, 0
    %p56 = por %p54, %p55
    %p57 = scmp.ne.s32.totalorder %s45, %s46
    %p58 = scmp.eq.s32.totalorder %s15, 1
    %p59 = por %p57, %p58
    %p61 = scmp.ne.s32.totalorder %s46, %s60
    %p62 = scmp.eq.s32.totalorder %s15, 0
    %p63 = por %p61, %p62
    %s65 = sadd.s32 %s64, 1
    %p68 = scmp.eq.s32.totalorder %s9, 1
    %p69 = scmp.ne.s32.totalorder %s64, %s66
    %p70 = scmp.eq.s32.totalorder %s9, 0
    %p71 = por %p69, %p70
    %p72 = scmp.ne.s32.totalorder %s64, %s66
    %p73 = scmp.eq.s32.totalorder %s14, 1
    %p74 = por %p72, %p73
    %p75 = scmp.ne.s32.totalorder %s66, %s67
    %p76 = scmp.eq.s32.totalorder %s14, 0
    %p77 = por %p75, %p76
    %p78 = scmp.ne.s32.totalorder %s66, %s67
    %p79 = scmp.eq.s32.totalorder %s15, 1
    %p80 = por %p78, %p79
    %p82 = scmp.ne.s32.totalorder %s67, %s81
    %p83 = scmp.eq.s32.totalorder %s15, 0
    %p84 = por %p82, %p83
    %s85 = ssub.s32 %s9, %s16
    %p86 = scmp.eq.s32.totalorder %s85, 0
    %s88 = sadd.s32 %s87, 1
    %s89 = scalar_select %p86, %s87, %s88
    %p92 = pneg %p86
    %p93 = scmp.eq.s32.totalorder %s9, 1
    %p94 = por %p92, %p93
    %p95 = scmp.ne.s32.totalorder %s87, %s90
    %p96 = scmp.eq.s32.totalorder %s9, 0
    %p97 = por %p95, %p96
    %p98 = scmp.ne.s32.totalorder %s87, %s90
    %p99 = scmp.eq.s32.totalorder %s14, 1
    %p100 = por %p98, %p99
    %p101 = scmp.ne.s32.totalorder %s90, %s91
    %p102 = scmp.eq.s32.totalorder %s14, 0
    %p103 = por %p101, %p102
    %p104 = scmp.ne.s32.totalorder %s90, %s91
    %p105 = scmp.eq.s32.totalorder %s15, 1
    %p106 = por %p104, %p105
    %p108 = scmp.ne.s32.totalorder %s91, %s107
    %p109 = scmp.eq.s32.totalorder %s15, 0
    %p110 = por %p108, %p109
    %p111 = scmp.le.s32.totalorder 1, %s9
    %p112 = scmp.lt.s32.totalorder %s9, 3
    %p113 = pnand %p111, %p112
    %p114 = pneg %p113
    // Predicated region
    $region9: #{_lambda_.42} parent=5 // pred_check
      _
    $region10: #{_lambda_.42} parent=5 // pred_check_branch
      %116 = sbr.rel (%p113) target = $region12
    $region11: #{_lambda_.42} parent=5 // pred_region
      %s117 = ssub.s32 %s9, 1
      // Predicated region
      $region13: #{_lambda_.42} parent=11 // pred_check
        %p118 = pneg %p56
      $region14: #{_lambda_.42} parent=11 // pred_check_branch
        %120 = sbr.rel (%p118) target = $region16
      $region15: #{_lambda_.42} parent=11 // pred_region
        _
      $region16: #{_lambda_.42} parent=11 // pred_fallthru
        _
      // Predicated region
      $region17: #{_lambda_.42} parent=11 // pred_check
        %p121 = pneg %p77
      $region18: #{_lambda_.42} parent=11 // pred_check_branch
        %123 = sbr.rel (%p121) target = $region20
      $region19: #{_lambda_.42} parent=11 // pred_region
        _
      $region20: #{_lambda_.42} parent=11 // pred_fallthru
        _
    $region12: #{_lambda_.42} parent=5 // pred_fallthru
      _
    %p124 = scmp.lt.s32.totalorder %s9, 2
    // Predicated region
    $region21: #{_lambda_.42} parent=5 // pred_check
      %p125 = pneg %p124
    $region22: #{_lambda_.42} parent=5 // pred_check_branch
      %127 = sbr.rel (%p125) target = $region24
    $region23: #{_lambda_.42} parent=5 // pred_region
      // Predicated region
      $region25: #{_lambda_.42} parent=23 // pred_check
        %p128 = pneg %p29
      $region26: #{_lambda_.42} parent=23 // pred_check_branch
        %130 = sbr.rel (%p128) target = $region28
      $region27: #{_lambda_.42} parent=23 // pred_region
        %s131 = smul.u32 8, %s9
        %p132 = scmp.lt.s32.totalorder %s131, 15
        %s133 = scalar_select %p132, %s131, 15
        %s134 = smul.addr %s133, 4
        %s135 = scalar_lea.vmem %s0, %s134
        %s136 = smul.u32 8, %s9
      $region28: #{_lambda_.42} parent=23 // pred_fallthru
        _
    $region24: #{_lambda_.42} parent=5 // pred_fallthru
      _
    %p137 = scmp.le.s32.totalorder 1, %s9
    %p138 = scmp.lt.s32.totalorder %s9, 3
    %p139 = pnand %p137, %p138
    %p140 = pneg %p139
    // Predicated region
    $region29: #{_lambda_.42} parent=5 // pred_check
      _
    $region30: #{_lambda_.42} parent=5 // pred_check_branch
      %142 = sbr.rel (%p139) target = $region32
    $region31: #{_lambda_.42} parent=5 // pred_region
      %s143 = ssub.s32 %s9, 1
      %s144 = smul.u32 8, %s14
      %p145 = scmp.lt.s32.totalorder %s144, 15
      %s146 = scalar_select %p145, %s144, 15
      %s147 = smul.addr %s146, 4
      %s148 = scalar_lea.vmem %s0, %s147
      %p149 = pneg %p35
      %p150 = pneg %p32
      %p151 = pneg %p56
      %p152 = pneg %p53
      %p153 = pneg %p77
      %p154 = pneg %p74
      %p155 = pneg %p103
      %p156 = pneg %p100
      %s157 = smul.u32 8, %s14
      %p158 = scmp.lt.s32.totalorder %s157, 15
      %s159 = scalar_select %p158, %s157, 15
      %s160 = smul.addr %s159, 4
      %s161 = scalar_lea.vmem %s3, %s160
      %s162 = smul.u32 8, %s14
      %p163 = scmp.lt.s32.totalorder %s162, 15
      %s164 = scalar_select %p163, %s162, 15
      %s165 = smul.addr %s164, 4
      %s166 = scalar_lea.vmem %s0, %s165
      %s167 = smul.u32 8, %s14
      %s168 = smul.u32 8, %s14
      %p169 = scmp.lt.s32.totalorder %s168, 15
      %s170 = scalar_select %p169, %s168, 15
      %s171 = smul.addr %s170, 4
      %s172 = scalar_lea.vmem %s3, %s171
      %s173 = smul.u32 8, %s14
      %v175 = vld [vmem:[%s166] sm:$0xf]
      %v176 = vld [vmem:[%s166 + $0x4] sm:$0xf]
      %v177 = vld [vmem:[%s166 + $0x8] sm:$0xf]
      %v178 = vld [vmem:[%s166 + $0xc] sm:$0xf]
      %v179 = vld [vmem:[%s166 + $0x10] sm:$0xf]
      %v180 = vld [vmem:[%s166 + $0x14] sm:$0xf]
      %v181 = vld [vmem:[%s166 + $0x18] sm:$0xf]
      %v182 = vld [vmem:[%s166 + $0x1c] sm:$0xf]
      %v183 = vld [vmem:[%s1] sm:$0xf]
      %v184 = vld [vmem:[%s1 + $0x4] sm:$0xf]
      %v185 = vld [vmem:[%s1 + $0x8] sm:$0xf]
      %v186 = vld [vmem:[%s1 + $0xc] sm:$0xf]
      %v187 = vld [vmem:[%s1 + $0x10] sm:$0xf]
      %v188 = vld [vmem:[%s1 + $0x14] sm:$0xf]
      %v189 = vld [vmem:[%s1 + $0x18] sm:$0xf]
      %v190 = vld [vmem:[%s1 + $0x1c] sm:$0xf]
      %v191 = vld [vmem:[%s1 + $0x20] sm:$0xf]
      %v192 = vld [vmem:[%s1 + $0x24] sm:$0xf]
      %v193 = vld [vmem:[%s1 + $0x28] sm:$0xf]
      %v194 = vld [vmem:[%s1 + $0x2c] sm:$0xf]
      %v195 = vld [vmem:[%s1 + $0x30] sm:$0xf]
      %v196 = vld [vmem:[%s1 + $0x34] sm:$0xf]
      %v197 = vld [vmem:[%s1 + $0x38] sm:$0xf]
      %v198 = vld [vmem:[%s1 + $0x3c] sm:$0xf]
      %v199 = vld [vmem:[%s2] sm:$0x1]
      %v201 = vlaneseq
      %v202 = vshrl.u32 %v201, 7
      %v203 = vsub.s32 0, %v202
      %v204 = vrot.slane %v199, %v203
      %v214 = vunpack.c.l.b16 %v175
      %v215 = vunpack.c.l.b16 %v176
      %v216 = vunpack.c.l.b16 %v177
      %v217 = vunpack.c.l.b16 %v178
      %v218 = vunpack.c.l.b16 %v179
      %v219 = vunpack.c.l.b16 %v180
      %v220 = vunpack.c.l.b16 %v181
      %v221 = vunpack.c.l.b16 %v182
      %v222 = vpack.c.b16 %v215, %v214
      %v223 = vpack.c.b16 %v217, %v216
      %v224 = vpack.c.b16 %v219, %v218
      %v225 = vpack.c.b16 %v221, %v220
      %v246 = vunpack.c.l.b16 %v183
      %v247 = vunpack.c.l.b16 %v184
      %v248 = vunpack.c.l.b16 %v185
      %v249 = vunpack.c.l.b16 %v186
      %v250 = vunpack.c.l.b16 %v187
      %v251 = vunpack.c.l.b16 %v188
      %v252 = vunpack.c.l.b16 %v189
      %v253 = vunpack.c.l.b16 %v190
      %v254 = vunpack.c.l.b16 %v191
      %v255 = vunpack.c.l.b16 %v192
      %v256 = vunpack.c.l.b16 %v193
      %v257 = vunpack.c.l.b16 %v194
      %v258 = vunpack.c.l.b16 %v195
      %v259 = vunpack.c.l.b16 %v196
      %v260 = vunpack.c.l.b16 %v197
      %v261 = vunpack.c.l.b16 %v198
      %v262 = vpack.c.b16 %v247, %v246
      %v263 = vpack.c.b16 %v249, %v248
      %v264 = vpack.c.b16 %v251, %v250
      %v265 = vpack.c.b16 %v253, %v252
      %v266 = vpack.c.b16 %v255, %v254
      %v267 = vpack.c.b16 %v257, %v256
      %v268 = vpack.c.b16 %v259, %v258
      %v269 = vpack.c.b16 %v261, %v260
      %278 = vmatprep.subr.bf16.mxu0 0
      %279 = vmatpush1.bf16.msra.mxu0 %v269
      %280 = vmatprep.subr.bf16.mxu0 0
      %281 = vmatpush1.bf16.msra.mxu0 %v268
      %282 = vmatprep.subr.bf16.mxu0 0
      %283 = vmatpush1.bf16.msra.mxu0 %v267
      %284 = vmatprep.subr.bf16.mxu0 0
      %285 = vmatpush1.bf16.msra.mxu0 %v266
      %286 = vmatprep.subr.bf16.mxu0 0
      %287 = vmatpush1.bf16.msra.mxu0 %v265
      %288 = vmatprep.subr.bf16.mxu0 0
      %289 = vmatpush1.bf16.msra.mxu0 %v264
      %290 = vmatprep.subr.bf16.mxu0 0
      %291 = vmatpush1.bf16.msra.mxu0 %v263
      %292 = vmatprep.subr.bf16.mxu0 0
      %293 = vmatpush1.bf16.msra.mxu0 %v262
      %294 = vmatprep.subr.bf16.mxu0 0
      %295 = vmatpush2.bf16.msra.mxu0 0
      %296 = vmatprep.subr.bf16.mxu0 0
      %297 = vmatpush2.bf16.msra.mxu0 0
      %298 = vmatprep.subr.bf16.mxu0 0
      %299 = vmatpush2.bf16.msra.mxu0 0
      %300 = vmatprep.subr.bf16.mxu0 0
      %301 = vmatpush2.bf16.msra.mxu0 0
      %302 = vmatprep.subr.bf16.mxu0 0
      %303 = vmatpush2.bf16.msra.mxu0 0
      %304 = vmatprep.subr.bf16.mxu0 0
      %305 = vmatpush2.bf16.msra.mxu0 0
      %306 = vmatprep.subr.bf16.mxu0 0
      %307 = vmatpush2.bf16.msra.mxu0 0
      %308 = vmatprep.subr.bf16.mxu0 0
      %309 = vmatpush2.bf16.msra.mxu0 0
      %310 = vmatprep.mubr.bf16.mxu0 0
      %311 = vmatmul.mubr.bf16.gmra.mxu0 %v222
      %v312 = vpop.f32.mrf.mxu0
      %v313 = vadd.f32 %v204, %v312
      %v314 = vpop.f32.mrf.mxu0
      %v315 = vpop.f32.mrf.mxu0
      %v316 = vadd.f32 %v204, %v315
      %v317 = vpop.f32.mrf.mxu0
      %318 = vmatprep.mubr.bf16.mxu0 0
      %319 = vmatmul.mubr.bf16.gmra.mxu0 %v223
      %v320 = vpop.f32.mrf.mxu0
      %v321 = vadd.f32 %v204, %v320
      %v322 = vpop.f32.mrf.mxu0
      %v323 = vpop.f32.mrf.mxu0
      %v324 = vadd.f32 %v204, %v323
      %v325 = vpop.f32.mrf.mxu0
      %326 = vmatprep.mubr.bf16.mxu0 0
      %327 = vmatmul.mubr.bf16.gmra.mxu0 %v224
      %v328 = vpop.f32.mrf.mxu0
      %v329 = vadd.f32 %v204, %v328
      %v330 = vpop.f32.mrf.mxu0
      %v331 = vpop.f32.mrf.mxu0
      %v332 = vadd.f32 %v204, %v331
      %v333 = vpop.f32.mrf.mxu0
      %334 = vmatprep.mubr.bf16.mxu0 0
      %335 = vmatmul.mubr.bf16.gmra.mxu0 %v225
      %v336 = vpop.f32.mrf.mxu0
      %v337 = vadd.f32 %v204, %v336
      %v338 = vpop.f32.mrf.mxu0
      %v339 = vpop.f32.mrf.mxu0
      %v340 = vadd.f32 %v204, %v339
      %v341 = vpop.f32.mrf.mxu0
      %342 = vdwg.mxu0
      %v343 = vmax.f32 %v313, 0.0
      %v344 = vmax.f32 %v316, 0.0
      %v345 = vmax.f32 %v321, 0.0
      %v346 = vmax.f32 %v324, 0.0
      %v347 = vmax.f32 %v329, 0.0
      %v348 = vmax.f32 %v332, 0.0
      %v349 = vmax.f32 %v337, 0.0
      %v350 = vmax.f32 %v340, 0.0
      %v351 = vpack.c.bf16 %v344, %v343
      %v352 = vpack.c.bf16 %v346, %v345
      %v353 = vpack.c.bf16 %v348, %v347
      %v354 = vpack.c.bf16 %v350, %v349
      %v359 = vunpack.c.l.b16 %v351
      %v360 = vunpack.c.h.b16 %v351
      %v361 = vunpack.c.l.b16 %v352
      %v362 = vunpack.c.h.b16 %v352
      %v363 = vunpack.c.l.b16 %v353
      %v364 = vunpack.c.h.b16 %v353
      %v365 = vunpack.c.l.b16 %v354
      %v366 = vunpack.c.h.b16 %v354
      %v367 = vpack.c.b16 %v359, %v359
      %v368 = vpack.c.b16 %v360, %v360
      %v369 = vpack.c.b16 %v361, %v361
      %v370 = vpack.c.b16 %v362, %v362
      %v371 = vpack.c.b16 %v363, %v363
      %v372 = vpack.c.b16 %v364, %v364
      %v373 = vpack.c.b16 %v365, %v365
      %v374 = vpack.c.b16 %v366, %v366
      %383 = vst [vmem:[%s172] sm:$0xf] %v367
      %384 = vst [vmem:[%s172 + $0x4] sm:$0xf] %v368
      %385 = vst [vmem:[%s172 + $0x8] sm:$0xf] %v369
      %386 = vst [vmem:[%s172 + $0xc] sm:$0xf] %v370
      %387 = vst [vmem:[%s172 + $0x10] sm:$0xf] %v371
      %388 = vst [vmem:[%s172 + $0x14] sm:$0xf] %v372
      %389 = vst [vmem:[%s172 + $0x18] sm:$0xf] %v373
      %390 = vst [vmem:[%s172 + $0x1c] sm:$0xf] %v374
      %s391 = smul.u32 8, %s14
      %p392 = scmp.lt.s32.totalorder %s391, 15
      %s393 = scalar_select %p392, %s391, 15
      %s394 = smul.addr %s393, 4
      %s395 = scalar_lea.vmem %s3, %s394
      // Predicated region
      $region33: #{_lambda_.42} parent=31 // pred_check
        %p396 = pneg %p100
      $region34: #{_lambda_.42} parent=31 // pred_check_branch
        %398 = sbr.rel (%p396) target = $region36
      $region35: #{_lambda_.42} parent=31 // pred_region
        %s399 = smul.u32 8, %s14
      $region36: #{_lambda_.42} parent=31 // pred_fallthru
        _
    $region32: #{_lambda_.42} parent=5 // pred_fallthru
      _
    %p400 = scmp.le.s32.totalorder 2, %s9
    // Predicated region
    $region37: #{_lambda_.42} parent=5 // pred_check
      %p401 = pneg %p400
    $region38: #{_lambda_.42} parent=5 // pred_check_branch
      %403 = sbr.rel (%p401) target = $region40
    $region39: #{_lambda_.42} parent=5 // pred_region
      %s404 = ssub.s32 %s9, 2
      // Predicated region
      $region41: #{_lambda_.42} parent=39 // pred_check
        %p405 = pneg %p106
      $region42: #{_lambda_.42} parent=39 // pred_check_branch
        %407 = sbr.rel (%p405) target = $region44
      $region43: #{_lambda_.42} parent=39 // pred_region
        %s408 = smul.u32 8, %s15
        %p409 = scmp.lt.s32.totalorder %s408, 15
        %s410 = scalar_select %p409, %s408, 15
        %s411 = smul.addr %s410, 4
        %s412 = scalar_lea.vmem %s3, %s411
      $region44: #{_lambda_.42} parent=39 // pred_fallthru
        _
    $region40: #{_lambda_.42} parent=5 // pred_fallthru
      _
  $region6: #{_lambda_.42} parent=0 // loop_footer
    %s13 = sadd.s32 1, %s9
  $region7: #{_lambda_.42} parent=0 // loop_footer_branch
    %8 = sbr.rel target = $region3
  $region8: #{_lambda_.42} parent=0 // loop_exit
    _

// kernel: _lambda_.46
$region0: #{_lambda_.46}
  #allocation0 [shape = 'u32[]', space=smem, size = 0x4, offset = 0x4, fixed_abs, tag = 'smem constant byte address 0x4 - core index']
  #allocation1 [shape = 'u32[144,128]{1,0:T(1,128)}', space=vmem, size = 0x12000, scoped, tag = 'internal scratch']
  %s0 = inlined_call_operand.vmem [shape: bf16[512,64], index: 0, kind: input, shape index: {}]
  %s1 = inlined_call_operand.vmem [shape: bf16[64,128], index: 1, kind: input, shape index: {}]
  %s2 = inlined_call_operand.vmem [shape: f32[1,128], index: 2, kind: input, shape index: {}]
  %s3 = inlined_call_operand.vmem [shape: f32[512,128], index: 3, kind: output, shape index: {}]
  %s4 = sld [smem:[#allocation0]]
  $region45: #{_lambda_.46} parent=0
    _
  %s6 = ssub.s32 1, %s4
  %s7 = scalar_select 0, %s6, %s4
  loop: start=0, step=1, limit=6
  $region2: #{_lambda_.46} parent=0 // loop_pre_header
    _
  $region3: #{_lambda_.46} parent=0 // loop_header
    %s9 = sphi 0, %s13
    %p10 = scmp.ge.s32.totalorder %s9, 6
    %s19 = sphi 0, %s21
    %s22 = sphi 0, %s19
    %s23 = sphi 0, %s22
    %s39 = sphi 0, %s23
    %s43 = sphi 0, %s43
    %s45 = sphi 0, %s43
    %s46 = sphi 0, %s45
    %s60 = sphi 0, %s46
    %s64 = sphi 0, %s64
    %s66 = sphi 0, %s64
    %s67 = sphi 0, %s66
    %s81 = sphi 0, %s67
    %s87 = sphi 0, %s89
    %s90 = sphi 0, %s87
    %s91 = sphi 0, %s90
    %s107 = sphi 0, %s91
  $region4: #{_lambda_.46} parent=0 // loop_header_branch
    %12 = sbr.rel (%p10) target = $region8
  $region5: #{_lambda_.46} parent=0 // loop_body
    %s14 = ssub.s32 %s9, 1
    %s15 = ssub.s32 %s9, 2
    %s16 = sadd.s32 %s9, 1
    %s17 = ssub.s32 %s9, %s16
    %p18 = scmp.eq.s32.totalorder %s17, 0
    %s20 = sadd.s32 %s19, 1
    %s21 = scalar_select %p18, %s19, %s20
    %p24 = pneg %p18
    %p25 = scmp.eq.s32.totalorder %s9, 3
    %p26 = por %p24, %p25
    %p27 = scmp.ne.s32.totalorder %s19, %s22
    %p28 = scmp.eq.s32.totalorder %s9, 0
    %p29 = por %p27, %p28
    %p30 = scmp.ne.s32.totalorder %s19, %s22
    %p31 = scmp.eq.s32.totalorder %s14, 3
    %p32 = por %p30, %p31
    %p33 = scmp.ne.s32.totalorder %s22, %s23
    %p34 = scmp.eq.s32.totalorder %s14, 0
    %p35 = por %p33, %p34
    %p36 = scmp.ne.s32.totalorder %s22, %s23
    %p37 = scmp.eq.s32.totalorder %s15, 3
    %p38 = por %p36, %p37
    %p40 = scmp.ne.s32.totalorder %s23, %s39
    %p41 = scmp.eq.s32.totalorder %s15, 0
    %p42 = por %p40, %p41
    %s44 = sadd.s32 %s43, 1
    %p47 = scmp.eq.s32.totalorder %s9, 3
    %p48 = scmp.ne.s32.totalorder %s43, %s45
    %p49 = scmp.eq.s32.totalorder %s9, 0
    %p50 = por %p48, %p49
    %p51 = scmp.ne.s32.totalorder %s43, %s45
    %p52 = scmp.eq.s32.totalorder %s14, 3
    %p53 = por %p51, %p52
    %p54 = scmp.ne.s32.totalorder %s45, %s46
    %p55 = scmp.eq.s32.totalorder %s14, 0
    %p56 = por %p54, %p55
    %p57 = scmp.ne.s32.totalorder %s45, %s46
    %p58 = scmp.eq.s32.totalorder %s15, 3
    %p59 = por %p57, %p58
    %p61 = scmp.ne.s32.totalorder %s46, %s60
    %p62 = scmp.eq.s32.totalorder %s15, 0
    %p63 = por %p61, %p62
    %s65 = sadd.s32 %s64, 1
    %p68 = scmp.eq.s32.totalorder %s9, 3
    %p69 = scmp.ne.s32.totalorder %s64, %s66
    %p70 = scmp.eq.s32.totalorder %s9, 0
    %p71 = por %p69, %p70
    %p72 = scmp.ne.s32.totalorder %s64, %s66
    %p73 = scmp.eq.s32.totalorder %s14, 3
    %p74 = por %p72, %p73
    %p75 = scmp.ne.s32.totalorder %s66, %s67
    %p76 = scmp.eq.s32.totalorder %s14, 0
    %p77 = por %p75, %p76
    %p78 = scmp.ne.s32.totalorder %s66, %s67
    %p79 = scmp.eq.s32.totalorder %s15, 3
    %p80 = por %p78, %p79
    %p82 = scmp.ne.s32.totalorder %s67, %s81
    %p83 = scmp.eq.s32.totalorder %s15, 0
    %p84 = por %p82, %p83
    %s85 = ssub.s32 %s9, %s16
    %p86 = scmp.eq.s32.totalorder %s85, 0
    %s88 = sadd.s32 %s87, 1
    %s89 = scalar_select %p86, %s87, %s88
    %p92 = pneg %p86
    %p93 = scmp.eq.s32.totalorder %s9, 3
    %p94 = por %p92, %p93
    %p95 = scmp.ne.s32.totalorder %s87, %s90
    %p96 = scmp.eq.s32.totalorder %s9, 0
    %p97 = por %p95, %p96
    %p98 = scmp.ne.s32.totalorder %s87, %s90
    %p99 = scmp.eq.s32.totalorder %s14, 3
    %p100 = por %p98, %p99
    %p101 = scmp.ne.s32.totalorder %s90, %s91
    %p102 = scmp.eq.s32.totalorder %s14, 0
    %p103 = por %p101, %p102
    %p104 = scmp.ne.s32.totalorder %s90, %s91
    %p105 = scmp.eq.s32.totalorder %s15, 3
    %p106 = por %p104, %p105
    %p108 = scmp.ne.s32.totalorder %s91, %s107
    %p109 = scmp.eq.s32.totalorder %s15, 0
    %p110 = por %p108, %p109
    %p111 = scmp.le.s32.totalorder 1, %s9
    %p112 = scmp.lt.s32.totalorder %s9, 5
    %p113 = pnand %p111, %p112
    %p114 = pneg %p113
    // Predicated region
    $region9: #{_lambda_.46} parent=5 // pred_check
      _
    $region10: #{_lambda_.46} parent=5 // pred_check_branch
      %116 = sbr.rel (%p113) target = $region12
    $region11: #{_lambda_.46} parent=5 // pred_region
      %s117 = ssub.s32 %s9, 1
      // Predicated region
      $region13: #{_lambda_.46} parent=11 // pred_check
        %p118 = pneg %p56
      $region14: #{_lambda_.46} parent=11 // pred_check_branch
        %120 = sbr.rel (%p118) target = $region16
      $region15: #{_lambda_.46} parent=11 // pred_region
        _
      $region16: #{_lambda_.46} parent=11 // pred_fallthru
        _
      // Predicated region
      $region17: #{_lambda_.46} parent=11 // pred_check
        %p121 = pneg %p77
      $region18: #{_lambda_.46} parent=11 // pred_check_branch
        %123 = sbr.rel (%p121) target = $region20
      $region19: #{_lambda_.46} parent=11 // pred_region
        _
      $region20: #{_lambda_.46} parent=11 // pred_fallthru
        _
    $region12: #{_lambda_.46} parent=5 // pred_fallthru
      _
    %p124 = scmp.lt.s32.totalorder %s9, 4
    // Predicated region
    $region21: #{_lambda_.46} parent=5 // pred_check
      %p125 = pneg %p124
    $region22: #{_lambda_.46} parent=5 // pred_check_branch
      %127 = sbr.rel (%p125) target = $region24
    $region23: #{_lambda_.46} parent=5 // pred_region
      // Predicated region
      $region25: #{_lambda_.46} parent=23 // pred_check
        %p128 = pneg %p29
      $region26: #{_lambda_.46} parent=23 // pred_check_branch
        %130 = sbr.rel (%p128) target = $region28
      $region27: #{_lambda_.46} parent=23 // pred_region
        %s131 = smul.u32 16, %s9
        %p132 = scmp.lt.s32.totalorder %s131, 63
        %s133 = scalar_select %p132, %s131, 63
        %s134 = smul.addr %s133, 4
        %s135 = scalar_lea.vmem %s0, %s134
        %s136 = smul.u32 16, %s9
      $region28: #{_lambda_.46} parent=23 // pred_fallthru
        _
    $region24: #{_lambda_.46} parent=5 // pred_fallthru
      _
    %p137 = scmp.le.s32.totalorder 1, %s9
    %p138 = scmp.lt.s32.totalorder %s9, 5
    %p139 = pnand %p137, %p138
    %p140 = pneg %p139
    // Predicated region
    $region29: #{_lambda_.46} parent=5 // pred_check
      _
    $region30: #{_lambda_.46} parent=5 // pred_check_branch
      %142 = sbr.rel (%p139) target = $region32
    $region31: #{_lambda_.46} parent=5 // pred_region
      %s143 = ssub.s32 %s9, 1
      %s144 = smul.u32 16, %s14
      %p145 = scmp.lt.s32.totalorder %s144, 63
      %s146 = scalar_select %p145, %s144, 63
      %s147 = smul.addr %s146, 4
      %s148 = scalar_lea.vmem %s0, %s147
      %p149 = pneg %p35
      %p150 = pneg %p32
      %p151 = pneg %p56
      %p152 = pneg %p53
      %p153 = pneg %p77
      %p154 = pneg %p74
      %p155 = pneg %p103
      %p156 = pneg %p100
      %s157 = smul.u32 16, %s14
      %p158 = scmp.lt.s32.totalorder %s157, 63
      %s159 = scalar_select %p158, %s157, 63
      %s160 = smul.addr %s159, 8
      %s161 = scalar_lea.vmem %s3, %s160
      %s162 = smul.u32 16, %s14
      %p163 = scmp.lt.s32.totalorder %s162, 63
      %s164 = scalar_select %p163, %s162, 63
      %s165 = smul.addr %s164, 4
      %s166 = scalar_lea.vmem %s0, %s165
      %s167 = smul.u32 16, %s14
      %s168 = smul.u32 16, %s14
      %p169 = scmp.lt.s32.totalorder %s168, 63
      %s170 = scalar_select %p169, %s168, 63
      %s171 = smul.addr %s170, 8
      %s172 = scalar_lea.vmem %s3, %s171
      %s173 = smul.u32 16, %s14
      %v175 = vld [vmem:[%s166] sm:$0xf]
      %v176 = vld [vmem:[%s166 + $0x4] sm:$0xf]
      %v177 = vld [vmem:[%s166 + $0x8] sm:$0xf]
      %v178 = vld [vmem:[%s166 + $0xc] sm:$0xf]
      %v179 = vld [vmem:[%s166 + $0x10] sm:$0xf]
      %v180 = vld [vmem:[%s166 + $0x14] sm:$0xf]
      %v181 = vld [vmem:[%s166 + $0x18] sm:$0xf]
      %v182 = vld [vmem:[%s166 + $0x1c] sm:$0xf]
      %v183 = vld [vmem:[%s166 + $0x20] sm:$0xf]
      %v184 = vld [vmem:[%s166 + $0x24] sm:$0xf]
      %v185 = vld [vmem:[%s166 + $0x28] sm:$0xf]
      %v186 = vld [vmem:[%s166 + $0x2c] sm:$0xf]
      %v187 = vld [vmem:[%s166 + $0x30] sm:$0xf]
      %v188 = vld [vmem:[%s166 + $0x34] sm:$0xf]
      %v189 = vld [vmem:[%s166 + $0x38] sm:$0xf]
      %v190 = vld [vmem:[%s166 + $0x3c] sm:$0xf]
      %v191 = vld [vmem:[%s1] sm:$0xf]
      %v192 = vld [vmem:[%s1 + $0x4] sm:$0xf]
      %v193 = vld [vmem:[%s1 + $0x8] sm:$0xf]
      %v194 = vld [vmem:[%s1 + $0xc] sm:$0xf]
      %v195 = vld [vmem:[%s1 + $0x10] sm:$0xf]
      %v196 = vld [vmem:[%s1 + $0x14] sm:$0xf]
      %v197 = vld [vmem:[%s1 + $0x18] sm:$0xf]
      %v198 = vld [vmem:[%s1 + $0x1c] sm:$0xf]
      %v199 = vld [vmem:[%s2] sm:$0x1]
      %v201 = vlaneseq
      %v202 = vshrl.u32 %v201, 7
      %v203 = vsub.s32 0, %v202
      %v204 = vrot.slane %v199, %v203
      %v222 = vunpack.c.l.b16 %v175
      %v223 = vunpack.c.l.b16 %v176
      %v224 = vunpack.c.l.b16 %v177
      %v225 = vunpack.c.l.b16 %v178
      %v226 = vunpack.c.l.b16 %v179
      %v227 = vunpack.c.l.b16 %v180
      %v228 = vunpack.c.l.b16 %v181
      %v229 = vunpack.c.l.b16 %v182
      %v230 = vunpack.c.l.b16 %v183
      %v231 = vunpack.c.l.b16 %v184
      %v232 = vunpack.c.l.b16 %v185
      %v233 = vunpack.c.l.b16 %v186
      %v234 = vunpack.c.l.b16 %v187
      %v235 = vunpack.c.l.b16 %v188
      %v236 = vunpack.c.l.b16 %v189
      %v237 = vunpack.c.l.b16 %v190
      %v238 = vpack.c.b16 %v223, %v222
      %v239 = vpack.c.b16 %v225, %v224
      %v240 = vpack.c.b16 %v227, %v226
      %v241 = vpack.c.b16 %v229, %v228
      %v242 = vpack.c.b16 %v231, %v230
      %v243 = vpack.c.b16 %v233, %v232
      %v244 = vpack.c.b16 %v235, %v234
      %v245 = vpack.c.b16 %v237, %v236
      %v254 = vunpack.c.l.b16 %v191
      %v255 = vunpack.c.l.b16 %v192
      %v256 = vunpack.c.l.b16 %v193
      %v257 = vunpack.c.l.b16 %v194
      %v258 = vunpack.c.l.b16 %v195
      %v259 = vunpack.c.l.b16 %v196
      %v260 = vunpack.c.l.b16 %v197
      %v261 = vunpack.c.l.b16 %v198
      %v262 = vpack.c.b16 %v255, %v254
      %v263 = vpack.c.b16 %v257, %v256
      %v264 = vpack.c.b16 %v259, %v258
      %v265 = vpack.c.b16 %v261, %v260
      %vm270 = vcmask 523264
      %v272 = vsel %vm270, %v238, 0
      %v275 = vsel %vm270, %v239, 0
      %v278 = vsel %vm270, %v240, 0
      %v281 = vsel %vm270, %v241, 0
      %v284 = vsel %vm270, %v242, 0
      %v287 = vsel %vm270, %v243, 0
      %v290 = vsel %vm270, %v244, 0
      %v293 = vsel %vm270, %v245, 0
      %295 = vmatprep.subr.bf16.mxu0 0
      %296 = vmatpush1.bf16.msra.mxu0 0
      %297 = vmatprep.subr.bf16.mxu0 0
      %298 = vmatpush1.bf16.msra.mxu0 0
      %299 = vmatprep.subr.bf16.mxu0 0
      %300 = vmatpush1.bf16.msra.mxu0 0
      %301 = vmatprep.subr.bf16.mxu0 0
      %302 = vmatpush1.bf16.msra.mxu0 0
      %303 = vmatprep.subr.bf16.mxu0 0
      %304 = vmatpush1.bf16.msra.mxu0 %v265
      %305 = vmatprep.subr.bf16.mxu0 0
      %306 = vmatpush1.bf16.msra.mxu0 %v264
      %307 = vmatprep.subr.bf16.mxu0 0
      %308 = vmatpush1.bf16.msra.mxu0 %v263
      %309 = vmatprep.subr.bf16.mxu0 0
      %310 = vmatpush1.bf16.msra.mxu0 %v262
      %311 = vmatprep.subr.bf16.mxu0 0
      %312 = vmatpush2.bf16.msra.mxu0 0
      %313 = vmatprep.subr.bf16.mxu0 0
      %314 = vmatpush2.bf16.msra.mxu0 0
      %315 = vmatprep.subr.bf16.mxu0 0
      %316 = vmatpush2.bf16.msra.mxu0 0
      %317 = vmatprep.subr.bf16.mxu0 0
      %318 = vmatpush2.bf16.msra.mxu0 0
      %319 = vmatprep.subr.bf16.mxu0 0
      %320 = vmatpush2.bf16.msra.mxu0 0
      %321 = vmatprep.subr.bf16.mxu0 0
      %322 = vmatpush2.bf16.msra.mxu0 0
      %323 = vmatprep.subr.bf16.mxu0 0
      %324 = vmatpush2.bf16.msra.mxu0 0
      %325 = vmatprep.subr.bf16.mxu0 0
      %326 = vmatpush2.bf16.msra.mxu0 0
      %327 = vmatprep.mubr.bf16.mxu0 0
      %328 = vmatmul.mubr.bf16.gmra.mxu0 %v272
      %v329 = vpop.f32.mrf.mxu0
      %v330 = vadd.f32 %v204, %v329
      %v331 = vpop.f32.mrf.mxu0
      %v332 = vpop.f32.mrf.mxu0
      %v333 = vadd.f32 %v204, %v332
      %v334 = vpop.f32.mrf.mxu0
      %335 = vmatprep.mubr.bf16.mxu0 0
      %336 = vmatmul.mubr.bf16.gmra.mxu0 %v275
      %v337 = vpop.f32.mrf.mxu0
      %v338 = vadd.f32 %v204, %v337
      %v339 = vpop.f32.mrf.mxu0
      %v340 = vpop.f32.mrf.mxu0
      %v341 = vadd.f32 %v204, %v340
      %v342 = vpop.f32.mrf.mxu0
      %343 = vmatprep.mubr.bf16.mxu0 0
      %344 = vmatmul.mubr.bf16.gmra.mxu0 %v278
      %v345 = vpop.f32.mrf.mxu0
      %v346 = vadd.f32 %v204, %v345
      %v347 = vpop.f32.mrf.mxu0
      %v348 = vpop.f32.mrf.mxu0
      %v349 = vadd.f32 %v204, %v348
      %v350 = vpop.f32.mrf.mxu0
      %351 = vmatprep.mubr.bf16.mxu0 0
      %352 = vmatmul.mubr.bf16.gmra.mxu0 %v281
      %v353 = vpop.f32.mrf.mxu0
      %v354 = vadd.f32 %v204, %v353
      %v355 = vpop.f32.mrf.mxu0
      %v356 = vpop.f32.mrf.mxu0
      %v357 = vadd.f32 %v204, %v356
      %v358 = vpop.f32.mrf.mxu0
      %359 = vmatprep.mubr.bf16.mxu0 0
      %360 = vmatmul.mubr.bf16.gmra.mxu0 %v284
      %v361 = vpop.f32.mrf.mxu0
      %v362 = vadd.f32 %v204, %v361
      %v363 = vpop.f32.mrf.mxu0
      %v364 = vpop.f32.mrf.mxu0
      %v365 = vadd.f32 %v204, %v364
      %v366 = vpop.f32.mrf.mxu0
      %367 = vmatprep.mubr.bf16.mxu0 0
      %368 = vmatmul.mubr.bf16.gmra.mxu0 %v287
      %v369 = vpop.f32.mrf.mxu0
      %v370 = vadd.f32 %v204, %v369
      %v371 = vpop.f32.mrf.mxu0
      %v372 = vpop.f32.mrf.mxu0
      %v373 = vadd.f32 %v204, %v372
      %v374 = vpop.f32.mrf.mxu0
      %375 = vmatprep.mubr.bf16.mxu0 0
      %376 = vmatmul.mubr.bf16.gmra.mxu0 %v290
      %v377 = vpop.f32.mrf.mxu0
      %v378 = vadd.f32 %v204, %v377
      %v379 = vpop.f32.mrf.mxu0
      %v380 = vpop.f32.mrf.mxu0
      %v381 = vadd.f32 %v204, %v380
      %v382 = vpop.f32.mrf.mxu0
      %383 = vmatprep.mubr.bf16.mxu0 0
      %384 = vmatmul.mubr.bf16.gmra.mxu0 %v293
      %v385 = vpop.f32.mrf.mxu0
      %v386 = vadd.f32 %v204, %v385
      %v387 = vpop.f32.mrf.mxu0
      %v388 = vpop.f32.mrf.mxu0
      %v389 = vadd.f32 %v204, %v388
      %v390 = vpop.f32.mrf.mxu0
      %391 = vdwg.mxu0
      %v392 = vxor.u32 %v330, 2147483648
      %v393 = vxor.u32 %v333, 2147483648
      %v394 = vxor.u32 %v338, 2147483648
      %v395 = vxor.u32 %v341, 2147483648
      %v396 = vxor.u32 %v346, 2147483648
      %v397 = vxor.u32 %v349, 2147483648
      %v398 = vxor.u32 %v354, 2147483648
      %v399 = vxor.u32 %v357, 2147483648
      %v400 = vxor.u32 %v362, 2147483648
      %v401 = vxor.u32 %v365, 2147483648
      %v402 = vxor.u32 %v370, 2147483648
      %v403 = vxor.u32 %v373, 2147483648
      %v404 = vxor.u32 %v378, 2147483648
      %v405 = vxor.u32 %v381, 2147483648
      %v406 = vxor.u32 %v386, 2147483648
      %v407 = vxor.u32 %v389, 2147483648
      %v408 = vmul.f32 %v392, 1.442695
      %v409 = vpow.pop %v408
      %v410 = vmul.f32 %v393, 1.442695
      %v411 = vpow.pop %v410
      %v412 = vmul.f32 %v394, 1.442695
      %v413 = vpow.pop %v412
      %v414 = vmul.f32 %v395, 1.442695
      %v415 = vpow.pop %v414
      %v416 = vmul.f32 %v396, 1.442695
      %v417 = vpow.pop %v416
      %v418 = vmul.f32 %v397, 1.442695
      %v419 = vpow.pop %v418
      %v420 = vmul.f32 %v398, 1.442695
      %v421 = vpow.pop %v420
      %v422 = vmul.f32 %v399, 1.442695
      %v423 = vpow.pop %v422
      %v424 = vmul.f32 %v400, 1.442695
      %v425 = vpow.pop %v424
      %v426 = vmul.f32 %v401, 1.442695
      %v427 = vpow.pop %v426
      %v428 = vmul.f32 %v402, 1.442695
      %v429 = vpow.pop %v428
      %v430 = vmul.f32 %v403, 1.442695
      %v431 = vpow.pop %v430
      %v432 = vmul.f32 %v404, 1.442695
      %v433 = vpow.pop %v432
      %v434 = vmul.f32 %v405, 1.442695
      %v435 = vpow.pop %v434
      %v436 = vmul.f32 %v406, 1.442695
      %v437 = vpow.pop %v436
      %v438 = vmul.f32 %v407, 1.442695
      %v439 = vpow.pop %v438
      %v440 = vadd.f32 %v409, 1.0
      %v441 = vadd.f32 %v411, 1.0
      %v442 = vadd.f32 %v413, 1.0
      %v443 = vadd.f32 %v415, 1.0
      %v444 = vadd.f32 %v417, 1.0
      %v445 = vadd.f32 %v419, 1.0
      %v446 = vadd.f32 %v421, 1.0
      %v447 = vadd.f32 %v423, 1.0
      %v448 = vadd.f32 %v425, 1.0
      %v449 = vadd.f32 %v427, 1.0
      %v450 = vadd.f32 %v429, 1.0
      %v451 = vadd.f32 %v431, 1.0
      %v452 = vadd.f32 %v433, 1.0
      %v453 = vadd.f32 %v435, 1.0
      %v454 = vadd.f32 %v437, 1.0
      %v455 = vadd.f32 %v439, 1.0
      %v456 = vrcp.pop %v440
      %v457 = vmul.f32 1.0, %v456
      %v458 = vrcp.pop %v441
      %v459 = vmul.f32 1.0, %v458
      %v460 = vrcp.pop %v442
      %v461 = vmul.f32 1.0, %v460
      %v462 = vrcp.pop %v443
      %v463 = vmul.f32 1.0, %v462
      %v464 = vrcp.pop %v444
      %v465 = vmul.f32 1.0, %v464
      %v466 = vrcp.pop %v445
      %v467 = vmul.f32 1.0, %v466
      %v468 = vrcp.pop %v446
      %v469 = vmul.f32 1.0, %v468
      %v470 = vrcp.pop %v447
      %v471 = vmul.f32 1.0, %v470
      %v472 = vrcp.pop %v448
      %v473 = vmul.f32 1.0, %v472
      %v474 = vrcp.pop %v449
      %v475 = vmul.f32 1.0, %v474
      %v476 = vrcp.pop %v450
      %v477 = vmul.f32 1.0, %v476
      %v478 = vrcp.pop %v451
      %v479 = vmul.f32 1.0, %v478
      %v480 = vrcp.pop %v452
      %v481 = vmul.f32 1.0, %v480
      %v482 = vrcp.pop %v453
      %v483 = vmul.f32 1.0, %v482
      %v484 = vrcp.pop %v454
      %v485 = vmul.f32 1.0, %v484
      %v486 = vrcp.pop %v455
      %v487 = vmul.f32 1.0, %v486
      %488 = vst [vmem:[%s172] sm:$0xff] %v457
      %489 = vst [vmem:[%s172 + $0x8] sm:$0xff] %v459
      %490 = vst [vmem:[%s172 + $0x10] sm:$0xff] %v461
      %491 = vst [vmem:[%s172 + $0x18] sm:$0xff] %v463
      %492 = vst [vmem:[%s172 + $0x20] sm:$0xff] %v465
      %493 = vst [vmem:[%s172 + $0x28] sm:$0xff] %v467
      %494 = vst [vmem:[%s172 + $0x30] sm:$0xff] %v469
      %495 = vst [vmem:[%s172 + $0x38] sm:$0xff] %v471
      %496 = vst [vmem:[%s172 + $0x40] sm:$0xff] %v473
      %497 = vst [vmem:[%s172 + $0x48] sm:$0xff] %v475
      %498 = vst [vmem:[%s172 + $0x50] sm:$0xff] %v477
      %499 = vst [vmem:[%s172 + $0x58] sm:$0xff] %v479
      %500 = vst [vmem:[%s172 + $0x60] sm:$0xff] %v481
      %501 = vst [vmem:[%s172 + $0x68] sm:$0xff] %v483
      %502 = vst [vmem:[%s172 + $0x70] sm:$0xff] %v485
      %503 = vst [vmem:[%s172 + $0x78] sm:$0xff] %v487
      %s504 = smul.u32 16, %s14
      %p505 = scmp.lt.s32.totalorder %s504, 63
      %s506 = scalar_select %p505, %s504, 63
      %s507 = smul.addr %s506, 8
      %s508 = scalar_lea.vmem %s3, %s507
      // Predicated region
      $region33: #{_lambda_.46} parent=31 // pred_check
        %p509 = pneg %p100
      $region34: #{_lambda_.46} parent=31 // pred_check_branch
        %511 = sbr.rel (%p509) target = $region36
      $region35: #{_lambda_.46} parent=31 // pred_region
        %s512 = smul.u32 16, %s14
      $region36: #{_lambda_.46} parent=31 // pred_fallthru
        _
    $region32: #{_lambda_.46} parent=5 // pred_fallthru
      _
    %p513 = scmp.le.s32.totalorder 2, %s9
    // Predicated region
    $region37: #{_lambda_.46} parent=5 // pred_check
      %p514 = pneg %p513
    $region38: #{_lambda_.46} parent=5 // pred_check_branch
      %516 = sbr.rel (%p514) target = $region40
    $region39: #{_lambda_.46} parent=5 // pred_region
      %s517 = ssub.s32 %s9, 2
      // Predicated region
      $region41: #{_lambda_.46} parent=39 // pred_check
        %p518 = pneg %p106
      $region42: #{_lambda_.46} parent=39 // pred_check_branch
        %520 = sbr.rel (%p518) target = $region44
      $region43: #{_lambda_.46} parent=39 // pred_region
        %s521 = smul.u32 16, %s15
        %p522 = scmp.lt.s32.totalorder %s521, 63
        %s523 = scalar_select %p522, %s521, 63
        %s524 = smul.addr %s523, 8
        %s525 = scalar_lea.vmem %s3, %s524
      $region44: #{_lambda_.46} parent=39 // pred_fallthru
        _
    $region40: #{_lambda_.46} parent=5 // pred_fallthru
      _
  $region6: #{_lambda_.46} parent=0 // loop_footer
    %s13 = sadd.s32 1, %s9
  $region7: #{_lambda_.46} parent=0 // loop_footer_branch
    %8 = sbr.rel target = $region3
  $region8: #{_lambda_.46} parent=0 // loop_exit
    _

</llo_original>
